<compile_context>
chip_gen: v6e
topology: v6e:2x2x1
jax: 0.10.0
libtpu: 0.0.40
codegen_flags: <defaults>
</compile_context>

<pallas_src>
import functools

import jax
import jax.numpy as jnp
from jax.experimental import pallas as pl
from jax.experimental.pallas import tpu as pltpu

C = 3                       # number of foreground classes
P = 7                       # ROI-align output size
IN_DIM = 256 * P * P        # 12544
HID = 1024
CLS_DIM = C + 1             # 4
REG_DIM = 4 * C             # 12
HEAD_PAD = 128              # lane-dense padded width of the fused head output
TK = 1792                   # K-tile for the first matmul (multiple of 128, divides 12544)

assert IN_DIM % TK == 0, "TK must divide IN_DIM (first-Linear reduction dim)"


def _boxhead_kernel(x_ref, w1_ref, b1_ref, w2_ref, b2_ref, wcr_ref, bcr_ref,
                    out_ref, acc_ref):
    k = pl.program_id(1)

    @pl.when(k == 0)
    def _():
        acc_ref[...] = jnp.zeros_like(acc_ref)

    # Streamed first Linear: accumulate x_tile @ W1_tile (bf16 in, f32 acc).
    acc_ref[...] += jnp.dot(x_ref[...].astype(jnp.bfloat16), w1_ref[...],
                            preferred_element_type=jnp.float32)

    @pl.when(k == pl.num_programs(1) - 1)
    def _():
        # intermediate tail: (+b1) ReLU -> Linear(1024,1024) -> (+b2) ReLU
        h1 = jnp.maximum(acc_ref[...] + b1_ref[...], 0.0)
        h2 = jnp.dot(h1.astype(jnp.bfloat16), w2_ref[...],
                     preferred_element_type=jnp.float32) + b2_ref[...]
        h2 = jnp.maximum(h2, 0.0)
        # fused classifier + regressor heads (padded to 128 lanes)
        out_ref[...] = (jnp.dot(h2.astype(jnp.bfloat16), wcr_ref[...],
                                preferred_element_type=jnp.float32)
                        + bcr_ref[...]).astype(out_ref.dtype)


@jax.jit
def boxhead_forward(x, w1, b1, w2, b2, wc, bc, wr, br):
    n = x.shape[0]

    # --- fuse classifier/regressor heads into one lane-dense (HID, 128) weight
    wcr = jnp.zeros((HID, HEAD_PAD), jnp.float32)
    wcr = wcr.at[:, :CLS_DIM].set(wc).at[:, CLS_DIM:CLS_DIM + REG_DIM].set(wr)
    bcr = jnp.zeros((1, HEAD_PAD), jnp.float32)
    bcr = bcr.at[:, :CLS_DIM].set(bc).at[:, CLS_DIM:CLS_DIM + REG_DIM].set(br)

    # --- bf16 weights: the kernel is HBM-bandwidth bound on W1; f32 acc + biases
    w1b = w1.astype(jnp.bfloat16)
    w2b = w2.astype(jnp.bfloat16)
    wcrb = wcr.astype(jnp.bfloat16)
    # TODO(synk): optional int8 W1 quantization (per-channel scales) is a further
    # ~2x HBM win on v5e/v6e only (v7x MXU has no int path); not applied here.

    # --- proposal tiling: leading "parallel" grid axis (megacore on v7x)
    tm = min(256, max(8, -(-n // 8) * 8))
    n_pad = -(-n // tm) * tm
    if n_pad != n:
        x = jnp.pad(x, ((0, n_pad - n), (0, 0)))

    grid = (n_pad // tm, IN_DIM // TK)

    flops = 2 * n_pad * (IN_DIM * HID + HID * HID + HID * HEAD_PAD)
    bytes_accessed = (w1b.size * 2 + w2b.size * 2 + wcrb.size * 2
                      + x.size * 4 + b1.size * 4 + b2.size * 4 + bcr.size * 4
                      + n_pad * HEAD_PAD * 4)

    out = pl.pallas_call(
        _boxhead_kernel,
        out_shape=jax.ShapeDtypeStruct((n_pad, HEAD_PAD), jnp.float32),
        grid_spec=pltpu.PrefetchScalarGridSpec(
            num_scalar_prefetch=0,
            grid=grid,
            in_specs=[
                pl.BlockSpec((tm, TK), lambda m, k: (m, k)),          # x tile
                pl.BlockSpec((TK, HID), lambda m, k: (k, 0)),         # W1 tile (bf16)
                pl.BlockSpec((1, HID), lambda m, k: (0, 0)),          # b1
                pl.BlockSpec((HID, HID), lambda m, k: (0, 0)),        # W2 (bf16, resident)
                pl.BlockSpec((1, HID), lambda m, k: (0, 0)),          # b2
                pl.BlockSpec((HID, HEAD_PAD), lambda m, k: (0, 0)),   # fused heads (bf16)
                pl.BlockSpec((1, HEAD_PAD), lambda m, k: (0, 0)),     # fused bias
            ],
            out_specs=pl.BlockSpec((tm, HEAD_PAD), lambda m, k: (m, 0)),
            scratch_shapes=[pltpu.VMEM((tm, HID), jnp.float32)],
        ),
        compiler_params=pltpu.CompilerParams(
            dimension_semantics=("parallel", "arbitrary"),
            vmem_limit_bytes=32 * 1024 * 1024,
        ),
        cost_estimate=pl.CostEstimate(
            flops=flops, transcendentals=0, bytes_accessed=bytes_accessed),
    )(x, w1b, b1, w2b, b2, wcrb, bcr)

    class_logits = out[:n, :CLS_DIM]
    box_pred = out[:n, CLS_DIM:CLS_DIM + REG_DIM]
    return class_logits, box_pred


def _init_params(key):
    ks = jax.random.split(key, 8)
    scale = 0.02
    w1 = scale * jax.random.normal(ks[0], (IN_DIM, HID), jnp.float32)
    b1 = scale * jax.random.normal(ks[1], (1, HID), jnp.float32)
    w2 = scale * jax.random.normal(ks[2], (HID, HID), jnp.float32)
    b2 = scale * jax.random.normal(ks[3], (1, HID), jnp.float32)
    wc = scale * jax.random.normal(ks[4], (HID, CLS_DIM), jnp.float32)
    bc = scale * jax.random.normal(ks[5], (1, CLS_DIM), jnp.float32)
    wr = scale * jax.random.normal(ks[6], (HID, REG_DIM), jnp.float32)
    br = scale * jax.random.normal(ks[7], (1, REG_DIM), jnp.float32)
    return w1, b1, w2, b2, wc, bc, wr, br


def _reference_forward(x, w1, b1, w2, b2, wc, bc, wr, br):
    # Mixed-precision reference matching the kernel's numerics
    # (bf16 operands into each matmul, f32 accumulation, f32 bias/ReLU).
    bf = jnp.bfloat16
    h = jnp.maximum(
        jnp.dot(x.astype(bf), w1.astype(bf), preferred_element_type=jnp.float32) + b1, 0.0)
    h = jnp.maximum(
        jnp.dot(h.astype(bf), w2.astype(bf), preferred_element_type=jnp.float32) + b2, 0.0)
    cls = jnp.dot(h.astype(bf), wc.astype(bf), preferred_element_type=jnp.float32) + bc
    reg = jnp.dot(h.astype(bf), wr.astype(bf), preferred_element_type=jnp.float32) + br
    return cls, reg


if __name__ == "__main__":
    key = jax.random.PRNGKey(0)
    k_x, k_p = jax.random.split(key)

    total_proposals = 8   # small batch of pooled ROI feature vectors
    x = jax.random.normal(k_x, (total_proposals, IN_DIM), jnp.float32)
    params = _init_params(k_p)

    cls_logits, box_pred = boxhead_forward(x, *params)
    jax.block_until_ready((cls_logits, box_pred))

    # numerical sanity check against a plain-JAX reference (same bf16 numerics)
    ref_cls, ref_reg = _reference_forward(x, *params)
    assert cls_logits.shape == (total_proposals, CLS_DIM)
    assert box_pred.shape == (total_proposals, REG_DIM)
    assert jnp.allclose(cls_logits, ref_cls, atol=1e-2, rtol=1e-2)
    assert jnp.allclose(box_pred, ref_reg, atol=1e-2, rtol=1e-2)

    # TODO(synk): create_ground_truth / compute_loss / NMS post-processing are
    # data-dependent host-side logic (sorting, dynamic gathers, per-image lists)
    # and are not part of forward(); they are not implemented as Pallas kernels.
    print("KERNEL_OK")
</pallas_src>

<mosaic_0001>
module attributes {stable_mosaic.version = 11 : i64} {
  func.func @_boxhead_kernel(%arg0: i32, %arg1: i32, %arg2: memref<8x1792xf32, #tpu.memory_space<vmem>>, %arg3: memref<1792x1024xbf16, #tpu.memory_space<vmem>>, %arg4: memref<1x1024xf32, #tpu.memory_space<vmem>>, %arg5: memref<1024x1024xbf16, #tpu.memory_space<vmem>>, %arg6: memref<1x1024xf32, #tpu.memory_space<vmem>>, %arg7: memref<1024x128xbf16, #tpu.memory_space<vmem>>, %arg8: memref<1x128xf32, #tpu.memory_space<vmem>>, %arg9: memref<8x128xf32, #tpu.memory_space<vmem>>, %arg10: memref<8x1024xf32, #tpu.memory_space<vmem>>) attributes {dimension_semantics = [#tpu.dimension_semantics<parallel>, #tpu.dimension_semantics<arbitrary>], iteration_bounds = array<i64: 1, 7>, scalar_prefetch = 0 : i64, scratch_operands = 1 : i64, tpu.core_type = #tpu.core_type<tc>, window_params = [{transform_indices = @transform_0, window_bounds = array<i64: 8, 1792>}, {transform_indices = @transform_1, window_bounds = array<i64: 1792, 1024>}, {pipeline_mode = #tpu.pipeline_mode<synchronous>, transform_indices = @transform_2, window_bounds = array<i64: 1, 1024>}, {pipeline_mode = #tpu.pipeline_mode<synchronous>, transform_indices = @transform_3, window_bounds = array<i64: 1024, 1024>}, {pipeline_mode = #tpu.pipeline_mode<synchronous>, transform_indices = @transform_4, window_bounds = array<i64: 1, 1024>}, {pipeline_mode = #tpu.pipeline_mode<synchronous>, transform_indices = @transform_5, window_bounds = array<i64: 1024, 128>}, {pipeline_mode = #tpu.pipeline_mode<synchronous>, transform_indices = @transform_6, window_bounds = array<i64: 1, 128>}, {transform_indices = @transform_7, window_bounds = array<i64: 8, 128>}]} {
    %c0_i32 = arith.constant 0 : i32
    %0 = arith.cmpi eq, %arg1, %c0_i32 : i32
    %1 = arith.extui %0 : i1 to i32
    %c0_i32_0 = arith.constant 0 : i32
    %2 = arith.cmpi ne, %1, %c0_i32_0 : i32
    scf.if %2 {
      %cst_9 = arith.constant 0.000000e+00 : f32
      %13 = vector.broadcast %cst_9 : f32 to vector<8x1024xf32>
      %c0_10 = arith.constant 0 : index
      %c0_11 = arith.constant 0 : index
      %14 = vector.load %arg10[%c0_10, %c0_11] : memref<8x1024xf32, #tpu.memory_space<vmem>>, vector<8x1024xf32>
      tpu.vector_store %arg10[%c0_10, %c0_11], %13 {strides = array<i32>} : memref<8x1024xf32, #tpu.memory_space<vmem>>, vector<8x1024xf32>,
    } else {
    }
    %c0 = arith.constant 0 : index
    %c0_1 = arith.constant 0 : index
    %3 = vector.load %arg10[%c0, %c0_1] : memref<8x1024xf32, #tpu.memory_space<vmem>>, vector<8x1024xf32>
    %c0_2 = arith.constant 0 : index
    %c0_3 = arith.constant 0 : index
    %4 = vector.load %arg2[%c0_2, %c0_3] : memref<8x1792xf32, #tpu.memory_space<vmem>>, vector<8x1792xf32>
    %5 = arith.truncf %4 : vector<8x1792xf32> to vector<8x1792xbf16>
    %c0_4 = arith.constant 0 : index
    %c0_5 = arith.constant 0 : index
    %6 = vector.load %arg3[%c0_4, %c0_5] : memref<1792x1024xbf16, #tpu.memory_space<vmem>>, vector<1792x1024xbf16>
    %cst = arith.constant dense<0.000000e+00> : vector<8x1024xf32>
    %7 = tpu.matmul %5, %6, %cst {dimension_numbers = #tpu.dot_dimension_numbers<[1], [0], [0], [1], [0, 0, 1, 1], [], []>} : vector<8x1792xbf16>, vector<1792x1024xbf16>, vector<8x1024xf32> -> vector<8x1024xf32>
    %8 = arith.addf %3, %7 : vector<8x1024xf32>
    %c0_6 = arith.constant 0 : index
    %c0_7 = arith.constant 0 : index
    %9 = vector.load %arg10[%c0_6, %c0_7] : memref<8x1024xf32, #tpu.memory_space<vmem>>, vector<8x1024xf32>
    tpu.vector_store %arg10[%c0_6, %c0_7], %8 {strides = array<i32>} : memref<8x1024xf32, #tpu.memory_space<vmem>>, vector<8x1024xf32>,
    %c6_i32 = arith.constant 6 : i32
    %10 = arith.cmpi eq, %arg1, %c6_i32 : i32
    %11 = arith.extui %10 : i1 to i32
    %c0_i32_8 = arith.constant 0 : i32
    %12 = arith.cmpi ne, %11, %c0_i32_8 : i32
    scf.if %12 {
      %c0_9 = arith.constant 0 : index
      %c0_10 = arith.constant 0 : index
      %13 = vector.load %arg10[%c0_9, %c0_10] : memref<8x1024xf32, #tpu.memory_space<vmem>>, vector<8x1024xf32>
      %c0_11 = arith.constant 0 : index
      %c0_12 = arith.constant 0 : index
      %14 = vector.load %arg4[%c0_11, %c0_12] : memref<1x1024xf32, #tpu.memory_space<vmem>>, vector<1x1024xf32>
      %15 = vector.broadcast %14 : vector<1x1024xf32> to vector<8x1024xf32>
      %16 = arith.addf %13, %15 : vector<8x1024xf32>
      %cst_13 = arith.constant 0.000000e+00 : f32
      %17 = vector.broadcast %cst_13 : f32 to vector<8x1024xf32>
      %18 = arith.maximumf %16, %17 : vector<8x1024xf32>
      %19 = arith.truncf %18 : vector<8x1024xf32> to vector<8x1024xbf16>
      %c0_14 = arith.constant 0 : index
      %c0_15 = arith.constant 0 : index
      %20 = vector.load %arg5[%c0_14, %c0_15] : memref<1024x1024xbf16, #tpu.memory_space<vmem>>, vector<1024x1024xbf16>
      %cst_16 = arith.constant dense<0.000000e+00> : vector<8x1024xf32>
      %21 = tpu.matmul %19, %20, %cst_16 {dimension_numbers = #tpu.dot_dimension_numbers<[1], [0], [0], [1], [0, 0, 1, 1], [], []>} : vector<8x1024xbf16>, vector<1024x1024xbf16>, vector<8x1024xf32> -> vector<8x1024xf32>
      %c0_17 = arith.constant 0 : index
      %c0_18 = arith.constant 0 : index
      %22 = vector.load %arg6[%c0_17, %c0_18] : memref<1x1024xf32, #tpu.memory_space<vmem>>, vector<1x1024xf32>
      %23 = vector.broadcast %22 : vector<1x1024xf32> to vector<8x1024xf32>
      %24 = arith.addf %21, %23 : vector<8x1024xf32>
      %cst_19 = arith.constant 0.000000e+00 : f32
      %25 = vector.broadcast %cst_19 : f32 to vector<8x1024xf32>
      %26 = arith.maximumf %24, %25 : vector<8x1024xf32>
      %27 = arith.truncf %26 : vector<8x1024xf32> to vector<8x1024xbf16>
      %c0_20 = arith.constant 0 : index
      %c0_21 = arith.constant 0 : index
      %28 = vector.load %arg7[%c0_20, %c0_21] : memref<1024x128xbf16, #tpu.memory_space<vmem>>, vector<1024x128xbf16>
      %cst_22 = arith.constant dense<0.000000e+00> : vector<8x128xf32>
      %29 = tpu.matmul %27, %28, %cst_22 {dimension_numbers = #tpu.dot_dimension_numbers<[1], [0], [0], [1], [0, 0, 1, 1], [], []>} : vector<8x1024xbf16>, vector<1024x128xbf16>, vector<8x128xf32> -> vector<8x128xf32>
      %c0_23 = arith.constant 0 : index
      %c0_24 = arith.constant 0 : index
      %30 = vector.load %arg8[%c0_23, %c0_24] : memref<1x128xf32, #tpu.memory_space<vmem>>, vector<1x128xf32>
      %31 = vector.broadcast %30 : vector<1x128xf32> to vector<8x128xf32>
      %32 = arith.addf %29, %31 : vector<8x128xf32>
      %c0_25 = arith.constant 0 : index
      %c0_26 = arith.constant 0 : index
      %33 = vector.load %arg9[%c0_25, %c0_26] : memref<8x128xf32, #tpu.memory_space<vmem>>, vector<8x128xf32>
      tpu.vector_store %arg9[%c0_25, %c0_26], %32 {strides = array<i32>} : memref<8x128xf32, #tpu.memory_space<vmem>>, vector<8x128xf32>,
    } else {
    }
    return
  }
  func.func @transform_0(%arg0: i32, %arg1: i32) -> (i32, i32) {
    %c0_i32 = arith.constant 0 : i32
    return %arg0, %arg1 : i32, i32
  }
  func.func @transform_1(%arg0: i32, %arg1: i32) -> (i32, i32) {
    %c0_i32 = arith.constant 0 : i32
    %c0_i32_0 = arith.constant 0 : i32
    return %arg1, %c0_i32 : i32, i32
  }
  func.func @transform_2(%arg0: i32, %arg1: i32) -> (i32, i32) {
    %c0_i32 = arith.constant 0 : i32
    %c0_i32_0 = arith.constant 0 : i32
    %c0_i32_1 = arith.constant 0 : i32
    return %c0_i32, %c0_i32_0 : i32, i32
  }
  func.func @transform_3(%arg0: i32, %arg1: i32) -> (i32, i32) {
    %c0_i32 = arith.constant 0 : i32
    %c0_i32_0 = arith.constant 0 : i32
    %c0_i32_1 = arith.constant 0 : i32
    return %c0_i32, %c0_i32_0 : i32, i32
  }
  func.func @transform_4(%arg0: i32, %arg1: i32) -> (i32, i32) {
    %c0_i32 = arith.constant 0 : i32
    %c0_i32_0 = arith.constant 0 : i32
    %c0_i32_1 = arith.constant 0 : i32
    return %c0_i32, %c0_i32_0 : i32, i32
  }
  func.func @transform_5(%arg0: i32, %arg1: i32) -> (i32, i32) {
    %c0_i32 = arith.constant 0 : i32
    %c0_i32_0 = arith.constant 0 : i32
    %c0_i32_1 = arith.constant 0 : i32
    return %c0_i32, %c0_i32_0 : i32, i32
  }
  func.func @transform_6(%arg0: i32, %arg1: i32) -> (i32, i32) {
    %c0_i32 = arith.constant 0 : i32
    %c0_i32_0 = arith.constant 0 : i32
    %c0_i32_1 = arith.constant 0 : i32
    return %c0_i32, %c0_i32_0 : i32, i32
  }
  func.func @transform_7(%arg0: i32, %arg1: i32) -> (i32, i32) {
    %c0_i32 = arith.constant 0 : i32
    %c0_i32_0 = arith.constant 0 : i32
    return %arg0, %c0_i32 : i32, i32
  }
}

</mosaic_0001>

<llo_original>
// kernel: boxhead_forward.1
$region0: #{boxhead_forward.1}
  #allocation0 [shape = 'u32[]', space=smem, size = 0x4, offset = 0x4, fixed_abs, tag = 'smem constant byte address 0x4 - core index']
  #allocation1 [shape = 'u32[144,128]{1,0:T(1,128)}', space=vmem, size = 0x12000, scoped, tag = 'internal scratch']
  #allocation2 [shape = 'f32[8,1024]{1,0:T(8,128)}', space=vmem, size = 0x8000, scoped, tag = 'scratch operand']
  %s0 = inlined_call_operand.vmem [shape: f32[8,12544], index: 0, kind: input, shape index: {}]
  %s1 = inlined_call_operand.vmem [shape: bf16[12544,1024], index: 1, kind: input, shape index: {}]
  %s2 = inlined_call_operand.vmem [shape: f32[1,1024], index: 2, kind: input, shape index: {}]
  %s3 = inlined_call_operand.vmem [shape: bf16[1024,1024], index: 3, kind: input, shape index: {}]
  %s4 = inlined_call_operand.vmem [shape: f32[1,1024], index: 4, kind: input, shape index: {}]
  %s5 = inlined_call_operand.vmem [shape: bf16[1024,128], index: 5, kind: input, shape index: {}]
  %s6 = inlined_call_operand.vmem [shape: f32[1,128], index: 6, kind: input, shape index: {}]
  %s7 = inlined_call_operand.vmem [shape: f32[8,128], index: 7, kind: output, shape index: {}]
  %s8 = sld [smem:[#allocation0]]
  $region69: #{boxhead_forward.1} parent=0
    _
  %s10 = ssub.s32 1, %s8
  %s11 = scalar_select 0, %s10, %s8
  loop: start=0, step=1, limit=9
  $region2: #{boxhead_forward.1} parent=0 // loop_pre_header
    _
  $region3: #{boxhead_forward.1} parent=0 // loop_header
    %s13 = sphi 0, %s17
    %p14 = scmp.ge.s32.totalorder %s13, 9
    %s20 = sphi 0, %s32
    %s21 = sphi 0, %s28
    %s22 = sphi 0, %s20
    %s23 = sphi 0, %s21
    %s24 = sphi 0, %s22
    %s25 = sphi 0, %s23
    %s37 = sphi 0, %s39
    %s40 = sphi 0, %s37
    %s41 = sphi 0, %s40
    %s57 = sphi 0, %s41
    %s63 = sphi 0, %s65
    %s66 = sphi 0, %s63
    %s67 = sphi 0, %s66
    %s83 = sphi 0, %s67
    %s87 = sphi 0, %s87
    %s89 = sphi 0, %s87
    %s90 = sphi 0, %s89
    %s104 = sphi 0, %s90
    %s108 = sphi 0, %s108
    %s110 = sphi 0, %s108
    %s111 = sphi 0, %s110
    %s125 = sphi 0, %s111
    %s129 = sphi 0, %s129
    %s131 = sphi 0, %s129
    %s132 = sphi 0, %s131
    %s146 = sphi 0, %s132
    %s150 = sphi 0, %s150
    %s152 = sphi 0, %s150
    %s153 = sphi 0, %s152
    %s167 = sphi 0, %s153
    %s171 = sphi 0, %s171
    %s173 = sphi 0, %s171
    %s174 = sphi 0, %s173
    %s188 = sphi 0, %s174
    %s194 = sphi 0, %s196
    %s197 = sphi 0, %s194
    %s198 = sphi 0, %s197
    %s214 = sphi 0, %s198
  $region4: #{boxhead_forward.1} parent=0 // loop_header_branch
    %16 = sbr.rel (%p14) target = $region8
  $region5: #{boxhead_forward.1} parent=0 // loop_body
    %s18 = ssub.s32 %s13, 1
    %s19 = ssub.s32 %s13, 2
    %s26 = sadd.s32 1, %s21
    %p27 = scmp.ge.s32.totalorder %s26, 7
    %s28 = scalar_select %p27, 0, %s26
    %s29 = sadd.s32 1, %s20
    %s30 = scalar_select %p27, %s29, %s20
    %p31 = scmp.ge.s32.totalorder %s30, 1
    %s32 = scalar_select %p31, 0, %s30
    %s33 = ssub.s32 %s20, %s32
    %s34 = ssub.s32 %s21, %s28
    %s35 = sor.u32 %s33, %s34
    %p36 = scmp.eq.s32.totalorder %s35, 0
    %s38 = sadd.s32 %s37, 1
    %s39 = scalar_select %p36, %s37, %s38
    %p42 = pneg %p36
    %p43 = scmp.eq.s32.totalorder %s13, 6
    %p44 = por %p42, %p43
    %p45 = scmp.ne.s32.totalorder %s37, %s40
    %p46 = scmp.eq.s32.totalorder %s13, 0
    %p47 = por %p45, %p46
    %p48 = scmp.ne.s32.totalorder %s37, %s40
    %p49 = scmp.eq.s32.totalorder %s18, 6
    %p50 = por %p48, %p49
    %p51 = scmp.ne.s32.totalorder %s40, %s41
    %p52 = scmp.eq.s32.totalorder %s18, 0
    %p53 = por %p51, %p52
    %p54 = scmp.ne.s32.totalorder %s40, %s41
    %p55 = scmp.eq.s32.totalorder %s19, 6
    %p56 = por %p54, %p55
    %p58 = scmp.ne.s32.totalorder %s41, %s57
    %p59 = scmp.eq.s32.totalorder %s19, 0
    %p60 = por %p58, %p59
    %s61 = ssub.s32 %s21, %s28
    %p62 = scmp.eq.s32.totalorder %s61, 0
    %s64 = sadd.s32 %s63, 1
    %s65 = scalar_select %p62, %s63, %s64
    %p68 = pneg %p62
    %p69 = scmp.eq.s32.totalorder %s13, 6
    %p70 = por %p68, %p69
    %p71 = scmp.ne.s32.totalorder %s63, %s66
    %p72 = scmp.eq.s32.totalorder %s13, 0
    %p73 = por %p71, %p72
    %p74 = scmp.ne.s32.totalorder %s63, %s66
    %p75 = scmp.eq.s32.totalorder %s18, 6
    %p76 = por %p74, %p75
    %p77 = scmp.ne.s32.totalorder %s66, %s67
    %p78 = scmp.eq.s32.totalorder %s18, 0
    %p79 = por %p77, %p78
    %p80 = scmp.ne.s32.totalorder %s66, %s67
    %p81 = scmp.eq.s32.totalorder %s19, 6
    %p82 = por %p80, %p81
    %p84 = scmp.ne.s32.totalorder %s67, %s83
    %p85 = scmp.eq.s32.totalorder %s19, 0
    %p86 = por %p84, %p85
    %s88 = sadd.s32 %s87, 1
    %p91 = scmp.eq.s32.totalorder %s13, 6
    %p92 = scmp.ne.s32.totalorder %s87, %s89
    %p93 = scmp.eq.s32.totalorder %s13, 0
    %p94 = por %p92, %p93
    %p95 = scmp.ne.s32.totalorder %s87, %s89
    %p96 = scmp.eq.s32.totalorder %s18, 6
    %p97 = por %p95, %p96
    %p98 = scmp.ne.s32.totalorder %s89, %s90
    %p99 = scmp.eq.s32.totalorder %s18, 0
    %p100 = por %p98, %p99
    %p101 = scmp.ne.s32.totalorder %s89, %s90
    %p102 = scmp.eq.s32.totalorder %s19, 6
    %p103 = por %p101, %p102
    %p105 = scmp.ne.s32.totalorder %s90, %s104
    %p106 = scmp.eq.s32.totalorder %s19, 0
    %p107 = por %p105, %p106
    %s109 = sadd.s32 %s108, 1
    %p112 = scmp.eq.s32.totalorder %s13, 6
    %p113 = scmp.ne.s32.totalorder %s108, %s110
    %p114 = scmp.eq.s32.totalorder %s13, 0
    %p115 = por %p113, %p114
    %p116 = scmp.ne.s32.totalorder %s108, %s110
    %p117 = scmp.eq.s32.totalorder %s18, 6
    %p118 = por %p116, %p117
    %p119 = scmp.ne.s32.totalorder %s110, %s111
    %p120 = scmp.eq.s32.totalorder %s18, 0
    %p121 = por %p119, %p120
    %p122 = scmp.ne.s32.totalorder %s110, %s111
    %p123 = scmp.eq.s32.totalorder %s19, 6
    %p124 = por %p122, %p123
    %p126 = scmp.ne.s32.totalorder %s111, %s125
    %p127 = scmp.eq.s32.totalorder %s19, 0
    %p128 = por %p126, %p127
    %s130 = sadd.s32 %s129, 1
    %p133 = scmp.eq.s32.totalorder %s13, 6
    %p134 = scmp.ne.s32.totalorder %s129, %s131
    %p135 = scmp.eq.s32.totalorder %s13, 0
    %p136 = por %p134, %p135
    %p137 = scmp.ne.s32.totalorder %s129, %s131
    %p138 = scmp.eq.s32.totalorder %s18, 6
    %p139 = por %p137, %p138
    %p140 = scmp.ne.s32.totalorder %s131, %s132
    %p141 = scmp.eq.s32.totalorder %s18, 0
    %p142 = por %p140, %p141
    %p143 = scmp.ne.s32.totalorder %s131, %s132
    %p144 = scmp.eq.s32.totalorder %s19, 6
    %p145 = por %p143, %p144
    %p147 = scmp.ne.s32.totalorder %s132, %s146
    %p148 = scmp.eq.s32.totalorder %s19, 0
    %p149 = por %p147, %p148
    %s151 = sadd.s32 %s150, 1
    %p154 = scmp.eq.s32.totalorder %s13, 6
    %p155 = scmp.ne.s32.totalorder %s150, %s152
    %p156 = scmp.eq.s32.totalorder %s13, 0
    %p157 = por %p155, %p156
    %p158 = scmp.ne.s32.totalorder %s150, %s152
    %p159 = scmp.eq.s32.totalorder %s18, 6
    %p160 = por %p158, %p159
    %p161 = scmp.ne.s32.totalorder %s152, %s153
    %p162 = scmp.eq.s32.totalorder %s18, 0
    %p163 = por %p161, %p162
    %p164 = scmp.ne.s32.totalorder %s152, %s153
    %p165 = scmp.eq.s32.totalorder %s19, 6
    %p166 = por %p164, %p165
    %p168 = scmp.ne.s32.totalorder %s153, %s167
    %p169 = scmp.eq.s32.totalorder %s19, 0
    %p170 = por %p168, %p169
    %s172 = sadd.s32 %s171, 1
    %p175 = scmp.eq.s32.totalorder %s13, 6
    %p176 = scmp.ne.s32.totalorder %s171, %s173
    %p177 = scmp.eq.s32.totalorder %s13, 0
    %p178 = por %p176, %p177
    %p179 = scmp.ne.s32.totalorder %s171, %s173
    %p180 = scmp.eq.s32.totalorder %s18, 6
    %p181 = por %p179, %p180
    %p182 = scmp.ne.s32.totalorder %s173, %s174
    %p183 = scmp.eq.s32.totalorder %s18, 0
    %p184 = por %p182, %p183
    %p185 = scmp.ne.s32.totalorder %s173, %s174
    %p186 = scmp.eq.s32.totalorder %s19, 6
    %p187 = por %p185, %p186
    %p189 = scmp.ne.s32.totalorder %s174, %s188
    %p190 = scmp.eq.s32.totalorder %s19, 0
    %p191 = por %p189, %p190
    %s192 = ssub.s32 %s20, %s32
    %p193 = scmp.eq.s32.totalorder %s192, 0
    %s195 = sadd.s32 %s194, 1
    %s196 = scalar_select %p193, %s194, %s195
    %p199 = pneg %p193
    %p200 = scmp.eq.s32.totalorder %s13, 6
    %p201 = por %p199, %p200
    %p202 = scmp.ne.s32.totalorder %s194, %s197
    %p203 = scmp.eq.s32.totalorder %s13, 0
    %p204 = por %p202, %p203
    %p205 = scmp.ne.s32.totalorder %s194, %s197
    %p206 = scmp.eq.s32.totalorder %s18, 6
    %p207 = por %p205, %p206
    %p208 = scmp.ne.s32.totalorder %s197, %s198
    %p209 = scmp.eq.s32.totalorder %s18, 0
    %p210 = por %p208, %p209
    %p211 = scmp.ne.s32.totalorder %s197, %s198
    %p212 = scmp.eq.s32.totalorder %s19, 6
    %p213 = por %p211, %p212
    %p215 = scmp.ne.s32.totalorder %s198, %s214
    %p216 = scmp.eq.s32.totalorder %s19, 0
    %p217 = por %p215, %p216
    %p218 = scmp.le.s32.totalorder 1, %s13
    %p219 = scmp.lt.s32.totalorder %s13, 8
    %p220 = pnand %p218, %p219
    %p221 = pneg %p220
    // Predicated region
    $region9: #{boxhead_forward.1} parent=5 // pred_check
      _
    $region10: #{boxhead_forward.1} parent=5 // pred_check_branch
      %223 = sbr.rel (%p220) target = $region12
    $region11: #{boxhead_forward.1} parent=5 // pred_region
      %s224 = ssub.s32 %s13, 1
      // Predicated region
      $region13: #{boxhead_forward.1} parent=11 // pred_check
        %p225 = pneg %p100
      $region14: #{boxhead_forward.1} parent=11 // pred_check_branch
        %227 = sbr.rel (%p225) target = $region16
      $region15: #{boxhead_forward.1} parent=11 // pred_region
        _
      $region16: #{boxhead_forward.1} parent=11 // pred_fallthru
        _
      // Predicated region
      $region17: #{boxhead_forward.1} parent=11 // pred_check
        %p228 = pneg %p121
      $region18: #{boxhead_forward.1} parent=11 // pred_check_branch
        %230 = sbr.rel (%p228) target = $region20
      $region19: #{boxhead_forward.1} parent=11 // pred_region
        _
      $region20: #{boxhead_forward.1} parent=11 // pred_fallthru
        _
      // Predicated region
      $region21: #{boxhead_forward.1} parent=11 // pred_check
        %p231 = pneg %p142
      $region22: #{boxhead_forward.1} parent=11 // pred_check_branch
        %233 = sbr.rel (%p231) target = $region24
      $region23: #{boxhead_forward.1} parent=11 // pred_region
        _
      $region24: #{boxhead_forward.1} parent=11 // pred_fallthru
        _
      // Predicated region
      $region25: #{boxhead_forward.1} parent=11 // pred_check
        %p234 = pneg %p163
      $region26: #{boxhead_forward.1} parent=11 // pred_check_branch
        %236 = sbr.rel (%p234) target = $region28
      $region27: #{boxhead_forward.1} parent=11 // pred_region
        _
      $region28: #{boxhead_forward.1} parent=11 // pred_fallthru
        _
      // Predicated region
      $region29: #{boxhead_forward.1} parent=11 // pred_check
        %p237 = pneg %p184
      $region30: #{boxhead_forward.1} parent=11 // pred_check_branch
        %239 = sbr.rel (%p237) target = $region32
      $region31: #{boxhead_forward.1} parent=11 // pred_region
        _
      $region32: #{boxhead_forward.1} parent=11 // pred_fallthru
        _
    $region12: #{boxhead_forward.1} parent=5 // pred_fallthru
      _
    %p240 = scmp.lt.s32.totalorder %s13, 7
    // Predicated region
    $region33: #{boxhead_forward.1} parent=5 // pred_check
      %p241 = pneg %p240
    $region34: #{boxhead_forward.1} parent=5 // pred_check_branch
      %243 = sbr.rel (%p241) target = $region36
    $region35: #{boxhead_forward.1} parent=5 // pred_region
      // Predicated region
      $region37: #{boxhead_forward.1} parent=35 // pred_check
        %p244 = pneg %p47
      $region38: #{boxhead_forward.1} parent=35 // pred_check_branch
        %246 = sbr.rel (%p244) target = $region40
      $region39: #{boxhead_forward.1} parent=35 // pred_region
        %s247 = smul.u32 14, %s21
        %p248 = scmp.lt.s32.totalorder %s20, 0
        %s249 = scalar_select %p248, %s20, 0
        %p250 = scmp.lt.s32.totalorder %s247, 97
        %s251 = scalar_select %p250, %s247, 97
        %s252 = smul.addr %s249, 98
        %s253 = sadd.s32 %s251, %s252
        %s254 = smul.addr %s253, 8
        %s255 = scalar_lea.vmem %s0, %s254
        %s256 = smul.u32 14, %s21
      $region40: #{boxhead_forward.1} parent=35 // pred_fallthru
        _
      // Predicated region
      $region41: #{boxhead_forward.1} parent=35 // pred_check
        %p257 = pneg %p73
      $region42: #{boxhead_forward.1} parent=35 // pred_check_branch
        %259 = sbr.rel (%p257) target = $region44
      $region43: #{boxhead_forward.1} parent=35 // pred_region
        %s260 = smul.u32 224, %s21
        %p261 = scmp.lt.s32.totalorder %s260, 1567
        %s262 = scalar_select %p261, %s260, 1567
        %s263 = smul.addr %s262, 8
        %s264 = smul.addr %s263, 4
        %s265 = scalar_lea.vmem %s1, %s264
        %s266 = smul.u32 224, %s21
      $region44: #{boxhead_forward.1} parent=35 // pred_fallthru
        _
    $region36: #{boxhead_forward.1} parent=5 // pred_fallthru
      _
    %p267 = scmp.le.s32.totalorder 1, %s13
    %p268 = scmp.lt.s32.totalorder %s13, 8
    %p269 = pnand %p267, %p268
    %p270 = pneg %p269
    // Predicated region
    $region45: #{boxhead_forward.1} parent=5 // pred_check
      _
    $region46: #{boxhead_forward.1} parent=5 // pred_check_branch
      %272 = sbr.rel (%p269) target = $region48
    $region47: #{boxhead_forward.1} parent=5 // pred_region
      %s273 = ssub.s32 %s13, 1
      %s274 = smul.u32 14, %s23
      %p275 = scmp.lt.s32.totalorder %s22, 0
      %s276 = scalar_select %p275, %s22, 0
      %p277 = scmp.lt.s32.totalorder %s274, 97
      %s278 = scalar_select %p277, %s274, 97
      %s279 = smul.addr %s276, 98
      %s280 = sadd.s32 %s278, %s279
      %s281 = smul.addr %s280, 8
      %s282 = scalar_lea.vmem %s0, %s281
      %p283 = pneg %p53
      %p284 = pneg %p50
      %s285 = smul.u32 224, %s23
      %p286 = scmp.lt.s32.totalorder %s285, 1567
      %s287 = scalar_select %p286, %s285, 1567
      %s288 = smul.addr %s287, 8
      %s289 = smul.addr %s288, 4
      %s290 = scalar_lea.vmem %s1, %s289
      %p291 = pneg %p79
      %p292 = pneg %p76
      %p293 = pneg %p100
      %p294 = pneg %p97
      %p295 = pneg %p121
      %p296 = pneg %p118
      %p297 = pneg %p142
      %p298 = pneg %p139
      %p299 = pneg %p163
      %p300 = pneg %p160
      %p301 = pneg %p184
      %p302 = pneg %p181
      %p303 = pneg %p210
      %p304 = pneg %p207
      %p305 = scmp.lt.s32.totalorder %s22, 0
      %s306 = scalar_select %p305, %s22, 0
      %s307 = smul.addr %s306, 8
      %s308 = scalar_lea.vmem %s7, %s307
      %s309 = smul.u32 14, %s23
      %p310 = scmp.lt.s32.totalorder %s22, 0
      %s311 = scalar_select %p310, %s22, 0
      %p312 = scmp.lt.s32.totalorder %s309, 97
      %s313 = scalar_select %p312, %s309, 97
      %s314 = smul.addr %s311, 98
      %s315 = sadd.s32 %s313, %s314
      %s316 = smul.addr %s315, 8
      %s317 = scalar_lea.vmem %s0, %s316
      %s318 = smul.u32 14, %s23
      %s319 = smul.u32 224, %s23
      %p320 = scmp.lt.s32.totalorder %s319, 1567
      %s321 = scalar_select %p320, %s319, 1567
      %s322 = smul.addr %s321, 8
      %s323 = smul.addr %s322, 4
      %s324 = scalar_lea.vmem %s1, %s323
      %s325 = smul.u32 224, %s23
      %p326 = scmp.lt.s32.totalorder %s22, 0
      %s327 = scalar_select %p326, %s22, 0
      %s328 = smul.addr %s327, 8
      %s329 = scalar_lea.vmem %s7, %s328
      %p331 = scmp.eq.s32.totalorder %s23, 0
      // Predicated region
      $region49: #{boxhead_forward.1} parent=47 // pred_check
        %p332 = pneg %p331
      $region50: #{boxhead_forward.1} parent=47 // pred_check_branch
        %334 = sbr.rel (%p332) target = $region52
      $region51: #{boxhead_forward.1} parent=47 // pred_region
        %335 = vst [vmem:[#allocation2] sm:$0xff] 0.0
        %336 = vst [vmem:[#allocation2 + $0x8] sm:$0xff] 0.0
        %337 = vst [vmem:[#allocation2 + $0x10] sm:$0xff] 0.0
        %338 = vst [vmem:[#allocation2 + $0x18] sm:$0xff] 0.0
        %339 = vst [vmem:[#allocation2 + $0x20] sm:$0xff] 0.0
        %340 = vst [vmem:[#allocation2 + $0x28] sm:$0xff] 0.0
        %341 = vst [vmem:[#allocation2 + $0x30] sm:$0xff] 0.0
        %342 = vst [vmem:[#allocation2 + $0x38] sm:$0xff] 0.0
      $region52: #{boxhead_forward.1} parent=47 // pred_fallthru
        _
      %v343 = vld [vmem:[#allocation2] sm:$0xff]
      %v344 = vld [vmem:[#allocation2 + $0x8] sm:$0xff]
      %v345 = vld [vmem:[#allocation2 + $0x10] sm:$0xff]
      %v346 = vld [vmem:[#allocation2 + $0x18] sm:$0xff]
      %v347 = vld [vmem:[#allocation2 + $0x20] sm:$0xff]
      %v348 = vld [vmem:[#allocation2 + $0x28] sm:$0xff]
      %v349 = vld [vmem:[#allocation2 + $0x30] sm:$0xff]
      %v350 = vld [vmem:[#allocation2 + $0x38] sm:$0xff]
      %v351 = vld [vmem:[%s317] sm:$0xff]
      %v352 = vld [vmem:[%s317 + $0x8] sm:$0xff]
      %v353 = vld [vmem:[%s317 + $0x10] sm:$0xff]
      %v354 = vld [vmem:[%s317 + $0x18] sm:$0xff]
      %v355 = vld [vmem:[%s317 + $0x20] sm:$0xff]
      %v356 = vld [vmem:[%s317 + $0x28] sm:$0xff]
      %v357 = vld [vmem:[%s317 + $0x30] sm:$0xff]
      %v358 = vld [vmem:[%s317 + $0x38] sm:$0xff]
      %v359 = vld [vmem:[%s317 + $0x40] sm:$0xff]
      %v360 = vld [vmem:[%s317 + $0x48] sm:$0xff]
      %v361 = vld [vmem:[%s317 + $0x50] sm:$0xff]
      %v362 = vld [vmem:[%s317 + $0x58] sm:$0xff]
      %v363 = vld [vmem:[%s317 + $0x60] sm:$0xff]
      %v364 = vld [vmem:[%s317 + $0x68] sm:$0xff]
      %v365 = vpack.c.bf16 %v351, %v351
      %v366 = vpack.c.bf16 %v352, %v352
      %v367 = vpack.c.bf16 %v353, %v353
      %v368 = vpack.c.bf16 %v354, %v354
      %v369 = vpack.c.bf16 %v355, %v355
      %v370 = vpack.c.bf16 %v356, %v356
      %v371 = vpack.c.bf16 %v357, %v357
      %v372 = vpack.c.bf16 %v358, %v358
      %v373 = vpack.c.bf16 %v359, %v359
      %v374 = vpack.c.bf16 %v360, %v360
      %v375 = vpack.c.bf16 %v361, %v361
      %v376 = vpack.c.bf16 %v362, %v362
      %v377 = vpack.c.bf16 %v363, %v363
      %v378 = vpack.c.bf16 %v364, %v364
      %v379 = vld [vmem:[%s324] sm:$0xff]
      %v380 = vld [vmem:[%s324 + $0x8] sm:$0xff]
      %v381 = vld [vmem:[%s324 + $0x10] sm:$0xff]
      %v382 = vld [vmem:[%s324 + $0x18] sm:$0xff]
      %v383 = vld [vmem:[%s324 + $0x20] sm:$0xff]
      %v384 = vld [vmem:[%s324 + $0x28] sm:$0xff]
      %v385 = vld [vmem:[%s324 + $0x30] sm:$0xff]
      %v386 = vld [vmem:[%s324 + $0x38] sm:$0xff]
      %v387 = vld [vmem:[%s324 + $0x40] sm:$0xff]
      %v388 = vld [vmem:[%s324 + $0x48] sm:$0xff]
      %v389 = vld [vmem:[%s324 + $0x50] sm:$0xff]
      %v390 = vld [vmem:[%s324 + $0x58] sm:$0xff]
      %v391 = vld [vmem:[%s324 + $0x60] sm:$0xff]
      %v392 = vld [vmem:[%s324 + $0x68] sm:$0xff]
      %v393 = vld [vmem:[%s324 + $0x70] sm:$0xff]
      %v394 = vld [vmem:[%s324 + $0x78] sm:$0xff]
      %v395 = vld [vmem:[%s324 + $0x80] sm:$0xff]
      %v396 = vld [vmem:[%s324 + $0x88] sm:$0xff]
      %v397 = vld [vmem:[%s324 + $0x90] sm:$0xff]
      %v398 = vld [vmem:[%s324 + $0x98] sm:$0xff]
      %v399 = vld [vmem:[%s324 + $0xa0] sm:$0xff]
      %v400 = vld [vmem:[%s324 + $0xa8] sm:$0xff]
      %v401 = vld [vmem:[%s324 + $0xb0] sm:$0xff]
      %v402 = vld [vmem:[%s324 + $0xb8] sm:$0xff]
      %v403 = vld [vmem:[%s324 + $0xc0] sm:$0xff]
      %v404 = vld [vmem:[%s324 + $0xc8] sm:$0xff]
      %v405 = vld [vmem:[%s324 + $0xd0] sm:$0xff]
      %v406 = vld [vmem:[%s324 + $0xd8] sm:$0xff]
      %v407 = vld [vmem:[%s324 + $0xe0] sm:$0xff]
      %v408 = vld [vmem:[%s324 + $0xe8] sm:$0xff]
      %v409 = vld [vmem:[%s324 + $0xf0] sm:$0xff]
      %v410 = vld [vmem:[%s324 + $0xf8] sm:$0xff]
      %v411 = vld [vmem:[%s324 + $0x100] sm:$0xff]
      %v412 = vld [vmem:[%s324 + $0x108] sm:$0xff]
      %v413 = vld [vmem:[%s324 + $0x110] sm:$0xff]
      %v414 = vld [vmem:[%s324 + $0x118] sm:$0xff]
      %v415 = vld [vmem:[%s324 + $0x120] sm:$0xff]
      %v416 = vld [vmem:[%s324 + $0x128] sm:$0xff]
      %v417 = vld [vmem:[%s324 + $0x130] sm:$0xff]
      %v418 = vld [vmem:[%s324 + $0x138] sm:$0xff]
      %v419 = vld [vmem:[%s324 + $0x140] sm:$0xff]
      %v420 = vld [vmem:[%s324 + $0x148] sm:$0xff]
      %v421 = vld [vmem:[%s324 + $0x150] sm:$0xff]
      %v422 = vld [vmem:[%s324 + $0x158] sm:$0xff]
      %v423 = vld [vmem:[%s324 + $0x160] sm:$0xff]
      %v424 = vld [vmem:[%s324 + $0x168] sm:$0xff]
      %v425 = vld [vmem:[%s324 + $0x170] sm:$0xff]
      %v426 = vld [vmem:[%s324 + $0x178] sm:$0xff]
      %v427 = vld [vmem:[%s324 + $0x180] sm:$0xff]
      %v428 = vld [vmem:[%s324 + $0x188] sm:$0xff]
      %v429 = vld [vmem:[%s324 + $0x190] sm:$0xff]
      %v430 = vld [vmem:[%s324 + $0x198] sm:$0xff]
      %v431 = vld [vmem:[%s324 + $0x1a0] sm:$0xff]
      %v432 = vld [vmem:[%s324 + $0x1a8] sm:$0xff]
      %v433 = vld [vmem:[%s324 + $0x1b0] sm:$0xff]
      %v434 = vld [vmem:[%s324 + $0x1b8] sm:$0xff]
      %v435 = vld [vmem:[%s324 + $0x1c0] sm:$0xff]
      %v436 = vld [vmem:[%s324 + $0x1c8] sm:$0xff]
      %v437 = vld [vmem:[%s324 + $0x1d0] sm:$0xff]
      %v438 = vld [vmem:[%s324 + $0x1d8] sm:$0xff]
      %v439 = vld [vmem:[%s324 + $0x1e0] sm:$0xff]
      %v440 = vld [vmem:[%s324 + $0x1e8] sm:$0xff]
      %v441 = vld [vmem:[%s324 + $0x1f0] sm:$0xff]
      %v442 = vld [vmem:[%s324 + $0x1f8] sm:$0xff]
      %v443 = vld [vmem:[%s324 + $0x200] sm:$0xff]
      %v444 = vld [vmem:[%s324 + $0x208] sm:$0xff]
      %v445 = vld [vmem:[%s324 + $0x210] sm:$0xff]
      %v446 = vld [vmem:[%s324 + $0x218] sm:$0xff]
      %v447 = vld [vmem:[%s324 + $0x220] sm:$0xff]
      %v448 = vld [vmem:[%s324 + $0x228] sm:$0xff]
      %v449 = vld [vmem:[%s324 + $0x230] sm:$0xff]
      %v450 = vld [vmem:[%s324 + $0x238] sm:$0xff]
      %v451 = vld [vmem:[%s324 + $0x240] sm:$0xff]
      %v452 = vld [vmem:[%s324 + $0x248] sm:$0xff]
      %v453 = vld [vmem:[%s324 + $0x250] sm:$0xff]
      %v454 = vld [vmem:[%s324 + $0x258] sm:$0xff]
      %v455 = vld [vmem:[%s324 + $0x260] sm:$0xff]
      %v456 = vld [vmem:[%s324 + $0x268] sm:$0xff]
      %v457 = vld [vmem:[%s324 + $0x270] sm:$0xff]
      %v458 = vld [vmem:[%s324 + $0x278] sm:$0xff]
      %v459 = vld [vmem:[%s324 + $0x280] sm:$0xff]
      %v460 = vld [vmem:[%s324 + $0x288] sm:$0xff]
      %v461 = vld [vmem:[%s324 + $0x290] sm:$0xff]
      %v462 = vld [vmem:[%s324 + $0x298] sm:$0xff]
      %v463 = vld [vmem:[%s324 + $0x2a0] sm:$0xff]
      %v464 = vld [vmem:[%s324 + $0x2a8] sm:$0xff]
      %v465 = vld [vmem:[%s324 + $0x2b0] sm:$0xff]
      %v466 = vld [vmem:[%s324 + $0x2b8] sm:$0xff]
      %v467 = vld [vmem:[%s324 + $0x2c0] sm:$0xff]
      %v468 = vld [vmem:[%s324 + $0x2c8] sm:$0xff]
      %v469 = vld [vmem:[%s324 + $0x2d0] sm:$0xff]
      %v470 = vld [vmem:[%s324 + $0x2d8] sm:$0xff]
      %v471 = vld [vmem:[%s324 + $0x2e0] sm:$0xff]
      %v472 = vld [vmem:[%s324 + $0x2e8] sm:$0xff]
      %v473 = vld [vmem:[%s324 + $0x2f0] sm:$0xff]
      %v474 = vld [vmem:[%s324 + $0x2f8] sm:$0xff]
      %v475 = vld [vmem:[%s324 + $0x300] sm:$0xff]
      %v476 = vld [vmem:[%s324 + $0x308] sm:$0xff]
      %v477 = vld [vmem:[%s324 + $0x310] sm:$0xff]
      %v478 = vld [vmem:[%s324 + $0x318] sm:$0xff]
      %v479 = vld [vmem:[%s324 + $0x320] sm:$0xff]
      %v480 = vld [vmem:[%s324 + $0x328] sm:$0xff]
      %v481 = vld [vmem:[%s324 + $0x330] sm:$0xff]
      %v482 = vld [vmem:[%s324 + $0x338] sm:$0xff]
      %v483 = vld [vmem:[%s324 + $0x340] sm:$0xff]
      %v484 = vld [vmem:[%s324 + $0x348] sm:$0xff]
      %v485 = vld [vmem:[%s324 + $0x350] sm:$0xff]
      %v486 = vld [vmem:[%s324 + $0x358] sm:$0xff]
      %v487 = vld [vmem:[%s324 + $0x360] sm:$0xff]
      %v488 = vld [vmem:[%s324 + $0x368] sm:$0xff]
      %v489 = vld [vmem:[%s324 + $0x370] sm:$0xff]
      %v490 = vld [vmem:[%s324 + $0x378] sm:$0xff]
      %v491 = vld [vmem:[%s324 + $0x380] sm:$0xff]
      %v492 = vld [vmem:[%s324 + $0x388] sm:$0xff]
      %v493 = vld [vmem:[%s324 + $0x390] sm:$0xff]
      %v494 = vld [vmem:[%s324 + $0x398] sm:$0xff]
      %v495 = vld [vmem:[%s324 + $0x3a0] sm:$0xff]
      %v496 = vld [vmem:[%s324 + $0x3a8] sm:$0xff]
      %v497 = vld [vmem:[%s324 + $0x3b0] sm:$0xff]
      %v498 = vld [vmem:[%s324 + $0x3b8] sm:$0xff]
      %v499 = vld [vmem:[%s324 + $0x3c0] sm:$0xff]
      %v500 = vld [vmem:[%s324 + $0x3c8] sm:$0xff]
      %v501 = vld [vmem:[%s324 + $0x3d0] sm:$0xff]
      %v502 = vld [vmem:[%s324 + $0x3d8] sm:$0xff]
      %v503 = vld [vmem:[%s324 + $0x3e0] sm:$0xff]
      %v504 = vld [vmem:[%s324 + $0x3e8] sm:$0xff]
      %v505 = vld [vmem:[%s324 + $0x3f0] sm:$0xff]
      %v506 = vld [vmem:[%s324 + $0x3f8] sm:$0xff]
      %v507 = vld [vmem:[%s324 + $0x400] sm:$0xff]
      %v508 = vld [vmem:[%s324 + $0x408] sm:$0xff]
      %v509 = vld [vmem:[%s324 + $0x410] sm:$0xff]
      %v510 = vld [vmem:[%s324 + $0x418] sm:$0xff]
      %v511 = vld [vmem:[%s324 + $0x420] sm:$0xff]
      %v512 = vld [vmem:[%s324 + $0x428] sm:$0xff]
      %v513 = vld [vmem:[%s324 + $0x430] sm:$0xff]
      %v514 = vld [vmem:[%s324 + $0x438] sm:$0xff]
      %v515 = vld [vmem:[%s324 + $0x440] sm:$0xff]
      %v516 = vld [vmem:[%s324 + $0x448] sm:$0xff]
      %v517 = vld [vmem:[%s324 + $0x450] sm:$0xff]
      %v518 = vld [vmem:[%s324 + $0x458] sm:$0xff]
      %v519 = vld [vmem:[%s324 + $0x460] sm:$0xff]
      %v520 = vld [vmem:[%s324 + $0x468] sm:$0xff]
      %v521 = vld [vmem:[%s324 + $0x470] sm:$0xff]
      %v522 = vld [vmem:[%s324 + $0x478] sm:$0xff]
      %v523 = vld [vmem:[%s324 + $0x480] sm:$0xff]
      %v524 = vld [vmem:[%s324 + $0x488] sm:$0xff]
      %v525 = vld [vmem:[%s324 + $0x490] sm:$0xff]
      %v526 = vld [vmem:[%s324 + $0x498] sm:$0xff]
      %v527 = vld [vmem:[%s324 + $0x4a0] sm:$0xff]
      %v528 = vld [vmem:[%s324 + $0x4a8] sm:$0xff]
      %v529 = vld [vmem:[%s324 + $0x4b0] sm:$0xff]
      %v530 = vld [vmem:[%s324 + $0x4b8] sm:$0xff]
      %v531 = vld [vmem:[%s324 + $0x4c0] sm:$0xff]
      %v532 = vld [vmem:[%s324 + $0x4c8] sm:$0xff]
      %v533 = vld [vmem:[%s324 + $0x4d0] sm:$0xff]
      %v534 = vld [vmem:[%s324 + $0x4d8] sm:$0xff]
      %v535 = vld [vmem:[%s324 + $0x4e0] sm:$0xff]
      %v536 = vld [vmem:[%s324 + $0x4e8] sm:$0xff]
      %v537 = vld [vmem:[%s324 + $0x4f0] sm:$0xff]
      %v538 = vld [vmem:[%s324 + $0x4f8] sm:$0xff]
      %v539 = vld [vmem:[%s324 + $0x500] sm:$0xff]
      %v540 = vld [vmem:[%s324 + $0x508] sm:$0xff]
      %v541 = vld [vmem:[%s324 + $0x510] sm:$0xff]
      %v542 = vld [vmem:[%s324 + $0x518] sm:$0xff]
      %v543 = vld [vmem:[%s324 + $0x520] sm:$0xff]
      %v544 = vld [vmem:[%s324 + $0x528] sm:$0xff]
      %v545 = vld [vmem:[%s324 + $0x530] sm:$0xff]
      %v546 = vld [vmem:[%s324 + $0x538] sm:$0xff]
      %v547 = vld [vmem:[%s324 + $0x540] sm:$0xff]
      %v548 = vld [vmem:[%s324 + $0x548] sm:$0xff]
      %v549 = vld [vmem:[%s324 + $0x550] sm:$0xff]
      %v550 = vld [vmem:[%s324 + $0x558] sm:$0xff]
      %v551 = vld [vmem:[%s324 + $0x560] sm:$0xff]
      %v552 = vld [vmem:[%s324 + $0x568] sm:$0xff]
      %v553 = vld [vmem:[%s324 + $0x570] sm:$0xff]
      %v554 = vld [vmem:[%s324 + $0x578] sm:$0xff]
      %v555 = vld [vmem:[%s324 + $0x580] sm:$0xff]
      %v556 = vld [vmem:[%s324 + $0x588] sm:$0xff]
      %v557 = vld [vmem:[%s324 + $0x590] sm:$0xff]
      %v558 = vld [vmem:[%s324 + $0x598] sm:$0xff]
      %v559 = vld [vmem:[%s324 + $0x5a0] sm:$0xff]
      %v560 = vld [vmem:[%s324 + $0x5a8] sm:$0xff]
      %v561 = vld [vmem:[%s324 + $0x5b0] sm:$0xff]
      %v562 = vld [vmem:[%s324 + $0x5b8] sm:$0xff]
      %v563 = vld [vmem:[%s324 + $0x5c0] sm:$0xff]
      %v564 = vld [vmem:[%s324 + $0x5c8] sm:$0xff]
      %v565 = vld [vmem:[%s324 + $0x5d0] sm:$0xff]
      %v566 = vld [vmem:[%s324 + $0x5d8] sm:$0xff]
      %v567 = vld [vmem:[%s324 + $0x5e0] sm:$0xff]
      %v568 = vld [vmem:[%s324 + $0x5e8] sm:$0xff]
      %v569 = vld [vmem:[%s324 + $0x5f0] sm:$0xff]
      %v570 = vld [vmem:[%s324 + $0x5f8] sm:$0xff]
      %v571 = vld [vmem:[%s324 + $0x600] sm:$0xff]
      %v572 = vld [vmem:[%s324 + $0x608] sm:$0xff]
      %v573 = vld [vmem:[%s324 + $0x610] sm:$0xff]
      %v574 = vld [vmem:[%s324 + $0x618] sm:$0xff]
      %v575 = vld [vmem:[%s324 + $0x620] sm:$0xff]
      %v576 = vld [vmem:[%s324 + $0x628] sm:$0xff]
      %v577 = vld [vmem:[%s324 + $0x630] sm:$0xff]
      %v578 = vld [vmem:[%s324 + $0x638] sm:$0xff]
      %v579 = vld [vmem:[%s324 + $0x640] sm:$0xff]
      %v580 = vld [vmem:[%s324 + $0x648] sm:$0xff]
      %v581 = vld [vmem:[%s324 + $0x650] sm:$0xff]
      %v582 = vld [vmem:[%s324 + $0x658] sm:$0xff]
      %v583 = vld [vmem:[%s324 + $0x660] sm:$0xff]
      %v584 = vld [vmem:[%s324 + $0x668] sm:$0xff]
      %v585 = vld [vmem:[%s324 + $0x670] sm:$0xff]
      %v586 = vld [vmem:[%s324 + $0x678] sm:$0xff]
      %v587 = vld [vmem:[%s324 + $0x680] sm:$0xff]
      %v588 = vld [vmem:[%s324 + $0x688] sm:$0xff]
      %v589 = vld [vmem:[%s324 + $0x690] sm:$0xff]
      %v590 = vld [vmem:[%s324 + $0x698] sm:$0xff]
      %v591 = vld [vmem:[%s324 + $0x6a0] sm:$0xff]
      %v592 = vld [vmem:[%s324 + $0x6a8] sm:$0xff]
      %v593 = vld [vmem:[%s324 + $0x6b0] sm:$0xff]
      %v594 = vld [vmem:[%s324 + $0x6b8] sm:$0xff]
      %v595 = vld [vmem:[%s324 + $0x6c0] sm:$0xff]
      %v596 = vld [vmem:[%s324 + $0x6c8] sm:$0xff]
      %v597 = vld [vmem:[%s324 + $0x6d0] sm:$0xff]
      %v598 = vld [vmem:[%s324 + $0x6d8] sm:$0xff]
      %v599 = vld [vmem:[%s324 + $0x6e0] sm:$0xff]
      %v600 = vld [vmem:[%s324 + $0x6e8] sm:$0xff]
      %v601 = vld [vmem:[%s324 + $0x6f0] sm:$0xff]
      %v602 = vld [vmem:[%s324 + $0x6f8] sm:$0xff]
      %v603 = vld [vmem:[%s324 + $0x700] sm:$0xff]
      %v604 = vld [vmem:[%s324 + $0x708] sm:$0xff]
      %v605 = vld [vmem:[%s324 + $0x710] sm:$0xff]
      %v606 = vld [vmem:[%s324 + $0x718] sm:$0xff]
      %v607 = vld [vmem:[%s324 + $0x720] sm:$0xff]
      %v608 = vld [vmem:[%s324 + $0x728] sm:$0xff]
      %v609 = vld [vmem:[%s324 + $0x730] sm:$0xff]
      %v610 = vld [vmem:[%s324 + $0x738] sm:$0xff]
      %v611 = vld [vmem:[%s324 + $0x740] sm:$0xff]
      %v612 = vld [vmem:[%s324 + $0x748] sm:$0xff]
      %v613 = vld [vmem:[%s324 + $0x750] sm:$0xff]
      %v614 = vld [vmem:[%s324 + $0x758] sm:$0xff]
      %v615 = vld [vmem:[%s324 + $0x760] sm:$0xff]
      %v616 = vld [vmem:[%s324 + $0x768] sm:$0xff]
      %v617 = vld [vmem:[%s324 + $0x770] sm:$0xff]
      %v618 = vld [vmem:[%s324 + $0x778] sm:$0xff]
      %v619 = vld [vmem:[%s324 + $0x780] sm:$0xff]
      %v620 = vld [vmem:[%s324 + $0x788] sm:$0xff]
      %v621 = vld [vmem:[%s324 + $0x790] sm:$0xff]
      %v622 = vld [vmem:[%s324 + $0x798] sm:$0xff]
      %v623 = vld [vmem:[%s324 + $0x7a0] sm:$0xff]
      %v624 = vld [vmem:[%s324 + $0x7a8] sm:$0xff]
      %v625 = vld [vmem:[%s324 + $0x7b0] sm:$0xff]
      %v626 = vld [vmem:[%s324 + $0x7b8] sm:$0xff]
      %v627 = vld [vmem:[%s324 + $0x7c0] sm:$0xff]
      %v628 = vld [vmem:[%s324 + $0x7c8] sm:$0xff]
      %v629 = vld [vmem:[%s324 + $0x7d0] sm:$0xff]
      %v630 = vld [vmem:[%s324 + $0x7d8] sm:$0xff]
      %v631 = vld [vmem:[%s324 + $0x7e0] sm:$0xff]
      %v632 = vld [vmem:[%s324 + $0x7e8] sm:$0xff]
      %v633 = vld [vmem:[%s324 + $0x7f0] sm:$0xff]
      %v634 = vld [vmem:[%s324 + $0x7f8] sm:$0xff]
      %v635 = vld [vmem:[%s324 + $0x800] sm:$0xff]
      %v636 = vld [vmem:[%s324 + $0x808] sm:$0xff]
      %v637 = vld [vmem:[%s324 + $0x810] sm:$0xff]
      %v638 = vld [vmem:[%s324 + $0x818] sm:$0xff]
      %v639 = vld [vmem:[%s324 + $0x820] sm:$0xff]
      %v640 = vld [vmem:[%s324 + $0x828] sm:$0xff]
      %v641 = vld [vmem:[%s324 + $0x830] sm:$0xff]
      %v642 = vld [vmem:[%s324 + $0x838] sm:$0xff]
      %v643 = vld [vmem:[%s324 + $0x840] sm:$0xff]
      %v644 = vld [vmem:[%s324 + $0x848] sm:$0xff]
      %v645 = vld [vmem:[%s324 + $0x850] sm:$0xff]
      %v646 = vld [vmem:[%s324 + $0x858] sm:$0xff]
      %v647 = vld [vmem:[%s324 + $0x860] sm:$0xff]
      %v648 = vld [vmem:[%s324 + $0x868] sm:$0xff]
      %v649 = vld [vmem:[%s324 + $0x870] sm:$0xff]
      %v650 = vld [vmem:[%s324 + $0x878] sm:$0xff]
      %v651 = vld [vmem:[%s324 + $0x880] sm:$0xff]
      %v652 = vld [vmem:[%s324 + $0x888] sm:$0xff]
      %v653 = vld [vmem:[%s324 + $0x890] sm:$0xff]
      %v654 = vld [vmem:[%s324 + $0x898] sm:$0xff]
      %v655 = vld [vmem:[%s324 + $0x8a0] sm:$0xff]
      %v656 = vld [vmem:[%s324 + $0x8a8] sm:$0xff]
      %v657 = vld [vmem:[%s324 + $0x8b0] sm:$0xff]
      %v658 = vld [vmem:[%s324 + $0x8b8] sm:$0xff]
      %v659 = vld [vmem:[%s324 + $0x8c0] sm:$0xff]
      %v660 = vld [vmem:[%s324 + $0x8c8] sm:$0xff]
      %v661 = vld [vmem:[%s324 + $0x8d0] sm:$0xff]
      %v662 = vld [vmem:[%s324 + $0x8d8] sm:$0xff]
      %v663 = vld [vmem:[%s324 + $0x8e0] sm:$0xff]
      %v664 = vld [vmem:[%s324 + $0x8e8] sm:$0xff]
      %v665 = vld [vmem:[%s324 + $0x8f0] sm:$0xff]
      %v666 = vld [vmem:[%s324 + $0x8f8] sm:$0xff]
      %v667 = vld [vmem:[%s324 + $0x900] sm:$0xff]
      %v668 = vld [vmem:[%s324 + $0x908] sm:$0xff]
      %v669 = vld [vmem:[%s324 + $0x910] sm:$0xff]
      %v670 = vld [vmem:[%s324 + $0x918] sm:$0xff]
      %v671 = vld [vmem:[%s324 + $0x920] sm:$0xff]
      %v672 = vld [vmem:[%s324 + $0x928] sm:$0xff]
      %v673 = vld [vmem:[%s324 + $0x930] sm:$0xff]
      %v674 = vld [vmem:[%s324 + $0x938] sm:$0xff]
      %v675 = vld [vmem:[%s324 + $0x940] sm:$0xff]
      %v676 = vld [vmem:[%s324 + $0x948] sm:$0xff]
      %v677 = vld [vmem:[%s324 + $0x950] sm:$0xff]
      %v678 = vld [vmem:[%s324 + $0x958] sm:$0xff]
      %v679 = vld [vmem:[%s324 + $0x960] sm:$0xff]
      %v680 = vld [vmem:[%s324 + $0x968] sm:$0xff]
      %v681 = vld [vmem:[%s324 + $0x970] sm:$0xff]
      %v682 = vld [vmem:[%s324 + $0x978] sm:$0xff]
      %v683 = vld [vmem:[%s324 + $0x980] sm:$0xff]
      %v684 = vld [vmem:[%s324 + $0x988] sm:$0xff]
      %v685 = vld [vmem:[%s324 + $0x990] sm:$0xff]
      %v686 = vld [vmem:[%s324 + $0x998] sm:$0xff]
      %v687 = vld [vmem:[%s324 + $0x9a0] sm:$0xff]
      %v688 = vld [vmem:[%s324 + $0x9a8] sm:$0xff]
      %v689 = vld [vmem:[%s324 + $0x9b0] sm:$0xff]
      %v690 = vld [vmem:[%s324 + $0x9b8] sm:$0xff]
      %v691 = vld [vmem:[%s324 + $0x9c0] sm:$0xff]
      %v692 = vld [vmem:[%s324 + $0x9c8] sm:$0xff]
      %v693 = vld [vmem:[%s324 + $0x9d0] sm:$0xff]
      %v694 = vld [vmem:[%s324 + $0x9d8] sm:$0xff]
      %v695 = vld [vmem:[%s324 + $0x9e0] sm:$0xff]
      %v696 = vld [vmem:[%s324 + $0x9e8] sm:$0xff]
      %v697 = vld [vmem:[%s324 + $0x9f0] sm:$0xff]
      %v698 = vld [vmem:[%s324 + $0x9f8] sm:$0xff]
      %v699 = vld [vmem:[%s324 + $0xa00] sm:$0xff]
      %v700 = vld [vmem:[%s324 + $0xa08] sm:$0xff]
      %v701 = vld [vmem:[%s324 + $0xa10] sm:$0xff]
      %v702 = vld [vmem:[%s324 + $0xa18] sm:$0xff]
      %v703 = vld [vmem:[%s324 + $0xa20] sm:$0xff]
      %v704 = vld [vmem:[%s324 + $0xa28] sm:$0xff]
      %v705 = vld [vmem:[%s324 + $0xa30] sm:$0xff]
      %v706 = vld [vmem:[%s324 + $0xa38] sm:$0xff]
      %v707 = vld [vmem:[%s324 + $0xa40] sm:$0xff]
      %v708 = vld [vmem:[%s324 + $0xa48] sm:$0xff]
      %v709 = vld [vmem:[%s324 + $0xa50] sm:$0xff]
      %v710 = vld [vmem:[%s324 + $0xa58] sm:$0xff]
      %v711 = vld [vmem:[%s324 + $0xa60] sm:$0xff]
      %v712 = vld [vmem:[%s324 + $0xa68] sm:$0xff]
      %v713 = vld [vmem:[%s324 + $0xa70] sm:$0xff]
      %v714 = vld [vmem:[%s324 + $0xa78] sm:$0xff]
      %v715 = vld [vmem:[%s324 + $0xa80] sm:$0xff]
      %v716 = vld [vmem:[%s324 + $0xa88] sm:$0xff]
      %v717 = vld [vmem:[%s324 + $0xa90] sm:$0xff]
      %v718 = vld [vmem:[%s324 + $0xa98] sm:$0xff]
      %v719 = vld [vmem:[%s324 + $0xaa0] sm:$0xff]
      %v720 = vld [vmem:[%s324 + $0xaa8] sm:$0xff]
      %v721 = vld [vmem:[%s324 + $0xab0] sm:$0xff]
      %v722 = vld [vmem:[%s324 + $0xab8] sm:$0xff]
      %v723 = vld [vmem:[%s324 + $0xac0] sm:$0xff]
      %v724 = vld [vmem:[%s324 + $0xac8] sm:$0xff]
      %v725 = vld [vmem:[%s324 + $0xad0] sm:$0xff]
      %v726 = vld [vmem:[%s324 + $0xad8] sm:$0xff]
      %v727 = vld [vmem:[%s324 + $0xae0] sm:$0xff]
      %v728 = vld [vmem:[%s324 + $0xae8] sm:$0xff]
      %v729 = vld [vmem:[%s324 + $0xaf0] sm:$0xff]
      %v730 = vld [vmem:[%s324 + $0xaf8] sm:$0xff]
      %v731 = vld [vmem:[%s324 + $0xb00] sm:$0xff]
      %v732 = vld [vmem:[%s324 + $0xb08] sm:$0xff]
      %v733 = vld [vmem:[%s324 + $0xb10] sm:$0xff]
      %v734 = vld [vmem:[%s324 + $0xb18] sm:$0xff]
      %v735 = vld [vmem:[%s324 + $0xb20] sm:$0xff]
      %v736 = vld [vmem:[%s324 + $0xb28] sm:$0xff]
      %v737 = vld [vmem:[%s324 + $0xb30] sm:$0xff]
      %v738 = vld [vmem:[%s324 + $0xb38] sm:$0xff]
      %v739 = vld [vmem:[%s324 + $0xb40] sm:$0xff]
      %v740 = vld [vmem:[%s324 + $0xb48] sm:$0xff]
      %v741 = vld [vmem:[%s324 + $0xb50] sm:$0xff]
      %v742 = vld [vmem:[%s324 + $0xb58] sm:$0xff]
      %v743 = vld [vmem:[%s324 + $0xb60] sm:$0xff]
      %v744 = vld [vmem:[%s324 + $0xb68] sm:$0xff]
      %v745 = vld [vmem:[%s324 + $0xb70] sm:$0xff]
      %v746 = vld [vmem:[%s324 + $0xb78] sm:$0xff]
      %v747 = vld [vmem:[%s324 + $0xb80] sm:$0xff]
      %v748 = vld [vmem:[%s324 + $0xb88] sm:$0xff]
      %v749 = vld [vmem:[%s324 + $0xb90] sm:$0xff]
      %v750 = vld [vmem:[%s324 + $0xb98] sm:$0xff]
      %v751 = vld [vmem:[%s324 + $0xba0] sm:$0xff]
      %v752 = vld [vmem:[%s324 + $0xba8] sm:$0xff]
      %v753 = vld [vmem:[%s324 + $0xbb0] sm:$0xff]
      %v754 = vld [vmem:[%s324 + $0xbb8] sm:$0xff]
      %v755 = vld [vmem:[%s324 + $0xbc0] sm:$0xff]
      %v756 = vld [vmem:[%s324 + $0xbc8] sm:$0xff]
      %v757 = vld [vmem:[%s324 + $0xbd0] sm:$0xff]
      %v758 = vld [vmem:[%s324 + $0xbd8] sm:$0xff]
      %v759 = vld [vmem:[%s324 + $0xbe0] sm:$0xff]
      %v760 = vld [vmem:[%s324 + $0xbe8] sm:$0xff]
      %v761 = vld [vmem:[%s324 + $0xbf0] sm:$0xff]
      %v762 = vld [vmem:[%s324 + $0xbf8] sm:$0xff]
      %v763 = vld [vmem:[%s324 + $0xc00] sm:$0xff]
      %v764 = vld [vmem:[%s324 + $0xc08] sm:$0xff]
      %v765 = vld [vmem:[%s324 + $0xc10] sm:$0xff]
      %v766 = vld [vmem:[%s324 + $0xc18] sm:$0xff]
      %v767 = vld [vmem:[%s324 + $0xc20] sm:$0xff]
      %v768 = vld [vmem:[%s324 + $0xc28] sm:$0xff]
      %v769 = vld [vmem:[%s324 + $0xc30] sm:$0xff]
      %v770 = vld [vmem:[%s324 + $0xc38] sm:$0xff]
      %v771 = vld [vmem:[%s324 + $0xc40] sm:$0xff]
      %v772 = vld [vmem:[%s324 + $0xc48] sm:$0xff]
      %v773 = vld [vmem:[%s324 + $0xc50] sm:$0xff]
      %v774 = vld [vmem:[%s324 + $0xc58] sm:$0xff]
      %v775 = vld [vmem:[%s324 + $0xc60] sm:$0xff]
      %v776 = vld [vmem:[%s324 + $0xc68] sm:$0xff]
      %v777 = vld [vmem:[%s324 + $0xc70] sm:$0xff]
      %v778 = vld [vmem:[%s324 + $0xc78] sm:$0xff]
      %v779 = vld [vmem:[%s324 + $0xc80] sm:$0xff]
      %v780 = vld [vmem:[%s324 + $0xc88] sm:$0xff]
      %v781 = vld [vmem:[%s324 + $0xc90] sm:$0xff]
      %v782 = vld [vmem:[%s324 + $0xc98] sm:$0xff]
      %v783 = vld [vmem:[%s324 + $0xca0] sm:$0xff]
      %v784 = vld [vmem:[%s324 + $0xca8] sm:$0xff]
      %v785 = vld [vmem:[%s324 + $0xcb0] sm:$0xff]
      %v786 = vld [vmem:[%s324 + $0xcb8] sm:$0xff]
      %v787 = vld [vmem:[%s324 + $0xcc0] sm:$0xff]
      %v788 = vld [vmem:[%s324 + $0xcc8] sm:$0xff]
      %v789 = vld [vmem:[%s324 + $0xcd0] sm:$0xff]
      %v790 = vld [vmem:[%s324 + $0xcd8] sm:$0xff]
      %v791 = vld [vmem:[%s324 + $0xce0] sm:$0xff]
      %v792 = vld [vmem:[%s324 + $0xce8] sm:$0xff]
      %v793 = vld [vmem:[%s324 + $0xcf0] sm:$0xff]
      %v794 = vld [vmem:[%s324 + $0xcf8] sm:$0xff]
      %v795 = vld [vmem:[%s324 + $0xd00] sm:$0xff]
      %v796 = vld [vmem:[%s324 + $0xd08] sm:$0xff]
      %v797 = vld [vmem:[%s324 + $0xd10] sm:$0xff]
      %v798 = vld [vmem:[%s324 + $0xd18] sm:$0xff]
      %v799 = vld [vmem:[%s324 + $0xd20] sm:$0xff]
      %v800 = vld [vmem:[%s324 + $0xd28] sm:$0xff]
      %v801 = vld [vmem:[%s324 + $0xd30] sm:$0xff]
      %v802 = vld [vmem:[%s324 + $0xd38] sm:$0xff]
      %v803 = vld [vmem:[%s324 + $0xd40] sm:$0xff]
      %v804 = vld [vmem:[%s324 + $0xd48] sm:$0xff]
      %v805 = vld [vmem:[%s324 + $0xd50] sm:$0xff]
      %v806 = vld [vmem:[%s324 + $0xd58] sm:$0xff]
      %v807 = vld [vmem:[%s324 + $0xd60] sm:$0xff]
      %v808 = vld [vmem:[%s324 + $0xd68] sm:$0xff]
      %v809 = vld [vmem:[%s324 + $0xd70] sm:$0xff]
      %v810 = vld [vmem:[%s324 + $0xd78] sm:$0xff]
      %v811 = vld [vmem:[%s324 + $0xd80] sm:$0xff]
      %v812 = vld [vmem:[%s324 + $0xd88] sm:$0xff]
      %v813 = vld [vmem:[%s324 + $0xd90] sm:$0xff]
      %v814 = vld [vmem:[%s324 + $0xd98] sm:$0xff]
      %v815 = vld [vmem:[%s324 + $0xda0] sm:$0xff]
      %v816 = vld [vmem:[%s324 + $0xda8] sm:$0xff]
      %v817 = vld [vmem:[%s324 + $0xdb0] sm:$0xff]
      %v818 = vld [vmem:[%s324 + $0xdb8] sm:$0xff]
      %v819 = vld [vmem:[%s324 + $0xdc0] sm:$0xff]
      %v820 = vld [vmem:[%s324 + $0xdc8] sm:$0xff]
      %v821 = vld [vmem:[%s324 + $0xdd0] sm:$0xff]
      %v822 = vld [vmem:[%s324 + $0xdd8] sm:$0xff]
      %v823 = vld [vmem:[%s324 + $0xde0] sm:$0xff]
      %v824 = vld [vmem:[%s324 + $0xde8] sm:$0xff]
      %v825 = vld [vmem:[%s324 + $0xdf0] sm:$0xff]
      %v826 = vld [vmem:[%s324 + $0xdf8] sm:$0xff]
      %v827 = vld [vmem:[%s324 + $0xe00] sm:$0xff]
      %v828 = vld [vmem:[%s324 + $0xe08] sm:$0xff]
      %v829 = vld [vmem:[%s324 + $0xe10] sm:$0xff]
      %v830 = vld [vmem:[%s324 + $0xe18] sm:$0xff]
      %v831 = vld [vmem:[%s324 + $0xe20] sm:$0xff]
      %v832 = vld [vmem:[%s324 + $0xe28] sm:$0xff]
      %v833 = vld [vmem:[%s324 + $0xe30] sm:$0xff]
      %v834 = vld [vmem:[%s324 + $0xe38] sm:$0xff]
      %v835 = vld [vmem:[%s324 + $0xe40] sm:$0xff]
      %v836 = vld [vmem:[%s324 + $0xe48] sm:$0xff]
      %v837 = vld [vmem:[%s324 + $0xe50] sm:$0xff]
      %v838 = vld [vmem:[%s324 + $0xe58] sm:$0xff]
      %v839 = vld [vmem:[%s324 + $0xe60] sm:$0xff]
      %v840 = vld [vmem:[%s324 + $0xe68] sm:$0xff]
      %v841 = vld [vmem:[%s324 + $0xe70] sm:$0xff]
      %v842 = vld [vmem:[%s324 + $0xe78] sm:$0xff]
      %v843 = vld [vmem:[%s324 + $0xe80] sm:$0xff]
      %v844 = vld [vmem:[%s324 + $0xe88] sm:$0xff]
      %v845 = vld [vmem:[%s324 + $0xe90] sm:$0xff]
      %v846 = vld [vmem:[%s324 + $0xe98] sm:$0xff]
      %v847 = vld [vmem:[%s324 + $0xea0] sm:$0xff]
      %v848 = vld [vmem:[%s324 + $0xea8] sm:$0xff]
      %v849 = vld [vmem:[%s324 + $0xeb0] sm:$0xff]
      %v850 = vld [vmem:[%s324 + $0xeb8] sm:$0xff]
      %v851 = vld [vmem:[%s324 + $0xec0] sm:$0xff]
      %v852 = vld [vmem:[%s324 + $0xec8] sm:$0xff]
      %v853 = vld [vmem:[%s324 + $0xed0] sm:$0xff]
      %v854 = vld [vmem:[%s324 + $0xed8] sm:$0xff]
      %v855 = vld [vmem:[%s324 + $0xee0] sm:$0xff]
      %v856 = vld [vmem:[%s324 + $0xee8] sm:$0xff]
      %v857 = vld [vmem:[%s324 + $0xef0] sm:$0xff]
      %v858 = vld [vmem:[%s324 + $0xef8] sm:$0xff]
      %v859 = vld [vmem:[%s324 + $0xf00] sm:$0xff]
      %v860 = vld [vmem:[%s324 + $0xf08] sm:$0xff]
      %v861 = vld [vmem:[%s324 + $0xf10] sm:$0xff]
      %v862 = vld [vmem:[%s324 + $0xf18] sm:$0xff]
      %v863 = vld [vmem:[%s324 + $0xf20] sm:$0xff]
      %v864 = vld [vmem:[%s324 + $0xf28] sm:$0xff]
      %v865 = vld [vmem:[%s324 + $0xf30] sm:$0xff]
      %v866 = vld [vmem:[%s324 + $0xf38] sm:$0xff]
      %v867 = vld [vmem:[%s324 + $0xf40] sm:$0xff]
      %v868 = vld [vmem:[%s324 + $0xf48] sm:$0xff]
      %v869 = vld [vmem:[%s324 + $0xf50] sm:$0xff]
      %v870 = vld [vmem:[%s324 + $0xf58] sm:$0xff]
      %v871 = vld [vmem:[%s324 + $0xf60] sm:$0xff]
      %v872 = vld [vmem:[%s324 + $0xf68] sm:$0xff]
      %v873 = vld [vmem:[%s324 + $0xf70] sm:$0xff]
      %v874 = vld [vmem:[%s324 + $0xf78] sm:$0xff]
      %v875 = vld [vmem:[%s324 + $0xf80] sm:$0xff]
      %v876 = vld [vmem:[%s324 + $0xf88] sm:$0xff]
      %v877 = vld [vmem:[%s324 + $0xf90] sm:$0xff]
      %v878 = vld [vmem:[%s324 + $0xf98] sm:$0xff]
      %v879 = vld [vmem:[%s324 + $0xfa0] sm:$0xff]
      %v880 = vld [vmem:[%s324 + $0xfa8] sm:$0xff]
      %v881 = vld [vmem:[%s324 + $0xfb0] sm:$0xff]
      %v882 = vld [vmem:[%s324 + $0xfb8] sm:$0xff]
      %v883 = vld [vmem:[%s324 + $0xfc0] sm:$0xff]
      %v884 = vld [vmem:[%s324 + $0xfc8] sm:$0xff]
      %v885 = vld [vmem:[%s324 + $0xfd0] sm:$0xff]
      %v886 = vld [vmem:[%s324 + $0xfd8] sm:$0xff]
      %v887 = vld [vmem:[%s324 + $0xfe0] sm:$0xff]
      %v888 = vld [vmem:[%s324 + $0xfe8] sm:$0xff]
      %v889 = vld [vmem:[%s324 + $0xff0] sm:$0xff]
      %v890 = vld [vmem:[%s324 + $0xff8] sm:$0xff]
      %v891 = vld [vmem:[%s324 + $0x1000] sm:$0xff]
      %v892 = vld [vmem:[%s324 + $0x1008] sm:$0xff]
      %v893 = vld [vmem:[%s324 + $0x1010] sm:$0xff]
      %v894 = vld [vmem:[%s324 + $0x1018] sm:$0xff]
      %v895 = vld [vmem:[%s324 + $0x1020] sm:$0xff]
      %v896 = vld [vmem:[%s324 + $0x1028] sm:$0xff]
      %v897 = vld [vmem:[%s324 + $0x1030] sm:$0xff]
      %v898 = vld [vmem:[%s324 + $0x1038] sm:$0xff]
      %v899 = vld [vmem:[%s324 + $0x1040] sm:$0xff]
      %v900 = vld [vmem:[%s324 + $0x1048] sm:$0xff]
      %v901 = vld [vmem:[%s324 + $0x1050] sm:$0xff]
      %v902 = vld [vmem:[%s324 + $0x1058] sm:$0xff]
      %v903 = vld [vmem:[%s324 + $0x1060] sm:$0xff]
      %v904 = vld [vmem:[%s324 + $0x1068] sm:$0xff]
      %v905 = vld [vmem:[%s324 + $0x1070] sm:$0xff]
      %v906 = vld [vmem:[%s324 + $0x1078] sm:$0xff]
      %v907 = vld [vmem:[%s324 + $0x1080] sm:$0xff]
      %v908 = vld [vmem:[%s324 + $0x1088] sm:$0xff]
      %v909 = vld [vmem:[%s324 + $0x1090] sm:$0xff]
      %v910 = vld [vmem:[%s324 + $0x1098] sm:$0xff]
      %v911 = vld [vmem:[%s324 + $0x10a0] sm:$0xff]
      %v912 = vld [vmem:[%s324 + $0x10a8] sm:$0xff]
      %v913 = vld [vmem:[%s324 + $0x10b0] sm:$0xff]
      %v914 = vld [vmem:[%s324 + $0x10b8] sm:$0xff]
      %v915 = vld [vmem:[%s324 + $0x10c0] sm:$0xff]
      %v916 = vld [vmem:[%s324 + $0x10c8] sm:$0xff]
      %v917 = vld [vmem:[%s324 + $0x10d0] sm:$0xff]
      %v918 = vld [vmem:[%s324 + $0x10d8] sm:$0xff]
      %v919 = vld [vmem:[%s324 + $0x10e0] sm:$0xff]
      %v920 = vld [vmem:[%s324 + $0x10e8] sm:$0xff]
      %v921 = vld [vmem:[%s324 + $0x10f0] sm:$0xff]
      %v922 = vld [vmem:[%s324 + $0x10f8] sm:$0xff]
      %v923 = vld [vmem:[%s324 + $0x1100] sm:$0xff]
      %v924 = vld [vmem:[%s324 + $0x1108] sm:$0xff]
      %v925 = vld [vmem:[%s324 + $0x1110] sm:$0xff]
      %v926 = vld [vmem:[%s324 + $0x1118] sm:$0xff]
      %v927 = vld [vmem:[%s324 + $0x1120] sm:$0xff]
      %v928 = vld [vmem:[%s324 + $0x1128] sm:$0xff]
      %v929 = vld [vmem:[%s324 + $0x1130] sm:$0xff]
      %v930 = vld [vmem:[%s324 + $0x1138] sm:$0xff]
      %v931 = vld [vmem:[%s324 + $0x1140] sm:$0xff]
      %v932 = vld [vmem:[%s324 + $0x1148] sm:$0xff]
      %v933 = vld [vmem:[%s324 + $0x1150] sm:$0xff]
      %v934 = vld [vmem:[%s324 + $0x1158] sm:$0xff]
      %v935 = vld [vmem:[%s324 + $0x1160] sm:$0xff]
      %v936 = vld [vmem:[%s324 + $0x1168] sm:$0xff]
      %v937 = vld [vmem:[%s324 + $0x1170] sm:$0xff]
      %v938 = vld [vmem:[%s324 + $0x1178] sm:$0xff]
      %v939 = vld [vmem:[%s324 + $0x1180] sm:$0xff]
      %v940 = vld [vmem:[%s324 + $0x1188] sm:$0xff]
      %v941 = vld [vmem:[%s324 + $0x1190] sm:$0xff]
      %v942 = vld [vmem:[%s324 + $0x1198] sm:$0xff]
      %v943 = vld [vmem:[%s324 + $0x11a0] sm:$0xff]
      %v944 = vld [vmem:[%s324 + $0x11a8] sm:$0xff]
      %v945 = vld [vmem:[%s324 + $0x11b0] sm:$0xff]
      %v946 = vld [vmem:[%s324 + $0x11b8] sm:$0xff]
      %v947 = vld [vmem:[%s324 + $0x11c0] sm:$0xff]
      %v948 = vld [vmem:[%s324 + $0x11c8] sm:$0xff]
      %v949 = vld [vmem:[%s324 + $0x11d0] sm:$0xff]
      %v950 = vld [vmem:[%s324 + $0x11d8] sm:$0xff]
      %v951 = vld [vmem:[%s324 + $0x11e0] sm:$0xff]
      %v952 = vld [vmem:[%s324 + $0x11e8] sm:$0xff]
      %v953 = vld [vmem:[%s324 + $0x11f0] sm:$0xff]
      %v954 = vld [vmem:[%s324 + $0x11f8] sm:$0xff]
      %v955 = vld [vmem:[%s324 + $0x1200] sm:$0xff]
      %v956 = vld [vmem:[%s324 + $0x1208] sm:$0xff]
      %v957 = vld [vmem:[%s324 + $0x1210] sm:$0xff]
      %v958 = vld [vmem:[%s324 + $0x1218] sm:$0xff]
      %v959 = vld [vmem:[%s324 + $0x1220] sm:$0xff]
      %v960 = vld [vmem:[%s324 + $0x1228] sm:$0xff]
      %v961 = vld [vmem:[%s324 + $0x1230] sm:$0xff]
      %v962 = vld [vmem:[%s324 + $0x1238] sm:$0xff]
      %v963 = vld [vmem:[%s324 + $0x1240] sm:$0xff]
      %v964 = vld [vmem:[%s324 + $0x1248] sm:$0xff]
      %v965 = vld [vmem:[%s324 + $0x1250] sm:$0xff]
      %v966 = vld [vmem:[%s324 + $0x1258] sm:$0xff]
      %v967 = vld [vmem:[%s324 + $0x1260] sm:$0xff]
      %v968 = vld [vmem:[%s324 + $0x1268] sm:$0xff]
      %v969 = vld [vmem:[%s324 + $0x1270] sm:$0xff]
      %v970 = vld [vmem:[%s324 + $0x1278] sm:$0xff]
      %v971 = vld [vmem:[%s324 + $0x1280] sm:$0xff]
      %v972 = vld [vmem:[%s324 + $0x1288] sm:$0xff]
      %v973 = vld [vmem:[%s324 + $0x1290] sm:$0xff]
      %v974 = vld [vmem:[%s324 + $0x1298] sm:$0xff]
      %v975 = vld [vmem:[%s324 + $0x12a0] sm:$0xff]
      %v976 = vld [vmem:[%s324 + $0x12a8] sm:$0xff]
      %v977 = vld [vmem:[%s324 + $0x12b0] sm:$0xff]
      %v978 = vld [vmem:[%s324 + $0x12b8] sm:$0xff]
      %v979 = vld [vmem:[%s324 + $0x12c0] sm:$0xff]
      %v980 = vld [vmem:[%s324 + $0x12c8] sm:$0xff]
      %v981 = vld [vmem:[%s324 + $0x12d0] sm:$0xff]
      %v982 = vld [vmem:[%s324 + $0x12d8] sm:$0xff]
      %v983 = vld [vmem:[%s324 + $0x12e0] sm:$0xff]
      %v984 = vld [vmem:[%s324 + $0x12e8] sm:$0xff]
      %v985 = vld [vmem:[%s324 + $0x12f0] sm:$0xff]
      %v986 = vld [vmem:[%s324 + $0x12f8] sm:$0xff]
      %v987 = vld [vmem:[%s324 + $0x1300] sm:$0xff]
      %v988 = vld [vmem:[%s324 + $0x1308] sm:$0xff]
      %v989 = vld [vmem:[%s324 + $0x1310] sm:$0xff]
      %v990 = vld [vmem:[%s324 + $0x1318] sm:$0xff]
      %v991 = vld [vmem:[%s324 + $0x1320] sm:$0xff]
      %v992 = vld [vmem:[%s324 + $0x1328] sm:$0xff]
      %v993 = vld [vmem:[%s324 + $0x1330] sm:$0xff]
      %v994 = vld [vmem:[%s324 + $0x1338] sm:$0xff]
      %v995 = vld [vmem:[%s324 + $0x1340] sm:$0xff]
      %v996 = vld [vmem:[%s324 + $0x1348] sm:$0xff]
      %v997 = vld [vmem:[%s324 + $0x1350] sm:$0xff]
      %v998 = vld [vmem:[%s324 + $0x1358] sm:$0xff]
      %v999 = vld [vmem:[%s324 + $0x1360] sm:$0xff]
      %v1000 = vld [vmem:[%s324 + $0x1368] sm:$0xff]
      %v1001 = vld [vmem:[%s324 + $0x1370] sm:$0xff]
      %v1002 = vld [vmem:[%s324 + $0x1378] sm:$0xff]
      %v1003 = vld [vmem:[%s324 + $0x1380] sm:$0xff]
      %v1004 = vld [vmem:[%s324 + $0x1388] sm:$0xff]
      %v1005 = vld [vmem:[%s324 + $0x1390] sm:$0xff]
      %v1006 = vld [vmem:[%s324 + $0x1398] sm:$0xff]
      %v1007 = vld [vmem:[%s324 + $0x13a0] sm:$0xff]
      %v1008 = vld [vmem:[%s324 + $0x13a8] sm:$0xff]
      %v1009 = vld [vmem:[%s324 + $0x13b0] sm:$0xff]
      %v1010 = vld [vmem:[%s324 + $0x13b8] sm:$0xff]
      %v1011 = vld [vmem:[%s324 + $0x13c0] sm:$0xff]
      %v1012 = vld [vmem:[%s324 + $0x13c8] sm:$0xff]
      %v1013 = vld [vmem:[%s324 + $0x13d0] sm:$0xff]
      %v1014 = vld [vmem:[%s324 + $0x13d8] sm:$0xff]
      %v1015 = vld [vmem:[%s324 + $0x13e0] sm:$0xff]
      %v1016 = vld [vmem:[%s324 + $0x13e8] sm:$0xff]
      %v1017 = vld [vmem:[%s324 + $0x13f0] sm:$0xff]
      %v1018 = vld [vmem:[%s324 + $0x13f8] sm:$0xff]
      %v1019 = vld [vmem:[%s324 + $0x1400] sm:$0xff]
      %v1020 = vld [vmem:[%s324 + $0x1408] sm:$0xff]
      %v1021 = vld [vmem:[%s324 + $0x1410] sm:$0xff]
      %v1022 = vld [vmem:[%s324 + $0x1418] sm:$0xff]
      %v1023 = vld [vmem:[%s324 + $0x1420] sm:$0xff]
      %v1024 = vld [vmem:[%s324 + $0x1428] sm:$0xff]
      %v1025 = vld [vmem:[%s324 + $0x1430] sm:$0xff]
      %v1026 = vld [vmem:[%s324 + $0x1438] sm:$0xff]
      %v1027 = vld [vmem:[%s324 + $0x1440] sm:$0xff]
      %v1028 = vld [vmem:[%s324 + $0x1448] sm:$0xff]
      %v1029 = vld [vmem:[%s324 + $0x1450] sm:$0xff]
      %v1030 = vld [vmem:[%s324 + $0x1458] sm:$0xff]
      %v1031 = vld [vmem:[%s324 + $0x1460] sm:$0xff]
      %v1032 = vld [vmem:[%s324 + $0x1468] sm:$0xff]
      %v1033 = vld [vmem:[%s324 + $0x1470] sm:$0xff]
      %v1034 = vld [vmem:[%s324 + $0x1478] sm:$0xff]
      %v1035 = vld [vmem:[%s324 + $0x1480] sm:$0xff]
      %v1036 = vld [vmem:[%s324 + $0x1488] sm:$0xff]
      %v1037 = vld [vmem:[%s324 + $0x1490] sm:$0xff]
      %v1038 = vld [vmem:[%s324 + $0x1498] sm:$0xff]
      %v1039 = vld [vmem:[%s324 + $0x14a0] sm:$0xff]
      %v1040 = vld [vmem:[%s324 + $0x14a8] sm:$0xff]
      %v1041 = vld [vmem:[%s324 + $0x14b0] sm:$0xff]
      %v1042 = vld [vmem:[%s324 + $0x14b8] sm:$0xff]
      %v1043 = vld [vmem:[%s324 + $0x14c0] sm:$0xff]
      %v1044 = vld [vmem:[%s324 + $0x14c8] sm:$0xff]
      %v1045 = vld [vmem:[%s324 + $0x14d0] sm:$0xff]
      %v1046 = vld [vmem:[%s324 + $0x14d8] sm:$0xff]
      %v1047 = vld [vmem:[%s324 + $0x14e0] sm:$0xff]
      %v1048 = vld [vmem:[%s324 + $0x14e8] sm:$0xff]
      %v1049 = vld [vmem:[%s324 + $0x14f0] sm:$0xff]
      %v1050 = vld [vmem:[%s324 + $0x14f8] sm:$0xff]
      %v1051 = vld [vmem:[%s324 + $0x1500] sm:$0xff]
      %v1052 = vld [vmem:[%s324 + $0x1508] sm:$0xff]
      %v1053 = vld [vmem:[%s324 + $0x1510] sm:$0xff]
      %v1054 = vld [vmem:[%s324 + $0x1518] sm:$0xff]
      %v1055 = vld [vmem:[%s324 + $0x1520] sm:$0xff]
      %v1056 = vld [vmem:[%s324 + $0x1528] sm:$0xff]
      %v1057 = vld [vmem:[%s324 + $0x1530] sm:$0xff]
      %v1058 = vld [vmem:[%s324 + $0x1538] sm:$0xff]
      %v1059 = vld [vmem:[%s324 + $0x1540] sm:$0xff]
      %v1060 = vld [vmem:[%s324 + $0x1548] sm:$0xff]
      %v1061 = vld [vmem:[%s324 + $0x1550] sm:$0xff]
      %v1062 = vld [vmem:[%s324 + $0x1558] sm:$0xff]
      %v1063 = vld [vmem:[%s324 + $0x1560] sm:$0xff]
      %v1064 = vld [vmem:[%s324 + $0x1568] sm:$0xff]
      %v1065 = vld [vmem:[%s324 + $0x1570] sm:$0xff]
      %v1066 = vld [vmem:[%s324 + $0x1578] sm:$0xff]
      %v1067 = vld [vmem:[%s324 + $0x1580] sm:$0xff]
      %v1068 = vld [vmem:[%s324 + $0x1588] sm:$0xff]
      %v1069 = vld [vmem:[%s324 + $0x1590] sm:$0xff]
      %v1070 = vld [vmem:[%s324 + $0x1598] sm:$0xff]
      %v1071 = vld [vmem:[%s324 + $0x15a0] sm:$0xff]
      %v1072 = vld [vmem:[%s324 + $0x15a8] sm:$0xff]
      %v1073 = vld [vmem:[%s324 + $0x15b0] sm:$0xff]
      %v1074 = vld [vmem:[%s324 + $0x15b8] sm:$0xff]
      %v1075 = vld [vmem:[%s324 + $0x15c0] sm:$0xff]
      %v1076 = vld [vmem:[%s324 + $0x15c8] sm:$0xff]
      %v1077 = vld [vmem:[%s324 + $0x15d0] sm:$0xff]
      %v1078 = vld [vmem:[%s324 + $0x15d8] sm:$0xff]
      %v1079 = vld [vmem:[%s324 + $0x15e0] sm:$0xff]
      %v1080 = vld [vmem:[%s324 + $0x15e8] sm:$0xff]
      %v1081 = vld [vmem:[%s324 + $0x15f0] sm:$0xff]
      %v1082 = vld [vmem:[%s324 + $0x15f8] sm:$0xff]
      %v1083 = vld [vmem:[%s324 + $0x1600] sm:$0xff]
      %v1084 = vld [vmem:[%s324 + $0x1608] sm:$0xff]
      %v1085 = vld [vmem:[%s324 + $0x1610] sm:$0xff]
      %v1086 = vld [vmem:[%s324 + $0x1618] sm:$0xff]
      %v1087 = vld [vmem:[%s324 + $0x1620] sm:$0xff]
      %v1088 = vld [vmem:[%s324 + $0x1628] sm:$0xff]
      %v1089 = vld [vmem:[%s324 + $0x1630] sm:$0xff]
      %v1090 = vld [vmem:[%s324 + $0x1638] sm:$0xff]
      %v1091 = vld [vmem:[%s324 + $0x1640] sm:$0xff]
      %v1092 = vld [vmem:[%s324 + $0x1648] sm:$0xff]
      %v1093 = vld [vmem:[%s324 + $0x1650] sm:$0xff]
      %v1094 = vld [vmem:[%s324 + $0x1658] sm:$0xff]
      %v1095 = vld [vmem:[%s324 + $0x1660] sm:$0xff]
      %v1096 = vld [vmem:[%s324 + $0x1668] sm:$0xff]
      %v1097 = vld [vmem:[%s324 + $0x1670] sm:$0xff]
      %v1098 = vld [vmem:[%s324 + $0x1678] sm:$0xff]
      %v1099 = vld [vmem:[%s324 + $0x1680] sm:$0xff]
      %v1100 = vld [vmem:[%s324 + $0x1688] sm:$0xff]
      %v1101 = vld [vmem:[%s324 + $0x1690] sm:$0xff]
      %v1102 = vld [vmem:[%s324 + $0x1698] sm:$0xff]
      %v1103 = vld [vmem:[%s324 + $0x16a0] sm:$0xff]
      %v1104 = vld [vmem:[%s324 + $0x16a8] sm:$0xff]
      %v1105 = vld [vmem:[%s324 + $0x16b0] sm:$0xff]
      %v1106 = vld [vmem:[%s324 + $0x16b8] sm:$0xff]
      %v1107 = vld [vmem:[%s324 + $0x16c0] sm:$0xff]
      %v1108 = vld [vmem:[%s324 + $0x16c8] sm:$0xff]
      %v1109 = vld [vmem:[%s324 + $0x16d0] sm:$0xff]
      %v1110 = vld [vmem:[%s324 + $0x16d8] sm:$0xff]
      %v1111 = vld [vmem:[%s324 + $0x16e0] sm:$0xff]
      %v1112 = vld [vmem:[%s324 + $0x16e8] sm:$0xff]
      %v1113 = vld [vmem:[%s324 + $0x16f0] sm:$0xff]
      %v1114 = vld [vmem:[%s324 + $0x16f8] sm:$0xff]
      %v1115 = vld [vmem:[%s324 + $0x1700] sm:$0xff]
      %v1116 = vld [vmem:[%s324 + $0x1708] sm:$0xff]
      %v1117 = vld [vmem:[%s324 + $0x1710] sm:$0xff]
      %v1118 = vld [vmem:[%s324 + $0x1718] sm:$0xff]
      %v1119 = vld [vmem:[%s324 + $0x1720] sm:$0xff]
      %v1120 = vld [vmem:[%s324 + $0x1728] sm:$0xff]
      %v1121 = vld [vmem:[%s324 + $0x1730] sm:$0xff]
      %v1122 = vld [vmem:[%s324 + $0x1738] sm:$0xff]
      %v1123 = vld [vmem:[%s324 + $0x1740] sm:$0xff]
      %v1124 = vld [vmem:[%s324 + $0x1748] sm:$0xff]
      %v1125 = vld [vmem:[%s324 + $0x1750] sm:$0xff]
      %v1126 = vld [vmem:[%s324 + $0x1758] sm:$0xff]
      %v1127 = vld [vmem:[%s324 + $0x1760] sm:$0xff]
      %v1128 = vld [vmem:[%s324 + $0x1768] sm:$0xff]
      %v1129 = vld [vmem:[%s324 + $0x1770] sm:$0xff]
      %v1130 = vld [vmem:[%s324 + $0x1778] sm:$0xff]
      %v1131 = vld [vmem:[%s324 + $0x1780] sm:$0xff]
      %v1132 = vld [vmem:[%s324 + $0x1788] sm:$0xff]
      %v1133 = vld [vmem:[%s324 + $0x1790] sm:$0xff]
      %v1134 = vld [vmem:[%s324 + $0x1798] sm:$0xff]
      %v1135 = vld [vmem:[%s324 + $0x17a0] sm:$0xff]
      %v1136 = vld [vmem:[%s324 + $0x17a8] sm:$0xff]
      %v1137 = vld [vmem:[%s324 + $0x17b0] sm:$0xff]
      %v1138 = vld [vmem:[%s324 + $0x17b8] sm:$0xff]
      %v1139 = vld [vmem:[%s324 + $0x17c0] sm:$0xff]
      %v1140 = vld [vmem:[%s324 + $0x17c8] sm:$0xff]
      %v1141 = vld [vmem:[%s324 + $0x17d0] sm:$0xff]
      %v1142 = vld [vmem:[%s324 + $0x17d8] sm:$0xff]
      %v1143 = vld [vmem:[%s324 + $0x17e0] sm:$0xff]
      %v1144 = vld [vmem:[%s324 + $0x17e8] sm:$0xff]
      %v1145 = vld [vmem:[%s324 + $0x17f0] sm:$0xff]
      %v1146 = vld [vmem:[%s324 + $0x17f8] sm:$0xff]
      %v1147 = vld [vmem:[%s324 + $0x1800] sm:$0xff]
      %v1148 = vld [vmem:[%s324 + $0x1808] sm:$0xff]
      %v1149 = vld [vmem:[%s324 + $0x1810] sm:$0xff]
      %v1150 = vld [vmem:[%s324 + $0x1818] sm:$0xff]
      %v1151 = vld [vmem:[%s324 + $0x1820] sm:$0xff]
      %v1152 = vld [vmem:[%s324 + $0x1828] sm:$0xff]
      %v1153 = vld [vmem:[%s324 + $0x1830] sm:$0xff]
      %v1154 = vld [vmem:[%s324 + $0x1838] sm:$0xff]
      %v1155 = vld [vmem:[%s324 + $0x1840] sm:$0xff]
      %v1156 = vld [vmem:[%s324 + $0x1848] sm:$0xff]
      %v1157 = vld [vmem:[%s324 + $0x1850] sm:$0xff]
      %v1158 = vld [vmem:[%s324 + $0x1858] sm:$0xff]
      %v1159 = vld [vmem:[%s324 + $0x1860] sm:$0xff]
      %v1160 = vld [vmem:[%s324 + $0x1868] sm:$0xff]
      %v1161 = vld [vmem:[%s324 + $0x1870] sm:$0xff]
      %v1162 = vld [vmem:[%s324 + $0x1878] sm:$0xff]
      %v1163 = vld [vmem:[%s324 + $0x1880] sm:$0xff]
      %v1164 = vld [vmem:[%s324 + $0x1888] sm:$0xff]
      %v1165 = vld [vmem:[%s324 + $0x1890] sm:$0xff]
      %v1166 = vld [vmem:[%s324 + $0x1898] sm:$0xff]
      %v1167 = vld [vmem:[%s324 + $0x18a0] sm:$0xff]
      %v1168 = vld [vmem:[%s324 + $0x18a8] sm:$0xff]
      %v1169 = vld [vmem:[%s324 + $0x18b0] sm:$0xff]
      %v1170 = vld [vmem:[%s324 + $0x18b8] sm:$0xff]
      %v1171 = vld [vmem:[%s324 + $0x18c0] sm:$0xff]
      %v1172 = vld [vmem:[%s324 + $0x18c8] sm:$0xff]
      %v1173 = vld [vmem:[%s324 + $0x18d0] sm:$0xff]
      %v1174 = vld [vmem:[%s324 + $0x18d8] sm:$0xff]
      %v1175 = vld [vmem:[%s324 + $0x18e0] sm:$0xff]
      %v1176 = vld [vmem:[%s324 + $0x18e8] sm:$0xff]
      %v1177 = vld [vmem:[%s324 + $0x18f0] sm:$0xff]
      %v1178 = vld [vmem:[%s324 + $0x18f8] sm:$0xff]
      %v1179 = vld [vmem:[%s324 + $0x1900] sm:$0xff]
      %v1180 = vld [vmem:[%s324 + $0x1908] sm:$0xff]
      %v1181 = vld [vmem:[%s324 + $0x1910] sm:$0xff]
      %v1182 = vld [vmem:[%s324 + $0x1918] sm:$0xff]
      %v1183 = vld [vmem:[%s324 + $0x1920] sm:$0xff]
      %v1184 = vld [vmem:[%s324 + $0x1928] sm:$0xff]
      %v1185 = vld [vmem:[%s324 + $0x1930] sm:$0xff]
      %v1186 = vld [vmem:[%s324 + $0x1938] sm:$0xff]
      %v1187 = vld [vmem:[%s324 + $0x1940] sm:$0xff]
      %v1188 = vld [vmem:[%s324 + $0x1948] sm:$0xff]
      %v1189 = vld [vmem:[%s324 + $0x1950] sm:$0xff]
      %v1190 = vld [vmem:[%s324 + $0x1958] sm:$0xff]
      %v1191 = vld [vmem:[%s324 + $0x1960] sm:$0xff]
      %v1192 = vld [vmem:[%s324 + $0x1968] sm:$0xff]
      %v1193 = vld [vmem:[%s324 + $0x1970] sm:$0xff]
      %v1194 = vld [vmem:[%s324 + $0x1978] sm:$0xff]
      %v1195 = vld [vmem:[%s324 + $0x1980] sm:$0xff]
      %v1196 = vld [vmem:[%s324 + $0x1988] sm:$0xff]
      %v1197 = vld [vmem:[%s324 + $0x1990] sm:$0xff]
      %v1198 = vld [vmem:[%s324 + $0x1998] sm:$0xff]
      %v1199 = vld [vmem:[%s324 + $0x19a0] sm:$0xff]
      %v1200 = vld [vmem:[%s324 + $0x19a8] sm:$0xff]
      %v1201 = vld [vmem:[%s324 + $0x19b0] sm:$0xff]
      %v1202 = vld [vmem:[%s324 + $0x19b8] sm:$0xff]
      %v1203 = vld [vmem:[%s324 + $0x19c0] sm:$0xff]
      %v1204 = vld [vmem:[%s324 + $0x19c8] sm:$0xff]
      %v1205 = vld [vmem:[%s324 + $0x19d0] sm:$0xff]
      %v1206 = vld [vmem:[%s324 + $0x19d8] sm:$0xff]
      %v1207 = vld [vmem:[%s324 + $0x19e0] sm:$0xff]
      %v1208 = vld [vmem:[%s324 + $0x19e8] sm:$0xff]
      %v1209 = vld [vmem:[%s324 + $0x19f0] sm:$0xff]
      %v1210 = vld [vmem:[%s324 + $0x19f8] sm:$0xff]
      %v1211 = vld [vmem:[%s324 + $0x1a00] sm:$0xff]
      %v1212 = vld [vmem:[%s324 + $0x1a08] sm:$0xff]
      %v1213 = vld [vmem:[%s324 + $0x1a10] sm:$0xff]
      %v1214 = vld [vmem:[%s324 + $0x1a18] sm:$0xff]
      %v1215 = vld [vmem:[%s324 + $0x1a20] sm:$0xff]
      %v1216 = vld [vmem:[%s324 + $0x1a28] sm:$0xff]
      %v1217 = vld [vmem:[%s324 + $0x1a30] sm:$0xff]
      %v1218 = vld [vmem:[%s324 + $0x1a38] sm:$0xff]
      %v1219 = vld [vmem:[%s324 + $0x1a40] sm:$0xff]
      %v1220 = vld [vmem:[%s324 + $0x1a48] sm:$0xff]
      %v1221 = vld [vmem:[%s324 + $0x1a50] sm:$0xff]
      %v1222 = vld [vmem:[%s324 + $0x1a58] sm:$0xff]
      %v1223 = vld [vmem:[%s324 + $0x1a60] sm:$0xff]
      %v1224 = vld [vmem:[%s324 + $0x1a68] sm:$0xff]
      %v1225 = vld [vmem:[%s324 + $0x1a70] sm:$0xff]
      %v1226 = vld [vmem:[%s324 + $0x1a78] sm:$0xff]
      %v1227 = vld [vmem:[%s324 + $0x1a80] sm:$0xff]
      %v1228 = vld [vmem:[%s324 + $0x1a88] sm:$0xff]
      %v1229 = vld [vmem:[%s324 + $0x1a90] sm:$0xff]
      %v1230 = vld [vmem:[%s324 + $0x1a98] sm:$0xff]
      %v1231 = vld [vmem:[%s324 + $0x1aa0] sm:$0xff]
      %v1232 = vld [vmem:[%s324 + $0x1aa8] sm:$0xff]
      %v1233 = vld [vmem:[%s324 + $0x1ab0] sm:$0xff]
      %v1234 = vld [vmem:[%s324 + $0x1ab8] sm:$0xff]
      %v1235 = vld [vmem:[%s324 + $0x1ac0] sm:$0xff]
      %v1236 = vld [vmem:[%s324 + $0x1ac8] sm:$0xff]
      %v1237 = vld [vmem:[%s324 + $0x1ad0] sm:$0xff]
      %v1238 = vld [vmem:[%s324 + $0x1ad8] sm:$0xff]
      %v1239 = vld [vmem:[%s324 + $0x1ae0] sm:$0xff]
      %v1240 = vld [vmem:[%s324 + $0x1ae8] sm:$0xff]
      %v1241 = vld [vmem:[%s324 + $0x1af0] sm:$0xff]
      %v1242 = vld [vmem:[%s324 + $0x1af8] sm:$0xff]
      %v1243 = vld [vmem:[%s324 + $0x1b00] sm:$0xff]
      %v1244 = vld [vmem:[%s324 + $0x1b08] sm:$0xff]
      %v1245 = vld [vmem:[%s324 + $0x1b10] sm:$0xff]
      %v1246 = vld [vmem:[%s324 + $0x1b18] sm:$0xff]
      %v1247 = vld [vmem:[%s324 + $0x1b20] sm:$0xff]
      %v1248 = vld [vmem:[%s324 + $0x1b28] sm:$0xff]
      %v1249 = vld [vmem:[%s324 + $0x1b30] sm:$0xff]
      %v1250 = vld [vmem:[%s324 + $0x1b38] sm:$0xff]
      %v1251 = vld [vmem:[%s324 + $0x1b40] sm:$0xff]
      %v1252 = vld [vmem:[%s324 + $0x1b48] sm:$0xff]
      %v1253 = vld [vmem:[%s324 + $0x1b50] sm:$0xff]
      %v1254 = vld [vmem:[%s324 + $0x1b58] sm:$0xff]
      %v1255 = vld [vmem:[%s324 + $0x1b60] sm:$0xff]
      %v1256 = vld [vmem:[%s324 + $0x1b68] sm:$0xff]
      %v1257 = vld [vmem:[%s324 + $0x1b70] sm:$0xff]
      %v1258 = vld [vmem:[%s324 + $0x1b78] sm:$0xff]
      %v1259 = vld [vmem:[%s324 + $0x1b80] sm:$0xff]
      %v1260 = vld [vmem:[%s324 + $0x1b88] sm:$0xff]
      %v1261 = vld [vmem:[%s324 + $0x1b90] sm:$0xff]
      %v1262 = vld [vmem:[%s324 + $0x1b98] sm:$0xff]
      %v1263 = vld [vmem:[%s324 + $0x1ba0] sm:$0xff]
      %v1264 = vld [vmem:[%s324 + $0x1ba8] sm:$0xff]
      %v1265 = vld [vmem:[%s324 + $0x1bb0] sm:$0xff]
      %v1266 = vld [vmem:[%s324 + $0x1bb8] sm:$0xff]
      %v1267 = vld [vmem:[%s324 + $0x1bc0] sm:$0xff]
      %v1268 = vld [vmem:[%s324 + $0x1bc8] sm:$0xff]
      %v1269 = vld [vmem:[%s324 + $0x1bd0] sm:$0xff]
      %v1270 = vld [vmem:[%s324 + $0x1bd8] sm:$0xff]
      %v1271 = vld [vmem:[%s324 + $0x1be0] sm:$0xff]
      %v1272 = vld [vmem:[%s324 + $0x1be8] sm:$0xff]
      %v1273 = vld [vmem:[%s324 + $0x1bf0] sm:$0xff]
      %v1274 = vld [vmem:[%s324 + $0x1bf8] sm:$0xff]
      %v2171 = vunpack.c.l.b16 %v379
      %v2172 = vunpack.c.h.b16 %v379
      %v2173 = vunpack.c.l.b16 %v380
      %v2174 = vunpack.c.h.b16 %v380
      %v2175 = vunpack.c.l.b16 %v381
      %v2176 = vunpack.c.h.b16 %v381
      %v2177 = vunpack.c.l.b16 %v382
      %v2178 = vunpack.c.h.b16 %v382
      %v2179 = vunpack.c.l.b16 %v383
      %v2180 = vunpack.c.h.b16 %v383
      %v2181 = vunpack.c.l.b16 %v384
      %v2182 = vunpack.c.h.b16 %v384
      %v2183 = vunpack.c.l.b16 %v385
      %v2184 = vunpack.c.h.b16 %v385
      %v2185 = vunpack.c.l.b16 %v386
      %v2186 = vunpack.c.h.b16 %v386
      %v2187 = vunpack.c.l.b16 %v387
      %v2188 = vunpack.c.h.b16 %v387
      %v2189 = vunpack.c.l.b16 %v388
      %v2190 = vunpack.c.h.b16 %v388
      %v2191 = vunpack.c.l.b16 %v389
      %v2192 = vunpack.c.h.b16 %v389
      %v2193 = vunpack.c.l.b16 %v390
      %v2194 = vunpack.c.h.b16 %v390
      %v2195 = vunpack.c.l.b16 %v391
      %v2196 = vunpack.c.h.b16 %v391
      %v2197 = vunpack.c.l.b16 %v392
      %v2198 = vunpack.c.h.b16 %v392
      %v2199 = vunpack.c.l.b16 %v393
      %v2200 = vunpack.c.h.b16 %v393
      %v2201 = vunpack.c.l.b16 %v394
      %v2202 = vunpack.c.h.b16 %v394
      %v2203 = vunpack.c.l.b16 %v395
      %v2204 = vunpack.c.h.b16 %v395
      %v2205 = vunpack.c.l.b16 %v396
      %v2206 = vunpack.c.h.b16 %v396
      %v2207 = vunpack.c.l.b16 %v397
      %v2208 = vunpack.c.h.b16 %v397
      %v2209 = vunpack.c.l.b16 %v398
      %v2210 = vunpack.c.h.b16 %v398
      %v2211 = vunpack.c.l.b16 %v399
      %v2212 = vunpack.c.h.b16 %v399
      %v2213 = vunpack.c.l.b16 %v400
      %v2214 = vunpack.c.h.b16 %v400
      %v2215 = vunpack.c.l.b16 %v401
      %v2216 = vunpack.c.h.b16 %v401
      %v2217 = vunpack.c.l.b16 %v402
      %v2218 = vunpack.c.h.b16 %v402
      %v2219 = vunpack.c.l.b16 %v403
      %v2220 = vunpack.c.h.b16 %v403
      %v2221 = vunpack.c.l.b16 %v404
      %v2222 = vunpack.c.h.b16 %v404
      %v2223 = vunpack.c.l.b16 %v405
      %v2224 = vunpack.c.h.b16 %v405
      %v2225 = vunpack.c.l.b16 %v406
      %v2226 = vunpack.c.h.b16 %v406
      %v2227 = vunpack.c.l.b16 %v407
      %v2228 = vunpack.c.h.b16 %v407
      %v2229 = vunpack.c.l.b16 %v408
      %v2230 = vunpack.c.h.b16 %v408
      %v2231 = vunpack.c.l.b16 %v409
      %v2232 = vunpack.c.h.b16 %v409
      %v2233 = vunpack.c.l.b16 %v410
      %v2234 = vunpack.c.h.b16 %v410
      %v2235 = vunpack.c.l.b16 %v411
      %v2236 = vunpack.c.h.b16 %v411
      %v2237 = vunpack.c.l.b16 %v412
      %v2238 = vunpack.c.h.b16 %v412
      %v2239 = vunpack.c.l.b16 %v413
      %v2240 = vunpack.c.h.b16 %v413
      %v2241 = vunpack.c.l.b16 %v414
      %v2242 = vunpack.c.h.b16 %v414
      %v2243 = vunpack.c.l.b16 %v415
      %v2244 = vunpack.c.h.b16 %v415
      %v2245 = vunpack.c.l.b16 %v416
      %v2246 = vunpack.c.h.b16 %v416
      %v2247 = vunpack.c.l.b16 %v417
      %v2248 = vunpack.c.h.b16 %v417
      %v2249 = vunpack.c.l.b16 %v418
      %v2250 = vunpack.c.h.b16 %v418
      %v2251 = vunpack.c.l.b16 %v419
      %v2252 = vunpack.c.h.b16 %v419
      %v2253 = vunpack.c.l.b16 %v420
      %v2254 = vunpack.c.h.b16 %v420
      %v2255 = vunpack.c.l.b16 %v421
      %v2256 = vunpack.c.h.b16 %v421
      %v2257 = vunpack.c.l.b16 %v422
      %v2258 = vunpack.c.h.b16 %v422
      %v2259 = vunpack.c.l.b16 %v423
      %v2260 = vunpack.c.h.b16 %v423
      %v2261 = vunpack.c.l.b16 %v424
      %v2262 = vunpack.c.h.b16 %v424
      %v2263 = vunpack.c.l.b16 %v425
      %v2264 = vunpack.c.h.b16 %v425
      %v2265 = vunpack.c.l.b16 %v426
      %v2266 = vunpack.c.h.b16 %v426
      %v2267 = vunpack.c.l.b16 %v427
      %v2268 = vunpack.c.h.b16 %v427
      %v2269 = vunpack.c.l.b16 %v428
      %v2270 = vunpack.c.h.b16 %v428
      %v2271 = vunpack.c.l.b16 %v429
      %v2272 = vunpack.c.h.b16 %v429
      %v2273 = vunpack.c.l.b16 %v430
      %v2274 = vunpack.c.h.b16 %v430
      %v2275 = vunpack.c.l.b16 %v431
      %v2276 = vunpack.c.h.b16 %v431
      %v2277 = vunpack.c.l.b16 %v432
      %v2278 = vunpack.c.h.b16 %v432
      %v2279 = vunpack.c.l.b16 %v433
      %v2280 = vunpack.c.h.b16 %v433
      %v2281 = vunpack.c.l.b16 %v434
      %v2282 = vunpack.c.h.b16 %v434
      %v2283 = vunpack.c.l.b16 %v435
      %v2284 = vunpack.c.h.b16 %v435
      %v2285 = vunpack.c.l.b16 %v436
      %v2286 = vunpack.c.h.b16 %v436
      %v2287 = vunpack.c.l.b16 %v437
      %v2288 = vunpack.c.h.b16 %v437
      %v2289 = vunpack.c.l.b16 %v438
      %v2290 = vunpack.c.h.b16 %v438
      %v2291 = vunpack.c.l.b16 %v439
      %v2292 = vunpack.c.h.b16 %v439
      %v2293 = vunpack.c.l.b16 %v440
      %v2294 = vunpack.c.h.b16 %v440
      %v2295 = vunpack.c.l.b16 %v441
      %v2296 = vunpack.c.h.b16 %v441
      %v2297 = vunpack.c.l.b16 %v442
      %v2298 = vunpack.c.h.b16 %v442
      %v2299 = vunpack.c.l.b16 %v443
      %v2300 = vunpack.c.h.b16 %v443
      %v2301 = vunpack.c.l.b16 %v444
      %v2302 = vunpack.c.h.b16 %v444
      %v2303 = vunpack.c.l.b16 %v445
      %v2304 = vunpack.c.h.b16 %v445
      %v2305 = vunpack.c.l.b16 %v446
      %v2306 = vunpack.c.h.b16 %v446
      %v2307 = vunpack.c.l.b16 %v447
      %v2308 = vunpack.c.h.b16 %v447
      %v2309 = vunpack.c.l.b16 %v448
      %v2310 = vunpack.c.h.b16 %v448
      %v2311 = vunpack.c.l.b16 %v449
      %v2312 = vunpack.c.h.b16 %v449
      %v2313 = vunpack.c.l.b16 %v450
      %v2314 = vunpack.c.h.b16 %v450
      %v2315 = vunpack.c.l.b16 %v451
      %v2316 = vunpack.c.h.b16 %v451
      %v2317 = vunpack.c.l.b16 %v452
      %v2318 = vunpack.c.h.b16 %v452
      %v2319 = vunpack.c.l.b16 %v453
      %v2320 = vunpack.c.h.b16 %v453
      %v2321 = vunpack.c.l.b16 %v454
      %v2322 = vunpack.c.h.b16 %v454
      %v2323 = vunpack.c.l.b16 %v455
      %v2324 = vunpack.c.h.b16 %v455
      %v2325 = vunpack.c.l.b16 %v456
      %v2326 = vunpack.c.h.b16 %v456
      %v2327 = vunpack.c.l.b16 %v457
      %v2328 = vunpack.c.h.b16 %v457
      %v2329 = vunpack.c.l.b16 %v458
      %v2330 = vunpack.c.h.b16 %v458
      %v2331 = vunpack.c.l.b16 %v459
      %v2332 = vunpack.c.h.b16 %v459
      %v2333 = vunpack.c.l.b16 %v460
      %v2334 = vunpack.c.h.b16 %v460
      %v2335 = vunpack.c.l.b16 %v461
      %v2336 = vunpack.c.h.b16 %v461
      %v2337 = vunpack.c.l.b16 %v462
      %v2338 = vunpack.c.h.b16 %v462
      %v2339 = vunpack.c.l.b16 %v463
      %v2340 = vunpack.c.h.b16 %v463
      %v2341 = vunpack.c.l.b16 %v464
      %v2342 = vunpack.c.h.b16 %v464
      %v2343 = vunpack.c.l.b16 %v465
      %v2344 = vunpack.c.h.b16 %v465
      %v2345 = vunpack.c.l.b16 %v466
      %v2346 = vunpack.c.h.b16 %v466
      %v2347 = vunpack.c.l.b16 %v467
      %v2348 = vunpack.c.h.b16 %v467
      %v2349 = vunpack.c.l.b16 %v468
      %v2350 = vunpack.c.h.b16 %v468
      %v2351 = vunpack.c.l.b16 %v469
      %v2352 = vunpack.c.h.b16 %v469
      %v2353 = vunpack.c.l.b16 %v470
      %v2354 = vunpack.c.h.b16 %v470
      %v2355 = vunpack.c.l.b16 %v471
      %v2356 = vunpack.c.h.b16 %v471
      %v2357 = vunpack.c.l.b16 %v472
      %v2358 = vunpack.c.h.b16 %v472
      %v2359 = vunpack.c.l.b16 %v473
      %v2360 = vunpack.c.h.b16 %v473
      %v2361 = vunpack.c.l.b16 %v474
      %v2362 = vunpack.c.h.b16 %v474
      %v2363 = vunpack.c.l.b16 %v475
      %v2364 = vunpack.c.h.b16 %v475
      %v2365 = vunpack.c.l.b16 %v476
      %v2366 = vunpack.c.h.b16 %v476
      %v2367 = vunpack.c.l.b16 %v477
      %v2368 = vunpack.c.h.b16 %v477
      %v2369 = vunpack.c.l.b16 %v478
      %v2370 = vunpack.c.h.b16 %v478
      %v2371 = vunpack.c.l.b16 %v479
      %v2372 = vunpack.c.h.b16 %v479
      %v2373 = vunpack.c.l.b16 %v480
      %v2374 = vunpack.c.h.b16 %v480
      %v2375 = vunpack.c.l.b16 %v481
      %v2376 = vunpack.c.h.b16 %v481
      %v2377 = vunpack.c.l.b16 %v482
      %v2378 = vunpack.c.h.b16 %v482
      %v2379 = vunpack.c.l.b16 %v483
      %v2380 = vunpack.c.h.b16 %v483
      %v2381 = vunpack.c.l.b16 %v484
      %v2382 = vunpack.c.h.b16 %v484
      %v2383 = vunpack.c.l.b16 %v485
      %v2384 = vunpack.c.h.b16 %v485
      %v2385 = vunpack.c.l.b16 %v486
      %v2386 = vunpack.c.h.b16 %v486
      %v2387 = vunpack.c.l.b16 %v487
      %v2388 = vunpack.c.h.b16 %v487
      %v2389 = vunpack.c.l.b16 %v488
      %v2390 = vunpack.c.h.b16 %v488
      %v2391 = vunpack.c.l.b16 %v489
      %v2392 = vunpack.c.h.b16 %v489
      %v2393 = vunpack.c.l.b16 %v490
      %v2394 = vunpack.c.h.b16 %v490
      %v2395 = vunpack.c.l.b16 %v491
      %v2396 = vunpack.c.h.b16 %v491
      %v2397 = vunpack.c.l.b16 %v492
      %v2398 = vunpack.c.h.b16 %v492
      %v2399 = vunpack.c.l.b16 %v493
      %v2400 = vunpack.c.h.b16 %v493
      %v2401 = vunpack.c.l.b16 %v494
      %v2402 = vunpack.c.h.b16 %v494
      %v2403 = vunpack.c.l.b16 %v495
      %v2404 = vunpack.c.h.b16 %v495
      %v2405 = vunpack.c.l.b16 %v496
      %v2406 = vunpack.c.h.b16 %v496
      %v2407 = vunpack.c.l.b16 %v497
      %v2408 = vunpack.c.h.b16 %v497
      %v2409 = vunpack.c.l.b16 %v498
      %v2410 = vunpack.c.h.b16 %v498
      %v2411 = vunpack.c.l.b16 %v499
      %v2412 = vunpack.c.h.b16 %v499
      %v2413 = vunpack.c.l.b16 %v500
      %v2414 = vunpack.c.h.b16 %v500
      %v2415 = vunpack.c.l.b16 %v501
      %v2416 = vunpack.c.h.b16 %v501
      %v2417 = vunpack.c.l.b16 %v502
      %v2418 = vunpack.c.h.b16 %v502
      %v2419 = vunpack.c.l.b16 %v503
      %v2420 = vunpack.c.h.b16 %v503
      %v2421 = vunpack.c.l.b16 %v504
      %v2422 = vunpack.c.h.b16 %v504
      %v2423 = vunpack.c.l.b16 %v505
      %v2424 = vunpack.c.h.b16 %v505
      %v2425 = vunpack.c.l.b16 %v506
      %v2426 = vunpack.c.h.b16 %v506
      %v2427 = vunpack.c.l.b16 %v507
      %v2428 = vunpack.c.h.b16 %v507
      %v2429 = vunpack.c.l.b16 %v508
      %v2430 = vunpack.c.h.b16 %v508
      %v2431 = vunpack.c.l.b16 %v509
      %v2432 = vunpack.c.h.b16 %v509
      %v2433 = vunpack.c.l.b16 %v510
      %v2434 = vunpack.c.h.b16 %v510
      %v2435 = vunpack.c.l.b16 %v511
      %v2436 = vunpack.c.h.b16 %v511
      %v2437 = vunpack.c.l.b16 %v512
      %v2438 = vunpack.c.h.b16 %v512
      %v2439 = vunpack.c.l.b16 %v513
      %v2440 = vunpack.c.h.b16 %v513
      %v2441 = vunpack.c.l.b16 %v514
      %v2442 = vunpack.c.h.b16 %v514
      %v2443 = vunpack.c.l.b16 %v515
      %v2444 = vunpack.c.h.b16 %v515
      %v2445 = vunpack.c.l.b16 %v516
      %v2446 = vunpack.c.h.b16 %v516
      %v2447 = vunpack.c.l.b16 %v517
      %v2448 = vunpack.c.h.b16 %v517
      %v2449 = vunpack.c.l.b16 %v518
      %v2450 = vunpack.c.h.b16 %v518
      %v2451 = vunpack.c.l.b16 %v519
      %v2452 = vunpack.c.h.b16 %v519
      %v2453 = vunpack.c.l.b16 %v520
      %v2454 = vunpack.c.h.b16 %v520
      %v2455 = vunpack.c.l.b16 %v521
      %v2456 = vunpack.c.h.b16 %v521
      %v2457 = vunpack.c.l.b16 %v522
      %v2458 = vunpack.c.h.b16 %v522
      %v2459 = vunpack.c.l.b16 %v523
      %v2460 = vunpack.c.h.b16 %v523
      %v2461 = vunpack.c.l.b16 %v524
      %v2462 = vunpack.c.h.b16 %v524
      %v2463 = vunpack.c.l.b16 %v525
      %v2464 = vunpack.c.h.b16 %v525
      %v2465 = vunpack.c.l.b16 %v526
      %v2466 = vunpack.c.h.b16 %v526
      %v2467 = vunpack.c.l.b16 %v527
      %v2468 = vunpack.c.h.b16 %v527
      %v2469 = vunpack.c.l.b16 %v528
      %v2470 = vunpack.c.h.b16 %v528
      %v2471 = vunpack.c.l.b16 %v529
      %v2472 = vunpack.c.h.b16 %v529
      %v2473 = vunpack.c.l.b16 %v530
      %v2474 = vunpack.c.h.b16 %v530
      %v2475 = vunpack.c.l.b16 %v531
      %v2476 = vunpack.c.h.b16 %v531
      %v2477 = vunpack.c.l.b16 %v532
      %v2478 = vunpack.c.h.b16 %v532
      %v2479 = vunpack.c.l.b16 %v533
      %v2480 = vunpack.c.h.b16 %v533
      %v2481 = vunpack.c.l.b16 %v534
      %v2482 = vunpack.c.h.b16 %v534
      %v2483 = vunpack.c.l.b16 %v535
      %v2484 = vunpack.c.h.b16 %v535
      %v2485 = vunpack.c.l.b16 %v536
      %v2486 = vunpack.c.h.b16 %v536
      %v2487 = vunpack.c.l.b16 %v537
      %v2488 = vunpack.c.h.b16 %v537
      %v2489 = vunpack.c.l.b16 %v538
      %v2490 = vunpack.c.h.b16 %v538
      %v2491 = vunpack.c.l.b16 %v539
      %v2492 = vunpack.c.h.b16 %v539
      %v2493 = vunpack.c.l.b16 %v540
      %v2494 = vunpack.c.h.b16 %v540
      %v2495 = vunpack.c.l.b16 %v541
      %v2496 = vunpack.c.h.b16 %v541
      %v2497 = vunpack.c.l.b16 %v542
      %v2498 = vunpack.c.h.b16 %v542
      %v2499 = vunpack.c.l.b16 %v543
      %v2500 = vunpack.c.h.b16 %v543
      %v2501 = vunpack.c.l.b16 %v544
      %v2502 = vunpack.c.h.b16 %v544
      %v2503 = vunpack.c.l.b16 %v545
      %v2504 = vunpack.c.h.b16 %v545
      %v2505 = vunpack.c.l.b16 %v546
      %v2506 = vunpack.c.h.b16 %v546
      %v2507 = vunpack.c.l.b16 %v547
      %v2508 = vunpack.c.h.b16 %v547
      %v2509 = vunpack.c.l.b16 %v548
      %v2510 = vunpack.c.h.b16 %v548
      %v2511 = vunpack.c.l.b16 %v549
      %v2512 = vunpack.c.h.b16 %v549
      %v2513 = vunpack.c.l.b16 %v550
      %v2514 = vunpack.c.h.b16 %v550
      %v2515 = vunpack.c.l.b16 %v551
      %v2516 = vunpack.c.h.b16 %v551
      %v2517 = vunpack.c.l.b16 %v552
      %v2518 = vunpack.c.h.b16 %v552
      %v2519 = vunpack.c.l.b16 %v553
      %v2520 = vunpack.c.h.b16 %v553
      %v2521 = vunpack.c.l.b16 %v554
      %v2522 = vunpack.c.h.b16 %v554
      %v2523 = vunpack.c.l.b16 %v555
      %v2524 = vunpack.c.h.b16 %v555
      %v2525 = vunpack.c.l.b16 %v556
      %v2526 = vunpack.c.h.b16 %v556
      %v2527 = vunpack.c.l.b16 %v557
      %v2528 = vunpack.c.h.b16 %v557
      %v2529 = vunpack.c.l.b16 %v558
      %v2530 = vunpack.c.h.b16 %v558
      %v2531 = vunpack.c.l.b16 %v559
      %v2532 = vunpack.c.h.b16 %v559
      %v2533 = vunpack.c.l.b16 %v560
      %v2534 = vunpack.c.h.b16 %v560
      %v2535 = vunpack.c.l.b16 %v561
      %v2536 = vunpack.c.h.b16 %v561
      %v2537 = vunpack.c.l.b16 %v562
      %v2538 = vunpack.c.h.b16 %v562
      %v2539 = vunpack.c.l.b16 %v563
      %v2540 = vunpack.c.h.b16 %v563
      %v2541 = vunpack.c.l.b16 %v564
      %v2542 = vunpack.c.h.b16 %v564
      %v2543 = vunpack.c.l.b16 %v565
      %v2544 = vunpack.c.h.b16 %v565
      %v2545 = vunpack.c.l.b16 %v566
      %v2546 = vunpack.c.h.b16 %v566
      %v2547 = vunpack.c.l.b16 %v567
      %v2548 = vunpack.c.h.b16 %v567
      %v2549 = vunpack.c.l.b16 %v568
      %v2550 = vunpack.c.h.b16 %v568
      %v2551 = vunpack.c.l.b16 %v569
      %v2552 = vunpack.c.h.b16 %v569
      %v2553 = vunpack.c.l.b16 %v570
      %v2554 = vunpack.c.h.b16 %v570
      %v2555 = vunpack.c.l.b16 %v571
      %v2556 = vunpack.c.h.b16 %v571
      %v2557 = vunpack.c.l.b16 %v572
      %v2558 = vunpack.c.h.b16 %v572
      %v2559 = vunpack.c.l.b16 %v573
      %v2560 = vunpack.c.h.b16 %v573
      %v2561 = vunpack.c.l.b16 %v574
      %v2562 = vunpack.c.h.b16 %v574
      %v2563 = vunpack.c.l.b16 %v575
      %v2564 = vunpack.c.h.b16 %v575
      %v2565 = vunpack.c.l.b16 %v576
      %v2566 = vunpack.c.h.b16 %v576
      %v2567 = vunpack.c.l.b16 %v577
      %v2568 = vunpack.c.h.b16 %v577
      %v2569 = vunpack.c.l.b16 %v578
      %v2570 = vunpack.c.h.b16 %v578
      %v2571 = vunpack.c.l.b16 %v579
      %v2572 = vunpack.c.h.b16 %v579
      %v2573 = vunpack.c.l.b16 %v580
      %v2574 = vunpack.c.h.b16 %v580
      %v2575 = vunpack.c.l.b16 %v581
      %v2576 = vunpack.c.h.b16 %v581
      %v2577 = vunpack.c.l.b16 %v582
      %v2578 = vunpack.c.h.b16 %v582
      %v2579 = vunpack.c.l.b16 %v583
      %v2580 = vunpack.c.h.b16 %v583
      %v2581 = vunpack.c.l.b16 %v584
      %v2582 = vunpack.c.h.b16 %v584
      %v2583 = vunpack.c.l.b16 %v585
      %v2584 = vunpack.c.h.b16 %v585
      %v2585 = vunpack.c.l.b16 %v586
      %v2586 = vunpack.c.h.b16 %v586
      %v2587 = vunpack.c.l.b16 %v587
      %v2588 = vunpack.c.h.b16 %v587
      %v2589 = vunpack.c.l.b16 %v588
      %v2590 = vunpack.c.h.b16 %v588
      %v2591 = vunpack.c.l.b16 %v589
      %v2592 = vunpack.c.h.b16 %v589
      %v2593 = vunpack.c.l.b16 %v590
      %v2594 = vunpack.c.h.b16 %v590
      %v2595 = vunpack.c.l.b16 %v591
      %v2596 = vunpack.c.h.b16 %v591
      %v2597 = vunpack.c.l.b16 %v592
      %v2598 = vunpack.c.h.b16 %v592
      %v2599 = vunpack.c.l.b16 %v593
      %v2600 = vunpack.c.h.b16 %v593
      %v2601 = vunpack.c.l.b16 %v594
      %v2602 = vunpack.c.h.b16 %v594
      %v2603 = vunpack.c.l.b16 %v595
      %v2604 = vunpack.c.h.b16 %v595
      %v2605 = vunpack.c.l.b16 %v596
      %v2606 = vunpack.c.h.b16 %v596
      %v2607 = vunpack.c.l.b16 %v597
      %v2608 = vunpack.c.h.b16 %v597
      %v2609 = vunpack.c.l.b16 %v598
      %v2610 = vunpack.c.h.b16 %v598
      %v2611 = vunpack.c.l.b16 %v599
      %v2612 = vunpack.c.h.b16 %v599
      %v2613 = vunpack.c.l.b16 %v600
      %v2614 = vunpack.c.h.b16 %v600
      %v2615 = vunpack.c.l.b16 %v601
      %v2616 = vunpack.c.h.b16 %v601
      %v2617 = vunpack.c.l.b16 %v602
      %v2618 = vunpack.c.h.b16 %v602
      %v2619 = vunpack.c.l.b16 %v603
      %v2620 = vunpack.c.h.b16 %v603
      %v2621 = vunpack.c.l.b16 %v604
      %v2622 = vunpack.c.h.b16 %v604
      %v2623 = vunpack.c.l.b16 %v605
      %v2624 = vunpack.c.h.b16 %v605
      %v2625 = vunpack.c.l.b16 %v606
      %v2626 = vunpack.c.h.b16 %v606
      %v2627 = vunpack.c.l.b16 %v607
      %v2628 = vunpack.c.h.b16 %v607
      %v2629 = vunpack.c.l.b16 %v608
      %v2630 = vunpack.c.h.b16 %v608
      %v2631 = vunpack.c.l.b16 %v609
      %v2632 = vunpack.c.h.b16 %v609
      %v2633 = vunpack.c.l.b16 %v610
      %v2634 = vunpack.c.h.b16 %v610
      %v2635 = vunpack.c.l.b16 %v611
      %v2636 = vunpack.c.h.b16 %v611
      %v2637 = vunpack.c.l.b16 %v612
      %v2638 = vunpack.c.h.b16 %v612
      %v2639 = vunpack.c.l.b16 %v613
      %v2640 = vunpack.c.h.b16 %v613
      %v2641 = vunpack.c.l.b16 %v614
      %v2642 = vunpack.c.h.b16 %v614
      %v2643 = vunpack.c.l.b16 %v615
      %v2644 = vunpack.c.h.b16 %v615
      %v2645 = vunpack.c.l.b16 %v616
      %v2646 = vunpack.c.h.b16 %v616
      %v2647 = vunpack.c.l.b16 %v617
      %v2648 = vunpack.c.h.b16 %v617
      %v2649 = vunpack.c.l.b16 %v618
      %v2650 = vunpack.c.h.b16 %v618
      %v2651 = vunpack.c.l.b16 %v619
      %v2652 = vunpack.c.h.b16 %v619
      %v2653 = vunpack.c.l.b16 %v620
      %v2654 = vunpack.c.h.b16 %v620
      %v2655 = vunpack.c.l.b16 %v621
      %v2656 = vunpack.c.h.b16 %v621
      %v2657 = vunpack.c.l.b16 %v622
      %v2658 = vunpack.c.h.b16 %v622
      %v2659 = vunpack.c.l.b16 %v623
      %v2660 = vunpack.c.h.b16 %v623
      %v2661 = vunpack.c.l.b16 %v624
      %v2662 = vunpack.c.h.b16 %v624
      %v2663 = vunpack.c.l.b16 %v625
      %v2664 = vunpack.c.h.b16 %v625
      %v2665 = vunpack.c.l.b16 %v626
      %v2666 = vunpack.c.h.b16 %v626
      %v2667 = vunpack.c.l.b16 %v627
      %v2668 = vunpack.c.h.b16 %v627
      %v2669 = vunpack.c.l.b16 %v628
      %v2670 = vunpack.c.h.b16 %v628
      %v2671 = vunpack.c.l.b16 %v629
      %v2672 = vunpack.c.h.b16 %v629
      %v2673 = vunpack.c.l.b16 %v630
      %v2674 = vunpack.c.h.b16 %v630
      %v2675 = vunpack.c.l.b16 %v631
      %v2676 = vunpack.c.h.b16 %v631
      %v2677 = vunpack.c.l.b16 %v632
      %v2678 = vunpack.c.h.b16 %v632
      %v2679 = vunpack.c.l.b16 %v633
      %v2680 = vunpack.c.h.b16 %v633
      %v2681 = vunpack.c.l.b16 %v634
      %v2682 = vunpack.c.h.b16 %v634
      %v2683 = vunpack.c.l.b16 %v635
      %v2684 = vunpack.c.h.b16 %v635
      %v2685 = vunpack.c.l.b16 %v636
      %v2686 = vunpack.c.h.b16 %v636
      %v2687 = vunpack.c.l.b16 %v637
      %v2688 = vunpack.c.h.b16 %v637
      %v2689 = vunpack.c.l.b16 %v638
      %v2690 = vunpack.c.h.b16 %v638
      %v2691 = vunpack.c.l.b16 %v639
      %v2692 = vunpack.c.h.b16 %v639
      %v2693 = vunpack.c.l.b16 %v640
      %v2694 = vunpack.c.h.b16 %v640
      %v2695 = vunpack.c.l.b16 %v641
      %v2696 = vunpack.c.h.b16 %v641
      %v2697 = vunpack.c.l.b16 %v642
      %v2698 = vunpack.c.h.b16 %v642
      %v2699 = vunpack.c.l.b16 %v643
      %v2700 = vunpack.c.h.b16 %v643
      %v2701 = vunpack.c.l.b16 %v644
      %v2702 = vunpack.c.h.b16 %v644
      %v2703 = vunpack.c.l.b16 %v645
      %v2704 = vunpack.c.h.b16 %v645
      %v2705 = vunpack.c.l.b16 %v646
      %v2706 = vunpack.c.h.b16 %v646
      %v2707 = vunpack.c.l.b16 %v647
      %v2708 = vunpack.c.h.b16 %v647
      %v2709 = vunpack.c.l.b16 %v648
      %v2710 = vunpack.c.h.b16 %v648
      %v2711 = vunpack.c.l.b16 %v649
      %v2712 = vunpack.c.h.b16 %v649
      %v2713 = vunpack.c.l.b16 %v650
      %v2714 = vunpack.c.h.b16 %v650
      %v2715 = vunpack.c.l.b16 %v651
      %v2716 = vunpack.c.h.b16 %v651
      %v2717 = vunpack.c.l.b16 %v652
      %v2718 = vunpack.c.h.b16 %v652
      %v2719 = vunpack.c.l.b16 %v653
      %v2720 = vunpack.c.h.b16 %v653
      %v2721 = vunpack.c.l.b16 %v654
      %v2722 = vunpack.c.h.b16 %v654
      %v2723 = vunpack.c.l.b16 %v655
      %v2724 = vunpack.c.h.b16 %v655
      %v2725 = vunpack.c.l.b16 %v656
      %v2726 = vunpack.c.h.b16 %v656
      %v2727 = vunpack.c.l.b16 %v657
      %v2728 = vunpack.c.h.b16 %v657
      %v2729 = vunpack.c.l.b16 %v658
      %v2730 = vunpack.c.h.b16 %v658
      %v2731 = vunpack.c.l.b16 %v659
      %v2732 = vunpack.c.h.b16 %v659
      %v2733 = vunpack.c.l.b16 %v660
      %v2734 = vunpack.c.h.b16 %v660
      %v2735 = vunpack.c.l.b16 %v661
      %v2736 = vunpack.c.h.b16 %v661
      %v2737 = vunpack.c.l.b16 %v662
      %v2738 = vunpack.c.h.b16 %v662
      %v2739 = vunpack.c.l.b16 %v663
      %v2740 = vunpack.c.h.b16 %v663
      %v2741 = vunpack.c.l.b16 %v664
      %v2742 = vunpack.c.h.b16 %v664
      %v2743 = vunpack.c.l.b16 %v665
      %v2744 = vunpack.c.h.b16 %v665
      %v2745 = vunpack.c.l.b16 %v666
      %v2746 = vunpack.c.h.b16 %v666
      %v2747 = vunpack.c.l.b16 %v667
      %v2748 = vunpack.c.h.b16 %v667
      %v2749 = vunpack.c.l.b16 %v668
      %v2750 = vunpack.c.h.b16 %v668
      %v2751 = vunpack.c.l.b16 %v669
      %v2752 = vunpack.c.h.b16 %v669
      %v2753 = vunpack.c.l.b16 %v670
      %v2754 = vunpack.c.h.b16 %v670
      %v2755 = vunpack.c.l.b16 %v671
      %v2756 = vunpack.c.h.b16 %v671
      %v2757 = vunpack.c.l.b16 %v672
      %v2758 = vunpack.c.h.b16 %v672
      %v2759 = vunpack.c.l.b16 %v673
      %v2760 = vunpack.c.h.b16 %v673
      %v2761 = vunpack.c.l.b16 %v674
      %v2762 = vunpack.c.h.b16 %v674
      %v2763 = vunpack.c.l.b16 %v675
      %v2764 = vunpack.c.h.b16 %v675
      %v2765 = vunpack.c.l.b16 %v676
      %v2766 = vunpack.c.h.b16 %v676
      %v2767 = vunpack.c.l.b16 %v677
      %v2768 = vunpack.c.h.b16 %v677
      %v2769 = vunpack.c.l.b16 %v678
      %v2770 = vunpack.c.h.b16 %v678
      %v2771 = vunpack.c.l.b16 %v679
      %v2772 = vunpack.c.h.b16 %v679
      %v2773 = vunpack.c.l.b16 %v680
      %v2774 = vunpack.c.h.b16 %v680
      %v2775 = vunpack.c.l.b16 %v681
      %v2776 = vunpack.c.h.b16 %v681
      %v2777 = vunpack.c.l.b16 %v682
      %v2778 = vunpack.c.h.b16 %v682
      %v2779 = vunpack.c.l.b16 %v683
      %v2780 = vunpack.c.h.b16 %v683
      %v2781 = vunpack.c.l.b16 %v684
      %v2782 = vunpack.c.h.b16 %v684
      %v2783 = vunpack.c.l.b16 %v685
      %v2784 = vunpack.c.h.b16 %v685
      %v2785 = vunpack.c.l.b16 %v686
      %v2786 = vunpack.c.h.b16 %v686
      %v2787 = vunpack.c.l.b16 %v687
      %v2788 = vunpack.c.h.b16 %v687
      %v2789 = vunpack.c.l.b16 %v688
      %v2790 = vunpack.c.h.b16 %v688
      %v2791 = vunpack.c.l.b16 %v689
      %v2792 = vunpack.c.h.b16 %v689
      %v2793 = vunpack.c.l.b16 %v690
      %v2794 = vunpack.c.h.b16 %v690
      %v2795 = vunpack.c.l.b16 %v691
      %v2796 = vunpack.c.h.b16 %v691
      %v2797 = vunpack.c.l.b16 %v692
      %v2798 = vunpack.c.h.b16 %v692
      %v2799 = vunpack.c.l.b16 %v693
      %v2800 = vunpack.c.h.b16 %v693
      %v2801 = vunpack.c.l.b16 %v694
      %v2802 = vunpack.c.h.b16 %v694
      %v2803 = vunpack.c.l.b16 %v695
      %v2804 = vunpack.c.h.b16 %v695
      %v2805 = vunpack.c.l.b16 %v696
      %v2806 = vunpack.c.h.b16 %v696
      %v2807 = vunpack.c.l.b16 %v697
      %v2808 = vunpack.c.h.b16 %v697
      %v2809 = vunpack.c.l.b16 %v698
      %v2810 = vunpack.c.h.b16 %v698
      %v2811 = vunpack.c.l.b16 %v699
      %v2812 = vunpack.c.h.b16 %v699
      %v2813 = vunpack.c.l.b16 %v700
      %v2814 = vunpack.c.h.b16 %v700
      %v2815 = vunpack.c.l.b16 %v701
      %v2816 = vunpack.c.h.b16 %v701
      %v2817 = vunpack.c.l.b16 %v702
      %v2818 = vunpack.c.h.b16 %v702
      %v2819 = vunpack.c.l.b16 %v703
      %v2820 = vunpack.c.h.b16 %v703
      %v2821 = vunpack.c.l.b16 %v704
      %v2822 = vunpack.c.h.b16 %v704
      %v2823 = vunpack.c.l.b16 %v705
      %v2824 = vunpack.c.h.b16 %v705
      %v2825 = vunpack.c.l.b16 %v706
      %v2826 = vunpack.c.h.b16 %v706
      %v2827 = vunpack.c.l.b16 %v707
      %v2828 = vunpack.c.h.b16 %v707
      %v2829 = vunpack.c.l.b16 %v708
      %v2830 = vunpack.c.h.b16 %v708
      %v2831 = vunpack.c.l.b16 %v709
      %v2832 = vunpack.c.h.b16 %v709
      %v2833 = vunpack.c.l.b16 %v710
      %v2834 = vunpack.c.h.b16 %v710
      %v2835 = vunpack.c.l.b16 %v711
      %v2836 = vunpack.c.h.b16 %v711
      %v2837 = vunpack.c.l.b16 %v712
      %v2838 = vunpack.c.h.b16 %v712
      %v2839 = vunpack.c.l.b16 %v713
      %v2840 = vunpack.c.h.b16 %v713
      %v2841 = vunpack.c.l.b16 %v714
      %v2842 = vunpack.c.h.b16 %v714
      %v2843 = vunpack.c.l.b16 %v715
      %v2844 = vunpack.c.h.b16 %v715
      %v2845 = vunpack.c.l.b16 %v716
      %v2846 = vunpack.c.h.b16 %v716
      %v2847 = vunpack.c.l.b16 %v717
      %v2848 = vunpack.c.h.b16 %v717
      %v2849 = vunpack.c.l.b16 %v718
      %v2850 = vunpack.c.h.b16 %v718
      %v2851 = vunpack.c.l.b16 %v719
      %v2852 = vunpack.c.h.b16 %v719
      %v2853 = vunpack.c.l.b16 %v720
      %v2854 = vunpack.c.h.b16 %v720
      %v2855 = vunpack.c.l.b16 %v721
      %v2856 = vunpack.c.h.b16 %v721
      %v2857 = vunpack.c.l.b16 %v722
      %v2858 = vunpack.c.h.b16 %v722
      %v2859 = vunpack.c.l.b16 %v723
      %v2860 = vunpack.c.h.b16 %v723
      %v2861 = vunpack.c.l.b16 %v724
      %v2862 = vunpack.c.h.b16 %v724
      %v2863 = vunpack.c.l.b16 %v725
      %v2864 = vunpack.c.h.b16 %v725
      %v2865 = vunpack.c.l.b16 %v726
      %v2866 = vunpack.c.h.b16 %v726
      %v2867 = vunpack.c.l.b16 %v727
      %v2868 = vunpack.c.h.b16 %v727
      %v2869 = vunpack.c.l.b16 %v728
      %v2870 = vunpack.c.h.b16 %v728
      %v2871 = vunpack.c.l.b16 %v729
      %v2872 = vunpack.c.h.b16 %v729
      %v2873 = vunpack.c.l.b16 %v730
      %v2874 = vunpack.c.h.b16 %v730
      %v2875 = vunpack.c.l.b16 %v731
      %v2876 = vunpack.c.h.b16 %v731
      %v2877 = vunpack.c.l.b16 %v732
      %v2878 = vunpack.c.h.b16 %v732
      %v2879 = vunpack.c.l.b16 %v733
      %v2880 = vunpack.c.h.b16 %v733
      %v2881 = vunpack.c.l.b16 %v734
      %v2882 = vunpack.c.h.b16 %v734
      %v2883 = vunpack.c.l.b16 %v735
      %v2884 = vunpack.c.h.b16 %v735
      %v2885 = vunpack.c.l.b16 %v736
      %v2886 = vunpack.c.h.b16 %v736
      %v2887 = vunpack.c.l.b16 %v737
      %v2888 = vunpack.c.h.b16 %v737
      %v2889 = vunpack.c.l.b16 %v738
      %v2890 = vunpack.c.h.b16 %v738
      %v2891 = vunpack.c.l.b16 %v739
      %v2892 = vunpack.c.h.b16 %v739
      %v2893 = vunpack.c.l.b16 %v740
      %v2894 = vunpack.c.h.b16 %v740
      %v2895 = vunpack.c.l.b16 %v741
      %v2896 = vunpack.c.h.b16 %v741
      %v2897 = vunpack.c.l.b16 %v742
      %v2898 = vunpack.c.h.b16 %v742
      %v2899 = vunpack.c.l.b16 %v743
      %v2900 = vunpack.c.h.b16 %v743
      %v2901 = vunpack.c.l.b16 %v744
      %v2902 = vunpack.c.h.b16 %v744
      %v2903 = vunpack.c.l.b16 %v745
      %v2904 = vunpack.c.h.b16 %v745
      %v2905 = vunpack.c.l.b16 %v746
      %v2906 = vunpack.c.h.b16 %v746
      %v2907 = vunpack.c.l.b16 %v747
      %v2908 = vunpack.c.h.b16 %v747
      %v2909 = vunpack.c.l.b16 %v748
      %v2910 = vunpack.c.h.b16 %v748
      %v2911 = vunpack.c.l.b16 %v749
      %v2912 = vunpack.c.h.b16 %v749
      %v2913 = vunpack.c.l.b16 %v750
      %v2914 = vunpack.c.h.b16 %v750
      %v2915 = vunpack.c.l.b16 %v751
      %v2916 = vunpack.c.h.b16 %v751
      %v2917 = vunpack.c.l.b16 %v752
      %v2918 = vunpack.c.h.b16 %v752
      %v2919 = vunpack.c.l.b16 %v753
      %v2920 = vunpack.c.h.b16 %v753
      %v2921 = vunpack.c.l.b16 %v754
      %v2922 = vunpack.c.h.b16 %v754
      %v2923 = vunpack.c.l.b16 %v755
      %v2924 = vunpack.c.h.b16 %v755
      %v2925 = vunpack.c.l.b16 %v756
      %v2926 = vunpack.c.h.b16 %v756
      %v2927 = vunpack.c.l.b16 %v757
      %v2928 = vunpack.c.h.b16 %v757
      %v2929 = vunpack.c.l.b16 %v758
      %v2930 = vunpack.c.h.b16 %v758
      %v2931 = vunpack.c.l.b16 %v759
      %v2932 = vunpack.c.h.b16 %v759
      %v2933 = vunpack.c.l.b16 %v760
      %v2934 = vunpack.c.h.b16 %v760
      %v2935 = vunpack.c.l.b16 %v761
      %v2936 = vunpack.c.h.b16 %v761
      %v2937 = vunpack.c.l.b16 %v762
      %v2938 = vunpack.c.h.b16 %v762
      %v2939 = vunpack.c.l.b16 %v763
      %v2940 = vunpack.c.h.b16 %v763
      %v2941 = vunpack.c.l.b16 %v764
      %v2942 = vunpack.c.h.b16 %v764
      %v2943 = vunpack.c.l.b16 %v765
      %v2944 = vunpack.c.h.b16 %v765
      %v2945 = vunpack.c.l.b16 %v766
      %v2946 = vunpack.c.h.b16 %v766
      %v2947 = vunpack.c.l.b16 %v767
      %v2948 = vunpack.c.h.b16 %v767
      %v2949 = vunpack.c.l.b16 %v768
      %v2950 = vunpack.c.h.b16 %v768
      %v2951 = vunpack.c.l.b16 %v769
      %v2952 = vunpack.c.h.b16 %v769
      %v2953 = vunpack.c.l.b16 %v770
      %v2954 = vunpack.c.h.b16 %v770
      %v2955 = vunpack.c.l.b16 %v771
      %v2956 = vunpack.c.h.b16 %v771
      %v2957 = vunpack.c.l.b16 %v772
      %v2958 = vunpack.c.h.b16 %v772
      %v2959 = vunpack.c.l.b16 %v773
      %v2960 = vunpack.c.h.b16 %v773
      %v2961 = vunpack.c.l.b16 %v774
      %v2962 = vunpack.c.h.b16 %v774
      %v2963 = vunpack.c.l.b16 %v775
      %v2964 = vunpack.c.h.b16 %v775
      %v2965 = vunpack.c.l.b16 %v776
      %v2966 = vunpack.c.h.b16 %v776
      %v2967 = vunpack.c.l.b16 %v777
      %v2968 = vunpack.c.h.b16 %v777
      %v2969 = vunpack.c.l.b16 %v778
      %v2970 = vunpack.c.h.b16 %v778
      %v2971 = vunpack.c.l.b16 %v779
      %v2972 = vunpack.c.h.b16 %v779
      %v2973 = vunpack.c.l.b16 %v780
      %v2974 = vunpack.c.h.b16 %v780
      %v2975 = vunpack.c.l.b16 %v781
      %v2976 = vunpack.c.h.b16 %v781
      %v2977 = vunpack.c.l.b16 %v782
      %v2978 = vunpack.c.h.b16 %v782
      %v2979 = vunpack.c.l.b16 %v783
      %v2980 = vunpack.c.h.b16 %v783
      %v2981 = vunpack.c.l.b16 %v784
      %v2982 = vunpack.c.h.b16 %v784
      %v2983 = vunpack.c.l.b16 %v785
      %v2984 = vunpack.c.h.b16 %v785
      %v2985 = vunpack.c.l.b16 %v786
      %v2986 = vunpack.c.h.b16 %v786
      %v2987 = vunpack.c.l.b16 %v787
      %v2988 = vunpack.c.h.b16 %v787
      %v2989 = vunpack.c.l.b16 %v788
      %v2990 = vunpack.c.h.b16 %v788
      %v2991 = vunpack.c.l.b16 %v789
      %v2992 = vunpack.c.h.b16 %v789
      %v2993 = vunpack.c.l.b16 %v790
      %v2994 = vunpack.c.h.b16 %v790
      %v2995 = vunpack.c.l.b16 %v791
      %v2996 = vunpack.c.h.b16 %v791
      %v2997 = vunpack.c.l.b16 %v792
      %v2998 = vunpack.c.h.b16 %v792
      %v2999 = vunpack.c.l.b16 %v793
      %v3000 = vunpack.c.h.b16 %v793
      %v3001 = vunpack.c.l.b16 %v794
      %v3002 = vunpack.c.h.b16 %v794
      %v3003 = vunpack.c.l.b16 %v795
      %v3004 = vunpack.c.h.b16 %v795
      %v3005 = vunpack.c.l.b16 %v796
      %v3006 = vunpack.c.h.b16 %v796
      %v3007 = vunpack.c.l.b16 %v797
      %v3008 = vunpack.c.h.b16 %v797
      %v3009 = vunpack.c.l.b16 %v798
      %v3010 = vunpack.c.h.b16 %v798
      %v3011 = vunpack.c.l.b16 %v799
      %v3012 = vunpack.c.h.b16 %v799
      %v3013 = vunpack.c.l.b16 %v800
      %v3014 = vunpack.c.h.b16 %v800
      %v3015 = vunpack.c.l.b16 %v801
      %v3016 = vunpack.c.h.b16 %v801
      %v3017 = vunpack.c.l.b16 %v802
      %v3018 = vunpack.c.h.b16 %v802
      %v3019 = vunpack.c.l.b16 %v803
      %v3020 = vunpack.c.h.b16 %v803
      %v3021 = vunpack.c.l.b16 %v804
      %v3022 = vunpack.c.h.b16 %v804
      %v3023 = vunpack.c.l.b16 %v805
      %v3024 = vunpack.c.h.b16 %v805
      %v3025 = vunpack.c.l.b16 %v806
      %v3026 = vunpack.c.h.b16 %v806
      %v3027 = vunpack.c.l.b16 %v807
      %v3028 = vunpack.c.h.b16 %v807
      %v3029 = vunpack.c.l.b16 %v808
      %v3030 = vunpack.c.h.b16 %v808
      %v3031 = vunpack.c.l.b16 %v809
      %v3032 = vunpack.c.h.b16 %v809
      %v3033 = vunpack.c.l.b16 %v810
      %v3034 = vunpack.c.h.b16 %v810
      %v3035 = vunpack.c.l.b16 %v811
      %v3036 = vunpack.c.h.b16 %v811
      %v3037 = vunpack.c.l.b16 %v812
      %v3038 = vunpack.c.h.b16 %v812
      %v3039 = vunpack.c.l.b16 %v813
      %v3040 = vunpack.c.h.b16 %v813
      %v3041 = vunpack.c.l.b16 %v814
      %v3042 = vunpack.c.h.b16 %v814
      %v3043 = vunpack.c.l.b16 %v815
      %v3044 = vunpack.c.h.b16 %v815
      %v3045 = vunpack.c.l.b16 %v816
      %v3046 = vunpack.c.h.b16 %v816
      %v3047 = vunpack.c.l.b16 %v817
      %v3048 = vunpack.c.h.b16 %v817
      %v3049 = vunpack.c.l.b16 %v818
      %v3050 = vunpack.c.h.b16 %v818
      %v3051 = vunpack.c.l.b16 %v819
      %v3052 = vunpack.c.h.b16 %v819
      %v3053 = vunpack.c.l.b16 %v820
      %v3054 = vunpack.c.h.b16 %v820
      %v3055 = vunpack.c.l.b16 %v821
      %v3056 = vunpack.c.h.b16 %v821
      %v3057 = vunpack.c.l.b16 %v822
      %v3058 = vunpack.c.h.b16 %v822
      %v3059 = vunpack.c.l.b16 %v823
      %v3060 = vunpack.c.h.b16 %v823
      %v3061 = vunpack.c.l.b16 %v824
      %v3062 = vunpack.c.h.b16 %v824
      %v3063 = vunpack.c.l.b16 %v825
      %v3064 = vunpack.c.h.b16 %v825
      %v3065 = vunpack.c.l.b16 %v826
      %v3066 = vunpack.c.h.b16 %v826
      %v3067 = vunpack.c.l.b16 %v827
      %v3068 = vunpack.c.h.b16 %v827
      %v3069 = vunpack.c.l.b16 %v828
      %v3070 = vunpack.c.h.b16 %v828
      %v3071 = vunpack.c.l.b16 %v829
      %v3072 = vunpack.c.h.b16 %v829
      %v3073 = vunpack.c.l.b16 %v830
      %v3074 = vunpack.c.h.b16 %v830
      %v3075 = vunpack.c.l.b16 %v831
      %v3076 = vunpack.c.h.b16 %v831
      %v3077 = vunpack.c.l.b16 %v832
      %v3078 = vunpack.c.h.b16 %v832
      %v3079 = vunpack.c.l.b16 %v833
      %v3080 = vunpack.c.h.b16 %v833
      %v3081 = vunpack.c.l.b16 %v834
      %v3082 = vunpack.c.h.b16 %v834
      %v3083 = vunpack.c.l.b16 %v835
      %v3084 = vunpack.c.h.b16 %v835
      %v3085 = vunpack.c.l.b16 %v836
      %v3086 = vunpack.c.h.b16 %v836
      %v3087 = vunpack.c.l.b16 %v837
      %v3088 = vunpack.c.h.b16 %v837
      %v3089 = vunpack.c.l.b16 %v838
      %v3090 = vunpack.c.h.b16 %v838
      %v3091 = vunpack.c.l.b16 %v839
      %v3092 = vunpack.c.h.b16 %v839
      %v3093 = vunpack.c.l.b16 %v840
      %v3094 = vunpack.c.h.b16 %v840
      %v3095 = vunpack.c.l.b16 %v841
      %v3096 = vunpack.c.h.b16 %v841
      %v3097 = vunpack.c.l.b16 %v842
      %v3098 = vunpack.c.h.b16 %v842
      %v3099 = vunpack.c.l.b16 %v843
      %v3100 = vunpack.c.h.b16 %v843
      %v3101 = vunpack.c.l.b16 %v844
      %v3102 = vunpack.c.h.b16 %v844
      %v3103 = vunpack.c.l.b16 %v845
      %v3104 = vunpack.c.h.b16 %v845
      %v3105 = vunpack.c.l.b16 %v846
      %v3106 = vunpack.c.h.b16 %v846
      %v3107 = vunpack.c.l.b16 %v847
      %v3108 = vunpack.c.h.b16 %v847
      %v3109 = vunpack.c.l.b16 %v848
      %v3110 = vunpack.c.h.b16 %v848
      %v3111 = vunpack.c.l.b16 %v849
      %v3112 = vunpack.c.h.b16 %v849
      %v3113 = vunpack.c.l.b16 %v850
      %v3114 = vunpack.c.h.b16 %v850
      %v3115 = vunpack.c.l.b16 %v851
      %v3116 = vunpack.c.h.b16 %v851
      %v3117 = vunpack.c.l.b16 %v852
      %v3118 = vunpack.c.h.b16 %v852
      %v3119 = vunpack.c.l.b16 %v853
      %v3120 = vunpack.c.h.b16 %v853
      %v3121 = vunpack.c.l.b16 %v854
      %v3122 = vunpack.c.h.b16 %v854
      %v3123 = vunpack.c.l.b16 %v855
      %v3124 = vunpack.c.h.b16 %v855
      %v3125 = vunpack.c.l.b16 %v856
      %v3126 = vunpack.c.h.b16 %v856
      %v3127 = vunpack.c.l.b16 %v857
      %v3128 = vunpack.c.h.b16 %v857
      %v3129 = vunpack.c.l.b16 %v858
      %v3130 = vunpack.c.h.b16 %v858
      %v3131 = vunpack.c.l.b16 %v859
      %v3132 = vunpack.c.h.b16 %v859
      %v3133 = vunpack.c.l.b16 %v860
      %v3134 = vunpack.c.h.b16 %v860
      %v3135 = vunpack.c.l.b16 %v861
      %v3136 = vunpack.c.h.b16 %v861
      %v3137 = vunpack.c.l.b16 %v862
      %v3138 = vunpack.c.h.b16 %v862
      %v3139 = vunpack.c.l.b16 %v863
      %v3140 = vunpack.c.h.b16 %v863
      %v3141 = vunpack.c.l.b16 %v864
      %v3142 = vunpack.c.h.b16 %v864
      %v3143 = vunpack.c.l.b16 %v865
      %v3144 = vunpack.c.h.b16 %v865
      %v3145 = vunpack.c.l.b16 %v866
      %v3146 = vunpack.c.h.b16 %v866
      %v3147 = vunpack.c.l.b16 %v867
      %v3148 = vunpack.c.h.b16 %v867
      %v3149 = vunpack.c.l.b16 %v868
      %v3150 = vunpack.c.h.b16 %v868
      %v3151 = vunpack.c.l.b16 %v869
      %v3152 = vunpack.c.h.b16 %v869
      %v3153 = vunpack.c.l.b16 %v870
      %v3154 = vunpack.c.h.b16 %v870
      %v3155 = vunpack.c.l.b16 %v871
      %v3156 = vunpack.c.h.b16 %v871
      %v3157 = vunpack.c.l.b16 %v872
      %v3158 = vunpack.c.h.b16 %v872
      %v3159 = vunpack.c.l.b16 %v873
      %v3160 = vunpack.c.h.b16 %v873
      %v3161 = vunpack.c.l.b16 %v874
      %v3162 = vunpack.c.h.b16 %v874
      %v3163 = vunpack.c.l.b16 %v875
      %v3164 = vunpack.c.h.b16 %v875
      %v3165 = vunpack.c.l.b16 %v876
      %v3166 = vunpack.c.h.b16 %v876
      %v3167 = vunpack.c.l.b16 %v877
      %v3168 = vunpack.c.h.b16 %v877
      %v3169 = vunpack.c.l.b16 %v878
      %v3170 = vunpack.c.h.b16 %v878
      %v3171 = vunpack.c.l.b16 %v879
      %v3172 = vunpack.c.h.b16 %v879
      %v3173 = vunpack.c.l.b16 %v880
      %v3174 = vunpack.c.h.b16 %v880
      %v3175 = vunpack.c.l.b16 %v881
      %v3176 = vunpack.c.h.b16 %v881
      %v3177 = vunpack.c.l.b16 %v882
      %v3178 = vunpack.c.h.b16 %v882
      %v3179 = vunpack.c.l.b16 %v883
      %v3180 = vunpack.c.h.b16 %v883
      %v3181 = vunpack.c.l.b16 %v884
      %v3182 = vunpack.c.h.b16 %v884
      %v3183 = vunpack.c.l.b16 %v885
      %v3184 = vunpack.c.h.b16 %v885
      %v3185 = vunpack.c.l.b16 %v886
      %v3186 = vunpack.c.h.b16 %v886
      %v3187 = vunpack.c.l.b16 %v887
      %v3188 = vunpack.c.h.b16 %v887
      %v3189 = vunpack.c.l.b16 %v888
      %v3190 = vunpack.c.h.b16 %v888
      %v3191 = vunpack.c.l.b16 %v889
      %v3192 = vunpack.c.h.b16 %v889
      %v3193 = vunpack.c.l.b16 %v890
      %v3194 = vunpack.c.h.b16 %v890
      %v3195 = vunpack.c.l.b16 %v891
      %v3196 = vunpack.c.h.b16 %v891
      %v3197 = vunpack.c.l.b16 %v892
      %v3198 = vunpack.c.h.b16 %v892
      %v3199 = vunpack.c.l.b16 %v893
      %v3200 = vunpack.c.h.b16 %v893
      %v3201 = vunpack.c.l.b16 %v894
      %v3202 = vunpack.c.h.b16 %v894
      %v3203 = vunpack.c.l.b16 %v895
      %v3204 = vunpack.c.h.b16 %v895
      %v3205 = vunpack.c.l.b16 %v896
      %v3206 = vunpack.c.h.b16 %v896
      %v3207 = vunpack.c.l.b16 %v897
      %v3208 = vunpack.c.h.b16 %v897
      %v3209 = vunpack.c.l.b16 %v898
      %v3210 = vunpack.c.h.b16 %v898
      %v3211 = vunpack.c.l.b16 %v899
      %v3212 = vunpack.c.h.b16 %v899
      %v3213 = vunpack.c.l.b16 %v900
      %v3214 = vunpack.c.h.b16 %v900
      %v3215 = vunpack.c.l.b16 %v901
      %v3216 = vunpack.c.h.b16 %v901
      %v3217 = vunpack.c.l.b16 %v902
      %v3218 = vunpack.c.h.b16 %v902
      %v3219 = vunpack.c.l.b16 %v903
      %v3220 = vunpack.c.h.b16 %v903
      %v3221 = vunpack.c.l.b16 %v904
      %v3222 = vunpack.c.h.b16 %v904
      %v3223 = vunpack.c.l.b16 %v905
      %v3224 = vunpack.c.h.b16 %v905
      %v3225 = vunpack.c.l.b16 %v906
      %v3226 = vunpack.c.h.b16 %v906
      %v3227 = vunpack.c.l.b16 %v907
      %v3228 = vunpack.c.h.b16 %v907
      %v3229 = vunpack.c.l.b16 %v908
      %v3230 = vunpack.c.h.b16 %v908
      %v3231 = vunpack.c.l.b16 %v909
      %v3232 = vunpack.c.h.b16 %v909
      %v3233 = vunpack.c.l.b16 %v910
      %v3234 = vunpack.c.h.b16 %v910
      %v3235 = vunpack.c.l.b16 %v911
      %v3236 = vunpack.c.h.b16 %v911
      %v3237 = vunpack.c.l.b16 %v912
      %v3238 = vunpack.c.h.b16 %v912
      %v3239 = vunpack.c.l.b16 %v913
      %v3240 = vunpack.c.h.b16 %v913
      %v3241 = vunpack.c.l.b16 %v914
      %v3242 = vunpack.c.h.b16 %v914
      %v3243 = vunpack.c.l.b16 %v915
      %v3244 = vunpack.c.h.b16 %v915
      %v3245 = vunpack.c.l.b16 %v916
      %v3246 = vunpack.c.h.b16 %v916
      %v3247 = vunpack.c.l.b16 %v917
      %v3248 = vunpack.c.h.b16 %v917
      %v3249 = vunpack.c.l.b16 %v918
      %v3250 = vunpack.c.h.b16 %v918
      %v3251 = vunpack.c.l.b16 %v919
      %v3252 = vunpack.c.h.b16 %v919
      %v3253 = vunpack.c.l.b16 %v920
      %v3254 = vunpack.c.h.b16 %v920
      %v3255 = vunpack.c.l.b16 %v921
      %v3256 = vunpack.c.h.b16 %v921
      %v3257 = vunpack.c.l.b16 %v922
      %v3258 = vunpack.c.h.b16 %v922
      %v3259 = vunpack.c.l.b16 %v923
      %v3260 = vunpack.c.h.b16 %v923
      %v3261 = vunpack.c.l.b16 %v924
      %v3262 = vunpack.c.h.b16 %v924
      %v3263 = vunpack.c.l.b16 %v925
      %v3264 = vunpack.c.h.b16 %v925
      %v3265 = vunpack.c.l.b16 %v926
      %v3266 = vunpack.c.h.b16 %v926
      %v3267 = vunpack.c.l.b16 %v927
      %v3268 = vunpack.c.h.b16 %v927
      %v3269 = vunpack.c.l.b16 %v928
      %v3270 = vunpack.c.h.b16 %v928
      %v3271 = vunpack.c.l.b16 %v929
      %v3272 = vunpack.c.h.b16 %v929
      %v3273 = vunpack.c.l.b16 %v930
      %v3274 = vunpack.c.h.b16 %v930
      %v3275 = vunpack.c.l.b16 %v931
      %v3276 = vunpack.c.h.b16 %v931
      %v3277 = vunpack.c.l.b16 %v932
      %v3278 = vunpack.c.h.b16 %v932
      %v3279 = vunpack.c.l.b16 %v933
      %v3280 = vunpack.c.h.b16 %v933
      %v3281 = vunpack.c.l.b16 %v934
      %v3282 = vunpack.c.h.b16 %v934
      %v3283 = vunpack.c.l.b16 %v935
      %v3284 = vunpack.c.h.b16 %v935
      %v3285 = vunpack.c.l.b16 %v936
      %v3286 = vunpack.c.h.b16 %v936
      %v3287 = vunpack.c.l.b16 %v937
      %v3288 = vunpack.c.h.b16 %v937
      %v3289 = vunpack.c.l.b16 %v938
      %v3290 = vunpack.c.h.b16 %v938
      %v3291 = vunpack.c.l.b16 %v939
      %v3292 = vunpack.c.h.b16 %v939
      %v3293 = vunpack.c.l.b16 %v940
      %v3294 = vunpack.c.h.b16 %v940
      %v3295 = vunpack.c.l.b16 %v941
      %v3296 = vunpack.c.h.b16 %v941
      %v3297 = vunpack.c.l.b16 %v942
      %v3298 = vunpack.c.h.b16 %v942
      %v3299 = vunpack.c.l.b16 %v943
      %v3300 = vunpack.c.h.b16 %v943
      %v3301 = vunpack.c.l.b16 %v944
      %v3302 = vunpack.c.h.b16 %v944
      %v3303 = vunpack.c.l.b16 %v945
      %v3304 = vunpack.c.h.b16 %v945
      %v3305 = vunpack.c.l.b16 %v946
      %v3306 = vunpack.c.h.b16 %v946
      %v3307 = vunpack.c.l.b16 %v947
      %v3308 = vunpack.c.h.b16 %v947
      %v3309 = vunpack.c.l.b16 %v948
      %v3310 = vunpack.c.h.b16 %v948
      %v3311 = vunpack.c.l.b16 %v949
      %v3312 = vunpack.c.h.b16 %v949
      %v3313 = vunpack.c.l.b16 %v950
      %v3314 = vunpack.c.h.b16 %v950
      %v3315 = vunpack.c.l.b16 %v951
      %v3316 = vunpack.c.h.b16 %v951
      %v3317 = vunpack.c.l.b16 %v952
      %v3318 = vunpack.c.h.b16 %v952
      %v3319 = vunpack.c.l.b16 %v953
      %v3320 = vunpack.c.h.b16 %v953
      %v3321 = vunpack.c.l.b16 %v954
      %v3322 = vunpack.c.h.b16 %v954
      %v3323 = vunpack.c.l.b16 %v955
      %v3324 = vunpack.c.h.b16 %v955
      %v3325 = vunpack.c.l.b16 %v956
      %v3326 = vunpack.c.h.b16 %v956
      %v3327 = vunpack.c.l.b16 %v957
      %v3328 = vunpack.c.h.b16 %v957
      %v3329 = vunpack.c.l.b16 %v958
      %v3330 = vunpack.c.h.b16 %v958
      %v3331 = vunpack.c.l.b16 %v959
      %v3332 = vunpack.c.h.b16 %v959
      %v3333 = vunpack.c.l.b16 %v960
      %v3334 = vunpack.c.h.b16 %v960
      %v3335 = vunpack.c.l.b16 %v961
      %v3336 = vunpack.c.h.b16 %v961
      %v3337 = vunpack.c.l.b16 %v962
      %v3338 = vunpack.c.h.b16 %v962
      %v3339 = vunpack.c.l.b16 %v963
      %v3340 = vunpack.c.h.b16 %v963
      %v3341 = vunpack.c.l.b16 %v964
      %v3342 = vunpack.c.h.b16 %v964
      %v3343 = vunpack.c.l.b16 %v965
      %v3344 = vunpack.c.h.b16 %v965
      %v3345 = vunpack.c.l.b16 %v966
      %v3346 = vunpack.c.h.b16 %v966
      %v3347 = vunpack.c.l.b16 %v967
      %v3348 = vunpack.c.h.b16 %v967
      %v3349 = vunpack.c.l.b16 %v968
      %v3350 = vunpack.c.h.b16 %v968
      %v3351 = vunpack.c.l.b16 %v969
      %v3352 = vunpack.c.h.b16 %v969
      %v3353 = vunpack.c.l.b16 %v970
      %v3354 = vunpack.c.h.b16 %v970
      %v3355 = vunpack.c.l.b16 %v971
      %v3356 = vunpack.c.h.b16 %v971
      %v3357 = vunpack.c.l.b16 %v972
      %v3358 = vunpack.c.h.b16 %v972
      %v3359 = vunpack.c.l.b16 %v973
      %v3360 = vunpack.c.h.b16 %v973
      %v3361 = vunpack.c.l.b16 %v974
      %v3362 = vunpack.c.h.b16 %v974
      %v3363 = vunpack.c.l.b16 %v975
      %v3364 = vunpack.c.h.b16 %v975
      %v3365 = vunpack.c.l.b16 %v976
      %v3366 = vunpack.c.h.b16 %v976
      %v3367 = vunpack.c.l.b16 %v977
      %v3368 = vunpack.c.h.b16 %v977
      %v3369 = vunpack.c.l.b16 %v978
      %v3370 = vunpack.c.h.b16 %v978
      %v3371 = vunpack.c.l.b16 %v979
      %v3372 = vunpack.c.h.b16 %v979
      %v3373 = vunpack.c.l.b16 %v980
      %v3374 = vunpack.c.h.b16 %v980
      %v3375 = vunpack.c.l.b16 %v981
      %v3376 = vunpack.c.h.b16 %v981
      %v3377 = vunpack.c.l.b16 %v982
      %v3378 = vunpack.c.h.b16 %v982
      %v3379 = vunpack.c.l.b16 %v983
      %v3380 = vunpack.c.h.b16 %v983
      %v3381 = vunpack.c.l.b16 %v984
      %v3382 = vunpack.c.h.b16 %v984
      %v3383 = vunpack.c.l.b16 %v985
      %v3384 = vunpack.c.h.b16 %v985
      %v3385 = vunpack.c.l.b16 %v986
      %v3386 = vunpack.c.h.b16 %v986
      %v3387 = vunpack.c.l.b16 %v987
      %v3388 = vunpack.c.h.b16 %v987
      %v3389 = vunpack.c.l.b16 %v988
      %v3390 = vunpack.c.h.b16 %v988
      %v3391 = vunpack.c.l.b16 %v989
      %v3392 = vunpack.c.h.b16 %v989
      %v3393 = vunpack.c.l.b16 %v990
      %v3394 = vunpack.c.h.b16 %v990
      %v3395 = vunpack.c.l.b16 %v991
      %v3396 = vunpack.c.h.b16 %v991
      %v3397 = vunpack.c.l.b16 %v992
      %v3398 = vunpack.c.h.b16 %v992
      %v3399 = vunpack.c.l.b16 %v993
      %v3400 = vunpack.c.h.b16 %v993
      %v3401 = vunpack.c.l.b16 %v994
      %v3402 = vunpack.c.h.b16 %v994
      %v3403 = vunpack.c.l.b16 %v995
      %v3404 = vunpack.c.h.b16 %v995
      %v3405 = vunpack.c.l.b16 %v996
      %v3406 = vunpack.c.h.b16 %v996
      %v3407 = vunpack.c.l.b16 %v997
      %v3408 = vunpack.c.h.b16 %v997
      %v3409 = vunpack.c.l.b16 %v998
      %v3410 = vunpack.c.h.b16 %v998
      %v3411 = vunpack.c.l.b16 %v999
      %v3412 = vunpack.c.h.b16 %v999
      %v3413 = vunpack.c.l.b16 %v1000
      %v3414 = vunpack.c.h.b16 %v1000
      %v3415 = vunpack.c.l.b16 %v1001
      %v3416 = vunpack.c.h.b16 %v1001
      %v3417 = vunpack.c.l.b16 %v1002
      %v3418 = vunpack.c.h.b16 %v1002
      %v3419 = vunpack.c.l.b16 %v1003
      %v3420 = vunpack.c.h.b16 %v1003
      %v3421 = vunpack.c.l.b16 %v1004
      %v3422 = vunpack.c.h.b16 %v1004
      %v3423 = vunpack.c.l.b16 %v1005
      %v3424 = vunpack.c.h.b16 %v1005
      %v3425 = vunpack.c.l.b16 %v1006
      %v3426 = vunpack.c.h.b16 %v1006
      %v3427 = vunpack.c.l.b16 %v1007
      %v3428 = vunpack.c.h.b16 %v1007
      %v3429 = vunpack.c.l.b16 %v1008
      %v3430 = vunpack.c.h.b16 %v1008
      %v3431 = vunpack.c.l.b16 %v1009
      %v3432 = vunpack.c.h.b16 %v1009
      %v3433 = vunpack.c.l.b16 %v1010
      %v3434 = vunpack.c.h.b16 %v1010
      %v3435 = vunpack.c.l.b16 %v1011
      %v3436 = vunpack.c.h.b16 %v1011
      %v3437 = vunpack.c.l.b16 %v1012
      %v3438 = vunpack.c.h.b16 %v1012
      %v3439 = vunpack.c.l.b16 %v1013
      %v3440 = vunpack.c.h.b16 %v1013
      %v3441 = vunpack.c.l.b16 %v1014
      %v3442 = vunpack.c.h.b16 %v1014
      %v3443 = vunpack.c.l.b16 %v1015
      %v3444 = vunpack.c.h.b16 %v1015
      %v3445 = vunpack.c.l.b16 %v1016
      %v3446 = vunpack.c.h.b16 %v1016
      %v3447 = vunpack.c.l.b16 %v1017
      %v3448 = vunpack.c.h.b16 %v1017
      %v3449 = vunpack.c.l.b16 %v1018
      %v3450 = vunpack.c.h.b16 %v1018
      %v3451 = vunpack.c.l.b16 %v1019
      %v3452 = vunpack.c.h.b16 %v1019
      %v3453 = vunpack.c.l.b16 %v1020
      %v3454 = vunpack.c.h.b16 %v1020
      %v3455 = vunpack.c.l.b16 %v1021
      %v3456 = vunpack.c.h.b16 %v1021
      %v3457 = vunpack.c.l.b16 %v1022
      %v3458 = vunpack.c.h.b16 %v1022
      %v3459 = vunpack.c.l.b16 %v1023
      %v3460 = vunpack.c.h.b16 %v1023
      %v3461 = vunpack.c.l.b16 %v1024
      %v3462 = vunpack.c.h.b16 %v1024
      %v3463 = vunpack.c.l.b16 %v1025
      %v3464 = vunpack.c.h.b16 %v1025
      %v3465 = vunpack.c.l.b16 %v1026
      %v3466 = vunpack.c.h.b16 %v1026
      %v3467 = vunpack.c.l.b16 %v1027
      %v3468 = vunpack.c.h.b16 %v1027
      %v3469 = vunpack.c.l.b16 %v1028
      %v3470 = vunpack.c.h.b16 %v1028
      %v3471 = vunpack.c.l.b16 %v1029
      %v3472 = vunpack.c.h.b16 %v1029
      %v3473 = vunpack.c.l.b16 %v1030
      %v3474 = vunpack.c.h.b16 %v1030
      %v3475 = vunpack.c.l.b16 %v1031
      %v3476 = vunpack.c.h.b16 %v1031
      %v3477 = vunpack.c.l.b16 %v1032
      %v3478 = vunpack.c.h.b16 %v1032
      %v3479 = vunpack.c.l.b16 %v1033
      %v3480 = vunpack.c.h.b16 %v1033
      %v3481 = vunpack.c.l.b16 %v1034
      %v3482 = vunpack.c.h.b16 %v1034
      %v3483 = vunpack.c.l.b16 %v1035
      %v3484 = vunpack.c.h.b16 %v1035
      %v3485 = vunpack.c.l.b16 %v1036
      %v3486 = vunpack.c.h.b16 %v1036
      %v3487 = vunpack.c.l.b16 %v1037
      %v3488 = vunpack.c.h.b16 %v1037
      %v3489 = vunpack.c.l.b16 %v1038
      %v3490 = vunpack.c.h.b16 %v1038
      %v3491 = vunpack.c.l.b16 %v1039
      %v3492 = vunpack.c.h.b16 %v1039
      %v3493 = vunpack.c.l.b16 %v1040
      %v3494 = vunpack.c.h.b16 %v1040
      %v3495 = vunpack.c.l.b16 %v1041
      %v3496 = vunpack.c.h.b16 %v1041
      %v3497 = vunpack.c.l.b16 %v1042
      %v3498 = vunpack.c.h.b16 %v1042
      %v3499 = vunpack.c.l.b16 %v1043
      %v3500 = vunpack.c.h.b16 %v1043
      %v3501 = vunpack.c.l.b16 %v1044
      %v3502 = vunpack.c.h.b16 %v1044
      %v3503 = vunpack.c.l.b16 %v1045
      %v3504 = vunpack.c.h.b16 %v1045
      %v3505 = vunpack.c.l.b16 %v1046
      %v3506 = vunpack.c.h.b16 %v1046
      %v3507 = vunpack.c.l.b16 %v1047
      %v3508 = vunpack.c.h.b16 %v1047
      %v3509 = vunpack.c.l.b16 %v1048
      %v3510 = vunpack.c.h.b16 %v1048
      %v3511 = vunpack.c.l.b16 %v1049
      %v3512 = vunpack.c.h.b16 %v1049
      %v3513 = vunpack.c.l.b16 %v1050
      %v3514 = vunpack.c.h.b16 %v1050
      %v3515 = vunpack.c.l.b16 %v1051
      %v3516 = vunpack.c.h.b16 %v1051
      %v3517 = vunpack.c.l.b16 %v1052
      %v3518 = vunpack.c.h.b16 %v1052
      %v3519 = vunpack.c.l.b16 %v1053
      %v3520 = vunpack.c.h.b16 %v1053
      %v3521 = vunpack.c.l.b16 %v1054
      %v3522 = vunpack.c.h.b16 %v1054
      %v3523 = vunpack.c.l.b16 %v1055
      %v3524 = vunpack.c.h.b16 %v1055
      %v3525 = vunpack.c.l.b16 %v1056
      %v3526 = vunpack.c.h.b16 %v1056
      %v3527 = vunpack.c.l.b16 %v1057
      %v3528 = vunpack.c.h.b16 %v1057
      %v3529 = vunpack.c.l.b16 %v1058
      %v3530 = vunpack.c.h.b16 %v1058
      %v3531 = vunpack.c.l.b16 %v1059
      %v3532 = vunpack.c.h.b16 %v1059
      %v3533 = vunpack.c.l.b16 %v1060
      %v3534 = vunpack.c.h.b16 %v1060
      %v3535 = vunpack.c.l.b16 %v1061
      %v3536 = vunpack.c.h.b16 %v1061
      %v3537 = vunpack.c.l.b16 %v1062
      %v3538 = vunpack.c.h.b16 %v1062
      %v3539 = vunpack.c.l.b16 %v1063
      %v3540 = vunpack.c.h.b16 %v1063
      %v3541 = vunpack.c.l.b16 %v1064
      %v3542 = vunpack.c.h.b16 %v1064
      %v3543 = vunpack.c.l.b16 %v1065
      %v3544 = vunpack.c.h.b16 %v1065
      %v3545 = vunpack.c.l.b16 %v1066
      %v3546 = vunpack.c.h.b16 %v1066
      %v3547 = vunpack.c.l.b16 %v1067
      %v3548 = vunpack.c.h.b16 %v1067
      %v3549 = vunpack.c.l.b16 %v1068
      %v3550 = vunpack.c.h.b16 %v1068
      %v3551 = vunpack.c.l.b16 %v1069
      %v3552 = vunpack.c.h.b16 %v1069
      %v3553 = vunpack.c.l.b16 %v1070
      %v3554 = vunpack.c.h.b16 %v1070
      %v3555 = vunpack.c.l.b16 %v1071
      %v3556 = vunpack.c.h.b16 %v1071
      %v3557 = vunpack.c.l.b16 %v1072
      %v3558 = vunpack.c.h.b16 %v1072
      %v3559 = vunpack.c.l.b16 %v1073
      %v3560 = vunpack.c.h.b16 %v1073
      %v3561 = vunpack.c.l.b16 %v1074
      %v3562 = vunpack.c.h.b16 %v1074
      %v3563 = vunpack.c.l.b16 %v1075
      %v3564 = vunpack.c.h.b16 %v1075
      %v3565 = vunpack.c.l.b16 %v1076
      %v3566 = vunpack.c.h.b16 %v1076
      %v3567 = vunpack.c.l.b16 %v1077
      %v3568 = vunpack.c.h.b16 %v1077
      %v3569 = vunpack.c.l.b16 %v1078
      %v3570 = vunpack.c.h.b16 %v1078
      %v3571 = vunpack.c.l.b16 %v1079
      %v3572 = vunpack.c.h.b16 %v1079
      %v3573 = vunpack.c.l.b16 %v1080
      %v3574 = vunpack.c.h.b16 %v1080
      %v3575 = vunpack.c.l.b16 %v1081
      %v3576 = vunpack.c.h.b16 %v1081
      %v3577 = vunpack.c.l.b16 %v1082
      %v3578 = vunpack.c.h.b16 %v1082
      %v3579 = vunpack.c.l.b16 %v1083
      %v3580 = vunpack.c.h.b16 %v1083
      %v3581 = vunpack.c.l.b16 %v1084
      %v3582 = vunpack.c.h.b16 %v1084
      %v3583 = vunpack.c.l.b16 %v1085
      %v3584 = vunpack.c.h.b16 %v1085
      %v3585 = vunpack.c.l.b16 %v1086
      %v3586 = vunpack.c.h.b16 %v1086
      %v3587 = vunpack.c.l.b16 %v1087
      %v3588 = vunpack.c.h.b16 %v1087
      %v3589 = vunpack.c.l.b16 %v1088
      %v3590 = vunpack.c.h.b16 %v1088
      %v3591 = vunpack.c.l.b16 %v1089
      %v3592 = vunpack.c.h.b16 %v1089
      %v3593 = vunpack.c.l.b16 %v1090
      %v3594 = vunpack.c.h.b16 %v1090
      %v3595 = vunpack.c.l.b16 %v1091
      %v3596 = vunpack.c.h.b16 %v1091
      %v3597 = vunpack.c.l.b16 %v1092
      %v3598 = vunpack.c.h.b16 %v1092
      %v3599 = vunpack.c.l.b16 %v1093
      %v3600 = vunpack.c.h.b16 %v1093
      %v3601 = vunpack.c.l.b16 %v1094
      %v3602 = vunpack.c.h.b16 %v1094
      %v3603 = vunpack.c.l.b16 %v1095
      %v3604 = vunpack.c.h.b16 %v1095
      %v3605 = vunpack.c.l.b16 %v1096
      %v3606 = vunpack.c.h.b16 %v1096
      %v3607 = vunpack.c.l.b16 %v1097
      %v3608 = vunpack.c.h.b16 %v1097
      %v3609 = vunpack.c.l.b16 %v1098
      %v3610 = vunpack.c.h.b16 %v1098
      %v3611 = vunpack.c.l.b16 %v1099
      %v3612 = vunpack.c.h.b16 %v1099
      %v3613 = vunpack.c.l.b16 %v1100
      %v3614 = vunpack.c.h.b16 %v1100
      %v3615 = vunpack.c.l.b16 %v1101
      %v3616 = vunpack.c.h.b16 %v1101
      %v3617 = vunpack.c.l.b16 %v1102
      %v3618 = vunpack.c.h.b16 %v1102
      %v3619 = vunpack.c.l.b16 %v1103
      %v3620 = vunpack.c.h.b16 %v1103
      %v3621 = vunpack.c.l.b16 %v1104
      %v3622 = vunpack.c.h.b16 %v1104
      %v3623 = vunpack.c.l.b16 %v1105
      %v3624 = vunpack.c.h.b16 %v1105
      %v3625 = vunpack.c.l.b16 %v1106
      %v3626 = vunpack.c.h.b16 %v1106
      %v3627 = vunpack.c.l.b16 %v1107
      %v3628 = vunpack.c.h.b16 %v1107
      %v3629 = vunpack.c.l.b16 %v1108
      %v3630 = vunpack.c.h.b16 %v1108
      %v3631 = vunpack.c.l.b16 %v1109
      %v3632 = vunpack.c.h.b16 %v1109
      %v3633 = vunpack.c.l.b16 %v1110
      %v3634 = vunpack.c.h.b16 %v1110
      %v3635 = vunpack.c.l.b16 %v1111
      %v3636 = vunpack.c.h.b16 %v1111
      %v3637 = vunpack.c.l.b16 %v1112
      %v3638 = vunpack.c.h.b16 %v1112
      %v3639 = vunpack.c.l.b16 %v1113
      %v3640 = vunpack.c.h.b16 %v1113
      %v3641 = vunpack.c.l.b16 %v1114
      %v3642 = vunpack.c.h.b16 %v1114
      %v3643 = vunpack.c.l.b16 %v1115
      %v3644 = vunpack.c.h.b16 %v1115
      %v3645 = vunpack.c.l.b16 %v1116
      %v3646 = vunpack.c.h.b16 %v1116
      %v3647 = vunpack.c.l.b16 %v1117
      %v3648 = vunpack.c.h.b16 %v1117
      %v3649 = vunpack.c.l.b16 %v1118
      %v3650 = vunpack.c.h.b16 %v1118
      %v3651 = vunpack.c.l.b16 %v1119
      %v3652 = vunpack.c.h.b16 %v1119
      %v3653 = vunpack.c.l.b16 %v1120
      %v3654 = vunpack.c.h.b16 %v1120
      %v3655 = vunpack.c.l.b16 %v1121
      %v3656 = vunpack.c.h.b16 %v1121
      %v3657 = vunpack.c.l.b16 %v1122
      %v3658 = vunpack.c.h.b16 %v1122
      %v3659 = vunpack.c.l.b16 %v1123
      %v3660 = vunpack.c.h.b16 %v1123
      %v3661 = vunpack.c.l.b16 %v1124
      %v3662 = vunpack.c.h.b16 %v1124
      %v3663 = vunpack.c.l.b16 %v1125
      %v3664 = vunpack.c.h.b16 %v1125
      %v3665 = vunpack.c.l.b16 %v1126
      %v3666 = vunpack.c.h.b16 %v1126
      %v3667 = vunpack.c.l.b16 %v1127
      %v3668 = vunpack.c.h.b16 %v1127
      %v3669 = vunpack.c.l.b16 %v1128
      %v3670 = vunpack.c.h.b16 %v1128
      %v3671 = vunpack.c.l.b16 %v1129
      %v3672 = vunpack.c.h.b16 %v1129
      %v3673 = vunpack.c.l.b16 %v1130
      %v3674 = vunpack.c.h.b16 %v1130
      %v3675 = vunpack.c.l.b16 %v1131
      %v3676 = vunpack.c.h.b16 %v1131
      %v3677 = vunpack.c.l.b16 %v1132
      %v3678 = vunpack.c.h.b16 %v1132
      %v3679 = vunpack.c.l.b16 %v1133
      %v3680 = vunpack.c.h.b16 %v1133
      %v3681 = vunpack.c.l.b16 %v1134
      %v3682 = vunpack.c.h.b16 %v1134
      %v3683 = vunpack.c.l.b16 %v1135
      %v3684 = vunpack.c.h.b16 %v1135
      %v3685 = vunpack.c.l.b16 %v1136
      %v3686 = vunpack.c.h.b16 %v1136
      %v3687 = vunpack.c.l.b16 %v1137
      %v3688 = vunpack.c.h.b16 %v1137
      %v3689 = vunpack.c.l.b16 %v1138
      %v3690 = vunpack.c.h.b16 %v1138
      %v3691 = vunpack.c.l.b16 %v1139
      %v3692 = vunpack.c.h.b16 %v1139
      %v3693 = vunpack.c.l.b16 %v1140
      %v3694 = vunpack.c.h.b16 %v1140
      %v3695 = vunpack.c.l.b16 %v1141
      %v3696 = vunpack.c.h.b16 %v1141
      %v3697 = vunpack.c.l.b16 %v1142
      %v3698 = vunpack.c.h.b16 %v1142
      %v3699 = vunpack.c.l.b16 %v1143
      %v3700 = vunpack.c.h.b16 %v1143
      %v3701 = vunpack.c.l.b16 %v1144
      %v3702 = vunpack.c.h.b16 %v1144
      %v3703 = vunpack.c.l.b16 %v1145
      %v3704 = vunpack.c.h.b16 %v1145
      %v3705 = vunpack.c.l.b16 %v1146
      %v3706 = vunpack.c.h.b16 %v1146
      %v3707 = vunpack.c.l.b16 %v1147
      %v3708 = vunpack.c.h.b16 %v1147
      %v3709 = vunpack.c.l.b16 %v1148
      %v3710 = vunpack.c.h.b16 %v1148
      %v3711 = vunpack.c.l.b16 %v1149
      %v3712 = vunpack.c.h.b16 %v1149
      %v3713 = vunpack.c.l.b16 %v1150
      %v3714 = vunpack.c.h.b16 %v1150
      %v3715 = vunpack.c.l.b16 %v1151
      %v3716 = vunpack.c.h.b16 %v1151
      %v3717 = vunpack.c.l.b16 %v1152
      %v3718 = vunpack.c.h.b16 %v1152
      %v3719 = vunpack.c.l.b16 %v1153
      %v3720 = vunpack.c.h.b16 %v1153
      %v3721 = vunpack.c.l.b16 %v1154
      %v3722 = vunpack.c.h.b16 %v1154
      %v3723 = vunpack.c.l.b16 %v1155
      %v3724 = vunpack.c.h.b16 %v1155
      %v3725 = vunpack.c.l.b16 %v1156
      %v3726 = vunpack.c.h.b16 %v1156
      %v3727 = vunpack.c.l.b16 %v1157
      %v3728 = vunpack.c.h.b16 %v1157
      %v3729 = vunpack.c.l.b16 %v1158
      %v3730 = vunpack.c.h.b16 %v1158
      %v3731 = vunpack.c.l.b16 %v1159
      %v3732 = vunpack.c.h.b16 %v1159
      %v3733 = vunpack.c.l.b16 %v1160
      %v3734 = vunpack.c.h.b16 %v1160
      %v3735 = vunpack.c.l.b16 %v1161
      %v3736 = vunpack.c.h.b16 %v1161
      %v3737 = vunpack.c.l.b16 %v1162
      %v3738 = vunpack.c.h.b16 %v1162
      %v3739 = vunpack.c.l.b16 %v1163
      %v3740 = vunpack.c.h.b16 %v1163
      %v3741 = vunpack.c.l.b16 %v1164
      %v3742 = vunpack.c.h.b16 %v1164
      %v3743 = vunpack.c.l.b16 %v1165
      %v3744 = vunpack.c.h.b16 %v1165
      %v3745 = vunpack.c.l.b16 %v1166
      %v3746 = vunpack.c.h.b16 %v1166
      %v3747 = vunpack.c.l.b16 %v1167
      %v3748 = vunpack.c.h.b16 %v1167
      %v3749 = vunpack.c.l.b16 %v1168
      %v3750 = vunpack.c.h.b16 %v1168
      %v3751 = vunpack.c.l.b16 %v1169
      %v3752 = vunpack.c.h.b16 %v1169
      %v3753 = vunpack.c.l.b16 %v1170
      %v3754 = vunpack.c.h.b16 %v1170
      %v3755 = vunpack.c.l.b16 %v1171
      %v3756 = vunpack.c.h.b16 %v1171
      %v3757 = vunpack.c.l.b16 %v1172
      %v3758 = vunpack.c.h.b16 %v1172
      %v3759 = vunpack.c.l.b16 %v1173
      %v3760 = vunpack.c.h.b16 %v1173
      %v3761 = vunpack.c.l.b16 %v1174
      %v3762 = vunpack.c.h.b16 %v1174
      %v3763 = vunpack.c.l.b16 %v1175
      %v3764 = vunpack.c.h.b16 %v1175
      %v3765 = vunpack.c.l.b16 %v1176
      %v3766 = vunpack.c.h.b16 %v1176
      %v3767 = vunpack.c.l.b16 %v1177
      %v3768 = vunpack.c.h.b16 %v1177
      %v3769 = vunpack.c.l.b16 %v1178
      %v3770 = vunpack.c.h.b16 %v1178
      %v3771 = vunpack.c.l.b16 %v1179
      %v3772 = vunpack.c.h.b16 %v1179
      %v3773 = vunpack.c.l.b16 %v1180
      %v3774 = vunpack.c.h.b16 %v1180
      %v3775 = vunpack.c.l.b16 %v1181
      %v3776 = vunpack.c.h.b16 %v1181
      %v3777 = vunpack.c.l.b16 %v1182
      %v3778 = vunpack.c.h.b16 %v1182
      %v3779 = vunpack.c.l.b16 %v1183
      %v3780 = vunpack.c.h.b16 %v1183
      %v3781 = vunpack.c.l.b16 %v1184
      %v3782 = vunpack.c.h.b16 %v1184
      %v3783 = vunpack.c.l.b16 %v1185
      %v3784 = vunpack.c.h.b16 %v1185
      %v3785 = vunpack.c.l.b16 %v1186
      %v3786 = vunpack.c.h.b16 %v1186
      %v3787 = vunpack.c.l.b16 %v1187
      %v3788 = vunpack.c.h.b16 %v1187
      %v3789 = vunpack.c.l.b16 %v1188
      %v3790 = vunpack.c.h.b16 %v1188
      %v3791 = vunpack.c.l.b16 %v1189
      %v3792 = vunpack.c.h.b16 %v1189
      %v3793 = vunpack.c.l.b16 %v1190
      %v3794 = vunpack.c.h.b16 %v1190
      %v3795 = vunpack.c.l.b16 %v1191
      %v3796 = vunpack.c.h.b16 %v1191
      %v3797 = vunpack.c.l.b16 %v1192
      %v3798 = vunpack.c.h.b16 %v1192
      %v3799 = vunpack.c.l.b16 %v1193
      %v3800 = vunpack.c.h.b16 %v1193
      %v3801 = vunpack.c.l.b16 %v1194
      %v3802 = vunpack.c.h.b16 %v1194
      %v3803 = vunpack.c.l.b16 %v1195
      %v3804 = vunpack.c.h.b16 %v1195
      %v3805 = vunpack.c.l.b16 %v1196
      %v3806 = vunpack.c.h.b16 %v1196
      %v3807 = vunpack.c.l.b16 %v1197
      %v3808 = vunpack.c.h.b16 %v1197
      %v3809 = vunpack.c.l.b16 %v1198
      %v3810 = vunpack.c.h.b16 %v1198
      %v3811 = vunpack.c.l.b16 %v1199
      %v3812 = vunpack.c.h.b16 %v1199
      %v3813 = vunpack.c.l.b16 %v1200
      %v3814 = vunpack.c.h.b16 %v1200
      %v3815 = vunpack.c.l.b16 %v1201
      %v3816 = vunpack.c.h.b16 %v1201
      %v3817 = vunpack.c.l.b16 %v1202
      %v3818 = vunpack.c.h.b16 %v1202
      %v3819 = vunpack.c.l.b16 %v1203
      %v3820 = vunpack.c.h.b16 %v1203
      %v3821 = vunpack.c.l.b16 %v1204
      %v3822 = vunpack.c.h.b16 %v1204
      %v3823 = vunpack.c.l.b16 %v1205
      %v3824 = vunpack.c.h.b16 %v1205
      %v3825 = vunpack.c.l.b16 %v1206
      %v3826 = vunpack.c.h.b16 %v1206
      %v3827 = vunpack.c.l.b16 %v1207
      %v3828 = vunpack.c.h.b16 %v1207
      %v3829 = vunpack.c.l.b16 %v1208
      %v3830 = vunpack.c.h.b16 %v1208
      %v3831 = vunpack.c.l.b16 %v1209
      %v3832 = vunpack.c.h.b16 %v1209
      %v3833 = vunpack.c.l.b16 %v1210
      %v3834 = vunpack.c.h.b16 %v1210
      %v3835 = vunpack.c.l.b16 %v1211
      %v3836 = vunpack.c.h.b16 %v1211
      %v3837 = vunpack.c.l.b16 %v1212
      %v3838 = vunpack.c.h.b16 %v1212
      %v3839 = vunpack.c.l.b16 %v1213
      %v3840 = vunpack.c.h.b16 %v1213
      %v3841 = vunpack.c.l.b16 %v1214
      %v3842 = vunpack.c.h.b16 %v1214
      %v3843 = vunpack.c.l.b16 %v1215
      %v3844 = vunpack.c.h.b16 %v1215
      %v3845 = vunpack.c.l.b16 %v1216
      %v3846 = vunpack.c.h.b16 %v1216
      %v3847 = vunpack.c.l.b16 %v1217
      %v3848 = vunpack.c.h.b16 %v1217
      %v3849 = vunpack.c.l.b16 %v1218
      %v3850 = vunpack.c.h.b16 %v1218
      %v3851 = vunpack.c.l.b16 %v1219
      %v3852 = vunpack.c.h.b16 %v1219
      %v3853 = vunpack.c.l.b16 %v1220
      %v3854 = vunpack.c.h.b16 %v1220
      %v3855 = vunpack.c.l.b16 %v1221
      %v3856 = vunpack.c.h.b16 %v1221
      %v3857 = vunpack.c.l.b16 %v1222
      %v3858 = vunpack.c.h.b16 %v1222
      %v3859 = vunpack.c.l.b16 %v1223
      %v3860 = vunpack.c.h.b16 %v1223
      %v3861 = vunpack.c.l.b16 %v1224
      %v3862 = vunpack.c.h.b16 %v1224
      %v3863 = vunpack.c.l.b16 %v1225
      %v3864 = vunpack.c.h.b16 %v1225
      %v3865 = vunpack.c.l.b16 %v1226
      %v3866 = vunpack.c.h.b16 %v1226
      %v3867 = vunpack.c.l.b16 %v1227
      %v3868 = vunpack.c.h.b16 %v1227
      %v3869 = vunpack.c.l.b16 %v1228
      %v3870 = vunpack.c.h.b16 %v1228
      %v3871 = vunpack.c.l.b16 %v1229
      %v3872 = vunpack.c.h.b16 %v1229
      %v3873 = vunpack.c.l.b16 %v1230
      %v3874 = vunpack.c.h.b16 %v1230
      %v3875 = vunpack.c.l.b16 %v1231
      %v3876 = vunpack.c.h.b16 %v1231
      %v3877 = vunpack.c.l.b16 %v1232
      %v3878 = vunpack.c.h.b16 %v1232
      %v3879 = vunpack.c.l.b16 %v1233
      %v3880 = vunpack.c.h.b16 %v1233
      %v3881 = vunpack.c.l.b16 %v1234
      %v3882 = vunpack.c.h.b16 %v1234
      %v3883 = vunpack.c.l.b16 %v1235
      %v3884 = vunpack.c.h.b16 %v1235
      %v3885 = vunpack.c.l.b16 %v1236
      %v3886 = vunpack.c.h.b16 %v1236
      %v3887 = vunpack.c.l.b16 %v1237
      %v3888 = vunpack.c.h.b16 %v1237
      %v3889 = vunpack.c.l.b16 %v1238
      %v3890 = vunpack.c.h.b16 %v1238
      %v3891 = vunpack.c.l.b16 %v1239
      %v3892 = vunpack.c.h.b16 %v1239
      %v3893 = vunpack.c.l.b16 %v1240
      %v3894 = vunpack.c.h.b16 %v1240
      %v3895 = vunpack.c.l.b16 %v1241
      %v3896 = vunpack.c.h.b16 %v1241
      %v3897 = vunpack.c.l.b16 %v1242
      %v3898 = vunpack.c.h.b16 %v1242
      %v3899 = vunpack.c.l.b16 %v1243
      %v3900 = vunpack.c.h.b16 %v1243
      %v3901 = vunpack.c.l.b16 %v1244
      %v3902 = vunpack.c.h.b16 %v1244
      %v3903 = vunpack.c.l.b16 %v1245
      %v3904 = vunpack.c.h.b16 %v1245
      %v3905 = vunpack.c.l.b16 %v1246
      %v3906 = vunpack.c.h.b16 %v1246
      %v3907 = vunpack.c.l.b16 %v1247
      %v3908 = vunpack.c.h.b16 %v1247
      %v3909 = vunpack.c.l.b16 %v1248
      %v3910 = vunpack.c.h.b16 %v1248
      %v3911 = vunpack.c.l.b16 %v1249
      %v3912 = vunpack.c.h.b16 %v1249
      %v3913 = vunpack.c.l.b16 %v1250
      %v3914 = vunpack.c.h.b16 %v1250
      %v3915 = vunpack.c.l.b16 %v1251
      %v3916 = vunpack.c.h.b16 %v1251
      %v3917 = vunpack.c.l.b16 %v1252
      %v3918 = vunpack.c.h.b16 %v1252
      %v3919 = vunpack.c.l.b16 %v1253
      %v3920 = vunpack.c.h.b16 %v1253
      %v3921 = vunpack.c.l.b16 %v1254
      %v3922 = vunpack.c.h.b16 %v1254
      %v3923 = vunpack.c.l.b16 %v1255
      %v3924 = vunpack.c.h.b16 %v1255
      %v3925 = vunpack.c.l.b16 %v1256
      %v3926 = vunpack.c.h.b16 %v1256
      %v3927 = vunpack.c.l.b16 %v1257
      %v3928 = vunpack.c.h.b16 %v1257
      %v3929 = vunpack.c.l.b16 %v1258
      %v3930 = vunpack.c.h.b16 %v1258
      %v3931 = vunpack.c.l.b16 %v1259
      %v3932 = vunpack.c.h.b16 %v1259
      %v3933 = vunpack.c.l.b16 %v1260
      %v3934 = vunpack.c.h.b16 %v1260
      %v3935 = vunpack.c.l.b16 %v1261
      %v3936 = vunpack.c.h.b16 %v1261
      %v3937 = vunpack.c.l.b16 %v1262
      %v3938 = vunpack.c.h.b16 %v1262
      %v3939 = vunpack.c.l.b16 %v1263
      %v3940 = vunpack.c.h.b16 %v1263
      %v3941 = vunpack.c.l.b16 %v1264
      %v3942 = vunpack.c.h.b16 %v1264
      %v3943 = vunpack.c.l.b16 %v1265
      %v3944 = vunpack.c.h.b16 %v1265
      %v3945 = vunpack.c.l.b16 %v1266
      %v3946 = vunpack.c.h.b16 %v1266
      %v3947 = vunpack.c.l.b16 %v1267
      %v3948 = vunpack.c.h.b16 %v1267
      %v3949 = vunpack.c.l.b16 %v1268
      %v3950 = vunpack.c.h.b16 %v1268
      %v3951 = vunpack.c.l.b16 %v1269
      %v3952 = vunpack.c.h.b16 %v1269
      %v3953 = vunpack.c.l.b16 %v1270
      %v3954 = vunpack.c.h.b16 %v1270
      %v3955 = vunpack.c.l.b16 %v1271
      %v3956 = vunpack.c.h.b16 %v1271
      %v3957 = vunpack.c.l.b16 %v1272
      %v3958 = vunpack.c.h.b16 %v1272
      %v3959 = vunpack.c.l.b16 %v1273
      %v3960 = vunpack.c.h.b16 %v1273
      %v3961 = vunpack.c.l.b16 %v1274
      %v3962 = vunpack.c.h.b16 %v1274
      %v3963 = vpack.c.b16 %v2179, %v2171
      %v3964 = vpack.c.b16 %v2180, %v2172
      %v3965 = vpack.c.b16 %v2181, %v2173
      %v3966 = vpack.c.b16 %v2182, %v2174
      %v3967 = vpack.c.b16 %v2183, %v2175
      %v3968 = vpack.c.b16 %v2184, %v2176
      %v3969 = vpack.c.b16 %v2185, %v2177
      %v3970 = vpack.c.b16 %v2186, %v2178
      %v3971 = vpack.c.b16 %v2195, %v2187
      %v3972 = vpack.c.b16 %v2196, %v2188
      %v3973 = vpack.c.b16 %v2197, %v2189
      %v3974 = vpack.c.b16 %v2198, %v2190
      %v3975 = vpack.c.b16 %v2199, %v2191
      %v3976 = vpack.c.b16 %v2200, %v2192
      %v3977 = vpack.c.b16 %v2201, %v2193
      %v3978 = vpack.c.b16 %v2202, %v2194
      %v3979 = vpack.c.b16 %v2211, %v2203
      %v3980 = vpack.c.b16 %v2212, %v2204
      %v3981 = vpack.c.b16 %v2213, %v2205
      %v3982 = vpack.c.b16 %v2214, %v2206
      %v3983 = vpack.c.b16 %v2215, %v2207
      %v3984 = vpack.c.b16 %v2216, %v2208
      %v3985 = vpack.c.b16 %v2217, %v2209
      %v3986 = vpack.c.b16 %v2218, %v2210
      %v3987 = vpack.c.b16 %v2227, %v2219
      %v3988 = vpack.c.b16 %v2228, %v2220
      %v3989 = vpack.c.b16 %v2229, %v2221
      %v3990 = vpack.c.b16 %v2230, %v2222
      %v3991 = vpack.c.b16 %v2231, %v2223
      %v3992 = vpack.c.b16 %v2232, %v2224
      %v3993 = vpack.c.b16 %v2233, %v2225
      %v3994 = vpack.c.b16 %v2234, %v2226
      %v3995 = vpack.c.b16 %v2243, %v2235
      %v3996 = vpack.c.b16 %v2244, %v2236
      %v3997 = vpack.c.b16 %v2245, %v2237
      %v3998 = vpack.c.b16 %v2246, %v2238
      %v3999 = vpack.c.b16 %v2247, %v2239
      %v4000 = vpack.c.b16 %v2248, %v2240
      %v4001 = vpack.c.b16 %v2249, %v2241
      %v4002 = vpack.c.b16 %v2250, %v2242
      %v4003 = vpack.c.b16 %v2259, %v2251
      %v4004 = vpack.c.b16 %v2260, %v2252
      %v4005 = vpack.c.b16 %v2261, %v2253
      %v4006 = vpack.c.b16 %v2262, %v2254
      %v4007 = vpack.c.b16 %v2263, %v2255
      %v4008 = vpack.c.b16 %v2264, %v2256
      %v4009 = vpack.c.b16 %v2265, %v2257
      %v4010 = vpack.c.b16 %v2266, %v2258
      %v4011 = vpack.c.b16 %v2275, %v2267
      %v4012 = vpack.c.b16 %v2276, %v2268
      %v4013 = vpack.c.b16 %v2277, %v2269
      %v4014 = vpack.c.b16 %v2278, %v2270
      %v4015 = vpack.c.b16 %v2279, %v2271
      %v4016 = vpack.c.b16 %v2280, %v2272
      %v4017 = vpack.c.b16 %v2281, %v2273
      %v4018 = vpack.c.b16 %v2282, %v2274
      %v4019 = vpack.c.b16 %v2291, %v2283
      %v4020 = vpack.c.b16 %v2292, %v2284
      %v4021 = vpack.c.b16 %v2293, %v2285
      %v4022 = vpack.c.b16 %v2294, %v2286
      %v4023 = vpack.c.b16 %v2295, %v2287
      %v4024 = vpack.c.b16 %v2296, %v2288
      %v4025 = vpack.c.b16 %v2297, %v2289
      %v4026 = vpack.c.b16 %v2298, %v2290
      %v4027 = vpack.c.b16 %v2307, %v2299
      %v4028 = vpack.c.b16 %v2308, %v2300
      %v4029 = vpack.c.b16 %v2309, %v2301
      %v4030 = vpack.c.b16 %v2310, %v2302
      %v4031 = vpack.c.b16 %v2311, %v2303
      %v4032 = vpack.c.b16 %v2312, %v2304
      %v4033 = vpack.c.b16 %v2313, %v2305
      %v4034 = vpack.c.b16 %v2314, %v2306
      %v4035 = vpack.c.b16 %v2323, %v2315
      %v4036 = vpack.c.b16 %v2324, %v2316
      %v4037 = vpack.c.b16 %v2325, %v2317
      %v4038 = vpack.c.b16 %v2326, %v2318
      %v4039 = vpack.c.b16 %v2327, %v2319
      %v4040 = vpack.c.b16 %v2328, %v2320
      %v4041 = vpack.c.b16 %v2329, %v2321
      %v4042 = vpack.c.b16 %v2330, %v2322
      %v4043 = vpack.c.b16 %v2339, %v2331
      %v4044 = vpack.c.b16 %v2340, %v2332
      %v4045 = vpack.c.b16 %v2341, %v2333
      %v4046 = vpack.c.b16 %v2342, %v2334
      %v4047 = vpack.c.b16 %v2343, %v2335
      %v4048 = vpack.c.b16 %v2344, %v2336
      %v4049 = vpack.c.b16 %v2345, %v2337
      %v4050 = vpack.c.b16 %v2346, %v2338
      %v4051 = vpack.c.b16 %v2355, %v2347
      %v4052 = vpack.c.b16 %v2356, %v2348
      %v4053 = vpack.c.b16 %v2357, %v2349
      %v4054 = vpack.c.b16 %v2358, %v2350
      %v4055 = vpack.c.b16 %v2359, %v2351
      %v4056 = vpack.c.b16 %v2360, %v2352
      %v4057 = vpack.c.b16 %v2361, %v2353
      %v4058 = vpack.c.b16 %v2362, %v2354
      %v4059 = vpack.c.b16 %v2371, %v2363
      %v4060 = vpack.c.b16 %v2372, %v2364
      %v4061 = vpack.c.b16 %v2373, %v2365
      %v4062 = vpack.c.b16 %v2374, %v2366
      %v4063 = vpack.c.b16 %v2375, %v2367
      %v4064 = vpack.c.b16 %v2376, %v2368
      %v4065 = vpack.c.b16 %v2377, %v2369
      %v4066 = vpack.c.b16 %v2378, %v2370
      %v4067 = vpack.c.b16 %v2387, %v2379
      %v4068 = vpack.c.b16 %v2388, %v2380
      %v4069 = vpack.c.b16 %v2389, %v2381
      %v4070 = vpack.c.b16 %v2390, %v2382
      %v4071 = vpack.c.b16 %v2391, %v2383
      %v4072 = vpack.c.b16 %v2392, %v2384
      %v4073 = vpack.c.b16 %v2393, %v2385
      %v4074 = vpack.c.b16 %v2394, %v2386
      %v4075 = vpack.c.b16 %v2403, %v2395
      %v4076 = vpack.c.b16 %v2404, %v2396
      %v4077 = vpack.c.b16 %v2405, %v2397
      %v4078 = vpack.c.b16 %v2406, %v2398
      %v4079 = vpack.c.b16 %v2407, %v2399
      %v4080 = vpack.c.b16 %v2408, %v2400
      %v4081 = vpack.c.b16 %v2409, %v2401
      %v4082 = vpack.c.b16 %v2410, %v2402
      %v4083 = vpack.c.b16 %v2419, %v2411
      %v4084 = vpack.c.b16 %v2420, %v2412
      %v4085 = vpack.c.b16 %v2421, %v2413
      %v4086 = vpack.c.b16 %v2422, %v2414
      %v4087 = vpack.c.b16 %v2423, %v2415
      %v4088 = vpack.c.b16 %v2424, %v2416
      %v4089 = vpack.c.b16 %v2425, %v2417
      %v4090 = vpack.c.b16 %v2426, %v2418
      %v4091 = vpack.c.b16 %v2435, %v2427
      %v4092 = vpack.c.b16 %v2436, %v2428
      %v4093 = vpack.c.b16 %v2437, %v2429
      %v4094 = vpack.c.b16 %v2438, %v2430
      %v4095 = vpack.c.b16 %v2439, %v2431
      %v4096 = vpack.c.b16 %v2440, %v2432
      %v4097 = vpack.c.b16 %v2441, %v2433
      %v4098 = vpack.c.b16 %v2442, %v2434
      %v4099 = vpack.c.b16 %v2451, %v2443
      %v4100 = vpack.c.b16 %v2452, %v2444
      %v4101 = vpack.c.b16 %v2453, %v2445
      %v4102 = vpack.c.b16 %v2454, %v2446
      %v4103 = vpack.c.b16 %v2455, %v2447
      %v4104 = vpack.c.b16 %v2456, %v2448
      %v4105 = vpack.c.b16 %v2457, %v2449
      %v4106 = vpack.c.b16 %v2458, %v2450
      %v4107 = vpack.c.b16 %v2467, %v2459
      %v4108 = vpack.c.b16 %v2468, %v2460
      %v4109 = vpack.c.b16 %v2469, %v2461
      %v4110 = vpack.c.b16 %v2470, %v2462
      %v4111 = vpack.c.b16 %v2471, %v2463
      %v4112 = vpack.c.b16 %v2472, %v2464
      %v4113 = vpack.c.b16 %v2473, %v2465
      %v4114 = vpack.c.b16 %v2474, %v2466
      %v4115 = vpack.c.b16 %v2483, %v2475
      %v4116 = vpack.c.b16 %v2484, %v2476
      %v4117 = vpack.c.b16 %v2485, %v2477
      %v4118 = vpack.c.b16 %v2486, %v2478
      %v4119 = vpack.c.b16 %v2487, %v2479
      %v4120 = vpack.c.b16 %v2488, %v2480
      %v4121 = vpack.c.b16 %v2489, %v2481
      %v4122 = vpack.c.b16 %v2490, %v2482
      %v4123 = vpack.c.b16 %v2499, %v2491
      %v4124 = vpack.c.b16 %v2500, %v2492
      %v4125 = vpack.c.b16 %v2501, %v2493
      %v4126 = vpack.c.b16 %v2502, %v2494
      %v4127 = vpack.c.b16 %v2503, %v2495
      %v4128 = vpack.c.b16 %v2504, %v2496
      %v4129 = vpack.c.b16 %v2505, %v2497
      %v4130 = vpack.c.b16 %v2506, %v2498
      %v4131 = vpack.c.b16 %v2515, %v2507
      %v4132 = vpack.c.b16 %v2516, %v2508
      %v4133 = vpack.c.b16 %v2517, %v2509
      %v4134 = vpack.c.b16 %v2518, %v2510
      %v4135 = vpack.c.b16 %v2519, %v2511
      %v4136 = vpack.c.b16 %v2520, %v2512
      %v4137 = vpack.c.b16 %v2521, %v2513
      %v4138 = vpack.c.b16 %v2522, %v2514
      %v4139 = vpack.c.b16 %v2531, %v2523
      %v4140 = vpack.c.b16 %v2532, %v2524
      %v4141 = vpack.c.b16 %v2533, %v2525
      %v4142 = vpack.c.b16 %v2534, %v2526
      %v4143 = vpack.c.b16 %v2535, %v2527
      %v4144 = vpack.c.b16 %v2536, %v2528
      %v4145 = vpack.c.b16 %v2537, %v2529
      %v4146 = vpack.c.b16 %v2538, %v2530
      %v4147 = vpack.c.b16 %v2547, %v2539
      %v4148 = vpack.c.b16 %v2548, %v2540
      %v4149 = vpack.c.b16 %v2549, %v2541
      %v4150 = vpack.c.b16 %v2550, %v2542
      %v4151 = vpack.c.b16 %v2551, %v2543
      %v4152 = vpack.c.b16 %v2552, %v2544
      %v4153 = vpack.c.b16 %v2553, %v2545
      %v4154 = vpack.c.b16 %v2554, %v2546
      %v4155 = vpack.c.b16 %v2563, %v2555
      %v4156 = vpack.c.b16 %v2564, %v2556
      %v4157 = vpack.c.b16 %v2565, %v2557
      %v4158 = vpack.c.b16 %v2566, %v2558
      %v4159 = vpack.c.b16 %v2567, %v2559
      %v4160 = vpack.c.b16 %v2568, %v2560
      %v4161 = vpack.c.b16 %v2569, %v2561
      %v4162 = vpack.c.b16 %v2570, %v2562
      %v4163 = vpack.c.b16 %v2579, %v2571
      %v4164 = vpack.c.b16 %v2580, %v2572
      %v4165 = vpack.c.b16 %v2581, %v2573
      %v4166 = vpack.c.b16 %v2582, %v2574
      %v4167 = vpack.c.b16 %v2583, %v2575
      %v4168 = vpack.c.b16 %v2584, %v2576
      %v4169 = vpack.c.b16 %v2585, %v2577
      %v4170 = vpack.c.b16 %v2586, %v2578
      %v4171 = vpack.c.b16 %v2595, %v2587
      %v4172 = vpack.c.b16 %v2596, %v2588
      %v4173 = vpack.c.b16 %v2597, %v2589
      %v4174 = vpack.c.b16 %v2598, %v2590
      %v4175 = vpack.c.b16 %v2599, %v2591
      %v4176 = vpack.c.b16 %v2600, %v2592
      %v4177 = vpack.c.b16 %v2601, %v2593
      %v4178 = vpack.c.b16 %v2602, %v2594
      %v4179 = vpack.c.b16 %v2611, %v2603
      %v4180 = vpack.c.b16 %v2612, %v2604
      %v4181 = vpack.c.b16 %v2613, %v2605
      %v4182 = vpack.c.b16 %v2614, %v2606
      %v4183 = vpack.c.b16 %v2615, %v2607
      %v4184 = vpack.c.b16 %v2616, %v2608
      %v4185 = vpack.c.b16 %v2617, %v2609
      %v4186 = vpack.c.b16 %v2618, %v2610
      %v4187 = vpack.c.b16 %v2627, %v2619
      %v4188 = vpack.c.b16 %v2628, %v2620
      %v4189 = vpack.c.b16 %v2629, %v2621
      %v4190 = vpack.c.b16 %v2630, %v2622
      %v4191 = vpack.c.b16 %v2631, %v2623
      %v4192 = vpack.c.b16 %v2632, %v2624
      %v4193 = vpack.c.b16 %v2633, %v2625
      %v4194 = vpack.c.b16 %v2634, %v2626
      %v4195 = vpack.c.b16 %v2643, %v2635
      %v4196 = vpack.c.b16 %v2644, %v2636
      %v4197 = vpack.c.b16 %v2645, %v2637
      %v4198 = vpack.c.b16 %v2646, %v2638
      %v4199 = vpack.c.b16 %v2647, %v2639
      %v4200 = vpack.c.b16 %v2648, %v2640
      %v4201 = vpack.c.b16 %v2649, %v2641
      %v4202 = vpack.c.b16 %v2650, %v2642
      %v4203 = vpack.c.b16 %v2659, %v2651
      %v4204 = vpack.c.b16 %v2660, %v2652
      %v4205 = vpack.c.b16 %v2661, %v2653
      %v4206 = vpack.c.b16 %v2662, %v2654
      %v4207 = vpack.c.b16 %v2663, %v2655
      %v4208 = vpack.c.b16 %v2664, %v2656
      %v4209 = vpack.c.b16 %v2665, %v2657
      %v4210 = vpack.c.b16 %v2666, %v2658
      %v4211 = vpack.c.b16 %v2675, %v2667
      %v4212 = vpack.c.b16 %v2676, %v2668
      %v4213 = vpack.c.b16 %v2677, %v2669
      %v4214 = vpack.c.b16 %v2678, %v2670
      %v4215 = vpack.c.b16 %v2679, %v2671
      %v4216 = vpack.c.b16 %v2680, %v2672
      %v4217 = vpack.c.b16 %v2681, %v2673
      %v4218 = vpack.c.b16 %v2682, %v2674
      %v4219 = vpack.c.b16 %v2691, %v2683
      %v4220 = vpack.c.b16 %v2692, %v2684
      %v4221 = vpack.c.b16 %v2693, %v2685
      %v4222 = vpack.c.b16 %v2694, %v2686
      %v4223 = vpack.c.b16 %v2695, %v2687
      %v4224 = vpack.c.b16 %v2696, %v2688
      %v4225 = vpack.c.b16 %v2697, %v2689
      %v4226 = vpack.c.b16 %v2698, %v2690
      %v4227 = vpack.c.b16 %v2707, %v2699
      %v4228 = vpack.c.b16 %v2708, %v2700
      %v4229 = vpack.c.b16 %v2709, %v2701
      %v4230 = vpack.c.b16 %v2710, %v2702
      %v4231 = vpack.c.b16 %v2711, %v2703
      %v4232 = vpack.c.b16 %v2712, %v2704
      %v4233 = vpack.c.b16 %v2713, %v2705
      %v4234 = vpack.c.b16 %v2714, %v2706
      %v4235 = vpack.c.b16 %v2723, %v2715
      %v4236 = vpack.c.b16 %v2724, %v2716
      %v4237 = vpack.c.b16 %v2725, %v2717
      %v4238 = vpack.c.b16 %v2726, %v2718
      %v4239 = vpack.c.b16 %v2727, %v2719
      %v4240 = vpack.c.b16 %v2728, %v2720
      %v4241 = vpack.c.b16 %v2729, %v2721
      %v4242 = vpack.c.b16 %v2730, %v2722
      %v4243 = vpack.c.b16 %v2739, %v2731
      %v4244 = vpack.c.b16 %v2740, %v2732
      %v4245 = vpack.c.b16 %v2741, %v2733
      %v4246 = vpack.c.b16 %v2742, %v2734
      %v4247 = vpack.c.b16 %v2743, %v2735
      %v4248 = vpack.c.b16 %v2744, %v2736
      %v4249 = vpack.c.b16 %v2745, %v2737
      %v4250 = vpack.c.b16 %v2746, %v2738
      %v4251 = vpack.c.b16 %v2755, %v2747
      %v4252 = vpack.c.b16 %v2756, %v2748
      %v4253 = vpack.c.b16 %v2757, %v2749
      %v4254 = vpack.c.b16 %v2758, %v2750
      %v4255 = vpack.c.b16 %v2759, %v2751
      %v4256 = vpack.c.b16 %v2760, %v2752
      %v4257 = vpack.c.b16 %v2761, %v2753
      %v4258 = vpack.c.b16 %v2762, %v2754
      %v4259 = vpack.c.b16 %v2771, %v2763
      %v4260 = vpack.c.b16 %v2772, %v2764
      %v4261 = vpack.c.b16 %v2773, %v2765
      %v4262 = vpack.c.b16 %v2774, %v2766
      %v4263 = vpack.c.b16 %v2775, %v2767
      %v4264 = vpack.c.b16 %v2776, %v2768
      %v4265 = vpack.c.b16 %v2777, %v2769
      %v4266 = vpack.c.b16 %v2778, %v2770
      %v4267 = vpack.c.b16 %v2787, %v2779
      %v4268 = vpack.c.b16 %v2788, %v2780
      %v4269 = vpack.c.b16 %v2789, %v2781
      %v4270 = vpack.c.b16 %v2790, %v2782
      %v4271 = vpack.c.b16 %v2791, %v2783
      %v4272 = vpack.c.b16 %v2792, %v2784
      %v4273 = vpack.c.b16 %v2793, %v2785
      %v4274 = vpack.c.b16 %v2794, %v2786
      %v4275 = vpack.c.b16 %v2803, %v2795
      %v4276 = vpack.c.b16 %v2804, %v2796
      %v4277 = vpack.c.b16 %v2805, %v2797
      %v4278 = vpack.c.b16 %v2806, %v2798
      %v4279 = vpack.c.b16 %v2807, %v2799
      %v4280 = vpack.c.b16 %v2808, %v2800
      %v4281 = vpack.c.b16 %v2809, %v2801
      %v4282 = vpack.c.b16 %v2810, %v2802
      %v4283 = vpack.c.b16 %v2819, %v2811
      %v4284 = vpack.c.b16 %v2820, %v2812
      %v4285 = vpack.c.b16 %v2821, %v2813
      %v4286 = vpack.c.b16 %v2822, %v2814
      %v4287 = vpack.c.b16 %v2823, %v2815
      %v4288 = vpack.c.b16 %v2824, %v2816
      %v4289 = vpack.c.b16 %v2825, %v2817
      %v4290 = vpack.c.b16 %v2826, %v2818
      %v4291 = vpack.c.b16 %v2835, %v2827
      %v4292 = vpack.c.b16 %v2836, %v2828
      %v4293 = vpack.c.b16 %v2837, %v2829
      %v4294 = vpack.c.b16 %v2838, %v2830
      %v4295 = vpack.c.b16 %v2839, %v2831
      %v4296 = vpack.c.b16 %v2840, %v2832
      %v4297 = vpack.c.b16 %v2841, %v2833
      %v4298 = vpack.c.b16 %v2842, %v2834
      %v4299 = vpack.c.b16 %v2851, %v2843
      %v4300 = vpack.c.b16 %v2852, %v2844
      %v4301 = vpack.c.b16 %v2853, %v2845
      %v4302 = vpack.c.b16 %v2854, %v2846
      %v4303 = vpack.c.b16 %v2855, %v2847
      %v4304 = vpack.c.b16 %v2856, %v2848
      %v4305 = vpack.c.b16 %v2857, %v2849
      %v4306 = vpack.c.b16 %v2858, %v2850
      %v4307 = vpack.c.b16 %v2867, %v2859
      %v4308 = vpack.c.b16 %v2868, %v2860
      %v4309 = vpack.c.b16 %v2869, %v2861
      %v4310 = vpack.c.b16 %v2870, %v2862
      %v4311 = vpack.c.b16 %v2871, %v2863
      %v4312 = vpack.c.b16 %v2872, %v2864
      %v4313 = vpack.c.b16 %v2873, %v2865
      %v4314 = vpack.c.b16 %v2874, %v2866
      %v4315 = vpack.c.b16 %v2883, %v2875
      %v4316 = vpack.c.b16 %v2884, %v2876
      %v4317 = vpack.c.b16 %v2885, %v2877
      %v4318 = vpack.c.b16 %v2886, %v2878
      %v4319 = vpack.c.b16 %v2887, %v2879
      %v4320 = vpack.c.b16 %v2888, %v2880
      %v4321 = vpack.c.b16 %v2889, %v2881
      %v4322 = vpack.c.b16 %v2890, %v2882
      %v4323 = vpack.c.b16 %v2899, %v2891
      %v4324 = vpack.c.b16 %v2900, %v2892
      %v4325 = vpack.c.b16 %v2901, %v2893
      %v4326 = vpack.c.b16 %v2902, %v2894
      %v4327 = vpack.c.b16 %v2903, %v2895
      %v4328 = vpack.c.b16 %v2904, %v2896
      %v4329 = vpack.c.b16 %v2905, %v2897
      %v4330 = vpack.c.b16 %v2906, %v2898
      %v4331 = vpack.c.b16 %v2915, %v2907
      %v4332 = vpack.c.b16 %v2916, %v2908
      %v4333 = vpack.c.b16 %v2917, %v2909
      %v4334 = vpack.c.b16 %v2918, %v2910
      %v4335 = vpack.c.b16 %v2919, %v2911
      %v4336 = vpack.c.b16 %v2920, %v2912
      %v4337 = vpack.c.b16 %v2921, %v2913
      %v4338 = vpack.c.b16 %v2922, %v2914
      %v4339 = vpack.c.b16 %v2931, %v2923
      %v4340 = vpack.c.b16 %v2932, %v2924
      %v4341 = vpack.c.b16 %v2933, %v2925
      %v4342 = vpack.c.b16 %v2934, %v2926
      %v4343 = vpack.c.b16 %v2935, %v2927
      %v4344 = vpack.c.b16 %v2936, %v2928
      %v4345 = vpack.c.b16 %v2937, %v2929
      %v4346 = vpack.c.b16 %v2938, %v2930
      %v4347 = vpack.c.b16 %v2947, %v2939
      %v4348 = vpack.c.b16 %v2948, %v2940
      %v4349 = vpack.c.b16 %v2949, %v2941
      %v4350 = vpack.c.b16 %v2950, %v2942
      %v4351 = vpack.c.b16 %v2951, %v2943
      %v4352 = vpack.c.b16 %v2952, %v2944
      %v4353 = vpack.c.b16 %v2953, %v2945
      %v4354 = vpack.c.b16 %v2954, %v2946
      %v4355 = vpack.c.b16 %v2963, %v2955
      %v4356 = vpack.c.b16 %v2964, %v2956
      %v4357 = vpack.c.b16 %v2965, %v2957
      %v4358 = vpack.c.b16 %v2966, %v2958
      %v4359 = vpack.c.b16 %v2967, %v2959
      %v4360 = vpack.c.b16 %v2968, %v2960
      %v4361 = vpack.c.b16 %v2969, %v2961
      %v4362 = vpack.c.b16 %v2970, %v2962
      %v4363 = vpack.c.b16 %v2979, %v2971
      %v4364 = vpack.c.b16 %v2980, %v2972
      %v4365 = vpack.c.b16 %v2981, %v2973
      %v4366 = vpack.c.b16 %v2982, %v2974
      %v4367 = vpack.c.b16 %v2983, %v2975
      %v4368 = vpack.c.b16 %v2984, %v2976
      %v4369 = vpack.c.b16 %v2985, %v2977
      %v4370 = vpack.c.b16 %v2986, %v2978
      %v4371 = vpack.c.b16 %v2995, %v2987
      %v4372 = vpack.c.b16 %v2996, %v2988
      %v4373 = vpack.c.b16 %v2997, %v2989
      %v4374 = vpack.c.b16 %v2998, %v2990
      %v4375 = vpack.c.b16 %v2999, %v2991
      %v4376 = vpack.c.b16 %v3000, %v2992
      %v4377 = vpack.c.b16 %v3001, %v2993
      %v4378 = vpack.c.b16 %v3002, %v2994
      %v4379 = vpack.c.b16 %v3011, %v3003
      %v4380 = vpack.c.b16 %v3012, %v3004
      %v4381 = vpack.c.b16 %v3013, %v3005
      %v4382 = vpack.c.b16 %v3014, %v3006
      %v4383 = vpack.c.b16 %v3015, %v3007
      %v4384 = vpack.c.b16 %v3016, %v3008
      %v4385 = vpack.c.b16 %v3017, %v3009
      %v4386 = vpack.c.b16 %v3018, %v3010
      %v4387 = vpack.c.b16 %v3027, %v3019
      %v4388 = vpack.c.b16 %v3028, %v3020
      %v4389 = vpack.c.b16 %v3029, %v3021
      %v4390 = vpack.c.b16 %v3030, %v3022
      %v4391 = vpack.c.b16 %v3031, %v3023
      %v4392 = vpack.c.b16 %v3032, %v3024
      %v4393 = vpack.c.b16 %v3033, %v3025
      %v4394 = vpack.c.b16 %v3034, %v3026
      %v4395 = vpack.c.b16 %v3043, %v3035
      %v4396 = vpack.c.b16 %v3044, %v3036
      %v4397 = vpack.c.b16 %v3045, %v3037
      %v4398 = vpack.c.b16 %v3046, %v3038
      %v4399 = vpack.c.b16 %v3047, %v3039
      %v4400 = vpack.c.b16 %v3048, %v3040
      %v4401 = vpack.c.b16 %v3049, %v3041
      %v4402 = vpack.c.b16 %v3050, %v3042
      %v4403 = vpack.c.b16 %v3059, %v3051
      %v4404 = vpack.c.b16 %v3060, %v3052
      %v4405 = vpack.c.b16 %v3061, %v3053
      %v4406 = vpack.c.b16 %v3062, %v3054
      %v4407 = vpack.c.b16 %v3063, %v3055
      %v4408 = vpack.c.b16 %v3064, %v3056
      %v4409 = vpack.c.b16 %v3065, %v3057
      %v4410 = vpack.c.b16 %v3066, %v3058
      %v4411 = vpack.c.b16 %v3075, %v3067
      %v4412 = vpack.c.b16 %v3076, %v3068
      %v4413 = vpack.c.b16 %v3077, %v3069
      %v4414 = vpack.c.b16 %v3078, %v3070
      %v4415 = vpack.c.b16 %v3079, %v3071
      %v4416 = vpack.c.b16 %v3080, %v3072
      %v4417 = vpack.c.b16 %v3081, %v3073
      %v4418 = vpack.c.b16 %v3082, %v3074
      %v4419 = vpack.c.b16 %v3091, %v3083
      %v4420 = vpack.c.b16 %v3092, %v3084
      %v4421 = vpack.c.b16 %v3093, %v3085
      %v4422 = vpack.c.b16 %v3094, %v3086
      %v4423 = vpack.c.b16 %v3095, %v3087
      %v4424 = vpack.c.b16 %v3096, %v3088
      %v4425 = vpack.c.b16 %v3097, %v3089
      %v4426 = vpack.c.b16 %v3098, %v3090
      %v4427 = vpack.c.b16 %v3107, %v3099
      %v4428 = vpack.c.b16 %v3108, %v3100
      %v4429 = vpack.c.b16 %v3109, %v3101
      %v4430 = vpack.c.b16 %v3110, %v3102
      %v4431 = vpack.c.b16 %v3111, %v3103
      %v4432 = vpack.c.b16 %v3112, %v3104
      %v4433 = vpack.c.b16 %v3113, %v3105
      %v4434 = vpack.c.b16 %v3114, %v3106
      %v4435 = vpack.c.b16 %v3123, %v3115
      %v4436 = vpack.c.b16 %v3124, %v3116
      %v4437 = vpack.c.b16 %v3125, %v3117
      %v4438 = vpack.c.b16 %v3126, %v3118
      %v4439 = vpack.c.b16 %v3127, %v3119
      %v4440 = vpack.c.b16 %v3128, %v3120
      %v4441 = vpack.c.b16 %v3129, %v3121
      %v4442 = vpack.c.b16 %v3130, %v3122
      %v4443 = vpack.c.b16 %v3139, %v3131
      %v4444 = vpack.c.b16 %v3140, %v3132
      %v4445 = vpack.c.b16 %v3141, %v3133
      %v4446 = vpack.c.b16 %v3142, %v3134
      %v4447 = vpack.c.b16 %v3143, %v3135
      %v4448 = vpack.c.b16 %v3144, %v3136
      %v4449 = vpack.c.b16 %v3145, %v3137
      %v4450 = vpack.c.b16 %v3146, %v3138
      %v4451 = vpack.c.b16 %v3155, %v3147
      %v4452 = vpack.c.b16 %v3156, %v3148
      %v4453 = vpack.c.b16 %v3157, %v3149
      %v4454 = vpack.c.b16 %v3158, %v3150
      %v4455 = vpack.c.b16 %v3159, %v3151
      %v4456 = vpack.c.b16 %v3160, %v3152
      %v4457 = vpack.c.b16 %v3161, %v3153
      %v4458 = vpack.c.b16 %v3162, %v3154
      %v4459 = vpack.c.b16 %v3171, %v3163
      %v4460 = vpack.c.b16 %v3172, %v3164
      %v4461 = vpack.c.b16 %v3173, %v3165
      %v4462 = vpack.c.b16 %v3174, %v3166
      %v4463 = vpack.c.b16 %v3175, %v3167
      %v4464 = vpack.c.b16 %v3176, %v3168
      %v4465 = vpack.c.b16 %v3177, %v3169
      %v4466 = vpack.c.b16 %v3178, %v3170
      %v4467 = vpack.c.b16 %v3187, %v3179
      %v4468 = vpack.c.b16 %v3188, %v3180
      %v4469 = vpack.c.b16 %v3189, %v3181
      %v4470 = vpack.c.b16 %v3190, %v3182
      %v4471 = vpack.c.b16 %v3191, %v3183
      %v4472 = vpack.c.b16 %v3192, %v3184
      %v4473 = vpack.c.b16 %v3193, %v3185
      %v4474 = vpack.c.b16 %v3194, %v3186
      %v4475 = vpack.c.b16 %v3203, %v3195
      %v4476 = vpack.c.b16 %v3204, %v3196
      %v4477 = vpack.c.b16 %v3205, %v3197
      %v4478 = vpack.c.b16 %v3206, %v3198
      %v4479 = vpack.c.b16 %v3207, %v3199
      %v4480 = vpack.c.b16 %v3208, %v3200
      %v4481 = vpack.c.b16 %v3209, %v3201
      %v4482 = vpack.c.b16 %v3210, %v3202
      %v4483 = vpack.c.b16 %v3219, %v3211
      %v4484 = vpack.c.b16 %v3220, %v3212
      %v4485 = vpack.c.b16 %v3221, %v3213
      %v4486 = vpack.c.b16 %v3222, %v3214
      %v4487 = vpack.c.b16 %v3223, %v3215
      %v4488 = vpack.c.b16 %v3224, %v3216
      %v4489 = vpack.c.b16 %v3225, %v3217
      %v4490 = vpack.c.b16 %v3226, %v3218
      %v4491 = vpack.c.b16 %v3235, %v3227
      %v4492 = vpack.c.b16 %v3236, %v3228
      %v4493 = vpack.c.b16 %v3237, %v3229
      %v4494 = vpack.c.b16 %v3238, %v3230
      %v4495 = vpack.c.b16 %v3239, %v3231
      %v4496 = vpack.c.b16 %v3240, %v3232
      %v4497 = vpack.c.b16 %v3241, %v3233
      %v4498 = vpack.c.b16 %v3242, %v3234
      %v4499 = vpack.c.b16 %v3251, %v3243
      %v4500 = vpack.c.b16 %v3252, %v3244
      %v4501 = vpack.c.b16 %v3253, %v3245
      %v4502 = vpack.c.b16 %v3254, %v3246
      %v4503 = vpack.c.b16 %v3255, %v3247
      %v4504 = vpack.c.b16 %v3256, %v3248
      %v4505 = vpack.c.b16 %v3257, %v3249
      %v4506 = vpack.c.b16 %v3258, %v3250
      %v4507 = vpack.c.b16 %v3267, %v3259
      %v4508 = vpack.c.b16 %v3268, %v3260
      %v4509 = vpack.c.b16 %v3269, %v3261
      %v4510 = vpack.c.b16 %v3270, %v3262
      %v4511 = vpack.c.b16 %v3271, %v3263
      %v4512 = vpack.c.b16 %v3272, %v3264
      %v4513 = vpack.c.b16 %v3273, %v3265
      %v4514 = vpack.c.b16 %v3274, %v3266
      %v4515 = vpack.c.b16 %v3283, %v3275
      %v4516 = vpack.c.b16 %v3284, %v3276
      %v4517 = vpack.c.b16 %v3285, %v3277
      %v4518 = vpack.c.b16 %v3286, %v3278
      %v4519 = vpack.c.b16 %v3287, %v3279
      %v4520 = vpack.c.b16 %v3288, %v3280
      %v4521 = vpack.c.b16 %v3289, %v3281
      %v4522 = vpack.c.b16 %v3290, %v3282
      %v4523 = vpack.c.b16 %v3299, %v3291
      %v4524 = vpack.c.b16 %v3300, %v3292
      %v4525 = vpack.c.b16 %v3301, %v3293
      %v4526 = vpack.c.b16 %v3302, %v3294
      %v4527 = vpack.c.b16 %v3303, %v3295
      %v4528 = vpack.c.b16 %v3304, %v3296
      %v4529 = vpack.c.b16 %v3305, %v3297
      %v4530 = vpack.c.b16 %v3306, %v3298
      %v4531 = vpack.c.b16 %v3315, %v3307
      %v4532 = vpack.c.b16 %v3316, %v3308
      %v4533 = vpack.c.b16 %v3317, %v3309
      %v4534 = vpack.c.b16 %v3318, %v3310
      %v4535 = vpack.c.b16 %v3319, %v3311
      %v4536 = vpack.c.b16 %v3320, %v3312
      %v4537 = vpack.c.b16 %v3321, %v3313
      %v4538 = vpack.c.b16 %v3322, %v3314
      %v4539 = vpack.c.b16 %v3331, %v3323
      %v4540 = vpack.c.b16 %v3332, %v3324
      %v4541 = vpack.c.b16 %v3333, %v3325
      %v4542 = vpack.c.b16 %v3334, %v3326
      %v4543 = vpack.c.b16 %v3335, %v3327
      %v4544 = vpack.c.b16 %v3336, %v3328
      %v4545 = vpack.c.b16 %v3337, %v3329
      %v4546 = vpack.c.b16 %v3338, %v3330
      %v4547 = vpack.c.b16 %v3347, %v3339
      %v4548 = vpack.c.b16 %v3348, %v3340
      %v4549 = vpack.c.b16 %v3349, %v3341
      %v4550 = vpack.c.b16 %v3350, %v3342
      %v4551 = vpack.c.b16 %v3351, %v3343
      %v4552 = vpack.c.b16 %v3352, %v3344
      %v4553 = vpack.c.b16 %v3353, %v3345
      %v4554 = vpack.c.b16 %v3354, %v3346
      %v4555 = vpack.c.b16 %v3363, %v3355
      %v4556 = vpack.c.b16 %v3364, %v3356
      %v4557 = vpack.c.b16 %v3365, %v3357
      %v4558 = vpack.c.b16 %v3366, %v3358
      %v4559 = vpack.c.b16 %v3367, %v3359
      %v4560 = vpack.c.b16 %v3368, %v3360
      %v4561 = vpack.c.b16 %v3369, %v3361
      %v4562 = vpack.c.b16 %v3370, %v3362
      %v4563 = vpack.c.b16 %v3379, %v3371
      %v4564 = vpack.c.b16 %v3380, %v3372
      %v4565 = vpack.c.b16 %v3381, %v3373
      %v4566 = vpack.c.b16 %v3382, %v3374
      %v4567 = vpack.c.b16 %v3383, %v3375
      %v4568 = vpack.c.b16 %v3384, %v3376
      %v4569 = vpack.c.b16 %v3385, %v3377
      %v4570 = vpack.c.b16 %v3386, %v3378
      %v4571 = vpack.c.b16 %v3395, %v3387
      %v4572 = vpack.c.b16 %v3396, %v3388
      %v4573 = vpack.c.b16 %v3397, %v3389
      %v4574 = vpack.c.b16 %v3398, %v3390
      %v4575 = vpack.c.b16 %v3399, %v3391
      %v4576 = vpack.c.b16 %v3400, %v3392
      %v4577 = vpack.c.b16 %v3401, %v3393
      %v4578 = vpack.c.b16 %v3402, %v3394
      %v4579 = vpack.c.b16 %v3411, %v3403
      %v4580 = vpack.c.b16 %v3412, %v3404
      %v4581 = vpack.c.b16 %v3413, %v3405
      %v4582 = vpack.c.b16 %v3414, %v3406
      %v4583 = vpack.c.b16 %v3415, %v3407
      %v4584 = vpack.c.b16 %v3416, %v3408
      %v4585 = vpack.c.b16 %v3417, %v3409
      %v4586 = vpack.c.b16 %v3418, %v3410
      %v4587 = vpack.c.b16 %v3427, %v3419
      %v4588 = vpack.c.b16 %v3428, %v3420
      %v4589 = vpack.c.b16 %v3429, %v3421
      %v4590 = vpack.c.b16 %v3430, %v3422
      %v4591 = vpack.c.b16 %v3431, %v3423
      %v4592 = vpack.c.b16 %v3432, %v3424
      %v4593 = vpack.c.b16 %v3433, %v3425
      %v4594 = vpack.c.b16 %v3434, %v3426
      %v4595 = vpack.c.b16 %v3443, %v3435
      %v4596 = vpack.c.b16 %v3444, %v3436
      %v4597 = vpack.c.b16 %v3445, %v3437
      %v4598 = vpack.c.b16 %v3446, %v3438
      %v4599 = vpack.c.b16 %v3447, %v3439
      %v4600 = vpack.c.b16 %v3448, %v3440
      %v4601 = vpack.c.b16 %v3449, %v3441
      %v4602 = vpack.c.b16 %v3450, %v3442
      %v4603 = vpack.c.b16 %v3459, %v3451
      %v4604 = vpack.c.b16 %v3460, %v3452
      %v4605 = vpack.c.b16 %v3461, %v3453
      %v4606 = vpack.c.b16 %v3462, %v3454
      %v4607 = vpack.c.b16 %v3463, %v3455
      %v4608 = vpack.c.b16 %v3464, %v3456
      %v4609 = vpack.c.b16 %v3465, %v3457
      %v4610 = vpack.c.b16 %v3466, %v3458
      %v4611 = vpack.c.b16 %v3475, %v3467
      %v4612 = vpack.c.b16 %v3476, %v3468
      %v4613 = vpack.c.b16 %v3477, %v3469
      %v4614 = vpack.c.b16 %v3478, %v3470
      %v4615 = vpack.c.b16 %v3479, %v3471
      %v4616 = vpack.c.b16 %v3480, %v3472
      %v4617 = vpack.c.b16 %v3481, %v3473
      %v4618 = vpack.c.b16 %v3482, %v3474
      %v4619 = vpack.c.b16 %v3491, %v3483
      %v4620 = vpack.c.b16 %v3492, %v3484
      %v4621 = vpack.c.b16 %v3493, %v3485
      %v4622 = vpack.c.b16 %v3494, %v3486
      %v4623 = vpack.c.b16 %v3495, %v3487
      %v4624 = vpack.c.b16 %v3496, %v3488
      %v4625 = vpack.c.b16 %v3497, %v3489
      %v4626 = vpack.c.b16 %v3498, %v3490
      %v4627 = vpack.c.b16 %v3507, %v3499
      %v4628 = vpack.c.b16 %v3508, %v3500
      %v4629 = vpack.c.b16 %v3509, %v3501
      %v4630 = vpack.c.b16 %v3510, %v3502
      %v4631 = vpack.c.b16 %v3511, %v3503
      %v4632 = vpack.c.b16 %v3512, %v3504
      %v4633 = vpack.c.b16 %v3513, %v3505
      %v4634 = vpack.c.b16 %v3514, %v3506
      %v4635 = vpack.c.b16 %v3523, %v3515
      %v4636 = vpack.c.b16 %v3524, %v3516
      %v4637 = vpack.c.b16 %v3525, %v3517
      %v4638 = vpack.c.b16 %v3526, %v3518
      %v4639 = vpack.c.b16 %v3527, %v3519
      %v4640 = vpack.c.b16 %v3528, %v3520
      %v4641 = vpack.c.b16 %v3529, %v3521
      %v4642 = vpack.c.b16 %v3530, %v3522
      %v4643 = vpack.c.b16 %v3539, %v3531
      %v4644 = vpack.c.b16 %v3540, %v3532
      %v4645 = vpack.c.b16 %v3541, %v3533
      %v4646 = vpack.c.b16 %v3542, %v3534
      %v4647 = vpack.c.b16 %v3543, %v3535
      %v4648 = vpack.c.b16 %v3544, %v3536
      %v4649 = vpack.c.b16 %v3545, %v3537
      %v4650 = vpack.c.b16 %v3546, %v3538
      %v4651 = vpack.c.b16 %v3555, %v3547
      %v4652 = vpack.c.b16 %v3556, %v3548
      %v4653 = vpack.c.b16 %v3557, %v3549
      %v4654 = vpack.c.b16 %v3558, %v3550
      %v4655 = vpack.c.b16 %v3559, %v3551
      %v4656 = vpack.c.b16 %v3560, %v3552
      %v4657 = vpack.c.b16 %v3561, %v3553
      %v4658 = vpack.c.b16 %v3562, %v3554
      %v4659 = vpack.c.b16 %v3571, %v3563
      %v4660 = vpack.c.b16 %v3572, %v3564
      %v4661 = vpack.c.b16 %v3573, %v3565
      %v4662 = vpack.c.b16 %v3574, %v3566
      %v4663 = vpack.c.b16 %v3575, %v3567
      %v4664 = vpack.c.b16 %v3576, %v3568
      %v4665 = vpack.c.b16 %v3577, %v3569
      %v4666 = vpack.c.b16 %v3578, %v3570
      %v4667 = vpack.c.b16 %v3587, %v3579
      %v4668 = vpack.c.b16 %v3588, %v3580
      %v4669 = vpack.c.b16 %v3589, %v3581
      %v4670 = vpack.c.b16 %v3590, %v3582
      %v4671 = vpack.c.b16 %v3591, %v3583
      %v4672 = vpack.c.b16 %v3592, %v3584
      %v4673 = vpack.c.b16 %v3593, %v3585
      %v4674 = vpack.c.b16 %v3594, %v3586
      %v4675 = vpack.c.b16 %v3603, %v3595
      %v4676 = vpack.c.b16 %v3604, %v3596
      %v4677 = vpack.c.b16 %v3605, %v3597
      %v4678 = vpack.c.b16 %v3606, %v3598
      %v4679 = vpack.c.b16 %v3607, %v3599
      %v4680 = vpack.c.b16 %v3608, %v3600
      %v4681 = vpack.c.b16 %v3609, %v3601
      %v4682 = vpack.c.b16 %v3610, %v3602
      %v4683 = vpack.c.b16 %v3619, %v3611
      %v4684 = vpack.c.b16 %v3620, %v3612
      %v4685 = vpack.c.b16 %v3621, %v3613
      %v4686 = vpack.c.b16 %v3622, %v3614
      %v4687 = vpack.c.b16 %v3623, %v3615
      %v4688 = vpack.c.b16 %v3624, %v3616
      %v4689 = vpack.c.b16 %v3625, %v3617
      %v4690 = vpack.c.b16 %v3626, %v3618
      %v4691 = vpack.c.b16 %v3635, %v3627
      %v4692 = vpack.c.b16 %v3636, %v3628
      %v4693 = vpack.c.b16 %v3637, %v3629
      %v4694 = vpack.c.b16 %v3638, %v3630
      %v4695 = vpack.c.b16 %v3639, %v3631
      %v4696 = vpack.c.b16 %v3640, %v3632
      %v4697 = vpack.c.b16 %v3641, %v3633
      %v4698 = vpack.c.b16 %v3642, %v3634
      %v4699 = vpack.c.b16 %v3651, %v3643
      %v4700 = vpack.c.b16 %v3652, %v3644
      %v4701 = vpack.c.b16 %v3653, %v3645
      %v4702 = vpack.c.b16 %v3654, %v3646
      %v4703 = vpack.c.b16 %v3655, %v3647
      %v4704 = vpack.c.b16 %v3656, %v3648
      %v4705 = vpack.c.b16 %v3657, %v3649
      %v4706 = vpack.c.b16 %v3658, %v3650
      %v4707 = vpack.c.b16 %v3667, %v3659
      %v4708 = vpack.c.b16 %v3668, %v3660
      %v4709 = vpack.c.b16 %v3669, %v3661
      %v4710 = vpack.c.b16 %v3670, %v3662
      %v4711 = vpack.c.b16 %v3671, %v3663
      %v4712 = vpack.c.b16 %v3672, %v3664
      %v4713 = vpack.c.b16 %v3673, %v3665
      %v4714 = vpack.c.b16 %v3674, %v3666
      %v4715 = vpack.c.b16 %v3683, %v3675
      %v4716 = vpack.c.b16 %v3684, %v3676
      %v4717 = vpack.c.b16 %v3685, %v3677
      %v4718 = vpack.c.b16 %v3686, %v3678
      %v4719 = vpack.c.b16 %v3687, %v3679
      %v4720 = vpack.c.b16 %v3688, %v3680
      %v4721 = vpack.c.b16 %v3689, %v3681
      %v4722 = vpack.c.b16 %v3690, %v3682
      %v4723 = vpack.c.b16 %v3699, %v3691
      %v4724 = vpack.c.b16 %v3700, %v3692
      %v4725 = vpack.c.b16 %v3701, %v3693
      %v4726 = vpack.c.b16 %v3702, %v3694
      %v4727 = vpack.c.b16 %v3703, %v3695
      %v4728 = vpack.c.b16 %v3704, %v3696
      %v4729 = vpack.c.b16 %v3705, %v3697
      %v4730 = vpack.c.b16 %v3706, %v3698
      %v4731 = vpack.c.b16 %v3715, %v3707
      %v4732 = vpack.c.b16 %v3716, %v3708
      %v4733 = vpack.c.b16 %v3717, %v3709
      %v4734 = vpack.c.b16 %v3718, %v3710
      %v4735 = vpack.c.b16 %v3719, %v3711
      %v4736 = vpack.c.b16 %v3720, %v3712
      %v4737 = vpack.c.b16 %v3721, %v3713
      %v4738 = vpack.c.b16 %v3722, %v3714
      %v4739 = vpack.c.b16 %v3731, %v3723
      %v4740 = vpack.c.b16 %v3732, %v3724
      %v4741 = vpack.c.b16 %v3733, %v3725
      %v4742 = vpack.c.b16 %v3734, %v3726
      %v4743 = vpack.c.b16 %v3735, %v3727
      %v4744 = vpack.c.b16 %v3736, %v3728
      %v4745 = vpack.c.b16 %v3737, %v3729
      %v4746 = vpack.c.b16 %v3738, %v3730
      %v4747 = vpack.c.b16 %v3747, %v3739
      %v4748 = vpack.c.b16 %v3748, %v3740
      %v4749 = vpack.c.b16 %v3749, %v3741
      %v4750 = vpack.c.b16 %v3750, %v3742
      %v4751 = vpack.c.b16 %v3751, %v3743
      %v4752 = vpack.c.b16 %v3752, %v3744
      %v4753 = vpack.c.b16 %v3753, %v3745
      %v4754 = vpack.c.b16 %v3754, %v3746
      %v4755 = vpack.c.b16 %v3763, %v3755
      %v4756 = vpack.c.b16 %v3764, %v3756
      %v4757 = vpack.c.b16 %v3765, %v3757
      %v4758 = vpack.c.b16 %v3766, %v3758
      %v4759 = vpack.c.b16 %v3767, %v3759
      %v4760 = vpack.c.b16 %v3768, %v3760
      %v4761 = vpack.c.b16 %v3769, %v3761
      %v4762 = vpack.c.b16 %v3770, %v3762
      %v4763 = vpack.c.b16 %v3779, %v3771
      %v4764 = vpack.c.b16 %v3780, %v3772
      %v4765 = vpack.c.b16 %v3781, %v3773
      %v4766 = vpack.c.b16 %v3782, %v3774
      %v4767 = vpack.c.b16 %v3783, %v3775
      %v4768 = vpack.c.b16 %v3784, %v3776
      %v4769 = vpack.c.b16 %v3785, %v3777
      %v4770 = vpack.c.b16 %v3786, %v3778
      %v4771 = vpack.c.b16 %v3795, %v3787
      %v4772 = vpack.c.b16 %v3796, %v3788
      %v4773 = vpack.c.b16 %v3797, %v3789
      %v4774 = vpack.c.b16 %v3798, %v3790
      %v4775 = vpack.c.b16 %v3799, %v3791
      %v4776 = vpack.c.b16 %v3800, %v3792
      %v4777 = vpack.c.b16 %v3801, %v3793
      %v4778 = vpack.c.b16 %v3802, %v3794
      %v4779 = vpack.c.b16 %v3811, %v3803
      %v4780 = vpack.c.b16 %v3812, %v3804
      %v4781 = vpack.c.b16 %v3813, %v3805
      %v4782 = vpack.c.b16 %v3814, %v3806
      %v4783 = vpack.c.b16 %v3815, %v3807
      %v4784 = vpack.c.b16 %v3816, %v3808
      %v4785 = vpack.c.b16 %v3817, %v3809
      %v4786 = vpack.c.b16 %v3818, %v3810
      %v4787 = vpack.c.b16 %v3827, %v3819
      %v4788 = vpack.c.b16 %v3828, %v3820
      %v4789 = vpack.c.b16 %v3829, %v3821
      %v4790 = vpack.c.b16 %v3830, %v3822
      %v4791 = vpack.c.b16 %v3831, %v3823
      %v4792 = vpack.c.b16 %v3832, %v3824
      %v4793 = vpack.c.b16 %v3833, %v3825
      %v4794 = vpack.c.b16 %v3834, %v3826
      %v4795 = vpack.c.b16 %v3843, %v3835
      %v4796 = vpack.c.b16 %v3844, %v3836
      %v4797 = vpack.c.b16 %v3845, %v3837
      %v4798 = vpack.c.b16 %v3846, %v3838
      %v4799 = vpack.c.b16 %v3847, %v3839
      %v4800 = vpack.c.b16 %v3848, %v3840
      %v4801 = vpack.c.b16 %v3849, %v3841
      %v4802 = vpack.c.b16 %v3850, %v3842
      %v4803 = vpack.c.b16 %v3859, %v3851
      %v4804 = vpack.c.b16 %v3860, %v3852
      %v4805 = vpack.c.b16 %v3861, %v3853
      %v4806 = vpack.c.b16 %v3862, %v3854
      %v4807 = vpack.c.b16 %v3863, %v3855
      %v4808 = vpack.c.b16 %v3864, %v3856
      %v4809 = vpack.c.b16 %v3865, %v3857
      %v4810 = vpack.c.b16 %v3866, %v3858
      %v4811 = vpack.c.b16 %v3875, %v3867
      %v4812 = vpack.c.b16 %v3876, %v3868
      %v4813 = vpack.c.b16 %v3877, %v3869
      %v4814 = vpack.c.b16 %v3878, %v3870
      %v4815 = vpack.c.b16 %v3879, %v3871
      %v4816 = vpack.c.b16 %v3880, %v3872
      %v4817 = vpack.c.b16 %v3881, %v3873
      %v4818 = vpack.c.b16 %v3882, %v3874
      %v4819 = vpack.c.b16 %v3891, %v3883
      %v4820 = vpack.c.b16 %v3892, %v3884
      %v4821 = vpack.c.b16 %v3893, %v3885
      %v4822 = vpack.c.b16 %v3894, %v3886
      %v4823 = vpack.c.b16 %v3895, %v3887
      %v4824 = vpack.c.b16 %v3896, %v3888
      %v4825 = vpack.c.b16 %v3897, %v3889
      %v4826 = vpack.c.b16 %v3898, %v3890
      %v4827 = vpack.c.b16 %v3907, %v3899
      %v4828 = vpack.c.b16 %v3908, %v3900
      %v4829 = vpack.c.b16 %v3909, %v3901
      %v4830 = vpack.c.b16 %v3910, %v3902
      %v4831 = vpack.c.b16 %v3911, %v3903
      %v4832 = vpack.c.b16 %v3912, %v3904
      %v4833 = vpack.c.b16 %v3913, %v3905
      %v4834 = vpack.c.b16 %v3914, %v3906
      %v4835 = vpack.c.b16 %v3923, %v3915
      %v4836 = vpack.c.b16 %v3924, %v3916
      %v4837 = vpack.c.b16 %v3925, %v3917
      %v4838 = vpack.c.b16 %v3926, %v3918
      %v4839 = vpack.c.b16 %v3927, %v3919
      %v4840 = vpack.c.b16 %v3928, %v3920
      %v4841 = vpack.c.b16 %v3929, %v3921
      %v4842 = vpack.c.b16 %v3930, %v3922
      %v4843 = vpack.c.b16 %v3939, %v3931
      %v4844 = vpack.c.b16 %v3940, %v3932
      %v4845 = vpack.c.b16 %v3941, %v3933
      %v4846 = vpack.c.b16 %v3942, %v3934
      %v4847 = vpack.c.b16 %v3943, %v3935
      %v4848 = vpack.c.b16 %v3944, %v3936
      %v4849 = vpack.c.b16 %v3945, %v3937
      %v4850 = vpack.c.b16 %v3946, %v3938
      %v4851 = vpack.c.b16 %v3955, %v3947
      %v4852 = vpack.c.b16 %v3956, %v3948
      %v4853 = vpack.c.b16 %v3957, %v3949
      %v4854 = vpack.c.b16 %v3958, %v3950
      %v4855 = vpack.c.b16 %v3959, %v3951
      %v4856 = vpack.c.b16 %v3960, %v3952
      %v4857 = vpack.c.b16 %v3961, %v3953
      %v4858 = vpack.c.b16 %v3962, %v3954
      %5755 = vmatprep.subr.bf16.mxu0 %v4020
      %5756 = vmatpush1.bf16.msra.mxu0 %v4019
      %5757 = vmatprep.subr.bf16.mxu0 %v4012
      %5758 = vmatpush1.bf16.msra.mxu0 %v4011
      %5759 = vmatprep.subr.bf16.mxu0 %v4004
      %5760 = vmatpush1.bf16.msra.mxu0 %v4003
      %5761 = vmatprep.subr.bf16.mxu0 %v3996
      %5762 = vmatpush1.bf16.msra.mxu0 %v3995
      %5763 = vmatprep.subr.bf16.mxu0 %v3988
      %5764 = vmatpush1.bf16.msra.mxu0 %v3987
      %5765 = vmatprep.subr.bf16.mxu0 %v3980
      %5766 = vmatpush1.bf16.msra.mxu0 %v3979
      %5767 = vmatprep.subr.bf16.mxu0 %v3972
      %5768 = vmatpush1.bf16.msra.mxu0 %v3971
      %5769 = vmatprep.subr.bf16.mxu0 %v3964
      %5770 = vmatpush1.bf16.msra.mxu0 %v3963
      %5771 = vmatprep.subr.bf16.mxu0 %v4084
      %5772 = vmatpush2.bf16.msra.mxu0 %v4083
      %5773 = vmatprep.subr.bf16.mxu0 %v4076
      %5774 = vmatpush2.bf16.msra.mxu0 %v4075
      %5775 = vmatprep.subr.bf16.mxu0 %v4068
      %5776 = vmatpush2.bf16.msra.mxu0 %v4067
      %5777 = vmatprep.subr.bf16.mxu0 %v4060
      %5778 = vmatpush2.bf16.msra.mxu0 %v4059
      %5779 = vmatprep.subr.bf16.mxu0 %v4052
      %5780 = vmatpush2.bf16.msra.mxu0 %v4051
      %5781 = vmatprep.subr.bf16.mxu0 %v4044
      %5782 = vmatpush2.bf16.msra.mxu0 %v4043
      %5783 = vmatprep.subr.bf16.mxu0 %v4036
      %5784 = vmatpush2.bf16.msra.mxu0 %v4035
      %5785 = vmatprep.subr.bf16.mxu0 %v4028
      %5786 = vmatpush2.bf16.msra.mxu0 %v4027
      %5787 = vmatprep.mubr.bf16.mxu0 %v366
      %5788 = vmatmul.mubr.bf16.gmra.mxu0 %v365
      %v5789 = vpop.f32.mrf.mxu0
      %v5790 = vadd.f32 0.0, %v5789
      %v5791 = vpop.f32.mrf.mxu0
      %v5792 = vadd.f32 0.0, %v5791
      %v5793 = vpop.f32.mrf.mxu0
      %v5794 = vpop.f32.mrf.mxu0
      %5795 = vdwg.mxu0
      %5796 = vmatprep.subr.bf16.mxu0 %v4148
      %5797 = vmatpush1.bf16.msra.mxu0 %v4147
      %5798 = vmatprep.subr.bf16.mxu0 %v4140
      %5799 = vmatpush1.bf16.msra.mxu0 %v4139
      %5800 = vmatprep.subr.bf16.mxu0 %v4132
      %5801 = vmatpush1.bf16.msra.mxu0 %v4131
      %5802 = vmatprep.subr.bf16.mxu0 %v4124
      %5803 = vmatpush1.bf16.msra.mxu0 %v4123
      %5804 = vmatprep.subr.bf16.mxu0 %v4116
      %5805 = vmatpush1.bf16.msra.mxu0 %v4115
      %5806 = vmatprep.subr.bf16.mxu0 %v4108
      %5807 = vmatpush1.bf16.msra.mxu0 %v4107
      %5808 = vmatprep.subr.bf16.mxu0 %v4100
      %5809 = vmatpush1.bf16.msra.mxu0 %v4099
      %5810 = vmatprep.subr.bf16.mxu0 %v4092
      %5811 = vmatpush1.bf16.msra.mxu0 %v4091
      %5812 = vmatprep.subr.bf16.mxu0 %v4212
      %5813 = vmatpush2.bf16.msra.mxu0 %v4211
      %5814 = vmatprep.subr.bf16.mxu0 %v4204
      %5815 = vmatpush2.bf16.msra.mxu0 %v4203
      %5816 = vmatprep.subr.bf16.mxu0 %v4196
      %5817 = vmatpush2.bf16.msra.mxu0 %v4195
      %5818 = vmatprep.subr.bf16.mxu0 %v4188
      %5819 = vmatpush2.bf16.msra.mxu0 %v4187
      %5820 = vmatprep.subr.bf16.mxu0 %v4180
      %5821 = vmatpush2.bf16.msra.mxu0 %v4179
      %5822 = vmatprep.subr.bf16.mxu0 %v4172
      %5823 = vmatpush2.bf16.msra.mxu0 %v4171
      %5824 = vmatprep.subr.bf16.mxu0 %v4164
      %5825 = vmatpush2.bf16.msra.mxu0 %v4163
      %5826 = vmatprep.subr.bf16.mxu0 %v4156
      %5827 = vmatpush2.bf16.msra.mxu0 %v4155
      %5828 = vmatprep.mubr.bf16.mxu0 %v368
      %5829 = vmatmul.mubr.bf16.gmra.mxu0 %v367
      %v5830 = vpop.f32.mrf.mxu0
      %v5831 = vadd.f32 %v5790, %v5830
      %v5832 = vpop.f32.mrf.mxu0
      %v5833 = vadd.f32 %v5792, %v5832
      %v5834 = vpop.f32.mrf.mxu0
      %v5835 = vpop.f32.mrf.mxu0
      %5836 = vdwg.mxu0
      %5837 = vmatprep.subr.bf16.mxu0 %v4276
      %5838 = vmatpush1.bf16.msra.mxu0 %v4275
      %5839 = vmatprep.subr.bf16.mxu0 %v4268
      %5840 = vmatpush1.bf16.msra.mxu0 %v4267
      %5841 = vmatprep.subr.bf16.mxu0 %v4260
      %5842 = vmatpush1.bf16.msra.mxu0 %v4259
      %5843 = vmatprep.subr.bf16.mxu0 %v4252
      %5844 = vmatpush1.bf16.msra.mxu0 %v4251
      %5845 = vmatprep.subr.bf16.mxu0 %v4244
      %5846 = vmatpush1.bf16.msra.mxu0 %v4243
      %5847 = vmatprep.subr.bf16.mxu0 %v4236
      %5848 = vmatpush1.bf16.msra.mxu0 %v4235
      %5849 = vmatprep.subr.bf16.mxu0 %v4228
      %5850 = vmatpush1.bf16.msra.mxu0 %v4227
      %5851 = vmatprep.subr.bf16.mxu0 %v4220
      %5852 = vmatpush1.bf16.msra.mxu0 %v4219
      %5853 = vmatprep.subr.bf16.mxu0 %v4340
      %5854 = vmatpush2.bf16.msra.mxu0 %v4339
      %5855 = vmatprep.subr.bf16.mxu0 %v4332
      %5856 = vmatpush2.bf16.msra.mxu0 %v4331
      %5857 = vmatprep.subr.bf16.mxu0 %v4324
      %5858 = vmatpush2.bf16.msra.mxu0 %v4323
      %5859 = vmatprep.subr.bf16.mxu0 %v4316
      %5860 = vmatpush2.bf16.msra.mxu0 %v4315
      %5861 = vmatprep.subr.bf16.mxu0 %v4308
      %5862 = vmatpush2.bf16.msra.mxu0 %v4307
      %5863 = vmatprep.subr.bf16.mxu0 %v4300
      %5864 = vmatpush2.bf16.msra.mxu0 %v4299
      %5865 = vmatprep.subr.bf16.mxu0 %v4292
      %5866 = vmatpush2.bf16.msra.mxu0 %v4291
      %5867 = vmatprep.subr.bf16.mxu0 %v4284
      %5868 = vmatpush2.bf16.msra.mxu0 %v4283
      %5869 = vmatprep.mubr.bf16.mxu0 %v370
      %5870 = vmatmul.mubr.bf16.gmra.mxu0 %v369
      %v5871 = vpop.f32.mrf.mxu0
      %v5872 = vadd.f32 %v5831, %v5871
      %v5873 = vpop.f32.mrf.mxu0
      %v5874 = vadd.f32 %v5833, %v5873
      %v5875 = vpop.f32.mrf.mxu0
      %v5876 = vpop.f32.mrf.mxu0
      %5877 = vdwg.mxu0
      %5878 = vmatprep.subr.bf16.mxu0 %v4404
      %5879 = vmatpush1.bf16.msra.mxu0 %v4403
      %5880 = vmatprep.subr.bf16.mxu0 %v4396
      %5881 = vmatpush1.bf16.msra.mxu0 %v4395
      %5882 = vmatprep.subr.bf16.mxu0 %v4388
      %5883 = vmatpush1.bf16.msra.mxu0 %v4387
      %5884 = vmatprep.subr.bf16.mxu0 %v4380
      %5885 = vmatpush1.bf16.msra.mxu0 %v4379
      %5886 = vmatprep.subr.bf16.mxu0 %v4372
      %5887 = vmatpush1.bf16.msra.mxu0 %v4371
      %5888 = vmatprep.subr.bf16.mxu0 %v4364
      %5889 = vmatpush1.bf16.msra.mxu0 %v4363
      %5890 = vmatprep.subr.bf16.mxu0 %v4356
      %5891 = vmatpush1.bf16.msra.mxu0 %v4355
      %5892 = vmatprep.subr.bf16.mxu0 %v4348
      %5893 = vmatpush1.bf16.msra.mxu0 %v4347
      %5894 = vmatprep.subr.bf16.mxu0 %v4468
      %5895 = vmatpush2.bf16.msra.mxu0 %v4467
      %5896 = vmatprep.subr.bf16.mxu0 %v4460
      %5897 = vmatpush2.bf16.msra.mxu0 %v4459
      %5898 = vmatprep.subr.bf16.mxu0 %v4452
      %5899 = vmatpush2.bf16.msra.mxu0 %v4451
      %5900 = vmatprep.subr.bf16.mxu0 %v4444
      %5901 = vmatpush2.bf16.msra.mxu0 %v4443
      %5902 = vmatprep.subr.bf16.mxu0 %v4436
      %5903 = vmatpush2.bf16.msra.mxu0 %v4435
      %5904 = vmatprep.subr.bf16.mxu0 %v4428
      %5905 = vmatpush2.bf16.msra.mxu0 %v4427
      %5906 = vmatprep.subr.bf16.mxu0 %v4420
      %5907 = vmatpush2.bf16.msra.mxu0 %v4419
      %5908 = vmatprep.subr.bf16.mxu0 %v4412
      %5909 = vmatpush2.bf16.msra.mxu0 %v4411
      %5910 = vmatprep.mubr.bf16.mxu0 %v372
      %5911 = vmatmul.mubr.bf16.gmra.mxu0 %v371
      %v5912 = vpop.f32.mrf.mxu0
      %v5913 = vadd.f32 %v5872, %v5912
      %v5914 = vpop.f32.mrf.mxu0
      %v5915 = vadd.f32 %v5874, %v5914
      %v5916 = vpop.f32.mrf.mxu0
      %v5917 = vpop.f32.mrf.mxu0
      %5918 = vdwg.mxu0
      %5919 = vmatprep.subr.bf16.mxu0 %v4532
      %5920 = vmatpush1.bf16.msra.mxu0 %v4531
      %5921 = vmatprep.subr.bf16.mxu0 %v4524
      %5922 = vmatpush1.bf16.msra.mxu0 %v4523
      %5923 = vmatprep.subr.bf16.mxu0 %v4516
      %5924 = vmatpush1.bf16.msra.mxu0 %v4515
      %5925 = vmatprep.subr.bf16.mxu0 %v4508
      %5926 = vmatpush1.bf16.msra.mxu0 %v4507
      %5927 = vmatprep.subr.bf16.mxu0 %v4500
      %5928 = vmatpush1.bf16.msra.mxu0 %v4499
      %5929 = vmatprep.subr.bf16.mxu0 %v4492
      %5930 = vmatpush1.bf16.msra.mxu0 %v4491
      %5931 = vmatprep.subr.bf16.mxu0 %v4484
      %5932 = vmatpush1.bf16.msra.mxu0 %v4483
      %5933 = vmatprep.subr.bf16.mxu0 %v4476
      %5934 = vmatpush1.bf16.msra.mxu0 %v4475
      %5935 = vmatprep.subr.bf16.mxu0 %v4596
      %5936 = vmatpush2.bf16.msra.mxu0 %v4595
      %5937 = vmatprep.subr.bf16.mxu0 %v4588
      %5938 = vmatpush2.bf16.msra.mxu0 %v4587
      %5939 = vmatprep.subr.bf16.mxu0 %v4580
      %5940 = vmatpush2.bf16.msra.mxu0 %v4579
      %5941 = vmatprep.subr.bf16.mxu0 %v4572
      %5942 = vmatpush2.bf16.msra.mxu0 %v4571
      %5943 = vmatprep.subr.bf16.mxu0 %v4564
      %5944 = vmatpush2.bf16.msra.mxu0 %v4563
      %5945 = vmatprep.subr.bf16.mxu0 %v4556
      %5946 = vmatpush2.bf16.msra.mxu0 %v4555
      %5947 = vmatprep.subr.bf16.mxu0 %v4548
      %5948 = vmatpush2.bf16.msra.mxu0 %v4547
      %5949 = vmatprep.subr.bf16.mxu0 %v4540
      %5950 = vmatpush2.bf16.msra.mxu0 %v4539
      %5951 = vmatprep.mubr.bf16.mxu0 %v374
      %5952 = vmatmul.mubr.bf16.gmra.mxu0 %v373
      %v5953 = vpop.f32.mrf.mxu0
      %v5954 = vadd.f32 %v5913, %v5953
      %v5955 = vpop.f32.mrf.mxu0
      %v5956 = vadd.f32 %v5915, %v5955
      %v5957 = vpop.f32.mrf.mxu0
      %v5958 = vpop.f32.mrf.mxu0
      %5959 = vdwg.mxu0
      %5960 = vmatprep.subr.bf16.mxu0 %v4660
      %5961 = vmatpush1.bf16.msra.mxu0 %v4659
      %5962 = vmatprep.subr.bf16.mxu0 %v4652
      %5963 = vmatpush1.bf16.msra.mxu0 %v4651
      %5964 = vmatprep.subr.bf16.mxu0 %v4644
      %5965 = vmatpush1.bf16.msra.mxu0 %v4643
      %5966 = vmatprep.subr.bf16.mxu0 %v4636
      %5967 = vmatpush1.bf16.msra.mxu0 %v4635
      %5968 = vmatprep.subr.bf16.mxu0 %v4628
      %5969 = vmatpush1.bf16.msra.mxu0 %v4627
      %5970 = vmatprep.subr.bf16.mxu0 %v4620
      %5971 = vmatpush1.bf16.msra.mxu0 %v4619
      %5972 = vmatprep.subr.bf16.mxu0 %v4612
      %5973 = vmatpush1.bf16.msra.mxu0 %v4611
      %5974 = vmatprep.subr.bf16.mxu0 %v4604
      %5975 = vmatpush1.bf16.msra.mxu0 %v4603
      %5976 = vmatprep.subr.bf16.mxu0 %v4724
      %5977 = vmatpush2.bf16.msra.mxu0 %v4723
      %5978 = vmatprep.subr.bf16.mxu0 %v4716
      %5979 = vmatpush2.bf16.msra.mxu0 %v4715
      %5980 = vmatprep.subr.bf16.mxu0 %v4708
      %5981 = vmatpush2.bf16.msra.mxu0 %v4707
      %5982 = vmatprep.subr.bf16.mxu0 %v4700
      %5983 = vmatpush2.bf16.msra.mxu0 %v4699
      %5984 = vmatprep.subr.bf16.mxu0 %v4692
      %5985 = vmatpush2.bf16.msra.mxu0 %v4691
      %5986 = vmatprep.subr.bf16.mxu0 %v4684
      %5987 = vmatpush2.bf16.msra.mxu0 %v4683
      %5988 = vmatprep.subr.bf16.mxu0 %v4676
      %5989 = vmatpush2.bf16.msra.mxu0 %v4675
      %5990 = vmatprep.subr.bf16.mxu0 %v4668
      %5991 = vmatpush2.bf16.msra.mxu0 %v4667
      %5992 = vmatprep.mubr.bf16.mxu0 %v376
      %5993 = vmatmul.mubr.bf16.gmra.mxu0 %v375
      %v5994 = vpop.f32.mrf.mxu0
      %v5995 = vadd.f32 %v5954, %v5994
      %v5996 = vpop.f32.mrf.mxu0
      %v5997 = vadd.f32 %v5956, %v5996
      %v5998 = vpop.f32.mrf.mxu0
      %v5999 = vpop.f32.mrf.mxu0
      %6000 = vdwg.mxu0
      %6001 = vmatprep.subr.bf16.mxu0 %v4788
      %6002 = vmatpush1.bf16.msra.mxu0 %v4787
      %6003 = vmatprep.subr.bf16.mxu0 %v4780
      %6004 = vmatpush1.bf16.msra.mxu0 %v4779
      %6005 = vmatprep.subr.bf16.mxu0 %v4772
      %6006 = vmatpush1.bf16.msra.mxu0 %v4771
      %6007 = vmatprep.subr.bf16.mxu0 %v4764
      %6008 = vmatpush1.bf16.msra.mxu0 %v4763
      %6009 = vmatprep.subr.bf16.mxu0 %v4756
      %6010 = vmatpush1.bf16.msra.mxu0 %v4755
      %6011 = vmatprep.subr.bf16.mxu0 %v4748
      %6012 = vmatpush1.bf16.msra.mxu0 %v4747
      %6013 = vmatprep.subr.bf16.mxu0 %v4740
      %6014 = vmatpush1.bf16.msra.mxu0 %v4739
      %6015 = vmatprep.subr.bf16.mxu0 %v4732
      %6016 = vmatpush1.bf16.msra.mxu0 %v4731
      %6017 = vmatprep.subr.bf16.mxu0 %v4852
      %6018 = vmatpush2.bf16.msra.mxu0 %v4851
      %6019 = vmatprep.subr.bf16.mxu0 %v4844
      %6020 = vmatpush2.bf16.msra.mxu0 %v4843
      %6021 = vmatprep.subr.bf16.mxu0 %v4836
      %6022 = vmatpush2.bf16.msra.mxu0 %v4835
      %6023 = vmatprep.subr.bf16.mxu0 %v4828
      %6024 = vmatpush2.bf16.msra.mxu0 %v4827
      %6025 = vmatprep.subr.bf16.mxu0 %v4820
      %6026 = vmatpush2.bf16.msra.mxu0 %v4819
      %6027 = vmatprep.subr.bf16.mxu0 %v4812
      %6028 = vmatpush2.bf16.msra.mxu0 %v4811
      %6029 = vmatprep.subr.bf16.mxu0 %v4804
      %6030 = vmatpush2.bf16.msra.mxu0 %v4803
      %6031 = vmatprep.subr.bf16.mxu0 %v4796
      %6032 = vmatpush2.bf16.msra.mxu0 %v4795
      %6033 = vmatprep.mubr.bf16.mxu0 %v378
      %6034 = vmatmul.mubr.bf16.gmra.mxu0 %v377
      %v6035 = vpop.f32.mrf.mxu0
      %v6036 = vadd.f32 %v5995, %v6035
      %v6037 = vpop.f32.mrf.mxu0
      %v6038 = vadd.f32 %v5997, %v6037
      %v6039 = vpop.f32.mrf.mxu0
      %v6040 = vpop.f32.mrf.mxu0
      %6041 = vdwg.mxu0
      %6042 = vmatprep.subr.bf16.mxu0 %v4022
      %6043 = vmatpush1.bf16.msra.mxu0 %v4021
      %6044 = vmatprep.subr.bf16.mxu0 %v4014
      %6045 = vmatpush1.bf16.msra.mxu0 %v4013
      %6046 = vmatprep.subr.bf16.mxu0 %v4006
      %6047 = vmatpush1.bf16.msra.mxu0 %v4005
      %6048 = vmatprep.subr.bf16.mxu0 %v3998
      %6049 = vmatpush1.bf16.msra.mxu0 %v3997
      %6050 = vmatprep.subr.bf16.mxu0 %v3990
      %6051 = vmatpush1.bf16.msra.mxu0 %v3989
      %6052 = vmatprep.subr.bf16.mxu0 %v3982
      %6053 = vmatpush1.bf16.msra.mxu0 %v3981
      %6054 = vmatprep.subr.bf16.mxu0 %v3974
      %6055 = vmatpush1.bf16.msra.mxu0 %v3973
      %6056 = vmatprep.subr.bf16.mxu0 %v3966
      %6057 = vmatpush1.bf16.msra.mxu0 %v3965
      %6058 = vmatprep.subr.bf16.mxu0 %v4086
      %6059 = vmatpush2.bf16.msra.mxu0 %v4085
      %6060 = vmatprep.subr.bf16.mxu0 %v4078
      %6061 = vmatpush2.bf16.msra.mxu0 %v4077
      %6062 = vmatprep.subr.bf16.mxu0 %v4070
      %6063 = vmatpush2.bf16.msra.mxu0 %v4069
      %6064 = vmatprep.subr.bf16.mxu0 %v4062
      %6065 = vmatpush2.bf16.msra.mxu0 %v4061
      %6066 = vmatprep.subr.bf16.mxu0 %v4054
      %6067 = vmatpush2.bf16.msra.mxu0 %v4053
      %6068 = vmatprep.subr.bf16.mxu0 %v4046
      %6069 = vmatpush2.bf16.msra.mxu0 %v4045
      %6070 = vmatprep.subr.bf16.mxu0 %v4038
      %6071 = vmatpush2.bf16.msra.mxu0 %v4037
      %6072 = vmatprep.subr.bf16.mxu0 %v4030
      %6073 = vmatpush2.bf16.msra.mxu0 %v4029
      %6074 = vmatprep.mubr.bf16.mxu0 %v366
      %6075 = vmatmul.mubr.bf16.gmra.mxu0 %v365
      %v6076 = vpop.f32.mrf.mxu0
      %v6077 = vadd.f32 0.0, %v6076
      %v6078 = vpop.f32.mrf.mxu0
      %v6079 = vadd.f32 0.0, %v6078
      %v6080 = vpop.f32.mrf.mxu0
      %v6081 = vpop.f32.mrf.mxu0
      %6082 = vdwg.mxu0
      %6083 = vmatprep.subr.bf16.mxu0 %v4150
      %6084 = vmatpush1.bf16.msra.mxu0 %v4149
      %6085 = vmatprep.subr.bf16.mxu0 %v4142
      %6086 = vmatpush1.bf16.msra.mxu0 %v4141
      %6087 = vmatprep.subr.bf16.mxu0 %v4134
      %6088 = vmatpush1.bf16.msra.mxu0 %v4133
      %6089 = vmatprep.subr.bf16.mxu0 %v4126
      %6090 = vmatpush1.bf16.msra.mxu0 %v4125
      %6091 = vmatprep.subr.bf16.mxu0 %v4118
      %6092 = vmatpush1.bf16.msra.mxu0 %v4117
      %6093 = vmatprep.subr.bf16.mxu0 %v4110
      %6094 = vmatpush1.bf16.msra.mxu0 %v4109
      %6095 = vmatprep.subr.bf16.mxu0 %v4102
      %6096 = vmatpush1.bf16.msra.mxu0 %v4101
      %6097 = vmatprep.subr.bf16.mxu0 %v4094
      %6098 = vmatpush1.bf16.msra.mxu0 %v4093
      %6099 = vmatprep.subr.bf16.mxu0 %v4214
      %6100 = vmatpush2.bf16.msra.mxu0 %v4213
      %6101 = vmatprep.subr.bf16.mxu0 %v4206
      %6102 = vmatpush2.bf16.msra.mxu0 %v4205
      %6103 = vmatprep.subr.bf16.mxu0 %v4198
      %6104 = vmatpush2.bf16.msra.mxu0 %v4197
      %6105 = vmatprep.subr.bf16.mxu0 %v4190
      %6106 = vmatpush2.bf16.msra.mxu0 %v4189
      %6107 = vmatprep.subr.bf16.mxu0 %v4182
      %6108 = vmatpush2.bf16.msra.mxu0 %v4181
      %6109 = vmatprep.subr.bf16.mxu0 %v4174
      %6110 = vmatpush2.bf16.msra.mxu0 %v4173
      %6111 = vmatprep.subr.bf16.mxu0 %v4166
      %6112 = vmatpush2.bf16.msra.mxu0 %v4165
      %6113 = vmatprep.subr.bf16.mxu0 %v4158
      %6114 = vmatpush2.bf16.msra.mxu0 %v4157
      %6115 = vmatprep.mubr.bf16.mxu0 %v368
      %6116 = vmatmul.mubr.bf16.gmra.mxu0 %v367
      %v6117 = vpop.f32.mrf.mxu0
      %v6118 = vadd.f32 %v6077, %v6117
      %v6119 = vpop.f32.mrf.mxu0
      %v6120 = vadd.f32 %v6079, %v6119
      %v6121 = vpop.f32.mrf.mxu0
      %v6122 = vpop.f32.mrf.mxu0
      %6123 = vdwg.mxu0
      %6124 = vmatprep.subr.bf16.mxu0 %v4278
      %6125 = vmatpush1.bf16.msra.mxu0 %v4277
      %6126 = vmatprep.subr.bf16.mxu0 %v4270
      %6127 = vmatpush1.bf16.msra.mxu0 %v4269
      %6128 = vmatprep.subr.bf16.mxu0 %v4262
      %6129 = vmatpush1.bf16.msra.mxu0 %v4261
      %6130 = vmatprep.subr.bf16.mxu0 %v4254
      %6131 = vmatpush1.bf16.msra.mxu0 %v4253
      %6132 = vmatprep.subr.bf16.mxu0 %v4246
      %6133 = vmatpush1.bf16.msra.mxu0 %v4245
      %6134 = vmatprep.subr.bf16.mxu0 %v4238
      %6135 = vmatpush1.bf16.msra.mxu0 %v4237
      %6136 = vmatprep.subr.bf16.mxu0 %v4230
      %6137 = vmatpush1.bf16.msra.mxu0 %v4229
      %6138 = vmatprep.subr.bf16.mxu0 %v4222
      %6139 = vmatpush1.bf16.msra.mxu0 %v4221
      %6140 = vmatprep.subr.bf16.mxu0 %v4342
      %6141 = vmatpush2.bf16.msra.mxu0 %v4341
      %6142 = vmatprep.subr.bf16.mxu0 %v4334
      %6143 = vmatpush2.bf16.msra.mxu0 %v4333
      %6144 = vmatprep.subr.bf16.mxu0 %v4326
      %6145 = vmatpush2.bf16.msra.mxu0 %v4325
      %6146 = vmatprep.subr.bf16.mxu0 %v4318
      %6147 = vmatpush2.bf16.msra.mxu0 %v4317
      %6148 = vmatprep.subr.bf16.mxu0 %v4310
      %6149 = vmatpush2.bf16.msra.mxu0 %v4309
      %6150 = vmatprep.subr.bf16.mxu0 %v4302
      %6151 = vmatpush2.bf16.msra.mxu0 %v4301
      %6152 = vmatprep.subr.bf16.mxu0 %v4294
      %6153 = vmatpush2.bf16.msra.mxu0 %v4293
      %6154 = vmatprep.subr.bf16.mxu0 %v4286
      %6155 = vmatpush2.bf16.msra.mxu0 %v4285
      %6156 = vmatprep.mubr.bf16.mxu0 %v370
      %6157 = vmatmul.mubr.bf16.gmra.mxu0 %v369
      %v6158 = vpop.f32.mrf.mxu0
      %v6159 = vadd.f32 %v6118, %v6158
      %v6160 = vpop.f32.mrf.mxu0
      %v6161 = vadd.f32 %v6120, %v6160
      %v6162 = vpop.f32.mrf.mxu0
      %v6163 = vpop.f32.mrf.mxu0
      %6164 = vdwg.mxu0
      %6165 = vmatprep.subr.bf16.mxu0 %v4406
      %6166 = vmatpush1.bf16.msra.mxu0 %v4405
      %6167 = vmatprep.subr.bf16.mxu0 %v4398
      %6168 = vmatpush1.bf16.msra.mxu0 %v4397
      %6169 = vmatprep.subr.bf16.mxu0 %v4390
      %6170 = vmatpush1.bf16.msra.mxu0 %v4389
      %6171 = vmatprep.subr.bf16.mxu0 %v4382
      %6172 = vmatpush1.bf16.msra.mxu0 %v4381
      %6173 = vmatprep.subr.bf16.mxu0 %v4374
      %6174 = vmatpush1.bf16.msra.mxu0 %v4373
      %6175 = vmatprep.subr.bf16.mxu0 %v4366
      %6176 = vmatpush1.bf16.msra.mxu0 %v4365
      %6177 = vmatprep.subr.bf16.mxu0 %v4358
      %6178 = vmatpush1.bf16.msra.mxu0 %v4357
      %6179 = vmatprep.subr.bf16.mxu0 %v4350
      %6180 = vmatpush1.bf16.msra.mxu0 %v4349
      %6181 = vmatprep.subr.bf16.mxu0 %v4470
      %6182 = vmatpush2.bf16.msra.mxu0 %v4469
      %6183 = vmatprep.subr.bf16.mxu0 %v4462
      %6184 = vmatpush2.bf16.msra.mxu0 %v4461
      %6185 = vmatprep.subr.bf16.mxu0 %v4454
      %6186 = vmatpush2.bf16.msra.mxu0 %v4453
      %6187 = vmatprep.subr.bf16.mxu0 %v4446
      %6188 = vmatpush2.bf16.msra.mxu0 %v4445
      %6189 = vmatprep.subr.bf16.mxu0 %v4438
      %6190 = vmatpush2.bf16.msra.mxu0 %v4437
      %6191 = vmatprep.subr.bf16.mxu0 %v4430
      %6192 = vmatpush2.bf16.msra.mxu0 %v4429
      %6193 = vmatprep.subr.bf16.mxu0 %v4422
      %6194 = vmatpush2.bf16.msra.mxu0 %v4421
      %6195 = vmatprep.subr.bf16.mxu0 %v4414
      %6196 = vmatpush2.bf16.msra.mxu0 %v4413
      %6197 = vmatprep.mubr.bf16.mxu0 %v372
      %6198 = vmatmul.mubr.bf16.gmra.mxu0 %v371
      %v6199 = vpop.f32.mrf.mxu0
      %v6200 = vadd.f32 %v6159, %v6199
      %v6201 = vpop.f32.mrf.mxu0
      %v6202 = vadd.f32 %v6161, %v6201
      %v6203 = vpop.f32.mrf.mxu0
      %v6204 = vpop.f32.mrf.mxu0
      %6205 = vdwg.mxu0
      %6206 = vmatprep.subr.bf16.mxu0 %v4534
      %6207 = vmatpush1.bf16.msra.mxu0 %v4533
      %6208 = vmatprep.subr.bf16.mxu0 %v4526
      %6209 = vmatpush1.bf16.msra.mxu0 %v4525
      %6210 = vmatprep.subr.bf16.mxu0 %v4518
      %6211 = vmatpush1.bf16.msra.mxu0 %v4517
      %6212 = vmatprep.subr.bf16.mxu0 %v4510
      %6213 = vmatpush1.bf16.msra.mxu0 %v4509
      %6214 = vmatprep.subr.bf16.mxu0 %v4502
      %6215 = vmatpush1.bf16.msra.mxu0 %v4501
      %6216 = vmatprep.subr.bf16.mxu0 %v4494
      %6217 = vmatpush1.bf16.msra.mxu0 %v4493
      %6218 = vmatprep.subr.bf16.mxu0 %v4486
      %6219 = vmatpush1.bf16.msra.mxu0 %v4485
      %6220 = vmatprep.subr.bf16.mxu0 %v4478
      %6221 = vmatpush1.bf16.msra.mxu0 %v4477
      %6222 = vmatprep.subr.bf16.mxu0 %v4598
      %6223 = vmatpush2.bf16.msra.mxu0 %v4597
      %6224 = vmatprep.subr.bf16.mxu0 %v4590
      %6225 = vmatpush2.bf16.msra.mxu0 %v4589
      %6226 = vmatprep.subr.bf16.mxu0 %v4582
      %6227 = vmatpush2.bf16.msra.mxu0 %v4581
      %6228 = vmatprep.subr.bf16.mxu0 %v4574
      %6229 = vmatpush2.bf16.msra.mxu0 %v4573
      %6230 = vmatprep.subr.bf16.mxu0 %v4566
      %6231 = vmatpush2.bf16.msra.mxu0 %v4565
      %6232 = vmatprep.subr.bf16.mxu0 %v4558
      %6233 = vmatpush2.bf16.msra.mxu0 %v4557
      %6234 = vmatprep.subr.bf16.mxu0 %v4550
      %6235 = vmatpush2.bf16.msra.mxu0 %v4549
      %6236 = vmatprep.subr.bf16.mxu0 %v4542
      %6237 = vmatpush2.bf16.msra.mxu0 %v4541
      %6238 = vmatprep.mubr.bf16.mxu0 %v374
      %6239 = vmatmul.mubr.bf16.gmra.mxu0 %v373
      %v6240 = vpop.f32.mrf.mxu0
      %v6241 = vadd.f32 %v6200, %v6240
      %v6242 = vpop.f32.mrf.mxu0
      %v6243 = vadd.f32 %v6202, %v6242
      %v6244 = vpop.f32.mrf.mxu0
      %v6245 = vpop.f32.mrf.mxu0
      %6246 = vdwg.mxu0
      %6247 = vmatprep.subr.bf16.mxu0 %v4662
      %6248 = vmatpush1.bf16.msra.mxu0 %v4661
      %6249 = vmatprep.subr.bf16.mxu0 %v4654
      %6250 = vmatpush1.bf16.msra.mxu0 %v4653
      %6251 = vmatprep.subr.bf16.mxu0 %v4646
      %6252 = vmatpush1.bf16.msra.mxu0 %v4645
      %6253 = vmatprep.subr.bf16.mxu0 %v4638
      %6254 = vmatpush1.bf16.msra.mxu0 %v4637
      %6255 = vmatprep.subr.bf16.mxu0 %v4630
      %6256 = vmatpush1.bf16.msra.mxu0 %v4629
      %6257 = vmatprep.subr.bf16.mxu0 %v4622
      %6258 = vmatpush1.bf16.msra.mxu0 %v4621
      %6259 = vmatprep.subr.bf16.mxu0 %v4614
      %6260 = vmatpush1.bf16.msra.mxu0 %v4613
      %6261 = vmatprep.subr.bf16.mxu0 %v4606
      %6262 = vmatpush1.bf16.msra.mxu0 %v4605
      %6263 = vmatprep.subr.bf16.mxu0 %v4726
      %6264 = vmatpush2.bf16.msra.mxu0 %v4725
      %6265 = vmatprep.subr.bf16.mxu0 %v4718
      %6266 = vmatpush2.bf16.msra.mxu0 %v4717
      %6267 = vmatprep.subr.bf16.mxu0 %v4710
      %6268 = vmatpush2.bf16.msra.mxu0 %v4709
      %6269 = vmatprep.subr.bf16.mxu0 %v4702
      %6270 = vmatpush2.bf16.msra.mxu0 %v4701
      %6271 = vmatprep.subr.bf16.mxu0 %v4694
      %6272 = vmatpush2.bf16.msra.mxu0 %v4693
      %6273 = vmatprep.subr.bf16.mxu0 %v4686
      %6274 = vmatpush2.bf16.msra.mxu0 %v4685
      %6275 = vmatprep.subr.bf16.mxu0 %v4678
      %6276 = vmatpush2.bf16.msra.mxu0 %v4677
      %6277 = vmatprep.subr.bf16.mxu0 %v4670
      %6278 = vmatpush2.bf16.msra.mxu0 %v4669
      %6279 = vmatprep.mubr.bf16.mxu0 %v376
      %6280 = vmatmul.mubr.bf16.gmra.mxu0 %v375
      %v6281 = vpop.f32.mrf.mxu0
      %v6282 = vadd.f32 %v6241, %v6281
      %v6283 = vpop.f32.mrf.mxu0
      %v6284 = vadd.f32 %v6243, %v6283
      %v6285 = vpop.f32.mrf.mxu0
      %v6286 = vpop.f32.mrf.mxu0
      %6287 = vdwg.mxu0
      %6288 = vmatprep.subr.bf16.mxu0 %v4790
      %6289 = vmatpush1.bf16.msra.mxu0 %v4789
      %6290 = vmatprep.subr.bf16.mxu0 %v4782
      %6291 = vmatpush1.bf16.msra.mxu0 %v4781
      %6292 = vmatprep.subr.bf16.mxu0 %v4774
      %6293 = vmatpush1.bf16.msra.mxu0 %v4773
      %6294 = vmatprep.subr.bf16.mxu0 %v4766
      %6295 = vmatpush1.bf16.msra.mxu0 %v4765
      %6296 = vmatprep.subr.bf16.mxu0 %v4758
      %6297 = vmatpush1.bf16.msra.mxu0 %v4757
      %6298 = vmatprep.subr.bf16.mxu0 %v4750
      %6299 = vmatpush1.bf16.msra.mxu0 %v4749
      %6300 = vmatprep.subr.bf16.mxu0 %v4742
      %6301 = vmatpush1.bf16.msra.mxu0 %v4741
      %6302 = vmatprep.subr.bf16.mxu0 %v4734
      %6303 = vmatpush1.bf16.msra.mxu0 %v4733
      %6304 = vmatprep.subr.bf16.mxu0 %v4854
      %6305 = vmatpush2.bf16.msra.mxu0 %v4853
      %6306 = vmatprep.subr.bf16.mxu0 %v4846
      %6307 = vmatpush2.bf16.msra.mxu0 %v4845
      %6308 = vmatprep.subr.bf16.mxu0 %v4838
      %6309 = vmatpush2.bf16.msra.mxu0 %v4837
      %6310 = vmatprep.subr.bf16.mxu0 %v4830
      %6311 = vmatpush2.bf16.msra.mxu0 %v4829
      %6312 = vmatprep.subr.bf16.mxu0 %v4822
      %6313 = vmatpush2.bf16.msra.mxu0 %v4821
      %6314 = vmatprep.subr.bf16.mxu0 %v4814
      %6315 = vmatpush2.bf16.msra.mxu0 %v4813
      %6316 = vmatprep.subr.bf16.mxu0 %v4806
      %6317 = vmatpush2.bf16.msra.mxu0 %v4805
      %6318 = vmatprep.subr.bf16.mxu0 %v4798
      %6319 = vmatpush2.bf16.msra.mxu0 %v4797
      %6320 = vmatprep.mubr.bf16.mxu0 %v378
      %6321 = vmatmul.mubr.bf16.gmra.mxu0 %v377
      %v6322 = vpop.f32.mrf.mxu0
      %v6323 = vadd.f32 %v6282, %v6322
      %v6324 = vpop.f32.mrf.mxu0
      %v6325 = vadd.f32 %v6284, %v6324
      %v6326 = vpop.f32.mrf.mxu0
      %v6327 = vpop.f32.mrf.mxu0
      %6328 = vdwg.mxu0
      %6329 = vmatprep.subr.bf16.mxu0 %v4024
      %6330 = vmatpush1.bf16.msra.mxu0 %v4023
      %6331 = vmatprep.subr.bf16.mxu0 %v4016
      %6332 = vmatpush1.bf16.msra.mxu0 %v4015
      %6333 = vmatprep.subr.bf16.mxu0 %v4008
      %6334 = vmatpush1.bf16.msra.mxu0 %v4007
      %6335 = vmatprep.subr.bf16.mxu0 %v4000
      %6336 = vmatpush1.bf16.msra.mxu0 %v3999
      %6337 = vmatprep.subr.bf16.mxu0 %v3992
      %6338 = vmatpush1.bf16.msra.mxu0 %v3991
      %6339 = vmatprep.subr.bf16.mxu0 %v3984
      %6340 = vmatpush1.bf16.msra.mxu0 %v3983
      %6341 = vmatprep.subr.bf16.mxu0 %v3976
      %6342 = vmatpush1.bf16.msra.mxu0 %v3975
      %6343 = vmatprep.subr.bf16.mxu0 %v3968
      %6344 = vmatpush1.bf16.msra.mxu0 %v3967
      %6345 = vmatprep.subr.bf16.mxu0 %v4088
      %6346 = vmatpush2.bf16.msra.mxu0 %v4087
      %6347 = vmatprep.subr.bf16.mxu0 %v4080
      %6348 = vmatpush2.bf16.msra.mxu0 %v4079
      %6349 = vmatprep.subr.bf16.mxu0 %v4072
      %6350 = vmatpush2.bf16.msra.mxu0 %v4071
      %6351 = vmatprep.subr.bf16.mxu0 %v4064
      %6352 = vmatpush2.bf16.msra.mxu0 %v4063
      %6353 = vmatprep.subr.bf16.mxu0 %v4056
      %6354 = vmatpush2.bf16.msra.mxu0 %v4055
      %6355 = vmatprep.subr.bf16.mxu0 %v4048
      %6356 = vmatpush2.bf16.msra.mxu0 %v4047
      %6357 = vmatprep.subr.bf16.mxu0 %v4040
      %6358 = vmatpush2.bf16.msra.mxu0 %v4039
      %6359 = vmatprep.subr.bf16.mxu0 %v4032
      %6360 = vmatpush2.bf16.msra.mxu0 %v4031
      %6361 = vmatprep.mubr.bf16.mxu0 %v366
      %6362 = vmatmul.mubr.bf16.gmra.mxu0 %v365
      %v6363 = vpop.f32.mrf.mxu0
      %v6364 = vadd.f32 0.0, %v6363
      %v6365 = vpop.f32.mrf.mxu0
      %v6366 = vadd.f32 0.0, %v6365
      %v6367 = vpop.f32.mrf.mxu0
      %v6368 = vpop.f32.mrf.mxu0
      %6369 = vdwg.mxu0
      %6370 = vmatprep.subr.bf16.mxu0 %v4152
      %6371 = vmatpush1.bf16.msra.mxu0 %v4151
      %6372 = vmatprep.subr.bf16.mxu0 %v4144
      %6373 = vmatpush1.bf16.msra.mxu0 %v4143
      %6374 = vmatprep.subr.bf16.mxu0 %v4136
      %6375 = vmatpush1.bf16.msra.mxu0 %v4135
      %6376 = vmatprep.subr.bf16.mxu0 %v4128
      %6377 = vmatpush1.bf16.msra.mxu0 %v4127
      %6378 = vmatprep.subr.bf16.mxu0 %v4120
      %6379 = vmatpush1.bf16.msra.mxu0 %v4119
      %6380 = vmatprep.subr.bf16.mxu0 %v4112
      %6381 = vmatpush1.bf16.msra.mxu0 %v4111
      %6382 = vmatprep.subr.bf16.mxu0 %v4104
      %6383 = vmatpush1.bf16.msra.mxu0 %v4103
      %6384 = vmatprep.subr.bf16.mxu0 %v4096
      %6385 = vmatpush1.bf16.msra.mxu0 %v4095
      %6386 = vmatprep.subr.bf16.mxu0 %v4216
      %6387 = vmatpush2.bf16.msra.mxu0 %v4215
      %6388 = vmatprep.subr.bf16.mxu0 %v4208
      %6389 = vmatpush2.bf16.msra.mxu0 %v4207
      %6390 = vmatprep.subr.bf16.mxu0 %v4200
      %6391 = vmatpush2.bf16.msra.mxu0 %v4199
      %6392 = vmatprep.subr.bf16.mxu0 %v4192
      %6393 = vmatpush2.bf16.msra.mxu0 %v4191
      %6394 = vmatprep.subr.bf16.mxu0 %v4184
      %6395 = vmatpush2.bf16.msra.mxu0 %v4183
      %6396 = vmatprep.subr.bf16.mxu0 %v4176
      %6397 = vmatpush2.bf16.msra.mxu0 %v4175
      %6398 = vmatprep.subr.bf16.mxu0 %v4168
      %6399 = vmatpush2.bf16.msra.mxu0 %v4167
      %6400 = vmatprep.subr.bf16.mxu0 %v4160
      %6401 = vmatpush2.bf16.msra.mxu0 %v4159
      %6402 = vmatprep.mubr.bf16.mxu0 %v368
      %6403 = vmatmul.mubr.bf16.gmra.mxu0 %v367
      %v6404 = vpop.f32.mrf.mxu0
      %v6405 = vadd.f32 %v6364, %v6404
      %v6406 = vpop.f32.mrf.mxu0
      %v6407 = vadd.f32 %v6366, %v6406
      %v6408 = vpop.f32.mrf.mxu0
      %v6409 = vpop.f32.mrf.mxu0
      %6410 = vdwg.mxu0
      %6411 = vmatprep.subr.bf16.mxu0 %v4280
      %6412 = vmatpush1.bf16.msra.mxu0 %v4279
      %6413 = vmatprep.subr.bf16.mxu0 %v4272
      %6414 = vmatpush1.bf16.msra.mxu0 %v4271
      %6415 = vmatprep.subr.bf16.mxu0 %v4264
      %6416 = vmatpush1.bf16.msra.mxu0 %v4263
      %6417 = vmatprep.subr.bf16.mxu0 %v4256
      %6418 = vmatpush1.bf16.msra.mxu0 %v4255
      %6419 = vmatprep.subr.bf16.mxu0 %v4248
      %6420 = vmatpush1.bf16.msra.mxu0 %v4247
      %6421 = vmatprep.subr.bf16.mxu0 %v4240
      %6422 = vmatpush1.bf16.msra.mxu0 %v4239
      %6423 = vmatprep.subr.bf16.mxu0 %v4232
      %6424 = vmatpush1.bf16.msra.mxu0 %v4231
      %6425 = vmatprep.subr.bf16.mxu0 %v4224
      %6426 = vmatpush1.bf16.msra.mxu0 %v4223
      %6427 = vmatprep.subr.bf16.mxu0 %v4344
      %6428 = vmatpush2.bf16.msra.mxu0 %v4343
      %6429 = vmatprep.subr.bf16.mxu0 %v4336
      %6430 = vmatpush2.bf16.msra.mxu0 %v4335
      %6431 = vmatprep.subr.bf16.mxu0 %v4328
      %6432 = vmatpush2.bf16.msra.mxu0 %v4327
      %6433 = vmatprep.subr.bf16.mxu0 %v4320
      %6434 = vmatpush2.bf16.msra.mxu0 %v4319
      %6435 = vmatprep.subr.bf16.mxu0 %v4312
      %6436 = vmatpush2.bf16.msra.mxu0 %v4311
      %6437 = vmatprep.subr.bf16.mxu0 %v4304
      %6438 = vmatpush2.bf16.msra.mxu0 %v4303
      %6439 = vmatprep.subr.bf16.mxu0 %v4296
      %6440 = vmatpush2.bf16.msra.mxu0 %v4295
      %6441 = vmatprep.subr.bf16.mxu0 %v4288
      %6442 = vmatpush2.bf16.msra.mxu0 %v4287
      %6443 = vmatprep.mubr.bf16.mxu0 %v370
      %6444 = vmatmul.mubr.bf16.gmra.mxu0 %v369
      %v6445 = vpop.f32.mrf.mxu0
      %v6446 = vadd.f32 %v6405, %v6445
      %v6447 = vpop.f32.mrf.mxu0
      %v6448 = vadd.f32 %v6407, %v6447
      %v6449 = vpop.f32.mrf.mxu0
      %v6450 = vpop.f32.mrf.mxu0
      %6451 = vdwg.mxu0
      %6452 = vmatprep.subr.bf16.mxu0 %v4408
      %6453 = vmatpush1.bf16.msra.mxu0 %v4407
      %6454 = vmatprep.subr.bf16.mxu0 %v4400
      %6455 = vmatpush1.bf16.msra.mxu0 %v4399
      %6456 = vmatprep.subr.bf16.mxu0 %v4392
      %6457 = vmatpush1.bf16.msra.mxu0 %v4391
      %6458 = vmatprep.subr.bf16.mxu0 %v4384
      %6459 = vmatpush1.bf16.msra.mxu0 %v4383
      %6460 = vmatprep.subr.bf16.mxu0 %v4376
      %6461 = vmatpush1.bf16.msra.mxu0 %v4375
      %6462 = vmatprep.subr.bf16.mxu0 %v4368
      %6463 = vmatpush1.bf16.msra.mxu0 %v4367
      %6464 = vmatprep.subr.bf16.mxu0 %v4360
      %6465 = vmatpush1.bf16.msra.mxu0 %v4359
      %6466 = vmatprep.subr.bf16.mxu0 %v4352
      %6467 = vmatpush1.bf16.msra.mxu0 %v4351
      %6468 = vmatprep.subr.bf16.mxu0 %v4472
      %6469 = vmatpush2.bf16.msra.mxu0 %v4471
      %6470 = vmatprep.subr.bf16.mxu0 %v4464
      %6471 = vmatpush2.bf16.msra.mxu0 %v4463
      %6472 = vmatprep.subr.bf16.mxu0 %v4456
      %6473 = vmatpush2.bf16.msra.mxu0 %v4455
      %6474 = vmatprep.subr.bf16.mxu0 %v4448
      %6475 = vmatpush2.bf16.msra.mxu0 %v4447
      %6476 = vmatprep.subr.bf16.mxu0 %v4440
      %6477 = vmatpush2.bf16.msra.mxu0 %v4439
      %6478 = vmatprep.subr.bf16.mxu0 %v4432
      %6479 = vmatpush2.bf16.msra.mxu0 %v4431
      %6480 = vmatprep.subr.bf16.mxu0 %v4424
      %6481 = vmatpush2.bf16.msra.mxu0 %v4423
      %6482 = vmatprep.subr.bf16.mxu0 %v4416
      %6483 = vmatpush2.bf16.msra.mxu0 %v4415
      %6484 = vmatprep.mubr.bf16.mxu0 %v372
      %6485 = vmatmul.mubr.bf16.gmra.mxu0 %v371
      %v6486 = vpop.f32.mrf.mxu0
      %v6487 = vadd.f32 %v6446, %v6486
      %v6488 = vpop.f32.mrf.mxu0
      %v6489 = vadd.f32 %v6448, %v6488
      %v6490 = vpop.f32.mrf.mxu0
      %v6491 = vpop.f32.mrf.mxu0
      %6492 = vdwg.mxu0
      %6493 = vmatprep.subr.bf16.mxu0 %v4536
      %6494 = vmatpush1.bf16.msra.mxu0 %v4535
      %6495 = vmatprep.subr.bf16.mxu0 %v4528
      %6496 = vmatpush1.bf16.msra.mxu0 %v4527
      %6497 = vmatprep.subr.bf16.mxu0 %v4520
      %6498 = vmatpush1.bf16.msra.mxu0 %v4519
      %6499 = vmatprep.subr.bf16.mxu0 %v4512
      %6500 = vmatpush1.bf16.msra.mxu0 %v4511
      %6501 = vmatprep.subr.bf16.mxu0 %v4504
      %6502 = vmatpush1.bf16.msra.mxu0 %v4503
      %6503 = vmatprep.subr.bf16.mxu0 %v4496
      %6504 = vmatpush1.bf16.msra.mxu0 %v4495
      %6505 = vmatprep.subr.bf16.mxu0 %v4488
      %6506 = vmatpush1.bf16.msra.mxu0 %v4487
      %6507 = vmatprep.subr.bf16.mxu0 %v4480
      %6508 = vmatpush1.bf16.msra.mxu0 %v4479
      %6509 = vmatprep.subr.bf16.mxu0 %v4600
      %6510 = vmatpush2.bf16.msra.mxu0 %v4599
      %6511 = vmatprep.subr.bf16.mxu0 %v4592
      %6512 = vmatpush2.bf16.msra.mxu0 %v4591
      %6513 = vmatprep.subr.bf16.mxu0 %v4584
      %6514 = vmatpush2.bf16.msra.mxu0 %v4583
      %6515 = vmatprep.subr.bf16.mxu0 %v4576
      %6516 = vmatpush2.bf16.msra.mxu0 %v4575
      %6517 = vmatprep.subr.bf16.mxu0 %v4568
      %6518 = vmatpush2.bf16.msra.mxu0 %v4567
      %6519 = vmatprep.subr.bf16.mxu0 %v4560
      %6520 = vmatpush2.bf16.msra.mxu0 %v4559
      %6521 = vmatprep.subr.bf16.mxu0 %v4552
      %6522 = vmatpush2.bf16.msra.mxu0 %v4551
      %6523 = vmatprep.subr.bf16.mxu0 %v4544
      %6524 = vmatpush2.bf16.msra.mxu0 %v4543
      %6525 = vmatprep.mubr.bf16.mxu0 %v374
      %6526 = vmatmul.mubr.bf16.gmra.mxu0 %v373
      %v6527 = vpop.f32.mrf.mxu0
      %v6528 = vadd.f32 %v6487, %v6527
      %v6529 = vpop.f32.mrf.mxu0
      %v6530 = vadd.f32 %v6489, %v6529
      %v6531 = vpop.f32.mrf.mxu0
      %v6532 = vpop.f32.mrf.mxu0
      %6533 = vdwg.mxu0
      %6534 = vmatprep.subr.bf16.mxu0 %v4664
      %6535 = vmatpush1.bf16.msra.mxu0 %v4663
      %6536 = vmatprep.subr.bf16.mxu0 %v4656
      %6537 = vmatpush1.bf16.msra.mxu0 %v4655
      %6538 = vmatprep.subr.bf16.mxu0 %v4648
      %6539 = vmatpush1.bf16.msra.mxu0 %v4647
      %6540 = vmatprep.subr.bf16.mxu0 %v4640
      %6541 = vmatpush1.bf16.msra.mxu0 %v4639
      %6542 = vmatprep.subr.bf16.mxu0 %v4632
      %6543 = vmatpush1.bf16.msra.mxu0 %v4631
      %6544 = vmatprep.subr.bf16.mxu0 %v4624
      %6545 = vmatpush1.bf16.msra.mxu0 %v4623
      %6546 = vmatprep.subr.bf16.mxu0 %v4616
      %6547 = vmatpush1.bf16.msra.mxu0 %v4615
      %6548 = vmatprep.subr.bf16.mxu0 %v4608
      %6549 = vmatpush1.bf16.msra.mxu0 %v4607
      %6550 = vmatprep.subr.bf16.mxu0 %v4728
      %6551 = vmatpush2.bf16.msra.mxu0 %v4727
      %6552 = vmatprep.subr.bf16.mxu0 %v4720
      %6553 = vmatpush2.bf16.msra.mxu0 %v4719
      %6554 = vmatprep.subr.bf16.mxu0 %v4712
      %6555 = vmatpush2.bf16.msra.mxu0 %v4711
      %6556 = vmatprep.subr.bf16.mxu0 %v4704
      %6557 = vmatpush2.bf16.msra.mxu0 %v4703
      %6558 = vmatprep.subr.bf16.mxu0 %v4696
      %6559 = vmatpush2.bf16.msra.mxu0 %v4695
      %6560 = vmatprep.subr.bf16.mxu0 %v4688
      %6561 = vmatpush2.bf16.msra.mxu0 %v4687
      %6562 = vmatprep.subr.bf16.mxu0 %v4680
      %6563 = vmatpush2.bf16.msra.mxu0 %v4679
      %6564 = vmatprep.subr.bf16.mxu0 %v4672
      %6565 = vmatpush2.bf16.msra.mxu0 %v4671
      %6566 = vmatprep.mubr.bf16.mxu0 %v376
      %6567 = vmatmul.mubr.bf16.gmra.mxu0 %v375
      %v6568 = vpop.f32.mrf.mxu0
      %v6569 = vadd.f32 %v6528, %v6568
      %v6570 = vpop.f32.mrf.mxu0
      %v6571 = vadd.f32 %v6530, %v6570
      %v6572 = vpop.f32.mrf.mxu0
      %v6573 = vpop.f32.mrf.mxu0
      %6574 = vdwg.mxu0
      %6575 = vmatprep.subr.bf16.mxu0 %v4792
      %6576 = vmatpush1.bf16.msra.mxu0 %v4791
      %6577 = vmatprep.subr.bf16.mxu0 %v4784
      %6578 = vmatpush1.bf16.msra.mxu0 %v4783
      %6579 = vmatprep.subr.bf16.mxu0 %v4776
      %6580 = vmatpush1.bf16.msra.mxu0 %v4775
      %6581 = vmatprep.subr.bf16.mxu0 %v4768
      %6582 = vmatpush1.bf16.msra.mxu0 %v4767
      %6583 = vmatprep.subr.bf16.mxu0 %v4760
      %6584 = vmatpush1.bf16.msra.mxu0 %v4759
      %6585 = vmatprep.subr.bf16.mxu0 %v4752
      %6586 = vmatpush1.bf16.msra.mxu0 %v4751
      %6587 = vmatprep.subr.bf16.mxu0 %v4744
      %6588 = vmatpush1.bf16.msra.mxu0 %v4743
      %6589 = vmatprep.subr.bf16.mxu0 %v4736
      %6590 = vmatpush1.bf16.msra.mxu0 %v4735
      %6591 = vmatprep.subr.bf16.mxu0 %v4856
      %6592 = vmatpush2.bf16.msra.mxu0 %v4855
      %6593 = vmatprep.subr.bf16.mxu0 %v4848
      %6594 = vmatpush2.bf16.msra.mxu0 %v4847
      %6595 = vmatprep.subr.bf16.mxu0 %v4840
      %6596 = vmatpush2.bf16.msra.mxu0 %v4839
      %6597 = vmatprep.subr.bf16.mxu0 %v4832
      %6598 = vmatpush2.bf16.msra.mxu0 %v4831
      %6599 = vmatprep.subr.bf16.mxu0 %v4824
      %6600 = vmatpush2.bf16.msra.mxu0 %v4823
      %6601 = vmatprep.subr.bf16.mxu0 %v4816
      %6602 = vmatpush2.bf16.msra.mxu0 %v4815
      %6603 = vmatprep.subr.bf16.mxu0 %v4808
      %6604 = vmatpush2.bf16.msra.mxu0 %v4807
      %6605 = vmatprep.subr.bf16.mxu0 %v4800
      %6606 = vmatpush2.bf16.msra.mxu0 %v4799
      %6607 = vmatprep.mubr.bf16.mxu0 %v378
      %6608 = vmatmul.mubr.bf16.gmra.mxu0 %v377
      %v6609 = vpop.f32.mrf.mxu0
      %v6610 = vadd.f32 %v6569, %v6609
      %v6611 = vpop.f32.mrf.mxu0
      %v6612 = vadd.f32 %v6571, %v6611
      %v6613 = vpop.f32.mrf.mxu0
      %v6614 = vpop.f32.mrf.mxu0
      %6615 = vdwg.mxu0
      %6616 = vmatprep.subr.bf16.mxu0 %v4026
      %6617 = vmatpush1.bf16.msra.mxu0 %v4025
      %6618 = vmatprep.subr.bf16.mxu0 %v4018
      %6619 = vmatpush1.bf16.msra.mxu0 %v4017
      %6620 = vmatprep.subr.bf16.mxu0 %v4010
      %6621 = vmatpush1.bf16.msra.mxu0 %v4009
      %6622 = vmatprep.subr.bf16.mxu0 %v4002
      %6623 = vmatpush1.bf16.msra.mxu0 %v4001
      %6624 = vmatprep.subr.bf16.mxu0 %v3994
      %6625 = vmatpush1.bf16.msra.mxu0 %v3993
      %6626 = vmatprep.subr.bf16.mxu0 %v3986
      %6627 = vmatpush1.bf16.msra.mxu0 %v3985
      %6628 = vmatprep.subr.bf16.mxu0 %v3978
      %6629 = vmatpush1.bf16.msra.mxu0 %v3977
      %6630 = vmatprep.subr.bf16.mxu0 %v3970
      %6631 = vmatpush1.bf16.msra.mxu0 %v3969
      %6632 = vmatprep.subr.bf16.mxu0 %v4090
      %6633 = vmatpush2.bf16.msra.mxu0 %v4089
      %6634 = vmatprep.subr.bf16.mxu0 %v4082
      %6635 = vmatpush2.bf16.msra.mxu0 %v4081
      %6636 = vmatprep.subr.bf16.mxu0 %v4074
      %6637 = vmatpush2.bf16.msra.mxu0 %v4073
      %6638 = vmatprep.subr.bf16.mxu0 %v4066
      %6639 = vmatpush2.bf16.msra.mxu0 %v4065
      %6640 = vmatprep.subr.bf16.mxu0 %v4058
      %6641 = vmatpush2.bf16.msra.mxu0 %v4057
      %6642 = vmatprep.subr.bf16.mxu0 %v4050
      %6643 = vmatpush2.bf16.msra.mxu0 %v4049
      %6644 = vmatprep.subr.bf16.mxu0 %v4042
      %6645 = vmatpush2.bf16.msra.mxu0 %v4041
      %6646 = vmatprep.subr.bf16.mxu0 %v4034
      %6647 = vmatpush2.bf16.msra.mxu0 %v4033
      %6648 = vmatprep.mubr.bf16.mxu0 %v366
      %6649 = vmatmul.mubr.bf16.gmra.mxu0 %v365
      %v6650 = vpop.f32.mrf.mxu0
      %v6651 = vadd.f32 0.0, %v6650
      %v6652 = vpop.f32.mrf.mxu0
      %v6653 = vadd.f32 0.0, %v6652
      %v6654 = vpop.f32.mrf.mxu0
      %v6655 = vpop.f32.mrf.mxu0
      %6656 = vdwg.mxu0
      %6657 = vmatprep.subr.bf16.mxu0 %v4154
      %6658 = vmatpush1.bf16.msra.mxu0 %v4153
      %6659 = vmatprep.subr.bf16.mxu0 %v4146
      %6660 = vmatpush1.bf16.msra.mxu0 %v4145
      %6661 = vmatprep.subr.bf16.mxu0 %v4138
      %6662 = vmatpush1.bf16.msra.mxu0 %v4137
      %6663 = vmatprep.subr.bf16.mxu0 %v4130
      %6664 = vmatpush1.bf16.msra.mxu0 %v4129
      %6665 = vmatprep.subr.bf16.mxu0 %v4122
      %6666 = vmatpush1.bf16.msra.mxu0 %v4121
      %6667 = vmatprep.subr.bf16.mxu0 %v4114
      %6668 = vmatpush1.bf16.msra.mxu0 %v4113
      %6669 = vmatprep.subr.bf16.mxu0 %v4106
      %6670 = vmatpush1.bf16.msra.mxu0 %v4105
      %6671 = vmatprep.subr.bf16.mxu0 %v4098
      %6672 = vmatpush1.bf16.msra.mxu0 %v4097
      %6673 = vmatprep.subr.bf16.mxu0 %v4218
      %6674 = vmatpush2.bf16.msra.mxu0 %v4217
      %6675 = vmatprep.subr.bf16.mxu0 %v4210
      %6676 = vmatpush2.bf16.msra.mxu0 %v4209
      %6677 = vmatprep.subr.bf16.mxu0 %v4202
      %6678 = vmatpush2.bf16.msra.mxu0 %v4201
      %6679 = vmatprep.subr.bf16.mxu0 %v4194
      %6680 = vmatpush2.bf16.msra.mxu0 %v4193
      %6681 = vmatprep.subr.bf16.mxu0 %v4186
      %6682 = vmatpush2.bf16.msra.mxu0 %v4185
      %6683 = vmatprep.subr.bf16.mxu0 %v4178
      %6684 = vmatpush2.bf16.msra.mxu0 %v4177
      %6685 = vmatprep.subr.bf16.mxu0 %v4170
      %6686 = vmatpush2.bf16.msra.mxu0 %v4169
      %6687 = vmatprep.subr.bf16.mxu0 %v4162
      %6688 = vmatpush2.bf16.msra.mxu0 %v4161
      %6689 = vmatprep.mubr.bf16.mxu0 %v368
      %6690 = vmatmul.mubr.bf16.gmra.mxu0 %v367
      %v6691 = vpop.f32.mrf.mxu0
      %v6692 = vadd.f32 %v6651, %v6691
      %v6693 = vpop.f32.mrf.mxu0
      %v6694 = vadd.f32 %v6653, %v6693
      %v6695 = vpop.f32.mrf.mxu0
      %v6696 = vpop.f32.mrf.mxu0
      %6697 = vdwg.mxu0
      %6698 = vmatprep.subr.bf16.mxu0 %v4282
      %6699 = vmatpush1.bf16.msra.mxu0 %v4281
      %6700 = vmatprep.subr.bf16.mxu0 %v4274
      %6701 = vmatpush1.bf16.msra.mxu0 %v4273
      %6702 = vmatprep.subr.bf16.mxu0 %v4266
      %6703 = vmatpush1.bf16.msra.mxu0 %v4265
      %6704 = vmatprep.subr.bf16.mxu0 %v4258
      %6705 = vmatpush1.bf16.msra.mxu0 %v4257
      %6706 = vmatprep.subr.bf16.mxu0 %v4250
      %6707 = vmatpush1.bf16.msra.mxu0 %v4249
      %6708 = vmatprep.subr.bf16.mxu0 %v4242
      %6709 = vmatpush1.bf16.msra.mxu0 %v4241
      %6710 = vmatprep.subr.bf16.mxu0 %v4234
      %6711 = vmatpush1.bf16.msra.mxu0 %v4233
      %6712 = vmatprep.subr.bf16.mxu0 %v4226
      %6713 = vmatpush1.bf16.msra.mxu0 %v4225
      %6714 = vmatprep.subr.bf16.mxu0 %v4346
      %6715 = vmatpush2.bf16.msra.mxu0 %v4345
      %6716 = vmatprep.subr.bf16.mxu0 %v4338
      %6717 = vmatpush2.bf16.msra.mxu0 %v4337
      %6718 = vmatprep.subr.bf16.mxu0 %v4330
      %6719 = vmatpush2.bf16.msra.mxu0 %v4329
      %6720 = vmatprep.subr.bf16.mxu0 %v4322
      %6721 = vmatpush2.bf16.msra.mxu0 %v4321
      %6722 = vmatprep.subr.bf16.mxu0 %v4314
      %6723 = vmatpush2.bf16.msra.mxu0 %v4313
      %6724 = vmatprep.subr.bf16.mxu0 %v4306
      %6725 = vmatpush2.bf16.msra.mxu0 %v4305
      %6726 = vmatprep.subr.bf16.mxu0 %v4298
      %6727 = vmatpush2.bf16.msra.mxu0 %v4297
      %6728 = vmatprep.subr.bf16.mxu0 %v4290
      %6729 = vmatpush2.bf16.msra.mxu0 %v4289
      %6730 = vmatprep.mubr.bf16.mxu0 %v370
      %6731 = vmatmul.mubr.bf16.gmra.mxu0 %v369
      %v6732 = vpop.f32.mrf.mxu0
      %v6733 = vadd.f32 %v6692, %v6732
      %v6734 = vpop.f32.mrf.mxu0
      %v6735 = vadd.f32 %v6694, %v6734
      %v6736 = vpop.f32.mrf.mxu0
      %v6737 = vpop.f32.mrf.mxu0
      %6738 = vdwg.mxu0
      %6739 = vmatprep.subr.bf16.mxu0 %v4410
      %6740 = vmatpush1.bf16.msra.mxu0 %v4409
      %6741 = vmatprep.subr.bf16.mxu0 %v4402
      %6742 = vmatpush1.bf16.msra.mxu0 %v4401
      %6743 = vmatprep.subr.bf16.mxu0 %v4394
      %6744 = vmatpush1.bf16.msra.mxu0 %v4393
      %6745 = vmatprep.subr.bf16.mxu0 %v4386
      %6746 = vmatpush1.bf16.msra.mxu0 %v4385
      %6747 = vmatprep.subr.bf16.mxu0 %v4378
      %6748 = vmatpush1.bf16.msra.mxu0 %v4377
      %6749 = vmatprep.subr.bf16.mxu0 %v4370
      %6750 = vmatpush1.bf16.msra.mxu0 %v4369
      %6751 = vmatprep.subr.bf16.mxu0 %v4362
      %6752 = vmatpush1.bf16.msra.mxu0 %v4361
      %6753 = vmatprep.subr.bf16.mxu0 %v4354
      %6754 = vmatpush1.bf16.msra.mxu0 %v4353
      %6755 = vmatprep.subr.bf16.mxu0 %v4474
      %6756 = vmatpush2.bf16.msra.mxu0 %v4473
      %6757 = vmatprep.subr.bf16.mxu0 %v4466
      %6758 = vmatpush2.bf16.msra.mxu0 %v4465
      %6759 = vmatprep.subr.bf16.mxu0 %v4458
      %6760 = vmatpush2.bf16.msra.mxu0 %v4457
      %6761 = vmatprep.subr.bf16.mxu0 %v4450
      %6762 = vmatpush2.bf16.msra.mxu0 %v4449
      %6763 = vmatprep.subr.bf16.mxu0 %v4442
      %6764 = vmatpush2.bf16.msra.mxu0 %v4441
      %6765 = vmatprep.subr.bf16.mxu0 %v4434
      %6766 = vmatpush2.bf16.msra.mxu0 %v4433
      %6767 = vmatprep.subr.bf16.mxu0 %v4426
      %6768 = vmatpush2.bf16.msra.mxu0 %v4425
      %6769 = vmatprep.subr.bf16.mxu0 %v4418
      %6770 = vmatpush2.bf16.msra.mxu0 %v4417
      %6771 = vmatprep.mubr.bf16.mxu0 %v372
      %6772 = vmatmul.mubr.bf16.gmra.mxu0 %v371
      %v6773 = vpop.f32.mrf.mxu0
      %v6774 = vadd.f32 %v6733, %v6773
      %v6775 = vpop.f32.mrf.mxu0
      %v6776 = vadd.f32 %v6735, %v6775
      %v6777 = vpop.f32.mrf.mxu0
      %v6778 = vpop.f32.mrf.mxu0
      %6779 = vdwg.mxu0
      %6780 = vmatprep.subr.bf16.mxu0 %v4538
      %6781 = vmatpush1.bf16.msra.mxu0 %v4537
      %6782 = vmatprep.subr.bf16.mxu0 %v4530
      %6783 = vmatpush1.bf16.msra.mxu0 %v4529
      %6784 = vmatprep.subr.bf16.mxu0 %v4522
      %6785 = vmatpush1.bf16.msra.mxu0 %v4521
      %6786 = vmatprep.subr.bf16.mxu0 %v4514
      %6787 = vmatpush1.bf16.msra.mxu0 %v4513
      %6788 = vmatprep.subr.bf16.mxu0 %v4506
      %6789 = vmatpush1.bf16.msra.mxu0 %v4505
      %6790 = vmatprep.subr.bf16.mxu0 %v4498
      %6791 = vmatpush1.bf16.msra.mxu0 %v4497
      %6792 = vmatprep.subr.bf16.mxu0 %v4490
      %6793 = vmatpush1.bf16.msra.mxu0 %v4489
      %6794 = vmatprep.subr.bf16.mxu0 %v4482
      %6795 = vmatpush1.bf16.msra.mxu0 %v4481
      %6796 = vmatprep.subr.bf16.mxu0 %v4602
      %6797 = vmatpush2.bf16.msra.mxu0 %v4601
      %6798 = vmatprep.subr.bf16.mxu0 %v4594
      %6799 = vmatpush2.bf16.msra.mxu0 %v4593
      %6800 = vmatprep.subr.bf16.mxu0 %v4586
      %6801 = vmatpush2.bf16.msra.mxu0 %v4585
      %6802 = vmatprep.subr.bf16.mxu0 %v4578
      %6803 = vmatpush2.bf16.msra.mxu0 %v4577
      %6804 = vmatprep.subr.bf16.mxu0 %v4570
      %6805 = vmatpush2.bf16.msra.mxu0 %v4569
      %6806 = vmatprep.subr.bf16.mxu0 %v4562
      %6807 = vmatpush2.bf16.msra.mxu0 %v4561
      %6808 = vmatprep.subr.bf16.mxu0 %v4554
      %6809 = vmatpush2.bf16.msra.mxu0 %v4553
      %6810 = vmatprep.subr.bf16.mxu0 %v4546
      %6811 = vmatpush2.bf16.msra.mxu0 %v4545
      %6812 = vmatprep.mubr.bf16.mxu0 %v374
      %6813 = vmatmul.mubr.bf16.gmra.mxu0 %v373
      %v6814 = vpop.f32.mrf.mxu0
      %v6815 = vadd.f32 %v6774, %v6814
      %v6816 = vpop.f32.mrf.mxu0
      %v6817 = vadd.f32 %v6776, %v6816
      %v6818 = vpop.f32.mrf.mxu0
      %v6819 = vpop.f32.mrf.mxu0
      %6820 = vdwg.mxu0
      %6821 = vmatprep.subr.bf16.mxu0 %v4666
      %6822 = vmatpush1.bf16.msra.mxu0 %v4665
      %6823 = vmatprep.subr.bf16.mxu0 %v4658
      %6824 = vmatpush1.bf16.msra.mxu0 %v4657
      %6825 = vmatprep.subr.bf16.mxu0 %v4650
      %6826 = vmatpush1.bf16.msra.mxu0 %v4649
      %6827 = vmatprep.subr.bf16.mxu0 %v4642
      %6828 = vmatpush1.bf16.msra.mxu0 %v4641
      %6829 = vmatprep.subr.bf16.mxu0 %v4634
      %6830 = vmatpush1.bf16.msra.mxu0 %v4633
      %6831 = vmatprep.subr.bf16.mxu0 %v4626
      %6832 = vmatpush1.bf16.msra.mxu0 %v4625
      %6833 = vmatprep.subr.bf16.mxu0 %v4618
      %6834 = vmatpush1.bf16.msra.mxu0 %v4617
      %6835 = vmatprep.subr.bf16.mxu0 %v4610
      %6836 = vmatpush1.bf16.msra.mxu0 %v4609
      %6837 = vmatprep.subr.bf16.mxu0 %v4730
      %6838 = vmatpush2.bf16.msra.mxu0 %v4729
      %6839 = vmatprep.subr.bf16.mxu0 %v4722
      %6840 = vmatpush2.bf16.msra.mxu0 %v4721
      %6841 = vmatprep.subr.bf16.mxu0 %v4714
      %6842 = vmatpush2.bf16.msra.mxu0 %v4713
      %6843 = vmatprep.subr.bf16.mxu0 %v4706
      %6844 = vmatpush2.bf16.msra.mxu0 %v4705
      %6845 = vmatprep.subr.bf16.mxu0 %v4698
      %6846 = vmatpush2.bf16.msra.mxu0 %v4697
      %6847 = vmatprep.subr.bf16.mxu0 %v4690
      %6848 = vmatpush2.bf16.msra.mxu0 %v4689
      %6849 = vmatprep.subr.bf16.mxu0 %v4682
      %6850 = vmatpush2.bf16.msra.mxu0 %v4681
      %6851 = vmatprep.subr.bf16.mxu0 %v4674
      %6852 = vmatpush2.bf16.msra.mxu0 %v4673
      %6853 = vmatprep.mubr.bf16.mxu0 %v376
      %6854 = vmatmul.mubr.bf16.gmra.mxu0 %v375
      %v6855 = vpop.f32.mrf.mxu0
      %v6856 = vadd.f32 %v6815, %v6855
      %v6857 = vpop.f32.mrf.mxu0
      %v6858 = vadd.f32 %v6817, %v6857
      %v6859 = vpop.f32.mrf.mxu0
      %v6860 = vpop.f32.mrf.mxu0
      %6861 = vdwg.mxu0
      %6862 = vmatprep.subr.bf16.mxu0 %v4794
      %6863 = vmatpush1.bf16.msra.mxu0 %v4793
      %6864 = vmatprep.subr.bf16.mxu0 %v4786
      %6865 = vmatpush1.bf16.msra.mxu0 %v4785
      %6866 = vmatprep.subr.bf16.mxu0 %v4778
      %6867 = vmatpush1.bf16.msra.mxu0 %v4777
      %6868 = vmatprep.subr.bf16.mxu0 %v4770
      %6869 = vmatpush1.bf16.msra.mxu0 %v4769
      %6870 = vmatprep.subr.bf16.mxu0 %v4762
      %6871 = vmatpush1.bf16.msra.mxu0 %v4761
      %6872 = vmatprep.subr.bf16.mxu0 %v4754
      %6873 = vmatpush1.bf16.msra.mxu0 %v4753
      %6874 = vmatprep.subr.bf16.mxu0 %v4746
      %6875 = vmatpush1.bf16.msra.mxu0 %v4745
      %6876 = vmatprep.subr.bf16.mxu0 %v4738
      %6877 = vmatpush1.bf16.msra.mxu0 %v4737
      %6878 = vmatprep.subr.bf16.mxu0 %v4858
      %6879 = vmatpush2.bf16.msra.mxu0 %v4857
      %6880 = vmatprep.subr.bf16.mxu0 %v4850
      %6881 = vmatpush2.bf16.msra.mxu0 %v4849
      %6882 = vmatprep.subr.bf16.mxu0 %v4842
      %6883 = vmatpush2.bf16.msra.mxu0 %v4841
      %6884 = vmatprep.subr.bf16.mxu0 %v4834
      %6885 = vmatpush2.bf16.msra.mxu0 %v4833
      %6886 = vmatprep.subr.bf16.mxu0 %v4826
      %6887 = vmatpush2.bf16.msra.mxu0 %v4825
      %6888 = vmatprep.subr.bf16.mxu0 %v4818
      %6889 = vmatpush2.bf16.msra.mxu0 %v4817
      %6890 = vmatprep.subr.bf16.mxu0 %v4810
      %6891 = vmatpush2.bf16.msra.mxu0 %v4809
      %6892 = vmatprep.subr.bf16.mxu0 %v4802
      %6893 = vmatpush2.bf16.msra.mxu0 %v4801
      %6894 = vmatprep.mubr.bf16.mxu0 %v378
      %6895 = vmatmul.mubr.bf16.gmra.mxu0 %v377
      %v6896 = vpop.f32.mrf.mxu0
      %v6897 = vadd.f32 %v6856, %v6896
      %v6898 = vpop.f32.mrf.mxu0
      %v6899 = vadd.f32 %v6858, %v6898
      %v6900 = vpop.f32.mrf.mxu0
      %v6901 = vpop.f32.mrf.mxu0
      %6902 = vdwg.mxu0
      %v6903 = vadd.f32 %v343, %v6036
      %v6904 = vadd.f32 %v344, %v6038
      %v6905 = vadd.f32 %v345, %v6323
      %v6906 = vadd.f32 %v346, %v6325
      %v6907 = vadd.f32 %v347, %v6610
      %v6908 = vadd.f32 %v348, %v6612
      %v6909 = vadd.f32 %v349, %v6897
      %v6910 = vadd.f32 %v350, %v6899
      %6911 = vst [vmem:[#allocation2] sm:$0xff] %v6903
      %6912 = vst [vmem:[#allocation2 + $0x8] sm:$0xff] %v6904
      %6913 = vst [vmem:[#allocation2 + $0x10] sm:$0xff] %v6905
      %6914 = vst [vmem:[#allocation2 + $0x18] sm:$0xff] %v6906
      %6915 = vst [vmem:[#allocation2 + $0x20] sm:$0xff] %v6907
      %6916 = vst [vmem:[#allocation2 + $0x28] sm:$0xff] %v6908
      %6917 = vst [vmem:[#allocation2 + $0x30] sm:$0xff] %v6909
      %6918 = vst [vmem:[#allocation2 + $0x38] sm:$0xff] %v6910
      %p6919 = scmp.eq.s32.totalorder %s23, 6
      // Predicated region
      $region53: #{boxhead_forward.1} parent=47 // pred_check
        %p6920 = pneg %p6919
      $region54: #{boxhead_forward.1} parent=47 // pred_check_branch
        %6922 = sbr.rel (%p6920) target = $region56
      $region55: #{boxhead_forward.1} parent=47 // pred_region
        %v6923 = vld [vmem:[#allocation2] sm:$0xff]
        %v6924 = vld [vmem:[#allocation2 + $0x8] sm:$0xff]
        %v6925 = vld [vmem:[#allocation2 + $0x10] sm:$0xff]
        %v6926 = vld [vmem:[#allocation2 + $0x18] sm:$0xff]
        %v6927 = vld [vmem:[#allocation2 + $0x20] sm:$0xff]
        %v6928 = vld [vmem:[#allocation2 + $0x28] sm:$0xff]
        %v6929 = vld [vmem:[#allocation2 + $0x30] sm:$0xff]
        %v6930 = vld [vmem:[#allocation2 + $0x38] sm:$0xff]
        %v6931 = vld [vmem:[%s2] sm:$0xff]
        %v6933 = vlaneseq
        %v6934 = vshrl.u32 %v6933, 7
        %v6935 = vsub.s32 0, %v6934
        %v6936 = vrot.slane %v6931, %v6935
        %v6937 = vlaneseq
        %v6938 = vshrl.u32 %v6937, 7
        %v6939 = vsub.s32 1, %v6938
        %v6940 = vrot.slane %v6931, %v6939
        %v6941 = vlaneseq
        %v6942 = vshrl.u32 %v6941, 7
        %v6943 = vsub.s32 2, %v6942
        %v6944 = vrot.slane %v6931, %v6943
        %v6945 = vlaneseq
        %v6946 = vshrl.u32 %v6945, 7
        %v6947 = vsub.s32 3, %v6946
        %v6948 = vrot.slane %v6931, %v6947
        %v6949 = vlaneseq
        %v6950 = vshrl.u32 %v6949, 7
        %v6951 = vsub.s32 4, %v6950
        %v6952 = vrot.slane %v6931, %v6951
        %v6953 = vlaneseq
        %v6954 = vshrl.u32 %v6953, 7
        %v6955 = vsub.s32 5, %v6954
        %v6956 = vrot.slane %v6931, %v6955
        %v6957 = vlaneseq
        %v6958 = vshrl.u32 %v6957, 7
        %v6959 = vsub.s32 6, %v6958
        %v6960 = vrot.slane %v6931, %v6959
        %v6961 = vlaneseq
        %v6962 = vshrl.u32 %v6961, 7
        %v6963 = vsub.s32 7, %v6962
        %v6964 = vrot.slane %v6931, %v6963
        %v6973 = vadd.f32 %v6923, %v6936
        %v6974 = vadd.f32 %v6924, %v6940
        %v6975 = vadd.f32 %v6925, %v6944
        %v6976 = vadd.f32 %v6926, %v6948
        %v6977 = vadd.f32 %v6927, %v6952
        %v6978 = vadd.f32 %v6928, %v6956
        %v6979 = vadd.f32 %v6929, %v6960
        %v6980 = vadd.f32 %v6930, %v6964
        %v6981 = vmax.f32 %v6973, 0.0
        %v6982 = vmax.f32 %v6974, 0.0
        %v6983 = vmax.f32 %v6975, 0.0
        %v6984 = vmax.f32 %v6976, 0.0
        %v6985 = vmax.f32 %v6977, 0.0
        %v6986 = vmax.f32 %v6978, 0.0
        %v6987 = vmax.f32 %v6979, 0.0
        %v6988 = vmax.f32 %v6980, 0.0
        %v6989 = vpack.c.bf16 %v6981, %v6981
        %v6990 = vpack.c.bf16 %v6982, %v6982
        %v6991 = vpack.c.bf16 %v6983, %v6983
        %v6992 = vpack.c.bf16 %v6984, %v6984
        %v6993 = vpack.c.bf16 %v6985, %v6985
        %v6994 = vpack.c.bf16 %v6986, %v6986
        %v6995 = vpack.c.bf16 %v6987, %v6987
        %v6996 = vpack.c.bf16 %v6988, %v6988
        %v6997 = vld [vmem:[%s3] sm:$0xff]
        %v6998 = vld [vmem:[%s3 + $0x8] sm:$0xff]
        %v6999 = vld [vmem:[%s3 + $0x10] sm:$0xff]
        %v7000 = vld [vmem:[%s3 + $0x18] sm:$0xff]
        %v7001 = vld [vmem:[%s3 + $0x20] sm:$0xff]
        %v7002 = vld [vmem:[%s3 + $0x28] sm:$0xff]
        %v7003 = vld [vmem:[%s3 + $0x30] sm:$0xff]
        %v7004 = vld [vmem:[%s3 + $0x38] sm:$0xff]
        %v7005 = vld [vmem:[%s3 + $0x40] sm:$0xff]
        %v7006 = vld [vmem:[%s3 + $0x48] sm:$0xff]
        %v7007 = vld [vmem:[%s3 + $0x50] sm:$0xff]
        %v7008 = vld [vmem:[%s3 + $0x58] sm:$0xff]
        %v7009 = vld [vmem:[%s3 + $0x60] sm:$0xff]
        %v7010 = vld [vmem:[%s3 + $0x68] sm:$0xff]
        %v7011 = vld [vmem:[%s3 + $0x70] sm:$0xff]
        %v7012 = vld [vmem:[%s3 + $0x78] sm:$0xff]
        %v7013 = vld [vmem:[%s3 + $0x80] sm:$0xff]
        %v7014 = vld [vmem:[%s3 + $0x88] sm:$0xff]
        %v7015 = vld [vmem:[%s3 + $0x90] sm:$0xff]
        %v7016 = vld [vmem:[%s3 + $0x98] sm:$0xff]
        %v7017 = vld [vmem:[%s3 + $0xa0] sm:$0xff]
        %v7018 = vld [vmem:[%s3 + $0xa8] sm:$0xff]
        %v7019 = vld [vmem:[%s3 + $0xb0] sm:$0xff]
        %v7020 = vld [vmem:[%s3 + $0xb8] sm:$0xff]
        %v7021 = vld [vmem:[%s3 + $0xc0] sm:$0xff]
        %v7022 = vld [vmem:[%s3 + $0xc8] sm:$0xff]
        %v7023 = vld [vmem:[%s3 + $0xd0] sm:$0xff]
        %v7024 = vld [vmem:[%s3 + $0xd8] sm:$0xff]
        %v7025 = vld [vmem:[%s3 + $0xe0] sm:$0xff]
        %v7026 = vld [vmem:[%s3 + $0xe8] sm:$0xff]
        %v7027 = vld [vmem:[%s3 + $0xf0] sm:$0xff]
        %v7028 = vld [vmem:[%s3 + $0xf8] sm:$0xff]
        %v7029 = vld [vmem:[%s3 + $0x100] sm:$0xff]
        %v7030 = vld [vmem:[%s3 + $0x108] sm:$0xff]
        %v7031 = vld [vmem:[%s3 + $0x110] sm:$0xff]
        %v7032 = vld [vmem:[%s3 + $0x118] sm:$0xff]
        %v7033 = vld [vmem:[%s3 + $0x120] sm:$0xff]
        %v7034 = vld [vmem:[%s3 + $0x128] sm:$0xff]
        %v7035 = vld [vmem:[%s3 + $0x130] sm:$0xff]
        %v7036 = vld [vmem:[%s3 + $0x138] sm:$0xff]
        %v7037 = vld [vmem:[%s3 + $0x140] sm:$0xff]
        %v7038 = vld [vmem:[%s3 + $0x148] sm:$0xff]
        %v7039 = vld [vmem:[%s3 + $0x150] sm:$0xff]
        %v7040 = vld [vmem:[%s3 + $0x158] sm:$0xff]
        %v7041 = vld [vmem:[%s3 + $0x160] sm:$0xff]
        %v7042 = vld [vmem:[%s3 + $0x168] sm:$0xff]
        %v7043 = vld [vmem:[%s3 + $0x170] sm:$0xff]
        %v7044 = vld [vmem:[%s3 + $0x178] sm:$0xff]
        %v7045 = vld [vmem:[%s3 + $0x180] sm:$0xff]
        %v7046 = vld [vmem:[%s3 + $0x188] sm:$0xff]
        %v7047 = vld [vmem:[%s3 + $0x190] sm:$0xff]
        %v7048 = vld [vmem:[%s3 + $0x198] sm:$0xff]
        %v7049 = vld [vmem:[%s3 + $0x1a0] sm:$0xff]
        %v7050 = vld [vmem:[%s3 + $0x1a8] sm:$0xff]
        %v7051 = vld [vmem:[%s3 + $0x1b0] sm:$0xff]
        %v7052 = vld [vmem:[%s3 + $0x1b8] sm:$0xff]
        %v7053 = vld [vmem:[%s3 + $0x1c0] sm:$0xff]
        %v7054 = vld [vmem:[%s3 + $0x1c8] sm:$0xff]
        %v7055 = vld [vmem:[%s3 + $0x1d0] sm:$0xff]
        %v7056 = vld [vmem:[%s3 + $0x1d8] sm:$0xff]
        %v7057 = vld [vmem:[%s3 + $0x1e0] sm:$0xff]
        %v7058 = vld [vmem:[%s3 + $0x1e8] sm:$0xff]
        %v7059 = vld [vmem:[%s3 + $0x1f0] sm:$0xff]
        %v7060 = vld [vmem:[%s3 + $0x1f8] sm:$0xff]
        %v7061 = vld [vmem:[%s3 + $0x200] sm:$0xff]
        %v7062 = vld [vmem:[%s3 + $0x208] sm:$0xff]
        %v7063 = vld [vmem:[%s3 + $0x210] sm:$0xff]
        %v7064 = vld [vmem:[%s3 + $0x218] sm:$0xff]
        %v7065 = vld [vmem:[%s3 + $0x220] sm:$0xff]
        %v7066 = vld [vmem:[%s3 + $0x228] sm:$0xff]
        %v7067 = vld [vmem:[%s3 + $0x230] sm:$0xff]
        %v7068 = vld [vmem:[%s3 + $0x238] sm:$0xff]
        %v7069 = vld [vmem:[%s3 + $0x240] sm:$0xff]
        %v7070 = vld [vmem:[%s3 + $0x248] sm:$0xff]
        %v7071 = vld [vmem:[%s3 + $0x250] sm:$0xff]
        %v7072 = vld [vmem:[%s3 + $0x258] sm:$0xff]
        %v7073 = vld [vmem:[%s3 + $0x260] sm:$0xff]
        %v7074 = vld [vmem:[%s3 + $0x268] sm:$0xff]
        %v7075 = vld [vmem:[%s3 + $0x270] sm:$0xff]
        %v7076 = vld [vmem:[%s3 + $0x278] sm:$0xff]
        %v7077 = vld [vmem:[%s3 + $0x280] sm:$0xff]
        %v7078 = vld [vmem:[%s3 + $0x288] sm:$0xff]
        %v7079 = vld [vmem:[%s3 + $0x290] sm:$0xff]
        %v7080 = vld [vmem:[%s3 + $0x298] sm:$0xff]
        %v7081 = vld [vmem:[%s3 + $0x2a0] sm:$0xff]
        %v7082 = vld [vmem:[%s3 + $0x2a8] sm:$0xff]
        %v7083 = vld [vmem:[%s3 + $0x2b0] sm:$0xff]
        %v7084 = vld [vmem:[%s3 + $0x2b8] sm:$0xff]
        %v7085 = vld [vmem:[%s3 + $0x2c0] sm:$0xff]
        %v7086 = vld [vmem:[%s3 + $0x2c8] sm:$0xff]
        %v7087 = vld [vmem:[%s3 + $0x2d0] sm:$0xff]
        %v7088 = vld [vmem:[%s3 + $0x2d8] sm:$0xff]
        %v7089 = vld [vmem:[%s3 + $0x2e0] sm:$0xff]
        %v7090 = vld [vmem:[%s3 + $0x2e8] sm:$0xff]
        %v7091 = vld [vmem:[%s3 + $0x2f0] sm:$0xff]
        %v7092 = vld [vmem:[%s3 + $0x2f8] sm:$0xff]
        %v7093 = vld [vmem:[%s3 + $0x300] sm:$0xff]
        %v7094 = vld [vmem:[%s3 + $0x308] sm:$0xff]
        %v7095 = vld [vmem:[%s3 + $0x310] sm:$0xff]
        %v7096 = vld [vmem:[%s3 + $0x318] sm:$0xff]
        %v7097 = vld [vmem:[%s3 + $0x320] sm:$0xff]
        %v7098 = vld [vmem:[%s3 + $0x328] sm:$0xff]
        %v7099 = vld [vmem:[%s3 + $0x330] sm:$0xff]
        %v7100 = vld [vmem:[%s3 + $0x338] sm:$0xff]
        %v7101 = vld [vmem:[%s3 + $0x340] sm:$0xff]
        %v7102 = vld [vmem:[%s3 + $0x348] sm:$0xff]
        %v7103 = vld [vmem:[%s3 + $0x350] sm:$0xff]
        %v7104 = vld [vmem:[%s3 + $0x358] sm:$0xff]
        %v7105 = vld [vmem:[%s3 + $0x360] sm:$0xff]
        %v7106 = vld [vmem:[%s3 + $0x368] sm:$0xff]
        %v7107 = vld [vmem:[%s3 + $0x370] sm:$0xff]
        %v7108 = vld [vmem:[%s3 + $0x378] sm:$0xff]
        %v7109 = vld [vmem:[%s3 + $0x380] sm:$0xff]
        %v7110 = vld [vmem:[%s3 + $0x388] sm:$0xff]
        %v7111 = vld [vmem:[%s3 + $0x390] sm:$0xff]
        %v7112 = vld [vmem:[%s3 + $0x398] sm:$0xff]
        %v7113 = vld [vmem:[%s3 + $0x3a0] sm:$0xff]
        %v7114 = vld [vmem:[%s3 + $0x3a8] sm:$0xff]
        %v7115 = vld [vmem:[%s3 + $0x3b0] sm:$0xff]
        %v7116 = vld [vmem:[%s3 + $0x3b8] sm:$0xff]
        %v7117 = vld [vmem:[%s3 + $0x3c0] sm:$0xff]
        %v7118 = vld [vmem:[%s3 + $0x3c8] sm:$0xff]
        %v7119 = vld [vmem:[%s3 + $0x3d0] sm:$0xff]
        %v7120 = vld [vmem:[%s3 + $0x3d8] sm:$0xff]
        %v7121 = vld [vmem:[%s3 + $0x3e0] sm:$0xff]
        %v7122 = vld [vmem:[%s3 + $0x3e8] sm:$0xff]
        %v7123 = vld [vmem:[%s3 + $0x3f0] sm:$0xff]
        %v7124 = vld [vmem:[%s3 + $0x3f8] sm:$0xff]
        %v7125 = vld [vmem:[%s3 + $0x400] sm:$0xff]
        %v7126 = vld [vmem:[%s3 + $0x408] sm:$0xff]
        %v7127 = vld [vmem:[%s3 + $0x410] sm:$0xff]
        %v7128 = vld [vmem:[%s3 + $0x418] sm:$0xff]
        %v7129 = vld [vmem:[%s3 + $0x420] sm:$0xff]
        %v7130 = vld [vmem:[%s3 + $0x428] sm:$0xff]
        %v7131 = vld [vmem:[%s3 + $0x430] sm:$0xff]
        %v7132 = vld [vmem:[%s3 + $0x438] sm:$0xff]
        %v7133 = vld [vmem:[%s3 + $0x440] sm:$0xff]
        %v7134 = vld [vmem:[%s3 + $0x448] sm:$0xff]
        %v7135 = vld [vmem:[%s3 + $0x450] sm:$0xff]
        %v7136 = vld [vmem:[%s3 + $0x458] sm:$0xff]
        %v7137 = vld [vmem:[%s3 + $0x460] sm:$0xff]
        %v7138 = vld [vmem:[%s3 + $0x468] sm:$0xff]
        %v7139 = vld [vmem:[%s3 + $0x470] sm:$0xff]
        %v7140 = vld [vmem:[%s3 + $0x478] sm:$0xff]
        %v7141 = vld [vmem:[%s3 + $0x480] sm:$0xff]
        %v7142 = vld [vmem:[%s3 + $0x488] sm:$0xff]
        %v7143 = vld [vmem:[%s3 + $0x490] sm:$0xff]
        %v7144 = vld [vmem:[%s3 + $0x498] sm:$0xff]
        %v7145 = vld [vmem:[%s3 + $0x4a0] sm:$0xff]
        %v7146 = vld [vmem:[%s3 + $0x4a8] sm:$0xff]
        %v7147 = vld [vmem:[%s3 + $0x4b0] sm:$0xff]
        %v7148 = vld [vmem:[%s3 + $0x4b8] sm:$0xff]
        %v7149 = vld [vmem:[%s3 + $0x4c0] sm:$0xff]
        %v7150 = vld [vmem:[%s3 + $0x4c8] sm:$0xff]
        %v7151 = vld [vmem:[%s3 + $0x4d0] sm:$0xff]
        %v7152 = vld [vmem:[%s3 + $0x4d8] sm:$0xff]
        %v7153 = vld [vmem:[%s3 + $0x4e0] sm:$0xff]
        %v7154 = vld [vmem:[%s3 + $0x4e8] sm:$0xff]
        %v7155 = vld [vmem:[%s3 + $0x4f0] sm:$0xff]
        %v7156 = vld [vmem:[%s3 + $0x4f8] sm:$0xff]
        %v7157 = vld [vmem:[%s3 + $0x500] sm:$0xff]
        %v7158 = vld [vmem:[%s3 + $0x508] sm:$0xff]
        %v7159 = vld [vmem:[%s3 + $0x510] sm:$0xff]
        %v7160 = vld [vmem:[%s3 + $0x518] sm:$0xff]
        %v7161 = vld [vmem:[%s3 + $0x520] sm:$0xff]
        %v7162 = vld [vmem:[%s3 + $0x528] sm:$0xff]
        %v7163 = vld [vmem:[%s3 + $0x530] sm:$0xff]
        %v7164 = vld [vmem:[%s3 + $0x538] sm:$0xff]
        %v7165 = vld [vmem:[%s3 + $0x540] sm:$0xff]
        %v7166 = vld [vmem:[%s3 + $0x548] sm:$0xff]
        %v7167 = vld [vmem:[%s3 + $0x550] sm:$0xff]
        %v7168 = vld [vmem:[%s3 + $0x558] sm:$0xff]
        %v7169 = vld [vmem:[%s3 + $0x560] sm:$0xff]
        %v7170 = vld [vmem:[%s3 + $0x568] sm:$0xff]
        %v7171 = vld [vmem:[%s3 + $0x570] sm:$0xff]
        %v7172 = vld [vmem:[%s3 + $0x578] sm:$0xff]
        %v7173 = vld [vmem:[%s3 + $0x580] sm:$0xff]
        %v7174 = vld [vmem:[%s3 + $0x588] sm:$0xff]
        %v7175 = vld [vmem:[%s3 + $0x590] sm:$0xff]
        %v7176 = vld [vmem:[%s3 + $0x598] sm:$0xff]
        %v7177 = vld [vmem:[%s3 + $0x5a0] sm:$0xff]
        %v7178 = vld [vmem:[%s3 + $0x5a8] sm:$0xff]
        %v7179 = vld [vmem:[%s3 + $0x5b0] sm:$0xff]
        %v7180 = vld [vmem:[%s3 + $0x5b8] sm:$0xff]
        %v7181 = vld [vmem:[%s3 + $0x5c0] sm:$0xff]
        %v7182 = vld [vmem:[%s3 + $0x5c8] sm:$0xff]
        %v7183 = vld [vmem:[%s3 + $0x5d0] sm:$0xff]
        %v7184 = vld [vmem:[%s3 + $0x5d8] sm:$0xff]
        %v7185 = vld [vmem:[%s3 + $0x5e0] sm:$0xff]
        %v7186 = vld [vmem:[%s3 + $0x5e8] sm:$0xff]
        %v7187 = vld [vmem:[%s3 + $0x5f0] sm:$0xff]
        %v7188 = vld [vmem:[%s3 + $0x5f8] sm:$0xff]
        %v7189 = vld [vmem:[%s3 + $0x600] sm:$0xff]
        %v7190 = vld [vmem:[%s3 + $0x608] sm:$0xff]
        %v7191 = vld [vmem:[%s3 + $0x610] sm:$0xff]
        %v7192 = vld [vmem:[%s3 + $0x618] sm:$0xff]
        %v7193 = vld [vmem:[%s3 + $0x620] sm:$0xff]
        %v7194 = vld [vmem:[%s3 + $0x628] sm:$0xff]
        %v7195 = vld [vmem:[%s3 + $0x630] sm:$0xff]
        %v7196 = vld [vmem:[%s3 + $0x638] sm:$0xff]
        %v7197 = vld [vmem:[%s3 + $0x640] sm:$0xff]
        %v7198 = vld [vmem:[%s3 + $0x648] sm:$0xff]
        %v7199 = vld [vmem:[%s3 + $0x650] sm:$0xff]
        %v7200 = vld [vmem:[%s3 + $0x658] sm:$0xff]
        %v7201 = vld [vmem:[%s3 + $0x660] sm:$0xff]
        %v7202 = vld [vmem:[%s3 + $0x668] sm:$0xff]
        %v7203 = vld [vmem:[%s3 + $0x670] sm:$0xff]
        %v7204 = vld [vmem:[%s3 + $0x678] sm:$0xff]
        %v7205 = vld [vmem:[%s3 + $0x680] sm:$0xff]
        %v7206 = vld [vmem:[%s3 + $0x688] sm:$0xff]
        %v7207 = vld [vmem:[%s3 + $0x690] sm:$0xff]
        %v7208 = vld [vmem:[%s3 + $0x698] sm:$0xff]
        %v7209 = vld [vmem:[%s3 + $0x6a0] sm:$0xff]
        %v7210 = vld [vmem:[%s3 + $0x6a8] sm:$0xff]
        %v7211 = vld [vmem:[%s3 + $0x6b0] sm:$0xff]
        %v7212 = vld [vmem:[%s3 + $0x6b8] sm:$0xff]
        %v7213 = vld [vmem:[%s3 + $0x6c0] sm:$0xff]
        %v7214 = vld [vmem:[%s3 + $0x6c8] sm:$0xff]
        %v7215 = vld [vmem:[%s3 + $0x6d0] sm:$0xff]
        %v7216 = vld [vmem:[%s3 + $0x6d8] sm:$0xff]
        %v7217 = vld [vmem:[%s3 + $0x6e0] sm:$0xff]
        %v7218 = vld [vmem:[%s3 + $0x6e8] sm:$0xff]
        %v7219 = vld [vmem:[%s3 + $0x6f0] sm:$0xff]
        %v7220 = vld [vmem:[%s3 + $0x6f8] sm:$0xff]
        %v7221 = vld [vmem:[%s3 + $0x700] sm:$0xff]
        %v7222 = vld [vmem:[%s3 + $0x708] sm:$0xff]
        %v7223 = vld [vmem:[%s3 + $0x710] sm:$0xff]
        %v7224 = vld [vmem:[%s3 + $0x718] sm:$0xff]
        %v7225 = vld [vmem:[%s3 + $0x720] sm:$0xff]
        %v7226 = vld [vmem:[%s3 + $0x728] sm:$0xff]
        %v7227 = vld [vmem:[%s3 + $0x730] sm:$0xff]
        %v7228 = vld [vmem:[%s3 + $0x738] sm:$0xff]
        %v7229 = vld [vmem:[%s3 + $0x740] sm:$0xff]
        %v7230 = vld [vmem:[%s3 + $0x748] sm:$0xff]
        %v7231 = vld [vmem:[%s3 + $0x750] sm:$0xff]
        %v7232 = vld [vmem:[%s3 + $0x758] sm:$0xff]
        %v7233 = vld [vmem:[%s3 + $0x760] sm:$0xff]
        %v7234 = vld [vmem:[%s3 + $0x768] sm:$0xff]
        %v7235 = vld [vmem:[%s3 + $0x770] sm:$0xff]
        %v7236 = vld [vmem:[%s3 + $0x778] sm:$0xff]
        %v7237 = vld [vmem:[%s3 + $0x780] sm:$0xff]
        %v7238 = vld [vmem:[%s3 + $0x788] sm:$0xff]
        %v7239 = vld [vmem:[%s3 + $0x790] sm:$0xff]
        %v7240 = vld [vmem:[%s3 + $0x798] sm:$0xff]
        %v7241 = vld [vmem:[%s3 + $0x7a0] sm:$0xff]
        %v7242 = vld [vmem:[%s3 + $0x7a8] sm:$0xff]
        %v7243 = vld [vmem:[%s3 + $0x7b0] sm:$0xff]
        %v7244 = vld [vmem:[%s3 + $0x7b8] sm:$0xff]
        %v7245 = vld [vmem:[%s3 + $0x7c0] sm:$0xff]
        %v7246 = vld [vmem:[%s3 + $0x7c8] sm:$0xff]
        %v7247 = vld [vmem:[%s3 + $0x7d0] sm:$0xff]
        %v7248 = vld [vmem:[%s3 + $0x7d8] sm:$0xff]
        %v7249 = vld [vmem:[%s3 + $0x7e0] sm:$0xff]
        %v7250 = vld [vmem:[%s3 + $0x7e8] sm:$0xff]
        %v7251 = vld [vmem:[%s3 + $0x7f0] sm:$0xff]
        %v7252 = vld [vmem:[%s3 + $0x7f8] sm:$0xff]
        %v7253 = vld [vmem:[%s3 + $0x800] sm:$0xff]
        %v7254 = vld [vmem:[%s3 + $0x808] sm:$0xff]
        %v7255 = vld [vmem:[%s3 + $0x810] sm:$0xff]
        %v7256 = vld [vmem:[%s3 + $0x818] sm:$0xff]
        %v7257 = vld [vmem:[%s3 + $0x820] sm:$0xff]
        %v7258 = vld [vmem:[%s3 + $0x828] sm:$0xff]
        %v7259 = vld [vmem:[%s3 + $0x830] sm:$0xff]
        %v7260 = vld [vmem:[%s3 + $0x838] sm:$0xff]
        %v7261 = vld [vmem:[%s3 + $0x840] sm:$0xff]
        %v7262 = vld [vmem:[%s3 + $0x848] sm:$0xff]
        %v7263 = vld [vmem:[%s3 + $0x850] sm:$0xff]
        %v7264 = vld [vmem:[%s3 + $0x858] sm:$0xff]
        %v7265 = vld [vmem:[%s3 + $0x860] sm:$0xff]
        %v7266 = vld [vmem:[%s3 + $0x868] sm:$0xff]
        %v7267 = vld [vmem:[%s3 + $0x870] sm:$0xff]
        %v7268 = vld [vmem:[%s3 + $0x878] sm:$0xff]
        %v7269 = vld [vmem:[%s3 + $0x880] sm:$0xff]
        %v7270 = vld [vmem:[%s3 + $0x888] sm:$0xff]
        %v7271 = vld [vmem:[%s3 + $0x890] sm:$0xff]
        %v7272 = vld [vmem:[%s3 + $0x898] sm:$0xff]
        %v7273 = vld [vmem:[%s3 + $0x8a0] sm:$0xff]
        %v7274 = vld [vmem:[%s3 + $0x8a8] sm:$0xff]
        %v7275 = vld [vmem:[%s3 + $0x8b0] sm:$0xff]
        %v7276 = vld [vmem:[%s3 + $0x8b8] sm:$0xff]
        %v7277 = vld [vmem:[%s3 + $0x8c0] sm:$0xff]
        %v7278 = vld [vmem:[%s3 + $0x8c8] sm:$0xff]
        %v7279 = vld [vmem:[%s3 + $0x8d0] sm:$0xff]
        %v7280 = vld [vmem:[%s3 + $0x8d8] sm:$0xff]
        %v7281 = vld [vmem:[%s3 + $0x8e0] sm:$0xff]
        %v7282 = vld [vmem:[%s3 + $0x8e8] sm:$0xff]
        %v7283 = vld [vmem:[%s3 + $0x8f0] sm:$0xff]
        %v7284 = vld [vmem:[%s3 + $0x8f8] sm:$0xff]
        %v7285 = vld [vmem:[%s3 + $0x900] sm:$0xff]
        %v7286 = vld [vmem:[%s3 + $0x908] sm:$0xff]
        %v7287 = vld [vmem:[%s3 + $0x910] sm:$0xff]
        %v7288 = vld [vmem:[%s3 + $0x918] sm:$0xff]
        %v7289 = vld [vmem:[%s3 + $0x920] sm:$0xff]
        %v7290 = vld [vmem:[%s3 + $0x928] sm:$0xff]
        %v7291 = vld [vmem:[%s3 + $0x930] sm:$0xff]
        %v7292 = vld [vmem:[%s3 + $0x938] sm:$0xff]
        %v7293 = vld [vmem:[%s3 + $0x940] sm:$0xff]
        %v7294 = vld [vmem:[%s3 + $0x948] sm:$0xff]
        %v7295 = vld [vmem:[%s3 + $0x950] sm:$0xff]
        %v7296 = vld [vmem:[%s3 + $0x958] sm:$0xff]
        %v7297 = vld [vmem:[%s3 + $0x960] sm:$0xff]
        %v7298 = vld [vmem:[%s3 + $0x968] sm:$0xff]
        %v7299 = vld [vmem:[%s3 + $0x970] sm:$0xff]
        %v7300 = vld [vmem:[%s3 + $0x978] sm:$0xff]
        %v7301 = vld [vmem:[%s3 + $0x980] sm:$0xff]
        %v7302 = vld [vmem:[%s3 + $0x988] sm:$0xff]
        %v7303 = vld [vmem:[%s3 + $0x990] sm:$0xff]
        %v7304 = vld [vmem:[%s3 + $0x998] sm:$0xff]
        %v7305 = vld [vmem:[%s3 + $0x9a0] sm:$0xff]
        %v7306 = vld [vmem:[%s3 + $0x9a8] sm:$0xff]
        %v7307 = vld [vmem:[%s3 + $0x9b0] sm:$0xff]
        %v7308 = vld [vmem:[%s3 + $0x9b8] sm:$0xff]
        %v7309 = vld [vmem:[%s3 + $0x9c0] sm:$0xff]
        %v7310 = vld [vmem:[%s3 + $0x9c8] sm:$0xff]
        %v7311 = vld [vmem:[%s3 + $0x9d0] sm:$0xff]
        %v7312 = vld [vmem:[%s3 + $0x9d8] sm:$0xff]
        %v7313 = vld [vmem:[%s3 + $0x9e0] sm:$0xff]
        %v7314 = vld [vmem:[%s3 + $0x9e8] sm:$0xff]
        %v7315 = vld [vmem:[%s3 + $0x9f0] sm:$0xff]
        %v7316 = vld [vmem:[%s3 + $0x9f8] sm:$0xff]
        %v7317 = vld [vmem:[%s3 + $0xa00] sm:$0xff]
        %v7318 = vld [vmem:[%s3 + $0xa08] sm:$0xff]
        %v7319 = vld [vmem:[%s3 + $0xa10] sm:$0xff]
        %v7320 = vld [vmem:[%s3 + $0xa18] sm:$0xff]
        %v7321 = vld [vmem:[%s3 + $0xa20] sm:$0xff]
        %v7322 = vld [vmem:[%s3 + $0xa28] sm:$0xff]
        %v7323 = vld [vmem:[%s3 + $0xa30] sm:$0xff]
        %v7324 = vld [vmem:[%s3 + $0xa38] sm:$0xff]
        %v7325 = vld [vmem:[%s3 + $0xa40] sm:$0xff]
        %v7326 = vld [vmem:[%s3 + $0xa48] sm:$0xff]
        %v7327 = vld [vmem:[%s3 + $0xa50] sm:$0xff]
        %v7328 = vld [vmem:[%s3 + $0xa58] sm:$0xff]
        %v7329 = vld [vmem:[%s3 + $0xa60] sm:$0xff]
        %v7330 = vld [vmem:[%s3 + $0xa68] sm:$0xff]
        %v7331 = vld [vmem:[%s3 + $0xa70] sm:$0xff]
        %v7332 = vld [vmem:[%s3 + $0xa78] sm:$0xff]
        %v7333 = vld [vmem:[%s3 + $0xa80] sm:$0xff]
        %v7334 = vld [vmem:[%s3 + $0xa88] sm:$0xff]
        %v7335 = vld [vmem:[%s3 + $0xa90] sm:$0xff]
        %v7336 = vld [vmem:[%s3 + $0xa98] sm:$0xff]
        %v7337 = vld [vmem:[%s3 + $0xaa0] sm:$0xff]
        %v7338 = vld [vmem:[%s3 + $0xaa8] sm:$0xff]
        %v7339 = vld [vmem:[%s3 + $0xab0] sm:$0xff]
        %v7340 = vld [vmem:[%s3 + $0xab8] sm:$0xff]
        %v7341 = vld [vmem:[%s3 + $0xac0] sm:$0xff]
        %v7342 = vld [vmem:[%s3 + $0xac8] sm:$0xff]
        %v7343 = vld [vmem:[%s3 + $0xad0] sm:$0xff]
        %v7344 = vld [vmem:[%s3 + $0xad8] sm:$0xff]
        %v7345 = vld [vmem:[%s3 + $0xae0] sm:$0xff]
        %v7346 = vld [vmem:[%s3 + $0xae8] sm:$0xff]
        %v7347 = vld [vmem:[%s3 + $0xaf0] sm:$0xff]
        %v7348 = vld [vmem:[%s3 + $0xaf8] sm:$0xff]
        %v7349 = vld [vmem:[%s3 + $0xb00] sm:$0xff]
        %v7350 = vld [vmem:[%s3 + $0xb08] sm:$0xff]
        %v7351 = vld [vmem:[%s3 + $0xb10] sm:$0xff]
        %v7352 = vld [vmem:[%s3 + $0xb18] sm:$0xff]
        %v7353 = vld [vmem:[%s3 + $0xb20] sm:$0xff]
        %v7354 = vld [vmem:[%s3 + $0xb28] sm:$0xff]
        %v7355 = vld [vmem:[%s3 + $0xb30] sm:$0xff]
        %v7356 = vld [vmem:[%s3 + $0xb38] sm:$0xff]
        %v7357 = vld [vmem:[%s3 + $0xb40] sm:$0xff]
        %v7358 = vld [vmem:[%s3 + $0xb48] sm:$0xff]
        %v7359 = vld [vmem:[%s3 + $0xb50] sm:$0xff]
        %v7360 = vld [vmem:[%s3 + $0xb58] sm:$0xff]
        %v7361 = vld [vmem:[%s3 + $0xb60] sm:$0xff]
        %v7362 = vld [vmem:[%s3 + $0xb68] sm:$0xff]
        %v7363 = vld [vmem:[%s3 + $0xb70] sm:$0xff]
        %v7364 = vld [vmem:[%s3 + $0xb78] sm:$0xff]
        %v7365 = vld [vmem:[%s3 + $0xb80] sm:$0xff]
        %v7366 = vld [vmem:[%s3 + $0xb88] sm:$0xff]
        %v7367 = vld [vmem:[%s3 + $0xb90] sm:$0xff]
        %v7368 = vld [vmem:[%s3 + $0xb98] sm:$0xff]
        %v7369 = vld [vmem:[%s3 + $0xba0] sm:$0xff]
        %v7370 = vld [vmem:[%s3 + $0xba8] sm:$0xff]
        %v7371 = vld [vmem:[%s3 + $0xbb0] sm:$0xff]
        %v7372 = vld [vmem:[%s3 + $0xbb8] sm:$0xff]
        %v7373 = vld [vmem:[%s3 + $0xbc0] sm:$0xff]
        %v7374 = vld [vmem:[%s3 + $0xbc8] sm:$0xff]
        %v7375 = vld [vmem:[%s3 + $0xbd0] sm:$0xff]
        %v7376 = vld [vmem:[%s3 + $0xbd8] sm:$0xff]
        %v7377 = vld [vmem:[%s3 + $0xbe0] sm:$0xff]
        %v7378 = vld [vmem:[%s3 + $0xbe8] sm:$0xff]
        %v7379 = vld [vmem:[%s3 + $0xbf0] sm:$0xff]
        %v7380 = vld [vmem:[%s3 + $0xbf8] sm:$0xff]
        %v7381 = vld [vmem:[%s3 + $0xc00] sm:$0xff]
        %v7382 = vld [vmem:[%s3 + $0xc08] sm:$0xff]
        %v7383 = vld [vmem:[%s3 + $0xc10] sm:$0xff]
        %v7384 = vld [vmem:[%s3 + $0xc18] sm:$0xff]
        %v7385 = vld [vmem:[%s3 + $0xc20] sm:$0xff]
        %v7386 = vld [vmem:[%s3 + $0xc28] sm:$0xff]
        %v7387 = vld [vmem:[%s3 + $0xc30] sm:$0xff]
        %v7388 = vld [vmem:[%s3 + $0xc38] sm:$0xff]
        %v7389 = vld [vmem:[%s3 + $0xc40] sm:$0xff]
        %v7390 = vld [vmem:[%s3 + $0xc48] sm:$0xff]
        %v7391 = vld [vmem:[%s3 + $0xc50] sm:$0xff]
        %v7392 = vld [vmem:[%s3 + $0xc58] sm:$0xff]
        %v7393 = vld [vmem:[%s3 + $0xc60] sm:$0xff]
        %v7394 = vld [vmem:[%s3 + $0xc68] sm:$0xff]
        %v7395 = vld [vmem:[%s3 + $0xc70] sm:$0xff]
        %v7396 = vld [vmem:[%s3 + $0xc78] sm:$0xff]
        %v7397 = vld [vmem:[%s3 + $0xc80] sm:$0xff]
        %v7398 = vld [vmem:[%s3 + $0xc88] sm:$0xff]
        %v7399 = vld [vmem:[%s3 + $0xc90] sm:$0xff]
        %v7400 = vld [vmem:[%s3 + $0xc98] sm:$0xff]
        %v7401 = vld [vmem:[%s3 + $0xca0] sm:$0xff]
        %v7402 = vld [vmem:[%s3 + $0xca8] sm:$0xff]
        %v7403 = vld [vmem:[%s3 + $0xcb0] sm:$0xff]
        %v7404 = vld [vmem:[%s3 + $0xcb8] sm:$0xff]
        %v7405 = vld [vmem:[%s3 + $0xcc0] sm:$0xff]
        %v7406 = vld [vmem:[%s3 + $0xcc8] sm:$0xff]
        %v7407 = vld [vmem:[%s3 + $0xcd0] sm:$0xff]
        %v7408 = vld [vmem:[%s3 + $0xcd8] sm:$0xff]
        %v7409 = vld [vmem:[%s3 + $0xce0] sm:$0xff]
        %v7410 = vld [vmem:[%s3 + $0xce8] sm:$0xff]
        %v7411 = vld [vmem:[%s3 + $0xcf0] sm:$0xff]
        %v7412 = vld [vmem:[%s3 + $0xcf8] sm:$0xff]
        %v7413 = vld [vmem:[%s3 + $0xd00] sm:$0xff]
        %v7414 = vld [vmem:[%s3 + $0xd08] sm:$0xff]
        %v7415 = vld [vmem:[%s3 + $0xd10] sm:$0xff]
        %v7416 = vld [vmem:[%s3 + $0xd18] sm:$0xff]
        %v7417 = vld [vmem:[%s3 + $0xd20] sm:$0xff]
        %v7418 = vld [vmem:[%s3 + $0xd28] sm:$0xff]
        %v7419 = vld [vmem:[%s3 + $0xd30] sm:$0xff]
        %v7420 = vld [vmem:[%s3 + $0xd38] sm:$0xff]
        %v7421 = vld [vmem:[%s3 + $0xd40] sm:$0xff]
        %v7422 = vld [vmem:[%s3 + $0xd48] sm:$0xff]
        %v7423 = vld [vmem:[%s3 + $0xd50] sm:$0xff]
        %v7424 = vld [vmem:[%s3 + $0xd58] sm:$0xff]
        %v7425 = vld [vmem:[%s3 + $0xd60] sm:$0xff]
        %v7426 = vld [vmem:[%s3 + $0xd68] sm:$0xff]
        %v7427 = vld [vmem:[%s3 + $0xd70] sm:$0xff]
        %v7428 = vld [vmem:[%s3 + $0xd78] sm:$0xff]
        %v7429 = vld [vmem:[%s3 + $0xd80] sm:$0xff]
        %v7430 = vld [vmem:[%s3 + $0xd88] sm:$0xff]
        %v7431 = vld [vmem:[%s3 + $0xd90] sm:$0xff]
        %v7432 = vld [vmem:[%s3 + $0xd98] sm:$0xff]
        %v7433 = vld [vmem:[%s3 + $0xda0] sm:$0xff]
        %v7434 = vld [vmem:[%s3 + $0xda8] sm:$0xff]
        %v7435 = vld [vmem:[%s3 + $0xdb0] sm:$0xff]
        %v7436 = vld [vmem:[%s3 + $0xdb8] sm:$0xff]
        %v7437 = vld [vmem:[%s3 + $0xdc0] sm:$0xff]
        %v7438 = vld [vmem:[%s3 + $0xdc8] sm:$0xff]
        %v7439 = vld [vmem:[%s3 + $0xdd0] sm:$0xff]
        %v7440 = vld [vmem:[%s3 + $0xdd8] sm:$0xff]
        %v7441 = vld [vmem:[%s3 + $0xde0] sm:$0xff]
        %v7442 = vld [vmem:[%s3 + $0xde8] sm:$0xff]
        %v7443 = vld [vmem:[%s3 + $0xdf0] sm:$0xff]
        %v7444 = vld [vmem:[%s3 + $0xdf8] sm:$0xff]
        %v7445 = vld [vmem:[%s3 + $0xe00] sm:$0xff]
        %v7446 = vld [vmem:[%s3 + $0xe08] sm:$0xff]
        %v7447 = vld [vmem:[%s3 + $0xe10] sm:$0xff]
        %v7448 = vld [vmem:[%s3 + $0xe18] sm:$0xff]
        %v7449 = vld [vmem:[%s3 + $0xe20] sm:$0xff]
        %v7450 = vld [vmem:[%s3 + $0xe28] sm:$0xff]
        %v7451 = vld [vmem:[%s3 + $0xe30] sm:$0xff]
        %v7452 = vld [vmem:[%s3 + $0xe38] sm:$0xff]
        %v7453 = vld [vmem:[%s3 + $0xe40] sm:$0xff]
        %v7454 = vld [vmem:[%s3 + $0xe48] sm:$0xff]
        %v7455 = vld [vmem:[%s3 + $0xe50] sm:$0xff]
        %v7456 = vld [vmem:[%s3 + $0xe58] sm:$0xff]
        %v7457 = vld [vmem:[%s3 + $0xe60] sm:$0xff]
        %v7458 = vld [vmem:[%s3 + $0xe68] sm:$0xff]
        %v7459 = vld [vmem:[%s3 + $0xe70] sm:$0xff]
        %v7460 = vld [vmem:[%s3 + $0xe78] sm:$0xff]
        %v7461 = vld [vmem:[%s3 + $0xe80] sm:$0xff]
        %v7462 = vld [vmem:[%s3 + $0xe88] sm:$0xff]
        %v7463 = vld [vmem:[%s3 + $0xe90] sm:$0xff]
        %v7464 = vld [vmem:[%s3 + $0xe98] sm:$0xff]
        %v7465 = vld [vmem:[%s3 + $0xea0] sm:$0xff]
        %v7466 = vld [vmem:[%s3 + $0xea8] sm:$0xff]
        %v7467 = vld [vmem:[%s3 + $0xeb0] sm:$0xff]
        %v7468 = vld [vmem:[%s3 + $0xeb8] sm:$0xff]
        %v7469 = vld [vmem:[%s3 + $0xec0] sm:$0xff]
        %v7470 = vld [vmem:[%s3 + $0xec8] sm:$0xff]
        %v7471 = vld [vmem:[%s3 + $0xed0] sm:$0xff]
        %v7472 = vld [vmem:[%s3 + $0xed8] sm:$0xff]
        %v7473 = vld [vmem:[%s3 + $0xee0] sm:$0xff]
        %v7474 = vld [vmem:[%s3 + $0xee8] sm:$0xff]
        %v7475 = vld [vmem:[%s3 + $0xef0] sm:$0xff]
        %v7476 = vld [vmem:[%s3 + $0xef8] sm:$0xff]
        %v7477 = vld [vmem:[%s3 + $0xf00] sm:$0xff]
        %v7478 = vld [vmem:[%s3 + $0xf08] sm:$0xff]
        %v7479 = vld [vmem:[%s3 + $0xf10] sm:$0xff]
        %v7480 = vld [vmem:[%s3 + $0xf18] sm:$0xff]
        %v7481 = vld [vmem:[%s3 + $0xf20] sm:$0xff]
        %v7482 = vld [vmem:[%s3 + $0xf28] sm:$0xff]
        %v7483 = vld [vmem:[%s3 + $0xf30] sm:$0xff]
        %v7484 = vld [vmem:[%s3 + $0xf38] sm:$0xff]
        %v7485 = vld [vmem:[%s3 + $0xf40] sm:$0xff]
        %v7486 = vld [vmem:[%s3 + $0xf48] sm:$0xff]
        %v7487 = vld [vmem:[%s3 + $0xf50] sm:$0xff]
        %v7488 = vld [vmem:[%s3 + $0xf58] sm:$0xff]
        %v7489 = vld [vmem:[%s3 + $0xf60] sm:$0xff]
        %v7490 = vld [vmem:[%s3 + $0xf68] sm:$0xff]
        %v7491 = vld [vmem:[%s3 + $0xf70] sm:$0xff]
        %v7492 = vld [vmem:[%s3 + $0xf78] sm:$0xff]
        %v7493 = vld [vmem:[%s3 + $0xf80] sm:$0xff]
        %v7494 = vld [vmem:[%s3 + $0xf88] sm:$0xff]
        %v7495 = vld [vmem:[%s3 + $0xf90] sm:$0xff]
        %v7496 = vld [vmem:[%s3 + $0xf98] sm:$0xff]
        %v7497 = vld [vmem:[%s3 + $0xfa0] sm:$0xff]
        %v7498 = vld [vmem:[%s3 + $0xfa8] sm:$0xff]
        %v7499 = vld [vmem:[%s3 + $0xfb0] sm:$0xff]
        %v7500 = vld [vmem:[%s3 + $0xfb8] sm:$0xff]
        %v7501 = vld [vmem:[%s3 + $0xfc0] sm:$0xff]
        %v7502 = vld [vmem:[%s3 + $0xfc8] sm:$0xff]
        %v7503 = vld [vmem:[%s3 + $0xfd0] sm:$0xff]
        %v7504 = vld [vmem:[%s3 + $0xfd8] sm:$0xff]
        %v7505 = vld [vmem:[%s3 + $0xfe0] sm:$0xff]
        %v7506 = vld [vmem:[%s3 + $0xfe8] sm:$0xff]
        %v7507 = vld [vmem:[%s3 + $0xff0] sm:$0xff]
        %v7508 = vld [vmem:[%s3 + $0xff8] sm:$0xff]
        %v7509 = vld [vmem:[%s4] sm:$0xff]
        %v7511 = vlaneseq
        %v7512 = vshrl.u32 %v7511, 7
        %v7513 = vsub.s32 0, %v7512
        %v7514 = vrot.slane %v7509, %v7513
        %v7515 = vlaneseq
        %v7516 = vshrl.u32 %v7515, 7
        %v7517 = vsub.s32 1, %v7516
        %v7518 = vrot.slane %v7509, %v7517
        %v7519 = vlaneseq
        %v7520 = vshrl.u32 %v7519, 7
        %v7521 = vsub.s32 2, %v7520
        %v7522 = vrot.slane %v7509, %v7521
        %v7523 = vlaneseq
        %v7524 = vshrl.u32 %v7523, 7
        %v7525 = vsub.s32 3, %v7524
        %v7526 = vrot.slane %v7509, %v7525
        %v7527 = vlaneseq
        %v7528 = vshrl.u32 %v7527, 7
        %v7529 = vsub.s32 4, %v7528
        %v7530 = vrot.slane %v7509, %v7529
        %v7531 = vlaneseq
        %v7532 = vshrl.u32 %v7531, 7
        %v7533 = vsub.s32 5, %v7532
        %v7534 = vrot.slane %v7509, %v7533
        %v7535 = vlaneseq
        %v7536 = vshrl.u32 %v7535, 7
        %v7537 = vsub.s32 6, %v7536
        %v7538 = vrot.slane %v7509, %v7537
        %v7539 = vlaneseq
        %v7540 = vshrl.u32 %v7539, 7
        %v7541 = vsub.s32 7, %v7540
        %v7542 = vrot.slane %v7509, %v7541
        %v8063 = vunpack.c.l.b16 %v6997
        %v8064 = vunpack.c.h.b16 %v6997
        %v8065 = vunpack.c.l.b16 %v6998
        %v8066 = vunpack.c.h.b16 %v6998
        %v8067 = vunpack.c.l.b16 %v6999
        %v8068 = vunpack.c.h.b16 %v6999
        %v8069 = vunpack.c.l.b16 %v7000
        %v8070 = vunpack.c.h.b16 %v7000
        %v8071 = vunpack.c.l.b16 %v7001
        %v8072 = vunpack.c.h.b16 %v7001
        %v8073 = vunpack.c.l.b16 %v7002
        %v8074 = vunpack.c.h.b16 %v7002
        %v8075 = vunpack.c.l.b16 %v7003
        %v8076 = vunpack.c.h.b16 %v7003
        %v8077 = vunpack.c.l.b16 %v7004
        %v8078 = vunpack.c.h.b16 %v7004
        %v8079 = vunpack.c.l.b16 %v7005
        %v8080 = vunpack.c.h.b16 %v7005
        %v8081 = vunpack.c.l.b16 %v7006
        %v8082 = vunpack.c.h.b16 %v7006
        %v8083 = vunpack.c.l.b16 %v7007
        %v8084 = vunpack.c.h.b16 %v7007
        %v8085 = vunpack.c.l.b16 %v7008
        %v8086 = vunpack.c.h.b16 %v7008
        %v8087 = vunpack.c.l.b16 %v7009
        %v8088 = vunpack.c.h.b16 %v7009
        %v8089 = vunpack.c.l.b16 %v7010
        %v8090 = vunpack.c.h.b16 %v7010
        %v8091 = vunpack.c.l.b16 %v7011
        %v8092 = vunpack.c.h.b16 %v7011
        %v8093 = vunpack.c.l.b16 %v7012
        %v8094 = vunpack.c.h.b16 %v7012
        %v8095 = vunpack.c.l.b16 %v7013
        %v8096 = vunpack.c.h.b16 %v7013
        %v8097 = vunpack.c.l.b16 %v7014
        %v8098 = vunpack.c.h.b16 %v7014
        %v8099 = vunpack.c.l.b16 %v7015
        %v8100 = vunpack.c.h.b16 %v7015
        %v8101 = vunpack.c.l.b16 %v7016
        %v8102 = vunpack.c.h.b16 %v7016
        %v8103 = vunpack.c.l.b16 %v7017
        %v8104 = vunpack.c.h.b16 %v7017
        %v8105 = vunpack.c.l.b16 %v7018
        %v8106 = vunpack.c.h.b16 %v7018
        %v8107 = vunpack.c.l.b16 %v7019
        %v8108 = vunpack.c.h.b16 %v7019
        %v8109 = vunpack.c.l.b16 %v7020
        %v8110 = vunpack.c.h.b16 %v7020
        %v8111 = vunpack.c.l.b16 %v7021
        %v8112 = vunpack.c.h.b16 %v7021
        %v8113 = vunpack.c.l.b16 %v7022
        %v8114 = vunpack.c.h.b16 %v7022
        %v8115 = vunpack.c.l.b16 %v7023
        %v8116 = vunpack.c.h.b16 %v7023
        %v8117 = vunpack.c.l.b16 %v7024
        %v8118 = vunpack.c.h.b16 %v7024
        %v8119 = vunpack.c.l.b16 %v7025
        %v8120 = vunpack.c.h.b16 %v7025
        %v8121 = vunpack.c.l.b16 %v7026
        %v8122 = vunpack.c.h.b16 %v7026
        %v8123 = vunpack.c.l.b16 %v7027
        %v8124 = vunpack.c.h.b16 %v7027
        %v8125 = vunpack.c.l.b16 %v7028
        %v8126 = vunpack.c.h.b16 %v7028
        %v8127 = vunpack.c.l.b16 %v7029
        %v8128 = vunpack.c.h.b16 %v7029
        %v8129 = vunpack.c.l.b16 %v7030
        %v8130 = vunpack.c.h.b16 %v7030
        %v8131 = vunpack.c.l.b16 %v7031
        %v8132 = vunpack.c.h.b16 %v7031
        %v8133 = vunpack.c.l.b16 %v7032
        %v8134 = vunpack.c.h.b16 %v7032
        %v8135 = vunpack.c.l.b16 %v7033
        %v8136 = vunpack.c.h.b16 %v7033
        %v8137 = vunpack.c.l.b16 %v7034
        %v8138 = vunpack.c.h.b16 %v7034
        %v8139 = vunpack.c.l.b16 %v7035
        %v8140 = vunpack.c.h.b16 %v7035
        %v8141 = vunpack.c.l.b16 %v7036
        %v8142 = vunpack.c.h.b16 %v7036
        %v8143 = vunpack.c.l.b16 %v7037
        %v8144 = vunpack.c.h.b16 %v7037
        %v8145 = vunpack.c.l.b16 %v7038
        %v8146 = vunpack.c.h.b16 %v7038
        %v8147 = vunpack.c.l.b16 %v7039
        %v8148 = vunpack.c.h.b16 %v7039
        %v8149 = vunpack.c.l.b16 %v7040
        %v8150 = vunpack.c.h.b16 %v7040
        %v8151 = vunpack.c.l.b16 %v7041
        %v8152 = vunpack.c.h.b16 %v7041
        %v8153 = vunpack.c.l.b16 %v7042
        %v8154 = vunpack.c.h.b16 %v7042
        %v8155 = vunpack.c.l.b16 %v7043
        %v8156 = vunpack.c.h.b16 %v7043
        %v8157 = vunpack.c.l.b16 %v7044
        %v8158 = vunpack.c.h.b16 %v7044
        %v8159 = vunpack.c.l.b16 %v7045
        %v8160 = vunpack.c.h.b16 %v7045
        %v8161 = vunpack.c.l.b16 %v7046
        %v8162 = vunpack.c.h.b16 %v7046
        %v8163 = vunpack.c.l.b16 %v7047
        %v8164 = vunpack.c.h.b16 %v7047
        %v8165 = vunpack.c.l.b16 %v7048
        %v8166 = vunpack.c.h.b16 %v7048
        %v8167 = vunpack.c.l.b16 %v7049
        %v8168 = vunpack.c.h.b16 %v7049
        %v8169 = vunpack.c.l.b16 %v7050
        %v8170 = vunpack.c.h.b16 %v7050
        %v8171 = vunpack.c.l.b16 %v7051
        %v8172 = vunpack.c.h.b16 %v7051
        %v8173 = vunpack.c.l.b16 %v7052
        %v8174 = vunpack.c.h.b16 %v7052
        %v8175 = vunpack.c.l.b16 %v7053
        %v8176 = vunpack.c.h.b16 %v7053
        %v8177 = vunpack.c.l.b16 %v7054
        %v8178 = vunpack.c.h.b16 %v7054
        %v8179 = vunpack.c.l.b16 %v7055
        %v8180 = vunpack.c.h.b16 %v7055
        %v8181 = vunpack.c.l.b16 %v7056
        %v8182 = vunpack.c.h.b16 %v7056
        %v8183 = vunpack.c.l.b16 %v7057
        %v8184 = vunpack.c.h.b16 %v7057
        %v8185 = vunpack.c.l.b16 %v7058
        %v8186 = vunpack.c.h.b16 %v7058
        %v8187 = vunpack.c.l.b16 %v7059
        %v8188 = vunpack.c.h.b16 %v7059
        %v8189 = vunpack.c.l.b16 %v7060
        %v8190 = vunpack.c.h.b16 %v7060
        %v8191 = vunpack.c.l.b16 %v7061
        %v8192 = vunpack.c.h.b16 %v7061
        %v8193 = vunpack.c.l.b16 %v7062
        %v8194 = vunpack.c.h.b16 %v7062
        %v8195 = vunpack.c.l.b16 %v7063
        %v8196 = vunpack.c.h.b16 %v7063
        %v8197 = vunpack.c.l.b16 %v7064
        %v8198 = vunpack.c.h.b16 %v7064
        %v8199 = vunpack.c.l.b16 %v7065
        %v8200 = vunpack.c.h.b16 %v7065
        %v8201 = vunpack.c.l.b16 %v7066
        %v8202 = vunpack.c.h.b16 %v7066
        %v8203 = vunpack.c.l.b16 %v7067
        %v8204 = vunpack.c.h.b16 %v7067
        %v8205 = vunpack.c.l.b16 %v7068
        %v8206 = vunpack.c.h.b16 %v7068
        %v8207 = vunpack.c.l.b16 %v7069
        %v8208 = vunpack.c.h.b16 %v7069
        %v8209 = vunpack.c.l.b16 %v7070
        %v8210 = vunpack.c.h.b16 %v7070
        %v8211 = vunpack.c.l.b16 %v7071
        %v8212 = vunpack.c.h.b16 %v7071
        %v8213 = vunpack.c.l.b16 %v7072
        %v8214 = vunpack.c.h.b16 %v7072
        %v8215 = vunpack.c.l.b16 %v7073
        %v8216 = vunpack.c.h.b16 %v7073
        %v8217 = vunpack.c.l.b16 %v7074
        %v8218 = vunpack.c.h.b16 %v7074
        %v8219 = vunpack.c.l.b16 %v7075
        %v8220 = vunpack.c.h.b16 %v7075
        %v8221 = vunpack.c.l.b16 %v7076
        %v8222 = vunpack.c.h.b16 %v7076
        %v8223 = vunpack.c.l.b16 %v7077
        %v8224 = vunpack.c.h.b16 %v7077
        %v8225 = vunpack.c.l.b16 %v7078
        %v8226 = vunpack.c.h.b16 %v7078
        %v8227 = vunpack.c.l.b16 %v7079
        %v8228 = vunpack.c.h.b16 %v7079
        %v8229 = vunpack.c.l.b16 %v7080
        %v8230 = vunpack.c.h.b16 %v7080
        %v8231 = vunpack.c.l.b16 %v7081
        %v8232 = vunpack.c.h.b16 %v7081
        %v8233 = vunpack.c.l.b16 %v7082
        %v8234 = vunpack.c.h.b16 %v7082
        %v8235 = vunpack.c.l.b16 %v7083
        %v8236 = vunpack.c.h.b16 %v7083
        %v8237 = vunpack.c.l.b16 %v7084
        %v8238 = vunpack.c.h.b16 %v7084
        %v8239 = vunpack.c.l.b16 %v7085
        %v8240 = vunpack.c.h.b16 %v7085
        %v8241 = vunpack.c.l.b16 %v7086
        %v8242 = vunpack.c.h.b16 %v7086
        %v8243 = vunpack.c.l.b16 %v7087
        %v8244 = vunpack.c.h.b16 %v7087
        %v8245 = vunpack.c.l.b16 %v7088
        %v8246 = vunpack.c.h.b16 %v7088
        %v8247 = vunpack.c.l.b16 %v7089
        %v8248 = vunpack.c.h.b16 %v7089
        %v8249 = vunpack.c.l.b16 %v7090
        %v8250 = vunpack.c.h.b16 %v7090
        %v8251 = vunpack.c.l.b16 %v7091
        %v8252 = vunpack.c.h.b16 %v7091
        %v8253 = vunpack.c.l.b16 %v7092
        %v8254 = vunpack.c.h.b16 %v7092
        %v8255 = vunpack.c.l.b16 %v7093
        %v8256 = vunpack.c.h.b16 %v7093
        %v8257 = vunpack.c.l.b16 %v7094
        %v8258 = vunpack.c.h.b16 %v7094
        %v8259 = vunpack.c.l.b16 %v7095
        %v8260 = vunpack.c.h.b16 %v7095
        %v8261 = vunpack.c.l.b16 %v7096
        %v8262 = vunpack.c.h.b16 %v7096
        %v8263 = vunpack.c.l.b16 %v7097
        %v8264 = vunpack.c.h.b16 %v7097
        %v8265 = vunpack.c.l.b16 %v7098
        %v8266 = vunpack.c.h.b16 %v7098
        %v8267 = vunpack.c.l.b16 %v7099
        %v8268 = vunpack.c.h.b16 %v7099
        %v8269 = vunpack.c.l.b16 %v7100
        %v8270 = vunpack.c.h.b16 %v7100
        %v8271 = vunpack.c.l.b16 %v7101
        %v8272 = vunpack.c.h.b16 %v7101
        %v8273 = vunpack.c.l.b16 %v7102
        %v8274 = vunpack.c.h.b16 %v7102
        %v8275 = vunpack.c.l.b16 %v7103
        %v8276 = vunpack.c.h.b16 %v7103
        %v8277 = vunpack.c.l.b16 %v7104
        %v8278 = vunpack.c.h.b16 %v7104
        %v8279 = vunpack.c.l.b16 %v7105
        %v8280 = vunpack.c.h.b16 %v7105
        %v8281 = vunpack.c.l.b16 %v7106
        %v8282 = vunpack.c.h.b16 %v7106
        %v8283 = vunpack.c.l.b16 %v7107
        %v8284 = vunpack.c.h.b16 %v7107
        %v8285 = vunpack.c.l.b16 %v7108
        %v8286 = vunpack.c.h.b16 %v7108
        %v8287 = vunpack.c.l.b16 %v7109
        %v8288 = vunpack.c.h.b16 %v7109
        %v8289 = vunpack.c.l.b16 %v7110
        %v8290 = vunpack.c.h.b16 %v7110
        %v8291 = vunpack.c.l.b16 %v7111
        %v8292 = vunpack.c.h.b16 %v7111
        %v8293 = vunpack.c.l.b16 %v7112
        %v8294 = vunpack.c.h.b16 %v7112
        %v8295 = vunpack.c.l.b16 %v7113
        %v8296 = vunpack.c.h.b16 %v7113
        %v8297 = vunpack.c.l.b16 %v7114
        %v8298 = vunpack.c.h.b16 %v7114
        %v8299 = vunpack.c.l.b16 %v7115
        %v8300 = vunpack.c.h.b16 %v7115
        %v8301 = vunpack.c.l.b16 %v7116
        %v8302 = vunpack.c.h.b16 %v7116
        %v8303 = vunpack.c.l.b16 %v7117
        %v8304 = vunpack.c.h.b16 %v7117
        %v8305 = vunpack.c.l.b16 %v7118
        %v8306 = vunpack.c.h.b16 %v7118
        %v8307 = vunpack.c.l.b16 %v7119
        %v8308 = vunpack.c.h.b16 %v7119
        %v8309 = vunpack.c.l.b16 %v7120
        %v8310 = vunpack.c.h.b16 %v7120
        %v8311 = vunpack.c.l.b16 %v7121
        %v8312 = vunpack.c.h.b16 %v7121
        %v8313 = vunpack.c.l.b16 %v7122
        %v8314 = vunpack.c.h.b16 %v7122
        %v8315 = vunpack.c.l.b16 %v7123
        %v8316 = vunpack.c.h.b16 %v7123
        %v8317 = vunpack.c.l.b16 %v7124
        %v8318 = vunpack.c.h.b16 %v7124
        %v8319 = vunpack.c.l.b16 %v7125
        %v8320 = vunpack.c.h.b16 %v7125
        %v8321 = vunpack.c.l.b16 %v7126
        %v8322 = vunpack.c.h.b16 %v7126
        %v8323 = vunpack.c.l.b16 %v7127
        %v8324 = vunpack.c.h.b16 %v7127
        %v8325 = vunpack.c.l.b16 %v7128
        %v8326 = vunpack.c.h.b16 %v7128
        %v8327 = vunpack.c.l.b16 %v7129
        %v8328 = vunpack.c.h.b16 %v7129
        %v8329 = vunpack.c.l.b16 %v7130
        %v8330 = vunpack.c.h.b16 %v7130
        %v8331 = vunpack.c.l.b16 %v7131
        %v8332 = vunpack.c.h.b16 %v7131
        %v8333 = vunpack.c.l.b16 %v7132
        %v8334 = vunpack.c.h.b16 %v7132
        %v8335 = vunpack.c.l.b16 %v7133
        %v8336 = vunpack.c.h.b16 %v7133
        %v8337 = vunpack.c.l.b16 %v7134
        %v8338 = vunpack.c.h.b16 %v7134
        %v8339 = vunpack.c.l.b16 %v7135
        %v8340 = vunpack.c.h.b16 %v7135
        %v8341 = vunpack.c.l.b16 %v7136
        %v8342 = vunpack.c.h.b16 %v7136
        %v8343 = vunpack.c.l.b16 %v7137
        %v8344 = vunpack.c.h.b16 %v7137
        %v8345 = vunpack.c.l.b16 %v7138
        %v8346 = vunpack.c.h.b16 %v7138
        %v8347 = vunpack.c.l.b16 %v7139
        %v8348 = vunpack.c.h.b16 %v7139
        %v8349 = vunpack.c.l.b16 %v7140
        %v8350 = vunpack.c.h.b16 %v7140
        %v8351 = vunpack.c.l.b16 %v7141
        %v8352 = vunpack.c.h.b16 %v7141
        %v8353 = vunpack.c.l.b16 %v7142
        %v8354 = vunpack.c.h.b16 %v7142
        %v8355 = vunpack.c.l.b16 %v7143
        %v8356 = vunpack.c.h.b16 %v7143
        %v8357 = vunpack.c.l.b16 %v7144
        %v8358 = vunpack.c.h.b16 %v7144
        %v8359 = vunpack.c.l.b16 %v7145
        %v8360 = vunpack.c.h.b16 %v7145
        %v8361 = vunpack.c.l.b16 %v7146
        %v8362 = vunpack.c.h.b16 %v7146
        %v8363 = vunpack.c.l.b16 %v7147
        %v8364 = vunpack.c.h.b16 %v7147
        %v8365 = vunpack.c.l.b16 %v7148
        %v8366 = vunpack.c.h.b16 %v7148
        %v8367 = vunpack.c.l.b16 %v7149
        %v8368 = vunpack.c.h.b16 %v7149
        %v8369 = vunpack.c.l.b16 %v7150
        %v8370 = vunpack.c.h.b16 %v7150
        %v8371 = vunpack.c.l.b16 %v7151
        %v8372 = vunpack.c.h.b16 %v7151
        %v8373 = vunpack.c.l.b16 %v7152
        %v8374 = vunpack.c.h.b16 %v7152
        %v8375 = vunpack.c.l.b16 %v7153
        %v8376 = vunpack.c.h.b16 %v7153
        %v8377 = vunpack.c.l.b16 %v7154
        %v8378 = vunpack.c.h.b16 %v7154
        %v8379 = vunpack.c.l.b16 %v7155
        %v8380 = vunpack.c.h.b16 %v7155
        %v8381 = vunpack.c.l.b16 %v7156
        %v8382 = vunpack.c.h.b16 %v7156
        %v8383 = vunpack.c.l.b16 %v7157
        %v8384 = vunpack.c.h.b16 %v7157
        %v8385 = vunpack.c.l.b16 %v7158
        %v8386 = vunpack.c.h.b16 %v7158
        %v8387 = vunpack.c.l.b16 %v7159
        %v8388 = vunpack.c.h.b16 %v7159
        %v8389 = vunpack.c.l.b16 %v7160
        %v8390 = vunpack.c.h.b16 %v7160
        %v8391 = vunpack.c.l.b16 %v7161
        %v8392 = vunpack.c.h.b16 %v7161
        %v8393 = vunpack.c.l.b16 %v7162
        %v8394 = vunpack.c.h.b16 %v7162
        %v8395 = vunpack.c.l.b16 %v7163
        %v8396 = vunpack.c.h.b16 %v7163
        %v8397 = vunpack.c.l.b16 %v7164
        %v8398 = vunpack.c.h.b16 %v7164
        %v8399 = vunpack.c.l.b16 %v7165
        %v8400 = vunpack.c.h.b16 %v7165
        %v8401 = vunpack.c.l.b16 %v7166
        %v8402 = vunpack.c.h.b16 %v7166
        %v8403 = vunpack.c.l.b16 %v7167
        %v8404 = vunpack.c.h.b16 %v7167
        %v8405 = vunpack.c.l.b16 %v7168
        %v8406 = vunpack.c.h.b16 %v7168
        %v8407 = vunpack.c.l.b16 %v7169
        %v8408 = vunpack.c.h.b16 %v7169
        %v8409 = vunpack.c.l.b16 %v7170
        %v8410 = vunpack.c.h.b16 %v7170
        %v8411 = vunpack.c.l.b16 %v7171
        %v8412 = vunpack.c.h.b16 %v7171
        %v8413 = vunpack.c.l.b16 %v7172
        %v8414 = vunpack.c.h.b16 %v7172
        %v8415 = vunpack.c.l.b16 %v7173
        %v8416 = vunpack.c.h.b16 %v7173
        %v8417 = vunpack.c.l.b16 %v7174
        %v8418 = vunpack.c.h.b16 %v7174
        %v8419 = vunpack.c.l.b16 %v7175
        %v8420 = vunpack.c.h.b16 %v7175
        %v8421 = vunpack.c.l.b16 %v7176
        %v8422 = vunpack.c.h.b16 %v7176
        %v8423 = vunpack.c.l.b16 %v7177
        %v8424 = vunpack.c.h.b16 %v7177
        %v8425 = vunpack.c.l.b16 %v7178
        %v8426 = vunpack.c.h.b16 %v7178
        %v8427 = vunpack.c.l.b16 %v7179
        %v8428 = vunpack.c.h.b16 %v7179
        %v8429 = vunpack.c.l.b16 %v7180
        %v8430 = vunpack.c.h.b16 %v7180
        %v8431 = vunpack.c.l.b16 %v7181
        %v8432 = vunpack.c.h.b16 %v7181
        %v8433 = vunpack.c.l.b16 %v7182
        %v8434 = vunpack.c.h.b16 %v7182
        %v8435 = vunpack.c.l.b16 %v7183
        %v8436 = vunpack.c.h.b16 %v7183
        %v8437 = vunpack.c.l.b16 %v7184
        %v8438 = vunpack.c.h.b16 %v7184
        %v8439 = vunpack.c.l.b16 %v7185
        %v8440 = vunpack.c.h.b16 %v7185
        %v8441 = vunpack.c.l.b16 %v7186
        %v8442 = vunpack.c.h.b16 %v7186
        %v8443 = vunpack.c.l.b16 %v7187
        %v8444 = vunpack.c.h.b16 %v7187
        %v8445 = vunpack.c.l.b16 %v7188
        %v8446 = vunpack.c.h.b16 %v7188
        %v8447 = vunpack.c.l.b16 %v7189
        %v8448 = vunpack.c.h.b16 %v7189
        %v8449 = vunpack.c.l.b16 %v7190
        %v8450 = vunpack.c.h.b16 %v7190
        %v8451 = vunpack.c.l.b16 %v7191
        %v8452 = vunpack.c.h.b16 %v7191
        %v8453 = vunpack.c.l.b16 %v7192
        %v8454 = vunpack.c.h.b16 %v7192
        %v8455 = vunpack.c.l.b16 %v7193
        %v8456 = vunpack.c.h.b16 %v7193
        %v8457 = vunpack.c.l.b16 %v7194
        %v8458 = vunpack.c.h.b16 %v7194
        %v8459 = vunpack.c.l.b16 %v7195
        %v8460 = vunpack.c.h.b16 %v7195
        %v8461 = vunpack.c.l.b16 %v7196
        %v8462 = vunpack.c.h.b16 %v7196
        %v8463 = vunpack.c.l.b16 %v7197
        %v8464 = vunpack.c.h.b16 %v7197
        %v8465 = vunpack.c.l.b16 %v7198
        %v8466 = vunpack.c.h.b16 %v7198
        %v8467 = vunpack.c.l.b16 %v7199
        %v8468 = vunpack.c.h.b16 %v7199
        %v8469 = vunpack.c.l.b16 %v7200
        %v8470 = vunpack.c.h.b16 %v7200
        %v8471 = vunpack.c.l.b16 %v7201
        %v8472 = vunpack.c.h.b16 %v7201
        %v8473 = vunpack.c.l.b16 %v7202
        %v8474 = vunpack.c.h.b16 %v7202
        %v8475 = vunpack.c.l.b16 %v7203
        %v8476 = vunpack.c.h.b16 %v7203
        %v8477 = vunpack.c.l.b16 %v7204
        %v8478 = vunpack.c.h.b16 %v7204
        %v8479 = vunpack.c.l.b16 %v7205
        %v8480 = vunpack.c.h.b16 %v7205
        %v8481 = vunpack.c.l.b16 %v7206
        %v8482 = vunpack.c.h.b16 %v7206
        %v8483 = vunpack.c.l.b16 %v7207
        %v8484 = vunpack.c.h.b16 %v7207
        %v8485 = vunpack.c.l.b16 %v7208
        %v8486 = vunpack.c.h.b16 %v7208
        %v8487 = vunpack.c.l.b16 %v7209
        %v8488 = vunpack.c.h.b16 %v7209
        %v8489 = vunpack.c.l.b16 %v7210
        %v8490 = vunpack.c.h.b16 %v7210
        %v8491 = vunpack.c.l.b16 %v7211
        %v8492 = vunpack.c.h.b16 %v7211
        %v8493 = vunpack.c.l.b16 %v7212
        %v8494 = vunpack.c.h.b16 %v7212
        %v8495 = vunpack.c.l.b16 %v7213
        %v8496 = vunpack.c.h.b16 %v7213
        %v8497 = vunpack.c.l.b16 %v7214
        %v8498 = vunpack.c.h.b16 %v7214
        %v8499 = vunpack.c.l.b16 %v7215
        %v8500 = vunpack.c.h.b16 %v7215
        %v8501 = vunpack.c.l.b16 %v7216
        %v8502 = vunpack.c.h.b16 %v7216
        %v8503 = vunpack.c.l.b16 %v7217
        %v8504 = vunpack.c.h.b16 %v7217
        %v8505 = vunpack.c.l.b16 %v7218
        %v8506 = vunpack.c.h.b16 %v7218
        %v8507 = vunpack.c.l.b16 %v7219
        %v8508 = vunpack.c.h.b16 %v7219
        %v8509 = vunpack.c.l.b16 %v7220
        %v8510 = vunpack.c.h.b16 %v7220
        %v8511 = vunpack.c.l.b16 %v7221
        %v8512 = vunpack.c.h.b16 %v7221
        %v8513 = vunpack.c.l.b16 %v7222
        %v8514 = vunpack.c.h.b16 %v7222
        %v8515 = vunpack.c.l.b16 %v7223
        %v8516 = vunpack.c.h.b16 %v7223
        %v8517 = vunpack.c.l.b16 %v7224
        %v8518 = vunpack.c.h.b16 %v7224
        %v8519 = vunpack.c.l.b16 %v7225
        %v8520 = vunpack.c.h.b16 %v7225
        %v8521 = vunpack.c.l.b16 %v7226
        %v8522 = vunpack.c.h.b16 %v7226
        %v8523 = vunpack.c.l.b16 %v7227
        %v8524 = vunpack.c.h.b16 %v7227
        %v8525 = vunpack.c.l.b16 %v7228
        %v8526 = vunpack.c.h.b16 %v7228
        %v8527 = vunpack.c.l.b16 %v7229
        %v8528 = vunpack.c.h.b16 %v7229
        %v8529 = vunpack.c.l.b16 %v7230
        %v8530 = vunpack.c.h.b16 %v7230
        %v8531 = vunpack.c.l.b16 %v7231
        %v8532 = vunpack.c.h.b16 %v7231
        %v8533 = vunpack.c.l.b16 %v7232
        %v8534 = vunpack.c.h.b16 %v7232
        %v8535 = vunpack.c.l.b16 %v7233
        %v8536 = vunpack.c.h.b16 %v7233
        %v8537 = vunpack.c.l.b16 %v7234
        %v8538 = vunpack.c.h.b16 %v7234
        %v8539 = vunpack.c.l.b16 %v7235
        %v8540 = vunpack.c.h.b16 %v7235
        %v8541 = vunpack.c.l.b16 %v7236
        %v8542 = vunpack.c.h.b16 %v7236
        %v8543 = vunpack.c.l.b16 %v7237
        %v8544 = vunpack.c.h.b16 %v7237
        %v8545 = vunpack.c.l.b16 %v7238
        %v8546 = vunpack.c.h.b16 %v7238
        %v8547 = vunpack.c.l.b16 %v7239
        %v8548 = vunpack.c.h.b16 %v7239
        %v8549 = vunpack.c.l.b16 %v7240
        %v8550 = vunpack.c.h.b16 %v7240
        %v8551 = vunpack.c.l.b16 %v7241
        %v8552 = vunpack.c.h.b16 %v7241
        %v8553 = vunpack.c.l.b16 %v7242
        %v8554 = vunpack.c.h.b16 %v7242
        %v8555 = vunpack.c.l.b16 %v7243
        %v8556 = vunpack.c.h.b16 %v7243
        %v8557 = vunpack.c.l.b16 %v7244
        %v8558 = vunpack.c.h.b16 %v7244
        %v8559 = vunpack.c.l.b16 %v7245
        %v8560 = vunpack.c.h.b16 %v7245
        %v8561 = vunpack.c.l.b16 %v7246
        %v8562 = vunpack.c.h.b16 %v7246
        %v8563 = vunpack.c.l.b16 %v7247
        %v8564 = vunpack.c.h.b16 %v7247
        %v8565 = vunpack.c.l.b16 %v7248
        %v8566 = vunpack.c.h.b16 %v7248
        %v8567 = vunpack.c.l.b16 %v7249
        %v8568 = vunpack.c.h.b16 %v7249
        %v8569 = vunpack.c.l.b16 %v7250
        %v8570 = vunpack.c.h.b16 %v7250
        %v8571 = vunpack.c.l.b16 %v7251
        %v8572 = vunpack.c.h.b16 %v7251
        %v8573 = vunpack.c.l.b16 %v7252
        %v8574 = vunpack.c.h.b16 %v7252
        %v8575 = vunpack.c.l.b16 %v7253
        %v8576 = vunpack.c.h.b16 %v7253
        %v8577 = vunpack.c.l.b16 %v7254
        %v8578 = vunpack.c.h.b16 %v7254
        %v8579 = vunpack.c.l.b16 %v7255
        %v8580 = vunpack.c.h.b16 %v7255
        %v8581 = vunpack.c.l.b16 %v7256
        %v8582 = vunpack.c.h.b16 %v7256
        %v8583 = vunpack.c.l.b16 %v7257
        %v8584 = vunpack.c.h.b16 %v7257
        %v8585 = vunpack.c.l.b16 %v7258
        %v8586 = vunpack.c.h.b16 %v7258
        %v8587 = vunpack.c.l.b16 %v7259
        %v8588 = vunpack.c.h.b16 %v7259
        %v8589 = vunpack.c.l.b16 %v7260
        %v8590 = vunpack.c.h.b16 %v7260
        %v8591 = vunpack.c.l.b16 %v7261
        %v8592 = vunpack.c.h.b16 %v7261
        %v8593 = vunpack.c.l.b16 %v7262
        %v8594 = vunpack.c.h.b16 %v7262
        %v8595 = vunpack.c.l.b16 %v7263
        %v8596 = vunpack.c.h.b16 %v7263
        %v8597 = vunpack.c.l.b16 %v7264
        %v8598 = vunpack.c.h.b16 %v7264
        %v8599 = vunpack.c.l.b16 %v7265
        %v8600 = vunpack.c.h.b16 %v7265
        %v8601 = vunpack.c.l.b16 %v7266
        %v8602 = vunpack.c.h.b16 %v7266
        %v8603 = vunpack.c.l.b16 %v7267
        %v8604 = vunpack.c.h.b16 %v7267
        %v8605 = vunpack.c.l.b16 %v7268
        %v8606 = vunpack.c.h.b16 %v7268
        %v8607 = vunpack.c.l.b16 %v7269
        %v8608 = vunpack.c.h.b16 %v7269
        %v8609 = vunpack.c.l.b16 %v7270
        %v8610 = vunpack.c.h.b16 %v7270
        %v8611 = vunpack.c.l.b16 %v7271
        %v8612 = vunpack.c.h.b16 %v7271
        %v8613 = vunpack.c.l.b16 %v7272
        %v8614 = vunpack.c.h.b16 %v7272
        %v8615 = vunpack.c.l.b16 %v7273
        %v8616 = vunpack.c.h.b16 %v7273
        %v8617 = vunpack.c.l.b16 %v7274
        %v8618 = vunpack.c.h.b16 %v7274
        %v8619 = vunpack.c.l.b16 %v7275
        %v8620 = vunpack.c.h.b16 %v7275
        %v8621 = vunpack.c.l.b16 %v7276
        %v8622 = vunpack.c.h.b16 %v7276
        %v8623 = vunpack.c.l.b16 %v7277
        %v8624 = vunpack.c.h.b16 %v7277
        %v8625 = vunpack.c.l.b16 %v7278
        %v8626 = vunpack.c.h.b16 %v7278
        %v8627 = vunpack.c.l.b16 %v7279
        %v8628 = vunpack.c.h.b16 %v7279
        %v8629 = vunpack.c.l.b16 %v7280
        %v8630 = vunpack.c.h.b16 %v7280
        %v8631 = vunpack.c.l.b16 %v7281
        %v8632 = vunpack.c.h.b16 %v7281
        %v8633 = vunpack.c.l.b16 %v7282
        %v8634 = vunpack.c.h.b16 %v7282
        %v8635 = vunpack.c.l.b16 %v7283
        %v8636 = vunpack.c.h.b16 %v7283
        %v8637 = vunpack.c.l.b16 %v7284
        %v8638 = vunpack.c.h.b16 %v7284
        %v8639 = vunpack.c.l.b16 %v7285
        %v8640 = vunpack.c.h.b16 %v7285
        %v8641 = vunpack.c.l.b16 %v7286
        %v8642 = vunpack.c.h.b16 %v7286
        %v8643 = vunpack.c.l.b16 %v7287
        %v8644 = vunpack.c.h.b16 %v7287
        %v8645 = vunpack.c.l.b16 %v7288
        %v8646 = vunpack.c.h.b16 %v7288
        %v8647 = vunpack.c.l.b16 %v7289
        %v8648 = vunpack.c.h.b16 %v7289
        %v8649 = vunpack.c.l.b16 %v7290
        %v8650 = vunpack.c.h.b16 %v7290
        %v8651 = vunpack.c.l.b16 %v7291
        %v8652 = vunpack.c.h.b16 %v7291
        %v8653 = vunpack.c.l.b16 %v7292
        %v8654 = vunpack.c.h.b16 %v7292
        %v8655 = vunpack.c.l.b16 %v7293
        %v8656 = vunpack.c.h.b16 %v7293
        %v8657 = vunpack.c.l.b16 %v7294
        %v8658 = vunpack.c.h.b16 %v7294
        %v8659 = vunpack.c.l.b16 %v7295
        %v8660 = vunpack.c.h.b16 %v7295
        %v8661 = vunpack.c.l.b16 %v7296
        %v8662 = vunpack.c.h.b16 %v7296
        %v8663 = vunpack.c.l.b16 %v7297
        %v8664 = vunpack.c.h.b16 %v7297
        %v8665 = vunpack.c.l.b16 %v7298
        %v8666 = vunpack.c.h.b16 %v7298
        %v8667 = vunpack.c.l.b16 %v7299
        %v8668 = vunpack.c.h.b16 %v7299
        %v8669 = vunpack.c.l.b16 %v7300
        %v8670 = vunpack.c.h.b16 %v7300
        %v8671 = vunpack.c.l.b16 %v7301
        %v8672 = vunpack.c.h.b16 %v7301
        %v8673 = vunpack.c.l.b16 %v7302
        %v8674 = vunpack.c.h.b16 %v7302
        %v8675 = vunpack.c.l.b16 %v7303
        %v8676 = vunpack.c.h.b16 %v7303
        %v8677 = vunpack.c.l.b16 %v7304
        %v8678 = vunpack.c.h.b16 %v7304
        %v8679 = vunpack.c.l.b16 %v7305
        %v8680 = vunpack.c.h.b16 %v7305
        %v8681 = vunpack.c.l.b16 %v7306
        %v8682 = vunpack.c.h.b16 %v7306
        %v8683 = vunpack.c.l.b16 %v7307
        %v8684 = vunpack.c.h.b16 %v7307
        %v8685 = vunpack.c.l.b16 %v7308
        %v8686 = vunpack.c.h.b16 %v7308
        %v8687 = vunpack.c.l.b16 %v7309
        %v8688 = vunpack.c.h.b16 %v7309
        %v8689 = vunpack.c.l.b16 %v7310
        %v8690 = vunpack.c.h.b16 %v7310
        %v8691 = vunpack.c.l.b16 %v7311
        %v8692 = vunpack.c.h.b16 %v7311
        %v8693 = vunpack.c.l.b16 %v7312
        %v8694 = vunpack.c.h.b16 %v7312
        %v8695 = vunpack.c.l.b16 %v7313
        %v8696 = vunpack.c.h.b16 %v7313
        %v8697 = vunpack.c.l.b16 %v7314
        %v8698 = vunpack.c.h.b16 %v7314
        %v8699 = vunpack.c.l.b16 %v7315
        %v8700 = vunpack.c.h.b16 %v7315
        %v8701 = vunpack.c.l.b16 %v7316
        %v8702 = vunpack.c.h.b16 %v7316
        %v8703 = vunpack.c.l.b16 %v7317
        %v8704 = vunpack.c.h.b16 %v7317
        %v8705 = vunpack.c.l.b16 %v7318
        %v8706 = vunpack.c.h.b16 %v7318
        %v8707 = vunpack.c.l.b16 %v7319
        %v8708 = vunpack.c.h.b16 %v7319
        %v8709 = vunpack.c.l.b16 %v7320
        %v8710 = vunpack.c.h.b16 %v7320
        %v8711 = vunpack.c.l.b16 %v7321
        %v8712 = vunpack.c.h.b16 %v7321
        %v8713 = vunpack.c.l.b16 %v7322
        %v8714 = vunpack.c.h.b16 %v7322
        %v8715 = vunpack.c.l.b16 %v7323
        %v8716 = vunpack.c.h.b16 %v7323
        %v8717 = vunpack.c.l.b16 %v7324
        %v8718 = vunpack.c.h.b16 %v7324
        %v8719 = vunpack.c.l.b16 %v7325
        %v8720 = vunpack.c.h.b16 %v7325
        %v8721 = vunpack.c.l.b16 %v7326
        %v8722 = vunpack.c.h.b16 %v7326
        %v8723 = vunpack.c.l.b16 %v7327
        %v8724 = vunpack.c.h.b16 %v7327
        %v8725 = vunpack.c.l.b16 %v7328
        %v8726 = vunpack.c.h.b16 %v7328
        %v8727 = vunpack.c.l.b16 %v7329
        %v8728 = vunpack.c.h.b16 %v7329
        %v8729 = vunpack.c.l.b16 %v7330
        %v8730 = vunpack.c.h.b16 %v7330
        %v8731 = vunpack.c.l.b16 %v7331
        %v8732 = vunpack.c.h.b16 %v7331
        %v8733 = vunpack.c.l.b16 %v7332
        %v8734 = vunpack.c.h.b16 %v7332
        %v8735 = vunpack.c.l.b16 %v7333
        %v8736 = vunpack.c.h.b16 %v7333
        %v8737 = vunpack.c.l.b16 %v7334
        %v8738 = vunpack.c.h.b16 %v7334
        %v8739 = vunpack.c.l.b16 %v7335
        %v8740 = vunpack.c.h.b16 %v7335
        %v8741 = vunpack.c.l.b16 %v7336
        %v8742 = vunpack.c.h.b16 %v7336
        %v8743 = vunpack.c.l.b16 %v7337
        %v8744 = vunpack.c.h.b16 %v7337
        %v8745 = vunpack.c.l.b16 %v7338
        %v8746 = vunpack.c.h.b16 %v7338
        %v8747 = vunpack.c.l.b16 %v7339
        %v8748 = vunpack.c.h.b16 %v7339
        %v8749 = vunpack.c.l.b16 %v7340
        %v8750 = vunpack.c.h.b16 %v7340
        %v8751 = vunpack.c.l.b16 %v7341
        %v8752 = vunpack.c.h.b16 %v7341
        %v8753 = vunpack.c.l.b16 %v7342
        %v8754 = vunpack.c.h.b16 %v7342
        %v8755 = vunpack.c.l.b16 %v7343
        %v8756 = vunpack.c.h.b16 %v7343
        %v8757 = vunpack.c.l.b16 %v7344
        %v8758 = vunpack.c.h.b16 %v7344
        %v8759 = vunpack.c.l.b16 %v7345
        %v8760 = vunpack.c.h.b16 %v7345
        %v8761 = vunpack.c.l.b16 %v7346
        %v8762 = vunpack.c.h.b16 %v7346
        %v8763 = vunpack.c.l.b16 %v7347
        %v8764 = vunpack.c.h.b16 %v7347
        %v8765 = vunpack.c.l.b16 %v7348
        %v8766 = vunpack.c.h.b16 %v7348
        %v8767 = vunpack.c.l.b16 %v7349
        %v8768 = vunpack.c.h.b16 %v7349
        %v8769 = vunpack.c.l.b16 %v7350
        %v8770 = vunpack.c.h.b16 %v7350
        %v8771 = vunpack.c.l.b16 %v7351
        %v8772 = vunpack.c.h.b16 %v7351
        %v8773 = vunpack.c.l.b16 %v7352
        %v8774 = vunpack.c.h.b16 %v7352
        %v8775 = vunpack.c.l.b16 %v7353
        %v8776 = vunpack.c.h.b16 %v7353
        %v8777 = vunpack.c.l.b16 %v7354
        %v8778 = vunpack.c.h.b16 %v7354
        %v8779 = vunpack.c.l.b16 %v7355
        %v8780 = vunpack.c.h.b16 %v7355
        %v8781 = vunpack.c.l.b16 %v7356
        %v8782 = vunpack.c.h.b16 %v7356
        %v8783 = vunpack.c.l.b16 %v7357
        %v8784 = vunpack.c.h.b16 %v7357
        %v8785 = vunpack.c.l.b16 %v7358
        %v8786 = vunpack.c.h.b16 %v7358
        %v8787 = vunpack.c.l.b16 %v7359
        %v8788 = vunpack.c.h.b16 %v7359
        %v8789 = vunpack.c.l.b16 %v7360
        %v8790 = vunpack.c.h.b16 %v7360
        %v8791 = vunpack.c.l.b16 %v7361
        %v8792 = vunpack.c.h.b16 %v7361
        %v8793 = vunpack.c.l.b16 %v7362
        %v8794 = vunpack.c.h.b16 %v7362
        %v8795 = vunpack.c.l.b16 %v7363
        %v8796 = vunpack.c.h.b16 %v7363
        %v8797 = vunpack.c.l.b16 %v7364
        %v8798 = vunpack.c.h.b16 %v7364
        %v8799 = vunpack.c.l.b16 %v7365
        %v8800 = vunpack.c.h.b16 %v7365
        %v8801 = vunpack.c.l.b16 %v7366
        %v8802 = vunpack.c.h.b16 %v7366
        %v8803 = vunpack.c.l.b16 %v7367
        %v8804 = vunpack.c.h.b16 %v7367
        %v8805 = vunpack.c.l.b16 %v7368
        %v8806 = vunpack.c.h.b16 %v7368
        %v8807 = vunpack.c.l.b16 %v7369
        %v8808 = vunpack.c.h.b16 %v7369
        %v8809 = vunpack.c.l.b16 %v7370
        %v8810 = vunpack.c.h.b16 %v7370
        %v8811 = vunpack.c.l.b16 %v7371
        %v8812 = vunpack.c.h.b16 %v7371
        %v8813 = vunpack.c.l.b16 %v7372
        %v8814 = vunpack.c.h.b16 %v7372
        %v8815 = vunpack.c.l.b16 %v7373
        %v8816 = vunpack.c.h.b16 %v7373
        %v8817 = vunpack.c.l.b16 %v7374
        %v8818 = vunpack.c.h.b16 %v7374
        %v8819 = vunpack.c.l.b16 %v7375
        %v8820 = vunpack.c.h.b16 %v7375
        %v8821 = vunpack.c.l.b16 %v7376
        %v8822 = vunpack.c.h.b16 %v7376
        %v8823 = vunpack.c.l.b16 %v7377
        %v8824 = vunpack.c.h.b16 %v7377
        %v8825 = vunpack.c.l.b16 %v7378
        %v8826 = vunpack.c.h.b16 %v7378
        %v8827 = vunpack.c.l.b16 %v7379
        %v8828 = vunpack.c.h.b16 %v7379
        %v8829 = vunpack.c.l.b16 %v7380
        %v8830 = vunpack.c.h.b16 %v7380
        %v8831 = vunpack.c.l.b16 %v7381
        %v8832 = vunpack.c.h.b16 %v7381
        %v8833 = vunpack.c.l.b16 %v7382
        %v8834 = vunpack.c.h.b16 %v7382
        %v8835 = vunpack.c.l.b16 %v7383
        %v8836 = vunpack.c.h.b16 %v7383
        %v8837 = vunpack.c.l.b16 %v7384
        %v8838 = vunpack.c.h.b16 %v7384
        %v8839 = vunpack.c.l.b16 %v7385
        %v8840 = vunpack.c.h.b16 %v7385
        %v8841 = vunpack.c.l.b16 %v7386
        %v8842 = vunpack.c.h.b16 %v7386
        %v8843 = vunpack.c.l.b16 %v7387
        %v8844 = vunpack.c.h.b16 %v7387
        %v8845 = vunpack.c.l.b16 %v7388
        %v8846 = vunpack.c.h.b16 %v7388
        %v8847 = vunpack.c.l.b16 %v7389
        %v8848 = vunpack.c.h.b16 %v7389
        %v8849 = vunpack.c.l.b16 %v7390
        %v8850 = vunpack.c.h.b16 %v7390
        %v8851 = vunpack.c.l.b16 %v7391
        %v8852 = vunpack.c.h.b16 %v7391
        %v8853 = vunpack.c.l.b16 %v7392
        %v8854 = vunpack.c.h.b16 %v7392
        %v8855 = vunpack.c.l.b16 %v7393
        %v8856 = vunpack.c.h.b16 %v7393
        %v8857 = vunpack.c.l.b16 %v7394
        %v8858 = vunpack.c.h.b16 %v7394
        %v8859 = vunpack.c.l.b16 %v7395
        %v8860 = vunpack.c.h.b16 %v7395
        %v8861 = vunpack.c.l.b16 %v7396
        %v8862 = vunpack.c.h.b16 %v7396
        %v8863 = vunpack.c.l.b16 %v7397
        %v8864 = vunpack.c.h.b16 %v7397
        %v8865 = vunpack.c.l.b16 %v7398
        %v8866 = vunpack.c.h.b16 %v7398
        %v8867 = vunpack.c.l.b16 %v7399
        %v8868 = vunpack.c.h.b16 %v7399
        %v8869 = vunpack.c.l.b16 %v7400
        %v8870 = vunpack.c.h.b16 %v7400
        %v8871 = vunpack.c.l.b16 %v7401
        %v8872 = vunpack.c.h.b16 %v7401
        %v8873 = vunpack.c.l.b16 %v7402
        %v8874 = vunpack.c.h.b16 %v7402
        %v8875 = vunpack.c.l.b16 %v7403
        %v8876 = vunpack.c.h.b16 %v7403
        %v8877 = vunpack.c.l.b16 %v7404
        %v8878 = vunpack.c.h.b16 %v7404
        %v8879 = vunpack.c.l.b16 %v7405
        %v8880 = vunpack.c.h.b16 %v7405
        %v8881 = vunpack.c.l.b16 %v7406
        %v8882 = vunpack.c.h.b16 %v7406
        %v8883 = vunpack.c.l.b16 %v7407
        %v8884 = vunpack.c.h.b16 %v7407
        %v8885 = vunpack.c.l.b16 %v7408
        %v8886 = vunpack.c.h.b16 %v7408
        %v8887 = vunpack.c.l.b16 %v7409
        %v8888 = vunpack.c.h.b16 %v7409
        %v8889 = vunpack.c.l.b16 %v7410
        %v8890 = vunpack.c.h.b16 %v7410
        %v8891 = vunpack.c.l.b16 %v7411
        %v8892 = vunpack.c.h.b16 %v7411
        %v8893 = vunpack.c.l.b16 %v7412
        %v8894 = vunpack.c.h.b16 %v7412
        %v8895 = vunpack.c.l.b16 %v7413
        %v8896 = vunpack.c.h.b16 %v7413
        %v8897 = vunpack.c.l.b16 %v7414
        %v8898 = vunpack.c.h.b16 %v7414
        %v8899 = vunpack.c.l.b16 %v7415
        %v8900 = vunpack.c.h.b16 %v7415
        %v8901 = vunpack.c.l.b16 %v7416
        %v8902 = vunpack.c.h.b16 %v7416
        %v8903 = vunpack.c.l.b16 %v7417
        %v8904 = vunpack.c.h.b16 %v7417
        %v8905 = vunpack.c.l.b16 %v7418
        %v8906 = vunpack.c.h.b16 %v7418
        %v8907 = vunpack.c.l.b16 %v7419
        %v8908 = vunpack.c.h.b16 %v7419
        %v8909 = vunpack.c.l.b16 %v7420
        %v8910 = vunpack.c.h.b16 %v7420
        %v8911 = vunpack.c.l.b16 %v7421
        %v8912 = vunpack.c.h.b16 %v7421
        %v8913 = vunpack.c.l.b16 %v7422
        %v8914 = vunpack.c.h.b16 %v7422
        %v8915 = vunpack.c.l.b16 %v7423
        %v8916 = vunpack.c.h.b16 %v7423
        %v8917 = vunpack.c.l.b16 %v7424
        %v8918 = vunpack.c.h.b16 %v7424
        %v8919 = vunpack.c.l.b16 %v7425
        %v8920 = vunpack.c.h.b16 %v7425
        %v8921 = vunpack.c.l.b16 %v7426
        %v8922 = vunpack.c.h.b16 %v7426
        %v8923 = vunpack.c.l.b16 %v7427
        %v8924 = vunpack.c.h.b16 %v7427
        %v8925 = vunpack.c.l.b16 %v7428
        %v8926 = vunpack.c.h.b16 %v7428
        %v8927 = vunpack.c.l.b16 %v7429
        %v8928 = vunpack.c.h.b16 %v7429
        %v8929 = vunpack.c.l.b16 %v7430
        %v8930 = vunpack.c.h.b16 %v7430
        %v8931 = vunpack.c.l.b16 %v7431
        %v8932 = vunpack.c.h.b16 %v7431
        %v8933 = vunpack.c.l.b16 %v7432
        %v8934 = vunpack.c.h.b16 %v7432
        %v8935 = vunpack.c.l.b16 %v7433
        %v8936 = vunpack.c.h.b16 %v7433
        %v8937 = vunpack.c.l.b16 %v7434
        %v8938 = vunpack.c.h.b16 %v7434
        %v8939 = vunpack.c.l.b16 %v7435
        %v8940 = vunpack.c.h.b16 %v7435
        %v8941 = vunpack.c.l.b16 %v7436
        %v8942 = vunpack.c.h.b16 %v7436
        %v8943 = vunpack.c.l.b16 %v7437
        %v8944 = vunpack.c.h.b16 %v7437
        %v8945 = vunpack.c.l.b16 %v7438
        %v8946 = vunpack.c.h.b16 %v7438
        %v8947 = vunpack.c.l.b16 %v7439
        %v8948 = vunpack.c.h.b16 %v7439
        %v8949 = vunpack.c.l.b16 %v7440
        %v8950 = vunpack.c.h.b16 %v7440
        %v8951 = vunpack.c.l.b16 %v7441
        %v8952 = vunpack.c.h.b16 %v7441
        %v8953 = vunpack.c.l.b16 %v7442
        %v8954 = vunpack.c.h.b16 %v7442
        %v8955 = vunpack.c.l.b16 %v7443
        %v8956 = vunpack.c.h.b16 %v7443
        %v8957 = vunpack.c.l.b16 %v7444
        %v8958 = vunpack.c.h.b16 %v7444
        %v8959 = vunpack.c.l.b16 %v7445
        %v8960 = vunpack.c.h.b16 %v7445
        %v8961 = vunpack.c.l.b16 %v7446
        %v8962 = vunpack.c.h.b16 %v7446
        %v8963 = vunpack.c.l.b16 %v7447
        %v8964 = vunpack.c.h.b16 %v7447
        %v8965 = vunpack.c.l.b16 %v7448
        %v8966 = vunpack.c.h.b16 %v7448
        %v8967 = vunpack.c.l.b16 %v7449
        %v8968 = vunpack.c.h.b16 %v7449
        %v8969 = vunpack.c.l.b16 %v7450
        %v8970 = vunpack.c.h.b16 %v7450
        %v8971 = vunpack.c.l.b16 %v7451
        %v8972 = vunpack.c.h.b16 %v7451
        %v8973 = vunpack.c.l.b16 %v7452
        %v8974 = vunpack.c.h.b16 %v7452
        %v8975 = vunpack.c.l.b16 %v7453
        %v8976 = vunpack.c.h.b16 %v7453
        %v8977 = vunpack.c.l.b16 %v7454
        %v8978 = vunpack.c.h.b16 %v7454
        %v8979 = vunpack.c.l.b16 %v7455
        %v8980 = vunpack.c.h.b16 %v7455
        %v8981 = vunpack.c.l.b16 %v7456
        %v8982 = vunpack.c.h.b16 %v7456
        %v8983 = vunpack.c.l.b16 %v7457
        %v8984 = vunpack.c.h.b16 %v7457
        %v8985 = vunpack.c.l.b16 %v7458
        %v8986 = vunpack.c.h.b16 %v7458
        %v8987 = vunpack.c.l.b16 %v7459
        %v8988 = vunpack.c.h.b16 %v7459
        %v8989 = vunpack.c.l.b16 %v7460
        %v8990 = vunpack.c.h.b16 %v7460
        %v8991 = vunpack.c.l.b16 %v7461
        %v8992 = vunpack.c.h.b16 %v7461
        %v8993 = vunpack.c.l.b16 %v7462
        %v8994 = vunpack.c.h.b16 %v7462
        %v8995 = vunpack.c.l.b16 %v7463
        %v8996 = vunpack.c.h.b16 %v7463
        %v8997 = vunpack.c.l.b16 %v7464
        %v8998 = vunpack.c.h.b16 %v7464
        %v8999 = vunpack.c.l.b16 %v7465
        %v9000 = vunpack.c.h.b16 %v7465
        %v9001 = vunpack.c.l.b16 %v7466
        %v9002 = vunpack.c.h.b16 %v7466
        %v9003 = vunpack.c.l.b16 %v7467
        %v9004 = vunpack.c.h.b16 %v7467
        %v9005 = vunpack.c.l.b16 %v7468
        %v9006 = vunpack.c.h.b16 %v7468
        %v9007 = vunpack.c.l.b16 %v7469
        %v9008 = vunpack.c.h.b16 %v7469
        %v9009 = vunpack.c.l.b16 %v7470
        %v9010 = vunpack.c.h.b16 %v7470
        %v9011 = vunpack.c.l.b16 %v7471
        %v9012 = vunpack.c.h.b16 %v7471
        %v9013 = vunpack.c.l.b16 %v7472
        %v9014 = vunpack.c.h.b16 %v7472
        %v9015 = vunpack.c.l.b16 %v7473
        %v9016 = vunpack.c.h.b16 %v7473
        %v9017 = vunpack.c.l.b16 %v7474
        %v9018 = vunpack.c.h.b16 %v7474
        %v9019 = vunpack.c.l.b16 %v7475
        %v9020 = vunpack.c.h.b16 %v7475
        %v9021 = vunpack.c.l.b16 %v7476
        %v9022 = vunpack.c.h.b16 %v7476
        %v9023 = vunpack.c.l.b16 %v7477
        %v9024 = vunpack.c.h.b16 %v7477
        %v9025 = vunpack.c.l.b16 %v7478
        %v9026 = vunpack.c.h.b16 %v7478
        %v9027 = vunpack.c.l.b16 %v7479
        %v9028 = vunpack.c.h.b16 %v7479
        %v9029 = vunpack.c.l.b16 %v7480
        %v9030 = vunpack.c.h.b16 %v7480
        %v9031 = vunpack.c.l.b16 %v7481
        %v9032 = vunpack.c.h.b16 %v7481
        %v9033 = vunpack.c.l.b16 %v7482
        %v9034 = vunpack.c.h.b16 %v7482
        %v9035 = vunpack.c.l.b16 %v7483
        %v9036 = vunpack.c.h.b16 %v7483
        %v9037 = vunpack.c.l.b16 %v7484
        %v9038 = vunpack.c.h.b16 %v7484
        %v9039 = vunpack.c.l.b16 %v7485
        %v9040 = vunpack.c.h.b16 %v7485
        %v9041 = vunpack.c.l.b16 %v7486
        %v9042 = vunpack.c.h.b16 %v7486
        %v9043 = vunpack.c.l.b16 %v7487
        %v9044 = vunpack.c.h.b16 %v7487
        %v9045 = vunpack.c.l.b16 %v7488
        %v9046 = vunpack.c.h.b16 %v7488
        %v9047 = vunpack.c.l.b16 %v7489
        %v9048 = vunpack.c.h.b16 %v7489
        %v9049 = vunpack.c.l.b16 %v7490
        %v9050 = vunpack.c.h.b16 %v7490
        %v9051 = vunpack.c.l.b16 %v7491
        %v9052 = vunpack.c.h.b16 %v7491
        %v9053 = vunpack.c.l.b16 %v7492
        %v9054 = vunpack.c.h.b16 %v7492
        %v9055 = vunpack.c.l.b16 %v7493
        %v9056 = vunpack.c.h.b16 %v7493
        %v9057 = vunpack.c.l.b16 %v7494
        %v9058 = vunpack.c.h.b16 %v7494
        %v9059 = vunpack.c.l.b16 %v7495
        %v9060 = vunpack.c.h.b16 %v7495
        %v9061 = vunpack.c.l.b16 %v7496
        %v9062 = vunpack.c.h.b16 %v7496
        %v9063 = vunpack.c.l.b16 %v7497
        %v9064 = vunpack.c.h.b16 %v7497
        %v9065 = vunpack.c.l.b16 %v7498
        %v9066 = vunpack.c.h.b16 %v7498
        %v9067 = vunpack.c.l.b16 %v7499
        %v9068 = vunpack.c.h.b16 %v7499
        %v9069 = vunpack.c.l.b16 %v7500
        %v9070 = vunpack.c.h.b16 %v7500
        %v9071 = vunpack.c.l.b16 %v7501
        %v9072 = vunpack.c.h.b16 %v7501
        %v9073 = vunpack.c.l.b16 %v7502
        %v9074 = vunpack.c.h.b16 %v7502
        %v9075 = vunpack.c.l.b16 %v7503
        %v9076 = vunpack.c.h.b16 %v7503
        %v9077 = vunpack.c.l.b16 %v7504
        %v9078 = vunpack.c.h.b16 %v7504
        %v9079 = vunpack.c.l.b16 %v7505
        %v9080 = vunpack.c.h.b16 %v7505
        %v9081 = vunpack.c.l.b16 %v7506
        %v9082 = vunpack.c.h.b16 %v7506
        %v9083 = vunpack.c.l.b16 %v7507
        %v9084 = vunpack.c.h.b16 %v7507
        %v9085 = vunpack.c.l.b16 %v7508
        %v9086 = vunpack.c.h.b16 %v7508
        %v9087 = vpack.c.b16 %v8071, %v8063
        %v9088 = vpack.c.b16 %v8072, %v8064
        %v9089 = vpack.c.b16 %v8073, %v8065
        %v9090 = vpack.c.b16 %v8074, %v8066
        %v9091 = vpack.c.b16 %v8075, %v8067
        %v9092 = vpack.c.b16 %v8076, %v8068
        %v9093 = vpack.c.b16 %v8077, %v8069
        %v9094 = vpack.c.b16 %v8078, %v8070
        %v9095 = vpack.c.b16 %v8087, %v8079
        %v9096 = vpack.c.b16 %v8088, %v8080
        %v9097 = vpack.c.b16 %v8089, %v8081
        %v9098 = vpack.c.b16 %v8090, %v8082
        %v9099 = vpack.c.b16 %v8091, %v8083
        %v9100 = vpack.c.b16 %v8092, %v8084
        %v9101 = vpack.c.b16 %v8093, %v8085
        %v9102 = vpack.c.b16 %v8094, %v8086
        %v9103 = vpack.c.b16 %v8103, %v8095
        %v9104 = vpack.c.b16 %v8104, %v8096
        %v9105 = vpack.c.b16 %v8105, %v8097
        %v9106 = vpack.c.b16 %v8106, %v8098
        %v9107 = vpack.c.b16 %v8107, %v8099
        %v9108 = vpack.c.b16 %v8108, %v8100
        %v9109 = vpack.c.b16 %v8109, %v8101
        %v9110 = vpack.c.b16 %v8110, %v8102
        %v9111 = vpack.c.b16 %v8119, %v8111
        %v9112 = vpack.c.b16 %v8120, %v8112
        %v9113 = vpack.c.b16 %v8121, %v8113
        %v9114 = vpack.c.b16 %v8122, %v8114
        %v9115 = vpack.c.b16 %v8123, %v8115
        %v9116 = vpack.c.b16 %v8124, %v8116
        %v9117 = vpack.c.b16 %v8125, %v8117
        %v9118 = vpack.c.b16 %v8126, %v8118
        %v9119 = vpack.c.b16 %v8135, %v8127
        %v9120 = vpack.c.b16 %v8136, %v8128
        %v9121 = vpack.c.b16 %v8137, %v8129
        %v9122 = vpack.c.b16 %v8138, %v8130
        %v9123 = vpack.c.b16 %v8139, %v8131
        %v9124 = vpack.c.b16 %v8140, %v8132
        %v9125 = vpack.c.b16 %v8141, %v8133
        %v9126 = vpack.c.b16 %v8142, %v8134
        %v9127 = vpack.c.b16 %v8151, %v8143
        %v9128 = vpack.c.b16 %v8152, %v8144
        %v9129 = vpack.c.b16 %v8153, %v8145
        %v9130 = vpack.c.b16 %v8154, %v8146
        %v9131 = vpack.c.b16 %v8155, %v8147
        %v9132 = vpack.c.b16 %v8156, %v8148
        %v9133 = vpack.c.b16 %v8157, %v8149
        %v9134 = vpack.c.b16 %v8158, %v8150
        %v9135 = vpack.c.b16 %v8167, %v8159
        %v9136 = vpack.c.b16 %v8168, %v8160
        %v9137 = vpack.c.b16 %v8169, %v8161
        %v9138 = vpack.c.b16 %v8170, %v8162
        %v9139 = vpack.c.b16 %v8171, %v8163
        %v9140 = vpack.c.b16 %v8172, %v8164
        %v9141 = vpack.c.b16 %v8173, %v8165
        %v9142 = vpack.c.b16 %v8174, %v8166
        %v9143 = vpack.c.b16 %v8183, %v8175
        %v9144 = vpack.c.b16 %v8184, %v8176
        %v9145 = vpack.c.b16 %v8185, %v8177
        %v9146 = vpack.c.b16 %v8186, %v8178
        %v9147 = vpack.c.b16 %v8187, %v8179
        %v9148 = vpack.c.b16 %v8188, %v8180
        %v9149 = vpack.c.b16 %v8189, %v8181
        %v9150 = vpack.c.b16 %v8190, %v8182
        %v9151 = vpack.c.b16 %v8199, %v8191
        %v9152 = vpack.c.b16 %v8200, %v8192
        %v9153 = vpack.c.b16 %v8201, %v8193
        %v9154 = vpack.c.b16 %v8202, %v8194
        %v9155 = vpack.c.b16 %v8203, %v8195
        %v9156 = vpack.c.b16 %v8204, %v8196
        %v9157 = vpack.c.b16 %v8205, %v8197
        %v9158 = vpack.c.b16 %v8206, %v8198
        %v9159 = vpack.c.b16 %v8215, %v8207
        %v9160 = vpack.c.b16 %v8216, %v8208
        %v9161 = vpack.c.b16 %v8217, %v8209
        %v9162 = vpack.c.b16 %v8218, %v8210
        %v9163 = vpack.c.b16 %v8219, %v8211
        %v9164 = vpack.c.b16 %v8220, %v8212
        %v9165 = vpack.c.b16 %v8221, %v8213
        %v9166 = vpack.c.b16 %v8222, %v8214
        %v9167 = vpack.c.b16 %v8231, %v8223
        %v9168 = vpack.c.b16 %v8232, %v8224
        %v9169 = vpack.c.b16 %v8233, %v8225
        %v9170 = vpack.c.b16 %v8234, %v8226
        %v9171 = vpack.c.b16 %v8235, %v8227
        %v9172 = vpack.c.b16 %v8236, %v8228
        %v9173 = vpack.c.b16 %v8237, %v8229
        %v9174 = vpack.c.b16 %v8238, %v8230
        %v9175 = vpack.c.b16 %v8247, %v8239
        %v9176 = vpack.c.b16 %v8248, %v8240
        %v9177 = vpack.c.b16 %v8249, %v8241
        %v9178 = vpack.c.b16 %v8250, %v8242
        %v9179 = vpack.c.b16 %v8251, %v8243
        %v9180 = vpack.c.b16 %v8252, %v8244
        %v9181 = vpack.c.b16 %v8253, %v8245
        %v9182 = vpack.c.b16 %v8254, %v8246
        %v9183 = vpack.c.b16 %v8263, %v8255
        %v9184 = vpack.c.b16 %v8264, %v8256
        %v9185 = vpack.c.b16 %v8265, %v8257
        %v9186 = vpack.c.b16 %v8266, %v8258
        %v9187 = vpack.c.b16 %v8267, %v8259
        %v9188 = vpack.c.b16 %v8268, %v8260
        %v9189 = vpack.c.b16 %v8269, %v8261
        %v9190 = vpack.c.b16 %v8270, %v8262
        %v9191 = vpack.c.b16 %v8279, %v8271
        %v9192 = vpack.c.b16 %v8280, %v8272
        %v9193 = vpack.c.b16 %v8281, %v8273
        %v9194 = vpack.c.b16 %v8282, %v8274
        %v9195 = vpack.c.b16 %v8283, %v8275
        %v9196 = vpack.c.b16 %v8284, %v8276
        %v9197 = vpack.c.b16 %v8285, %v8277
        %v9198 = vpack.c.b16 %v8286, %v8278
        %v9199 = vpack.c.b16 %v8295, %v8287
        %v9200 = vpack.c.b16 %v8296, %v8288
        %v9201 = vpack.c.b16 %v8297, %v8289
        %v9202 = vpack.c.b16 %v8298, %v8290
        %v9203 = vpack.c.b16 %v8299, %v8291
        %v9204 = vpack.c.b16 %v8300, %v8292
        %v9205 = vpack.c.b16 %v8301, %v8293
        %v9206 = vpack.c.b16 %v8302, %v8294
        %v9207 = vpack.c.b16 %v8311, %v8303
        %v9208 = vpack.c.b16 %v8312, %v8304
        %v9209 = vpack.c.b16 %v8313, %v8305
        %v9210 = vpack.c.b16 %v8314, %v8306
        %v9211 = vpack.c.b16 %v8315, %v8307
        %v9212 = vpack.c.b16 %v8316, %v8308
        %v9213 = vpack.c.b16 %v8317, %v8309
        %v9214 = vpack.c.b16 %v8318, %v8310
        %v9215 = vpack.c.b16 %v8327, %v8319
        %v9216 = vpack.c.b16 %v8328, %v8320
        %v9217 = vpack.c.b16 %v8329, %v8321
        %v9218 = vpack.c.b16 %v8330, %v8322
        %v9219 = vpack.c.b16 %v8331, %v8323
        %v9220 = vpack.c.b16 %v8332, %v8324
        %v9221 = vpack.c.b16 %v8333, %v8325
        %v9222 = vpack.c.b16 %v8334, %v8326
        %v9223 = vpack.c.b16 %v8343, %v8335
        %v9224 = vpack.c.b16 %v8344, %v8336
        %v9225 = vpack.c.b16 %v8345, %v8337
        %v9226 = vpack.c.b16 %v8346, %v8338
        %v9227 = vpack.c.b16 %v8347, %v8339
        %v9228 = vpack.c.b16 %v8348, %v8340
        %v9229 = vpack.c.b16 %v8349, %v8341
        %v9230 = vpack.c.b16 %v8350, %v8342
        %v9231 = vpack.c.b16 %v8359, %v8351
        %v9232 = vpack.c.b16 %v8360, %v8352
        %v9233 = vpack.c.b16 %v8361, %v8353
        %v9234 = vpack.c.b16 %v8362, %v8354
        %v9235 = vpack.c.b16 %v8363, %v8355
        %v9236 = vpack.c.b16 %v8364, %v8356
        %v9237 = vpack.c.b16 %v8365, %v8357
        %v9238 = vpack.c.b16 %v8366, %v8358
        %v9239 = vpack.c.b16 %v8375, %v8367
        %v9240 = vpack.c.b16 %v8376, %v8368
        %v9241 = vpack.c.b16 %v8377, %v8369
        %v9242 = vpack.c.b16 %v8378, %v8370
        %v9243 = vpack.c.b16 %v8379, %v8371
        %v9244 = vpack.c.b16 %v8380, %v8372
        %v9245 = vpack.c.b16 %v8381, %v8373
        %v9246 = vpack.c.b16 %v8382, %v8374
        %v9247 = vpack.c.b16 %v8391, %v8383
        %v9248 = vpack.c.b16 %v8392, %v8384
        %v9249 = vpack.c.b16 %v8393, %v8385
        %v9250 = vpack.c.b16 %v8394, %v8386
        %v9251 = vpack.c.b16 %v8395, %v8387
        %v9252 = vpack.c.b16 %v8396, %v8388
        %v9253 = vpack.c.b16 %v8397, %v8389
        %v9254 = vpack.c.b16 %v8398, %v8390
        %v9255 = vpack.c.b16 %v8407, %v8399
        %v9256 = vpack.c.b16 %v8408, %v8400
        %v9257 = vpack.c.b16 %v8409, %v8401
        %v9258 = vpack.c.b16 %v8410, %v8402
        %v9259 = vpack.c.b16 %v8411, %v8403
        %v9260 = vpack.c.b16 %v8412, %v8404
        %v9261 = vpack.c.b16 %v8413, %v8405
        %v9262 = vpack.c.b16 %v8414, %v8406
        %v9263 = vpack.c.b16 %v8423, %v8415
        %v9264 = vpack.c.b16 %v8424, %v8416
        %v9265 = vpack.c.b16 %v8425, %v8417
        %v9266 = vpack.c.b16 %v8426, %v8418
        %v9267 = vpack.c.b16 %v8427, %v8419
        %v9268 = vpack.c.b16 %v8428, %v8420
        %v9269 = vpack.c.b16 %v8429, %v8421
        %v9270 = vpack.c.b16 %v8430, %v8422
        %v9271 = vpack.c.b16 %v8439, %v8431
        %v9272 = vpack.c.b16 %v8440, %v8432
        %v9273 = vpack.c.b16 %v8441, %v8433
        %v9274 = vpack.c.b16 %v8442, %v8434
        %v9275 = vpack.c.b16 %v8443, %v8435
        %v9276 = vpack.c.b16 %v8444, %v8436
        %v9277 = vpack.c.b16 %v8445, %v8437
        %v9278 = vpack.c.b16 %v8446, %v8438
        %v9279 = vpack.c.b16 %v8455, %v8447
        %v9280 = vpack.c.b16 %v8456, %v8448
        %v9281 = vpack.c.b16 %v8457, %v8449
        %v9282 = vpack.c.b16 %v8458, %v8450
        %v9283 = vpack.c.b16 %v8459, %v8451
        %v9284 = vpack.c.b16 %v8460, %v8452
        %v9285 = vpack.c.b16 %v8461, %v8453
        %v9286 = vpack.c.b16 %v8462, %v8454
        %v9287 = vpack.c.b16 %v8471, %v8463
        %v9288 = vpack.c.b16 %v8472, %v8464
        %v9289 = vpack.c.b16 %v8473, %v8465
        %v9290 = vpack.c.b16 %v8474, %v8466
        %v9291 = vpack.c.b16 %v8475, %v8467
        %v9292 = vpack.c.b16 %v8476, %v8468
        %v9293 = vpack.c.b16 %v8477, %v8469
        %v9294 = vpack.c.b16 %v8478, %v8470
        %v9295 = vpack.c.b16 %v8487, %v8479
        %v9296 = vpack.c.b16 %v8488, %v8480
        %v9297 = vpack.c.b16 %v8489, %v8481
        %v9298 = vpack.c.b16 %v8490, %v8482
        %v9299 = vpack.c.b16 %v8491, %v8483
        %v9300 = vpack.c.b16 %v8492, %v8484
        %v9301 = vpack.c.b16 %v8493, %v8485
        %v9302 = vpack.c.b16 %v8494, %v8486
        %v9303 = vpack.c.b16 %v8503, %v8495
        %v9304 = vpack.c.b16 %v8504, %v8496
        %v9305 = vpack.c.b16 %v8505, %v8497
        %v9306 = vpack.c.b16 %v8506, %v8498
        %v9307 = vpack.c.b16 %v8507, %v8499
        %v9308 = vpack.c.b16 %v8508, %v8500
        %v9309 = vpack.c.b16 %v8509, %v8501
        %v9310 = vpack.c.b16 %v8510, %v8502
        %v9311 = vpack.c.b16 %v8519, %v8511
        %v9312 = vpack.c.b16 %v8520, %v8512
        %v9313 = vpack.c.b16 %v8521, %v8513
        %v9314 = vpack.c.b16 %v8522, %v8514
        %v9315 = vpack.c.b16 %v8523, %v8515
        %v9316 = vpack.c.b16 %v8524, %v8516
        %v9317 = vpack.c.b16 %v8525, %v8517
        %v9318 = vpack.c.b16 %v8526, %v8518
        %v9319 = vpack.c.b16 %v8535, %v8527
        %v9320 = vpack.c.b16 %v8536, %v8528
        %v9321 = vpack.c.b16 %v8537, %v8529
        %v9322 = vpack.c.b16 %v8538, %v8530
        %v9323 = vpack.c.b16 %v8539, %v8531
        %v9324 = vpack.c.b16 %v8540, %v8532
        %v9325 = vpack.c.b16 %v8541, %v8533
        %v9326 = vpack.c.b16 %v8542, %v8534
        %v9327 = vpack.c.b16 %v8551, %v8543
        %v9328 = vpack.c.b16 %v8552, %v8544
        %v9329 = vpack.c.b16 %v8553, %v8545
        %v9330 = vpack.c.b16 %v8554, %v8546
        %v9331 = vpack.c.b16 %v8555, %v8547
        %v9332 = vpack.c.b16 %v8556, %v8548
        %v9333 = vpack.c.b16 %v8557, %v8549
        %v9334 = vpack.c.b16 %v8558, %v8550
        %v9335 = vpack.c.b16 %v8567, %v8559
        %v9336 = vpack.c.b16 %v8568, %v8560
        %v9337 = vpack.c.b16 %v8569, %v8561
        %v9338 = vpack.c.b16 %v8570, %v8562
        %v9339 = vpack.c.b16 %v8571, %v8563
        %v9340 = vpack.c.b16 %v8572, %v8564
        %v9341 = vpack.c.b16 %v8573, %v8565
        %v9342 = vpack.c.b16 %v8574, %v8566
        %v9343 = vpack.c.b16 %v8583, %v8575
        %v9344 = vpack.c.b16 %v8584, %v8576
        %v9345 = vpack.c.b16 %v8585, %v8577
        %v9346 = vpack.c.b16 %v8586, %v8578
        %v9347 = vpack.c.b16 %v8587, %v8579
        %v9348 = vpack.c.b16 %v8588, %v8580
        %v9349 = vpack.c.b16 %v8589, %v8581
        %v9350 = vpack.c.b16 %v8590, %v8582
        %v9351 = vpack.c.b16 %v8599, %v8591
        %v9352 = vpack.c.b16 %v8600, %v8592
        %v9353 = vpack.c.b16 %v8601, %v8593
        %v9354 = vpack.c.b16 %v8602, %v8594
        %v9355 = vpack.c.b16 %v8603, %v8595
        %v9356 = vpack.c.b16 %v8604, %v8596
        %v9357 = vpack.c.b16 %v8605, %v8597
        %v9358 = vpack.c.b16 %v8606, %v8598
        %v9359 = vpack.c.b16 %v8615, %v8607
        %v9360 = vpack.c.b16 %v8616, %v8608
        %v9361 = vpack.c.b16 %v8617, %v8609
        %v9362 = vpack.c.b16 %v8618, %v8610
        %v9363 = vpack.c.b16 %v8619, %v8611
        %v9364 = vpack.c.b16 %v8620, %v8612
        %v9365 = vpack.c.b16 %v8621, %v8613
        %v9366 = vpack.c.b16 %v8622, %v8614
        %v9367 = vpack.c.b16 %v8631, %v8623
        %v9368 = vpack.c.b16 %v8632, %v8624
        %v9369 = vpack.c.b16 %v8633, %v8625
        %v9370 = vpack.c.b16 %v8634, %v8626
        %v9371 = vpack.c.b16 %v8635, %v8627
        %v9372 = vpack.c.b16 %v8636, %v8628
        %v9373 = vpack.c.b16 %v8637, %v8629
        %v9374 = vpack.c.b16 %v8638, %v8630
        %v9375 = vpack.c.b16 %v8647, %v8639
        %v9376 = vpack.c.b16 %v8648, %v8640
        %v9377 = vpack.c.b16 %v8649, %v8641
        %v9378 = vpack.c.b16 %v8650, %v8642
        %v9379 = vpack.c.b16 %v8651, %v8643
        %v9380 = vpack.c.b16 %v8652, %v8644
        %v9381 = vpack.c.b16 %v8653, %v8645
        %v9382 = vpack.c.b16 %v8654, %v8646
        %v9383 = vpack.c.b16 %v8663, %v8655
        %v9384 = vpack.c.b16 %v8664, %v8656
        %v9385 = vpack.c.b16 %v8665, %v8657
        %v9386 = vpack.c.b16 %v8666, %v8658
        %v9387 = vpack.c.b16 %v8667, %v8659
        %v9388 = vpack.c.b16 %v8668, %v8660
        %v9389 = vpack.c.b16 %v8669, %v8661
        %v9390 = vpack.c.b16 %v8670, %v8662
        %v9391 = vpack.c.b16 %v8679, %v8671
        %v9392 = vpack.c.b16 %v8680, %v8672
        %v9393 = vpack.c.b16 %v8681, %v8673
        %v9394 = vpack.c.b16 %v8682, %v8674
        %v9395 = vpack.c.b16 %v8683, %v8675
        %v9396 = vpack.c.b16 %v8684, %v8676
        %v9397 = vpack.c.b16 %v8685, %v8677
        %v9398 = vpack.c.b16 %v8686, %v8678
        %v9399 = vpack.c.b16 %v8695, %v8687
        %v9400 = vpack.c.b16 %v8696, %v8688
        %v9401 = vpack.c.b16 %v8697, %v8689
        %v9402 = vpack.c.b16 %v8698, %v8690
        %v9403 = vpack.c.b16 %v8699, %v8691
        %v9404 = vpack.c.b16 %v8700, %v8692
        %v9405 = vpack.c.b16 %v8701, %v8693
        %v9406 = vpack.c.b16 %v8702, %v8694
        %v9407 = vpack.c.b16 %v8711, %v8703
        %v9408 = vpack.c.b16 %v8712, %v8704
        %v9409 = vpack.c.b16 %v8713, %v8705
        %v9410 = vpack.c.b16 %v8714, %v8706
        %v9411 = vpack.c.b16 %v8715, %v8707
        %v9412 = vpack.c.b16 %v8716, %v8708
        %v9413 = vpack.c.b16 %v8717, %v8709
        %v9414 = vpack.c.b16 %v8718, %v8710
        %v9415 = vpack.c.b16 %v8727, %v8719
        %v9416 = vpack.c.b16 %v8728, %v8720
        %v9417 = vpack.c.b16 %v8729, %v8721
        %v9418 = vpack.c.b16 %v8730, %v8722
        %v9419 = vpack.c.b16 %v8731, %v8723
        %v9420 = vpack.c.b16 %v8732, %v8724
        %v9421 = vpack.c.b16 %v8733, %v8725
        %v9422 = vpack.c.b16 %v8734, %v8726
        %v9423 = vpack.c.b16 %v8743, %v8735
        %v9424 = vpack.c.b16 %v8744, %v8736
        %v9425 = vpack.c.b16 %v8745, %v8737
        %v9426 = vpack.c.b16 %v8746, %v8738
        %v9427 = vpack.c.b16 %v8747, %v8739
        %v9428 = vpack.c.b16 %v8748, %v8740
        %v9429 = vpack.c.b16 %v8749, %v8741
        %v9430 = vpack.c.b16 %v8750, %v8742
        %v9431 = vpack.c.b16 %v8759, %v8751
        %v9432 = vpack.c.b16 %v8760, %v8752
        %v9433 = vpack.c.b16 %v8761, %v8753
        %v9434 = vpack.c.b16 %v8762, %v8754
        %v9435 = vpack.c.b16 %v8763, %v8755
        %v9436 = vpack.c.b16 %v8764, %v8756
        %v9437 = vpack.c.b16 %v8765, %v8757
        %v9438 = vpack.c.b16 %v8766, %v8758
        %v9439 = vpack.c.b16 %v8775, %v8767
        %v9440 = vpack.c.b16 %v8776, %v8768
        %v9441 = vpack.c.b16 %v8777, %v8769
        %v9442 = vpack.c.b16 %v8778, %v8770
        %v9443 = vpack.c.b16 %v8779, %v8771
        %v9444 = vpack.c.b16 %v8780, %v8772
        %v9445 = vpack.c.b16 %v8781, %v8773
        %v9446 = vpack.c.b16 %v8782, %v8774
        %v9447 = vpack.c.b16 %v8791, %v8783
        %v9448 = vpack.c.b16 %v8792, %v8784
        %v9449 = vpack.c.b16 %v8793, %v8785
        %v9450 = vpack.c.b16 %v8794, %v8786
        %v9451 = vpack.c.b16 %v8795, %v8787
        %v9452 = vpack.c.b16 %v8796, %v8788
        %v9453 = vpack.c.b16 %v8797, %v8789
        %v9454 = vpack.c.b16 %v8798, %v8790
        %v9455 = vpack.c.b16 %v8807, %v8799
        %v9456 = vpack.c.b16 %v8808, %v8800
        %v9457 = vpack.c.b16 %v8809, %v8801
        %v9458 = vpack.c.b16 %v8810, %v8802
        %v9459 = vpack.c.b16 %v8811, %v8803
        %v9460 = vpack.c.b16 %v8812, %v8804
        %v9461 = vpack.c.b16 %v8813, %v8805
        %v9462 = vpack.c.b16 %v8814, %v8806
        %v9463 = vpack.c.b16 %v8823, %v8815
        %v9464 = vpack.c.b16 %v8824, %v8816
        %v9465 = vpack.c.b16 %v8825, %v8817
        %v9466 = vpack.c.b16 %v8826, %v8818
        %v9467 = vpack.c.b16 %v8827, %v8819
        %v9468 = vpack.c.b16 %v8828, %v8820
        %v9469 = vpack.c.b16 %v8829, %v8821
        %v9470 = vpack.c.b16 %v8830, %v8822
        %v9471 = vpack.c.b16 %v8839, %v8831
        %v9472 = vpack.c.b16 %v8840, %v8832
        %v9473 = vpack.c.b16 %v8841, %v8833
        %v9474 = vpack.c.b16 %v8842, %v8834
        %v9475 = vpack.c.b16 %v8843, %v8835
        %v9476 = vpack.c.b16 %v8844, %v8836
        %v9477 = vpack.c.b16 %v8845, %v8837
        %v9478 = vpack.c.b16 %v8846, %v8838
        %v9479 = vpack.c.b16 %v8855, %v8847
        %v9480 = vpack.c.b16 %v8856, %v8848
        %v9481 = vpack.c.b16 %v8857, %v8849
        %v9482 = vpack.c.b16 %v8858, %v8850
        %v9483 = vpack.c.b16 %v8859, %v8851
        %v9484 = vpack.c.b16 %v8860, %v8852
        %v9485 = vpack.c.b16 %v8861, %v8853
        %v9486 = vpack.c.b16 %v8862, %v8854
        %v9487 = vpack.c.b16 %v8871, %v8863
        %v9488 = vpack.c.b16 %v8872, %v8864
        %v9489 = vpack.c.b16 %v8873, %v8865
        %v9490 = vpack.c.b16 %v8874, %v8866
        %v9491 = vpack.c.b16 %v8875, %v8867
        %v9492 = vpack.c.b16 %v8876, %v8868
        %v9493 = vpack.c.b16 %v8877, %v8869
        %v9494 = vpack.c.b16 %v8878, %v8870
        %v9495 = vpack.c.b16 %v8887, %v8879
        %v9496 = vpack.c.b16 %v8888, %v8880
        %v9497 = vpack.c.b16 %v8889, %v8881
        %v9498 = vpack.c.b16 %v8890, %v8882
        %v9499 = vpack.c.b16 %v8891, %v8883
        %v9500 = vpack.c.b16 %v8892, %v8884
        %v9501 = vpack.c.b16 %v8893, %v8885
        %v9502 = vpack.c.b16 %v8894, %v8886
        %v9503 = vpack.c.b16 %v8903, %v8895
        %v9504 = vpack.c.b16 %v8904, %v8896
        %v9505 = vpack.c.b16 %v8905, %v8897
        %v9506 = vpack.c.b16 %v8906, %v8898
        %v9507 = vpack.c.b16 %v8907, %v8899
        %v9508 = vpack.c.b16 %v8908, %v8900
        %v9509 = vpack.c.b16 %v8909, %v8901
        %v9510 = vpack.c.b16 %v8910, %v8902
        %v9511 = vpack.c.b16 %v8919, %v8911
        %v9512 = vpack.c.b16 %v8920, %v8912
        %v9513 = vpack.c.b16 %v8921, %v8913
        %v9514 = vpack.c.b16 %v8922, %v8914
        %v9515 = vpack.c.b16 %v8923, %v8915
        %v9516 = vpack.c.b16 %v8924, %v8916
        %v9517 = vpack.c.b16 %v8925, %v8917
        %v9518 = vpack.c.b16 %v8926, %v8918
        %v9519 = vpack.c.b16 %v8935, %v8927
        %v9520 = vpack.c.b16 %v8936, %v8928
        %v9521 = vpack.c.b16 %v8937, %v8929
        %v9522 = vpack.c.b16 %v8938, %v8930
        %v9523 = vpack.c.b16 %v8939, %v8931
        %v9524 = vpack.c.b16 %v8940, %v8932
        %v9525 = vpack.c.b16 %v8941, %v8933
        %v9526 = vpack.c.b16 %v8942, %v8934
        %v9527 = vpack.c.b16 %v8951, %v8943
        %v9528 = vpack.c.b16 %v8952, %v8944
        %v9529 = vpack.c.b16 %v8953, %v8945
        %v9530 = vpack.c.b16 %v8954, %v8946
        %v9531 = vpack.c.b16 %v8955, %v8947
        %v9532 = vpack.c.b16 %v8956, %v8948
        %v9533 = vpack.c.b16 %v8957, %v8949
        %v9534 = vpack.c.b16 %v8958, %v8950
        %v9535 = vpack.c.b16 %v8967, %v8959
        %v9536 = vpack.c.b16 %v8968, %v8960
        %v9537 = vpack.c.b16 %v8969, %v8961
        %v9538 = vpack.c.b16 %v8970, %v8962
        %v9539 = vpack.c.b16 %v8971, %v8963
        %v9540 = vpack.c.b16 %v8972, %v8964
        %v9541 = vpack.c.b16 %v8973, %v8965
        %v9542 = vpack.c.b16 %v8974, %v8966
        %v9543 = vpack.c.b16 %v8983, %v8975
        %v9544 = vpack.c.b16 %v8984, %v8976
        %v9545 = vpack.c.b16 %v8985, %v8977
        %v9546 = vpack.c.b16 %v8986, %v8978
        %v9547 = vpack.c.b16 %v8987, %v8979
        %v9548 = vpack.c.b16 %v8988, %v8980
        %v9549 = vpack.c.b16 %v8989, %v8981
        %v9550 = vpack.c.b16 %v8990, %v8982
        %v9551 = vpack.c.b16 %v8999, %v8991
        %v9552 = vpack.c.b16 %v9000, %v8992
        %v9553 = vpack.c.b16 %v9001, %v8993
        %v9554 = vpack.c.b16 %v9002, %v8994
        %v9555 = vpack.c.b16 %v9003, %v8995
        %v9556 = vpack.c.b16 %v9004, %v8996
        %v9557 = vpack.c.b16 %v9005, %v8997
        %v9558 = vpack.c.b16 %v9006, %v8998
        %v9559 = vpack.c.b16 %v9015, %v9007
        %v9560 = vpack.c.b16 %v9016, %v9008
        %v9561 = vpack.c.b16 %v9017, %v9009
        %v9562 = vpack.c.b16 %v9018, %v9010
        %v9563 = vpack.c.b16 %v9019, %v9011
        %v9564 = vpack.c.b16 %v9020, %v9012
        %v9565 = vpack.c.b16 %v9021, %v9013
        %v9566 = vpack.c.b16 %v9022, %v9014
        %v9567 = vpack.c.b16 %v9031, %v9023
        %v9568 = vpack.c.b16 %v9032, %v9024
        %v9569 = vpack.c.b16 %v9033, %v9025
        %v9570 = vpack.c.b16 %v9034, %v9026
        %v9571 = vpack.c.b16 %v9035, %v9027
        %v9572 = vpack.c.b16 %v9036, %v9028
        %v9573 = vpack.c.b16 %v9037, %v9029
        %v9574 = vpack.c.b16 %v9038, %v9030
        %v9575 = vpack.c.b16 %v9047, %v9039
        %v9576 = vpack.c.b16 %v9048, %v9040
        %v9577 = vpack.c.b16 %v9049, %v9041
        %v9578 = vpack.c.b16 %v9050, %v9042
        %v9579 = vpack.c.b16 %v9051, %v9043
        %v9580 = vpack.c.b16 %v9052, %v9044
        %v9581 = vpack.c.b16 %v9053, %v9045
        %v9582 = vpack.c.b16 %v9054, %v9046
        %v9583 = vpack.c.b16 %v9063, %v9055
        %v9584 = vpack.c.b16 %v9064, %v9056
        %v9585 = vpack.c.b16 %v9065, %v9057
        %v9586 = vpack.c.b16 %v9066, %v9058
        %v9587 = vpack.c.b16 %v9067, %v9059
        %v9588 = vpack.c.b16 %v9068, %v9060
        %v9589 = vpack.c.b16 %v9069, %v9061
        %v9590 = vpack.c.b16 %v9070, %v9062
        %v9591 = vpack.c.b16 %v9079, %v9071
        %v9592 = vpack.c.b16 %v9080, %v9072
        %v9593 = vpack.c.b16 %v9081, %v9073
        %v9594 = vpack.c.b16 %v9082, %v9074
        %v9595 = vpack.c.b16 %v9083, %v9075
        %v9596 = vpack.c.b16 %v9084, %v9076
        %v9597 = vpack.c.b16 %v9085, %v9077
        %v9598 = vpack.c.b16 %v9086, %v9078
        %10111 = vmatprep.subr.bf16.mxu0 %v9144
        %10112 = vmatpush1.bf16.msra.mxu0 %v9143
        %10113 = vmatprep.subr.bf16.mxu0 %v9136
        %10114 = vmatpush1.bf16.msra.mxu0 %v9135
        %10115 = vmatprep.subr.bf16.mxu0 %v9128
        %10116 = vmatpush1.bf16.msra.mxu0 %v9127
        %10117 = vmatprep.subr.bf16.mxu0 %v9120
        %10118 = vmatpush1.bf16.msra.mxu0 %v9119
        %10119 = vmatprep.subr.bf16.mxu0 %v9112
        %10120 = vmatpush1.bf16.msra.mxu0 %v9111
        %10121 = vmatprep.subr.bf16.mxu0 %v9104
        %10122 = vmatpush1.bf16.msra.mxu0 %v9103
        %10123 = vmatprep.subr.bf16.mxu0 %v9096
        %10124 = vmatpush1.bf16.msra.mxu0 %v9095
        %10125 = vmatprep.subr.bf16.mxu0 %v9088
        %10126 = vmatpush1.bf16.msra.mxu0 %v9087
        %10127 = vmatprep.subr.bf16.mxu0 %v9208
        %10128 = vmatpush2.bf16.msra.mxu0 %v9207
        %10129 = vmatprep.subr.bf16.mxu0 %v9200
        %10130 = vmatpush2.bf16.msra.mxu0 %v9199
        %10131 = vmatprep.subr.bf16.mxu0 %v9192
        %10132 = vmatpush2.bf16.msra.mxu0 %v9191
        %10133 = vmatprep.subr.bf16.mxu0 %v9184
        %10134 = vmatpush2.bf16.msra.mxu0 %v9183
        %10135 = vmatprep.subr.bf16.mxu0 %v9176
        %10136 = vmatpush2.bf16.msra.mxu0 %v9175
        %10137 = vmatprep.subr.bf16.mxu0 %v9168
        %10138 = vmatpush2.bf16.msra.mxu0 %v9167
        %10139 = vmatprep.subr.bf16.mxu0 %v9160
        %10140 = vmatpush2.bf16.msra.mxu0 %v9159
        %10141 = vmatprep.subr.bf16.mxu0 %v9152
        %10142 = vmatpush2.bf16.msra.mxu0 %v9151
        %10143 = vmatprep.mubr.bf16.mxu0 %v6990
        %10144 = vmatmul.mubr.bf16.gmra.mxu0 %v6989
        %v10145 = vpop.f32.mrf.mxu0
        %v10146 = vadd.f32 %v7514, %v10145
        %v10147 = vpop.f32.mrf.mxu0
        %v10148 = vadd.f32 %v7518, %v10147
        %v10149 = vpop.f32.mrf.mxu0
        %v10150 = vpop.f32.mrf.mxu0
        %10151 = vdwg.mxu0
        %10152 = vmatprep.subr.bf16.mxu0 %v9272
        %10153 = vmatpush1.bf16.msra.mxu0 %v9271
        %10154 = vmatprep.subr.bf16.mxu0 %v9264
        %10155 = vmatpush1.bf16.msra.mxu0 %v9263
        %10156 = vmatprep.subr.bf16.mxu0 %v9256
        %10157 = vmatpush1.bf16.msra.mxu0 %v9255
        %10158 = vmatprep.subr.bf16.mxu0 %v9248
        %10159 = vmatpush1.bf16.msra.mxu0 %v9247
        %10160 = vmatprep.subr.bf16.mxu0 %v9240
        %10161 = vmatpush1.bf16.msra.mxu0 %v9239
        %10162 = vmatprep.subr.bf16.mxu0 %v9232
        %10163 = vmatpush1.bf16.msra.mxu0 %v9231
        %10164 = vmatprep.subr.bf16.mxu0 %v9224
        %10165 = vmatpush1.bf16.msra.mxu0 %v9223
        %10166 = vmatprep.subr.bf16.mxu0 %v9216
        %10167 = vmatpush1.bf16.msra.mxu0 %v9215
        %10168 = vmatprep.subr.bf16.mxu0 %v9336
        %10169 = vmatpush2.bf16.msra.mxu0 %v9335
        %10170 = vmatprep.subr.bf16.mxu0 %v9328
        %10171 = vmatpush2.bf16.msra.mxu0 %v9327
        %10172 = vmatprep.subr.bf16.mxu0 %v9320
        %10173 = vmatpush2.bf16.msra.mxu0 %v9319
        %10174 = vmatprep.subr.bf16.mxu0 %v9312
        %10175 = vmatpush2.bf16.msra.mxu0 %v9311
        %10176 = vmatprep.subr.bf16.mxu0 %v9304
        %10177 = vmatpush2.bf16.msra.mxu0 %v9303
        %10178 = vmatprep.subr.bf16.mxu0 %v9296
        %10179 = vmatpush2.bf16.msra.mxu0 %v9295
        %10180 = vmatprep.subr.bf16.mxu0 %v9288
        %10181 = vmatpush2.bf16.msra.mxu0 %v9287
        %10182 = vmatprep.subr.bf16.mxu0 %v9280
        %10183 = vmatpush2.bf16.msra.mxu0 %v9279
        %10184 = vmatprep.mubr.bf16.mxu0 %v6992
        %10185 = vmatmul.mubr.bf16.gmra.mxu0 %v6991
        %v10186 = vpop.f32.mrf.mxu0
        %v10187 = vadd.f32 %v10146, %v10186
        %v10188 = vpop.f32.mrf.mxu0
        %v10189 = vadd.f32 %v10148, %v10188
        %v10190 = vpop.f32.mrf.mxu0
        %v10191 = vpop.f32.mrf.mxu0
        %10192 = vdwg.mxu0
        %10193 = vmatprep.subr.bf16.mxu0 %v9400
        %10194 = vmatpush1.bf16.msra.mxu0 %v9399
        %10195 = vmatprep.subr.bf16.mxu0 %v9392
        %10196 = vmatpush1.bf16.msra.mxu0 %v9391
        %10197 = vmatprep.subr.bf16.mxu0 %v9384
        %10198 = vmatpush1.bf16.msra.mxu0 %v9383
        %10199 = vmatprep.subr.bf16.mxu0 %v9376
        %10200 = vmatpush1.bf16.msra.mxu0 %v9375
        %10201 = vmatprep.subr.bf16.mxu0 %v9368
        %10202 = vmatpush1.bf16.msra.mxu0 %v9367
        %10203 = vmatprep.subr.bf16.mxu0 %v9360
        %10204 = vmatpush1.bf16.msra.mxu0 %v9359
        %10205 = vmatprep.subr.bf16.mxu0 %v9352
        %10206 = vmatpush1.bf16.msra.mxu0 %v9351
        %10207 = vmatprep.subr.bf16.mxu0 %v9344
        %10208 = vmatpush1.bf16.msra.mxu0 %v9343
        %10209 = vmatprep.subr.bf16.mxu0 %v9464
        %10210 = vmatpush2.bf16.msra.mxu0 %v9463
        %10211 = vmatprep.subr.bf16.mxu0 %v9456
        %10212 = vmatpush2.bf16.msra.mxu0 %v9455
        %10213 = vmatprep.subr.bf16.mxu0 %v9448
        %10214 = vmatpush2.bf16.msra.mxu0 %v9447
        %10215 = vmatprep.subr.bf16.mxu0 %v9440
        %10216 = vmatpush2.bf16.msra.mxu0 %v9439
        %10217 = vmatprep.subr.bf16.mxu0 %v9432
        %10218 = vmatpush2.bf16.msra.mxu0 %v9431
        %10219 = vmatprep.subr.bf16.mxu0 %v9424
        %10220 = vmatpush2.bf16.msra.mxu0 %v9423
        %10221 = vmatprep.subr.bf16.mxu0 %v9416
        %10222 = vmatpush2.bf16.msra.mxu0 %v9415
        %10223 = vmatprep.subr.bf16.mxu0 %v9408
        %10224 = vmatpush2.bf16.msra.mxu0 %v9407
        %10225 = vmatprep.mubr.bf16.mxu0 %v6994
        %10226 = vmatmul.mubr.bf16.gmra.mxu0 %v6993
        %v10227 = vpop.f32.mrf.mxu0
        %v10228 = vadd.f32 %v10187, %v10227
        %v10229 = vpop.f32.mrf.mxu0
        %v10230 = vadd.f32 %v10189, %v10229
        %v10231 = vpop.f32.mrf.mxu0
        %v10232 = vpop.f32.mrf.mxu0
        %10233 = vdwg.mxu0
        %10234 = vmatprep.subr.bf16.mxu0 %v9528
        %10235 = vmatpush1.bf16.msra.mxu0 %v9527
        %10236 = vmatprep.subr.bf16.mxu0 %v9520
        %10237 = vmatpush1.bf16.msra.mxu0 %v9519
        %10238 = vmatprep.subr.bf16.mxu0 %v9512
        %10239 = vmatpush1.bf16.msra.mxu0 %v9511
        %10240 = vmatprep.subr.bf16.mxu0 %v9504
        %10241 = vmatpush1.bf16.msra.mxu0 %v9503
        %10242 = vmatprep.subr.bf16.mxu0 %v9496
        %10243 = vmatpush1.bf16.msra.mxu0 %v9495
        %10244 = vmatprep.subr.bf16.mxu0 %v9488
        %10245 = vmatpush1.bf16.msra.mxu0 %v9487
        %10246 = vmatprep.subr.bf16.mxu0 %v9480
        %10247 = vmatpush1.bf16.msra.mxu0 %v9479
        %10248 = vmatprep.subr.bf16.mxu0 %v9472
        %10249 = vmatpush1.bf16.msra.mxu0 %v9471
        %10250 = vmatprep.subr.bf16.mxu0 %v9592
        %10251 = vmatpush2.bf16.msra.mxu0 %v9591
        %10252 = vmatprep.subr.bf16.mxu0 %v9584
        %10253 = vmatpush2.bf16.msra.mxu0 %v9583
        %10254 = vmatprep.subr.bf16.mxu0 %v9576
        %10255 = vmatpush2.bf16.msra.mxu0 %v9575
        %10256 = vmatprep.subr.bf16.mxu0 %v9568
        %10257 = vmatpush2.bf16.msra.mxu0 %v9567
        %10258 = vmatprep.subr.bf16.mxu0 %v9560
        %10259 = vmatpush2.bf16.msra.mxu0 %v9559
        %10260 = vmatprep.subr.bf16.mxu0 %v9552
        %10261 = vmatpush2.bf16.msra.mxu0 %v9551
        %10262 = vmatprep.subr.bf16.mxu0 %v9544
        %10263 = vmatpush2.bf16.msra.mxu0 %v9543
        %10264 = vmatprep.subr.bf16.mxu0 %v9536
        %10265 = vmatpush2.bf16.msra.mxu0 %v9535
        %10266 = vmatprep.mubr.bf16.mxu0 %v6996
        %10267 = vmatmul.mubr.bf16.gmra.mxu0 %v6995
        %v10268 = vpop.f32.mrf.mxu0
        %v10269 = vadd.f32 %v10228, %v10268
        %v10270 = vpop.f32.mrf.mxu0
        %v10271 = vadd.f32 %v10230, %v10270
        %v10272 = vpop.f32.mrf.mxu0
        %v10273 = vpop.f32.mrf.mxu0
        %10274 = vdwg.mxu0
        %10275 = vmatprep.subr.bf16.mxu0 %v9146
        %10276 = vmatpush1.bf16.msra.mxu0 %v9145
        %10277 = vmatprep.subr.bf16.mxu0 %v9138
        %10278 = vmatpush1.bf16.msra.mxu0 %v9137
        %10279 = vmatprep.subr.bf16.mxu0 %v9130
        %10280 = vmatpush1.bf16.msra.mxu0 %v9129
        %10281 = vmatprep.subr.bf16.mxu0 %v9122
        %10282 = vmatpush1.bf16.msra.mxu0 %v9121
        %10283 = vmatprep.subr.bf16.mxu0 %v9114
        %10284 = vmatpush1.bf16.msra.mxu0 %v9113
        %10285 = vmatprep.subr.bf16.mxu0 %v9106
        %10286 = vmatpush1.bf16.msra.mxu0 %v9105
        %10287 = vmatprep.subr.bf16.mxu0 %v9098
        %10288 = vmatpush1.bf16.msra.mxu0 %v9097
        %10289 = vmatprep.subr.bf16.mxu0 %v9090
        %10290 = vmatpush1.bf16.msra.mxu0 %v9089
        %10291 = vmatprep.subr.bf16.mxu0 %v9210
        %10292 = vmatpush2.bf16.msra.mxu0 %v9209
        %10293 = vmatprep.subr.bf16.mxu0 %v9202
        %10294 = vmatpush2.bf16.msra.mxu0 %v9201
        %10295 = vmatprep.subr.bf16.mxu0 %v9194
        %10296 = vmatpush2.bf16.msra.mxu0 %v9193
        %10297 = vmatprep.subr.bf16.mxu0 %v9186
        %10298 = vmatpush2.bf16.msra.mxu0 %v9185
        %10299 = vmatprep.subr.bf16.mxu0 %v9178
        %10300 = vmatpush2.bf16.msra.mxu0 %v9177
        %10301 = vmatprep.subr.bf16.mxu0 %v9170
        %10302 = vmatpush2.bf16.msra.mxu0 %v9169
        %10303 = vmatprep.subr.bf16.mxu0 %v9162
        %10304 = vmatpush2.bf16.msra.mxu0 %v9161
        %10305 = vmatprep.subr.bf16.mxu0 %v9154
        %10306 = vmatpush2.bf16.msra.mxu0 %v9153
        %10307 = vmatprep.mubr.bf16.mxu0 %v6990
        %10308 = vmatmul.mubr.bf16.gmra.mxu0 %v6989
        %v10309 = vpop.f32.mrf.mxu0
        %v10310 = vadd.f32 %v7522, %v10309
        %v10311 = vpop.f32.mrf.mxu0
        %v10312 = vadd.f32 %v7526, %v10311
        %v10313 = vpop.f32.mrf.mxu0
        %v10314 = vpop.f32.mrf.mxu0
        %10315 = vdwg.mxu0
        %10316 = vmatprep.subr.bf16.mxu0 %v9274
        %10317 = vmatpush1.bf16.msra.mxu0 %v9273
        %10318 = vmatprep.subr.bf16.mxu0 %v9266
        %10319 = vmatpush1.bf16.msra.mxu0 %v9265
        %10320 = vmatprep.subr.bf16.mxu0 %v9258
        %10321 = vmatpush1.bf16.msra.mxu0 %v9257
        %10322 = vmatprep.subr.bf16.mxu0 %v9250
        %10323 = vmatpush1.bf16.msra.mxu0 %v9249
        %10324 = vmatprep.subr.bf16.mxu0 %v9242
        %10325 = vmatpush1.bf16.msra.mxu0 %v9241
        %10326 = vmatprep.subr.bf16.mxu0 %v9234
        %10327 = vmatpush1.bf16.msra.mxu0 %v9233
        %10328 = vmatprep.subr.bf16.mxu0 %v9226
        %10329 = vmatpush1.bf16.msra.mxu0 %v9225
        %10330 = vmatprep.subr.bf16.mxu0 %v9218
        %10331 = vmatpush1.bf16.msra.mxu0 %v9217
        %10332 = vmatprep.subr.bf16.mxu0 %v9338
        %10333 = vmatpush2.bf16.msra.mxu0 %v9337
        %10334 = vmatprep.subr.bf16.mxu0 %v9330
        %10335 = vmatpush2.bf16.msra.mxu0 %v9329
        %10336 = vmatprep.subr.bf16.mxu0 %v9322
        %10337 = vmatpush2.bf16.msra.mxu0 %v9321
        %10338 = vmatprep.subr.bf16.mxu0 %v9314
        %10339 = vmatpush2.bf16.msra.mxu0 %v9313
        %10340 = vmatprep.subr.bf16.mxu0 %v9306
        %10341 = vmatpush2.bf16.msra.mxu0 %v9305
        %10342 = vmatprep.subr.bf16.mxu0 %v9298
        %10343 = vmatpush2.bf16.msra.mxu0 %v9297
        %10344 = vmatprep.subr.bf16.mxu0 %v9290
        %10345 = vmatpush2.bf16.msra.mxu0 %v9289
        %10346 = vmatprep.subr.bf16.mxu0 %v9282
        %10347 = vmatpush2.bf16.msra.mxu0 %v9281
        %10348 = vmatprep.mubr.bf16.mxu0 %v6992
        %10349 = vmatmul.mubr.bf16.gmra.mxu0 %v6991
        %v10350 = vpop.f32.mrf.mxu0
        %v10351 = vadd.f32 %v10310, %v10350
        %v10352 = vpop.f32.mrf.mxu0
        %v10353 = vadd.f32 %v10312, %v10352
        %v10354 = vpop.f32.mrf.mxu0
        %v10355 = vpop.f32.mrf.mxu0
        %10356 = vdwg.mxu0
        %10357 = vmatprep.subr.bf16.mxu0 %v9402
        %10358 = vmatpush1.bf16.msra.mxu0 %v9401
        %10359 = vmatprep.subr.bf16.mxu0 %v9394
        %10360 = vmatpush1.bf16.msra.mxu0 %v9393
        %10361 = vmatprep.subr.bf16.mxu0 %v9386
        %10362 = vmatpush1.bf16.msra.mxu0 %v9385
        %10363 = vmatprep.subr.bf16.mxu0 %v9378
        %10364 = vmatpush1.bf16.msra.mxu0 %v9377
        %10365 = vmatprep.subr.bf16.mxu0 %v9370
        %10366 = vmatpush1.bf16.msra.mxu0 %v9369
        %10367 = vmatprep.subr.bf16.mxu0 %v9362
        %10368 = vmatpush1.bf16.msra.mxu0 %v9361
        %10369 = vmatprep.subr.bf16.mxu0 %v9354
        %10370 = vmatpush1.bf16.msra.mxu0 %v9353
        %10371 = vmatprep.subr.bf16.mxu0 %v9346
        %10372 = vmatpush1.bf16.msra.mxu0 %v9345
        %10373 = vmatprep.subr.bf16.mxu0 %v9466
        %10374 = vmatpush2.bf16.msra.mxu0 %v9465
        %10375 = vmatprep.subr.bf16.mxu0 %v9458
        %10376 = vmatpush2.bf16.msra.mxu0 %v9457
        %10377 = vmatprep.subr.bf16.mxu0 %v9450
        %10378 = vmatpush2.bf16.msra.mxu0 %v9449
        %10379 = vmatprep.subr.bf16.mxu0 %v9442
        %10380 = vmatpush2.bf16.msra.mxu0 %v9441
        %10381 = vmatprep.subr.bf16.mxu0 %v9434
        %10382 = vmatpush2.bf16.msra.mxu0 %v9433
        %10383 = vmatprep.subr.bf16.mxu0 %v9426
        %10384 = vmatpush2.bf16.msra.mxu0 %v9425
        %10385 = vmatprep.subr.bf16.mxu0 %v9418
        %10386 = vmatpush2.bf16.msra.mxu0 %v9417
        %10387 = vmatprep.subr.bf16.mxu0 %v9410
        %10388 = vmatpush2.bf16.msra.mxu0 %v9409
        %10389 = vmatprep.mubr.bf16.mxu0 %v6994
        %10390 = vmatmul.mubr.bf16.gmra.mxu0 %v6993
        %v10391 = vpop.f32.mrf.mxu0
        %v10392 = vadd.f32 %v10351, %v10391
        %v10393 = vpop.f32.mrf.mxu0
        %v10394 = vadd.f32 %v10353, %v10393
        %v10395 = vpop.f32.mrf.mxu0
        %v10396 = vpop.f32.mrf.mxu0
        %10397 = vdwg.mxu0
        %10398 = vmatprep.subr.bf16.mxu0 %v9530
        %10399 = vmatpush1.bf16.msra.mxu0 %v9529
        %10400 = vmatprep.subr.bf16.mxu0 %v9522
        %10401 = vmatpush1.bf16.msra.mxu0 %v9521
        %10402 = vmatprep.subr.bf16.mxu0 %v9514
        %10403 = vmatpush1.bf16.msra.mxu0 %v9513
        %10404 = vmatprep.subr.bf16.mxu0 %v9506
        %10405 = vmatpush1.bf16.msra.mxu0 %v9505
        %10406 = vmatprep.subr.bf16.mxu0 %v9498
        %10407 = vmatpush1.bf16.msra.mxu0 %v9497
        %10408 = vmatprep.subr.bf16.mxu0 %v9490
        %10409 = vmatpush1.bf16.msra.mxu0 %v9489
        %10410 = vmatprep.subr.bf16.mxu0 %v9482
        %10411 = vmatpush1.bf16.msra.mxu0 %v9481
        %10412 = vmatprep.subr.bf16.mxu0 %v9474
        %10413 = vmatpush1.bf16.msra.mxu0 %v9473
        %10414 = vmatprep.subr.bf16.mxu0 %v9594
        %10415 = vmatpush2.bf16.msra.mxu0 %v9593
        %10416 = vmatprep.subr.bf16.mxu0 %v9586
        %10417 = vmatpush2.bf16.msra.mxu0 %v9585
        %10418 = vmatprep.subr.bf16.mxu0 %v9578
        %10419 = vmatpush2.bf16.msra.mxu0 %v9577
        %10420 = vmatprep.subr.bf16.mxu0 %v9570
        %10421 = vmatpush2.bf16.msra.mxu0 %v9569
        %10422 = vmatprep.subr.bf16.mxu0 %v9562
        %10423 = vmatpush2.bf16.msra.mxu0 %v9561
        %10424 = vmatprep.subr.bf16.mxu0 %v9554
        %10425 = vmatpush2.bf16.msra.mxu0 %v9553
        %10426 = vmatprep.subr.bf16.mxu0 %v9546
        %10427 = vmatpush2.bf16.msra.mxu0 %v9545
        %10428 = vmatprep.subr.bf16.mxu0 %v9538
        %10429 = vmatpush2.bf16.msra.mxu0 %v9537
        %10430 = vmatprep.mubr.bf16.mxu0 %v6996
        %10431 = vmatmul.mubr.bf16.gmra.mxu0 %v6995
        %v10432 = vpop.f32.mrf.mxu0
        %v10433 = vadd.f32 %v10392, %v10432
        %v10434 = vpop.f32.mrf.mxu0
        %v10435 = vadd.f32 %v10394, %v10434
        %v10436 = vpop.f32.mrf.mxu0
        %v10437 = vpop.f32.mrf.mxu0
        %10438 = vdwg.mxu0
        %10439 = vmatprep.subr.bf16.mxu0 %v9148
        %10440 = vmatpush1.bf16.msra.mxu0 %v9147
        %10441 = vmatprep.subr.bf16.mxu0 %v9140
        %10442 = vmatpush1.bf16.msra.mxu0 %v9139
        %10443 = vmatprep.subr.bf16.mxu0 %v9132
        %10444 = vmatpush1.bf16.msra.mxu0 %v9131
        %10445 = vmatprep.subr.bf16.mxu0 %v9124
        %10446 = vmatpush1.bf16.msra.mxu0 %v9123
        %10447 = vmatprep.subr.bf16.mxu0 %v9116
        %10448 = vmatpush1.bf16.msra.mxu0 %v9115
        %10449 = vmatprep.subr.bf16.mxu0 %v9108
        %10450 = vmatpush1.bf16.msra.mxu0 %v9107
        %10451 = vmatprep.subr.bf16.mxu0 %v9100
        %10452 = vmatpush1.bf16.msra.mxu0 %v9099
        %10453 = vmatprep.subr.bf16.mxu0 %v9092
        %10454 = vmatpush1.bf16.msra.mxu0 %v9091
        %10455 = vmatprep.subr.bf16.mxu0 %v9212
        %10456 = vmatpush2.bf16.msra.mxu0 %v9211
        %10457 = vmatprep.subr.bf16.mxu0 %v9204
        %10458 = vmatpush2.bf16.msra.mxu0 %v9203
        %10459 = vmatprep.subr.bf16.mxu0 %v9196
        %10460 = vmatpush2.bf16.msra.mxu0 %v9195
        %10461 = vmatprep.subr.bf16.mxu0 %v9188
        %10462 = vmatpush2.bf16.msra.mxu0 %v9187
        %10463 = vmatprep.subr.bf16.mxu0 %v9180
        %10464 = vmatpush2.bf16.msra.mxu0 %v9179
        %10465 = vmatprep.subr.bf16.mxu0 %v9172
        %10466 = vmatpush2.bf16.msra.mxu0 %v9171
        %10467 = vmatprep.subr.bf16.mxu0 %v9164
        %10468 = vmatpush2.bf16.msra.mxu0 %v9163
        %10469 = vmatprep.subr.bf16.mxu0 %v9156
        %10470 = vmatpush2.bf16.msra.mxu0 %v9155
        %10471 = vmatprep.mubr.bf16.mxu0 %v6990
        %10472 = vmatmul.mubr.bf16.gmra.mxu0 %v6989
        %v10473 = vpop.f32.mrf.mxu0
        %v10474 = vadd.f32 %v7530, %v10473
        %v10475 = vpop.f32.mrf.mxu0
        %v10476 = vadd.f32 %v7534, %v10475
        %v10477 = vpop.f32.mrf.mxu0
        %v10478 = vpop.f32.mrf.mxu0
        %10479 = vdwg.mxu0
        %10480 = vmatprep.subr.bf16.mxu0 %v9276
        %10481 = vmatpush1.bf16.msra.mxu0 %v9275
        %10482 = vmatprep.subr.bf16.mxu0 %v9268
        %10483 = vmatpush1.bf16.msra.mxu0 %v9267
        %10484 = vmatprep.subr.bf16.mxu0 %v9260
        %10485 = vmatpush1.bf16.msra.mxu0 %v9259
        %10486 = vmatprep.subr.bf16.mxu0 %v9252
        %10487 = vmatpush1.bf16.msra.mxu0 %v9251
        %10488 = vmatprep.subr.bf16.mxu0 %v9244
        %10489 = vmatpush1.bf16.msra.mxu0 %v9243
        %10490 = vmatprep.subr.bf16.mxu0 %v9236
        %10491 = vmatpush1.bf16.msra.mxu0 %v9235
        %10492 = vmatprep.subr.bf16.mxu0 %v9228
        %10493 = vmatpush1.bf16.msra.mxu0 %v9227
        %10494 = vmatprep.subr.bf16.mxu0 %v9220
        %10495 = vmatpush1.bf16.msra.mxu0 %v9219
        %10496 = vmatprep.subr.bf16.mxu0 %v9340
        %10497 = vmatpush2.bf16.msra.mxu0 %v9339
        %10498 = vmatprep.subr.bf16.mxu0 %v9332
        %10499 = vmatpush2.bf16.msra.mxu0 %v9331
        %10500 = vmatprep.subr.bf16.mxu0 %v9324
        %10501 = vmatpush2.bf16.msra.mxu0 %v9323
        %10502 = vmatprep.subr.bf16.mxu0 %v9316
        %10503 = vmatpush2.bf16.msra.mxu0 %v9315
        %10504 = vmatprep.subr.bf16.mxu0 %v9308
        %10505 = vmatpush2.bf16.msra.mxu0 %v9307
        %10506 = vmatprep.subr.bf16.mxu0 %v9300
        %10507 = vmatpush2.bf16.msra.mxu0 %v9299
        %10508 = vmatprep.subr.bf16.mxu0 %v9292
        %10509 = vmatpush2.bf16.msra.mxu0 %v9291
        %10510 = vmatprep.subr.bf16.mxu0 %v9284
        %10511 = vmatpush2.bf16.msra.mxu0 %v9283
        %10512 = vmatprep.mubr.bf16.mxu0 %v6992
        %10513 = vmatmul.mubr.bf16.gmra.mxu0 %v6991
        %v10514 = vpop.f32.mrf.mxu0
        %v10515 = vadd.f32 %v10474, %v10514
        %v10516 = vpop.f32.mrf.mxu0
        %v10517 = vadd.f32 %v10476, %v10516
        %v10518 = vpop.f32.mrf.mxu0
        %v10519 = vpop.f32.mrf.mxu0
        %10520 = vdwg.mxu0
        %10521 = vmatprep.subr.bf16.mxu0 %v9404
        %10522 = vmatpush1.bf16.msra.mxu0 %v9403
        %10523 = vmatprep.subr.bf16.mxu0 %v9396
        %10524 = vmatpush1.bf16.msra.mxu0 %v9395
        %10525 = vmatprep.subr.bf16.mxu0 %v9388
        %10526 = vmatpush1.bf16.msra.mxu0 %v9387
        %10527 = vmatprep.subr.bf16.mxu0 %v9380
        %10528 = vmatpush1.bf16.msra.mxu0 %v9379
        %10529 = vmatprep.subr.bf16.mxu0 %v9372
        %10530 = vmatpush1.bf16.msra.mxu0 %v9371
        %10531 = vmatprep.subr.bf16.mxu0 %v9364
        %10532 = vmatpush1.bf16.msra.mxu0 %v9363
        %10533 = vmatprep.subr.bf16.mxu0 %v9356
        %10534 = vmatpush1.bf16.msra.mxu0 %v9355
        %10535 = vmatprep.subr.bf16.mxu0 %v9348
        %10536 = vmatpush1.bf16.msra.mxu0 %v9347
        %10537 = vmatprep.subr.bf16.mxu0 %v9468
        %10538 = vmatpush2.bf16.msra.mxu0 %v9467
        %10539 = vmatprep.subr.bf16.mxu0 %v9460
        %10540 = vmatpush2.bf16.msra.mxu0 %v9459
        %10541 = vmatprep.subr.bf16.mxu0 %v9452
        %10542 = vmatpush2.bf16.msra.mxu0 %v9451
        %10543 = vmatprep.subr.bf16.mxu0 %v9444
        %10544 = vmatpush2.bf16.msra.mxu0 %v9443
        %10545 = vmatprep.subr.bf16.mxu0 %v9436
        %10546 = vmatpush2.bf16.msra.mxu0 %v9435
        %10547 = vmatprep.subr.bf16.mxu0 %v9428
        %10548 = vmatpush2.bf16.msra.mxu0 %v9427
        %10549 = vmatprep.subr.bf16.mxu0 %v9420
        %10550 = vmatpush2.bf16.msra.mxu0 %v9419
        %10551 = vmatprep.subr.bf16.mxu0 %v9412
        %10552 = vmatpush2.bf16.msra.mxu0 %v9411
        %10553 = vmatprep.mubr.bf16.mxu0 %v6994
        %10554 = vmatmul.mubr.bf16.gmra.mxu0 %v6993
        %v10555 = vpop.f32.mrf.mxu0
        %v10556 = vadd.f32 %v10515, %v10555
        %v10557 = vpop.f32.mrf.mxu0
        %v10558 = vadd.f32 %v10517, %v10557
        %v10559 = vpop.f32.mrf.mxu0
        %v10560 = vpop.f32.mrf.mxu0
        %10561 = vdwg.mxu0
        %10562 = vmatprep.subr.bf16.mxu0 %v9532
        %10563 = vmatpush1.bf16.msra.mxu0 %v9531
        %10564 = vmatprep.subr.bf16.mxu0 %v9524
        %10565 = vmatpush1.bf16.msra.mxu0 %v9523
        %10566 = vmatprep.subr.bf16.mxu0 %v9516
        %10567 = vmatpush1.bf16.msra.mxu0 %v9515
        %10568 = vmatprep.subr.bf16.mxu0 %v9508
        %10569 = vmatpush1.bf16.msra.mxu0 %v9507
        %10570 = vmatprep.subr.bf16.mxu0 %v9500
        %10571 = vmatpush1.bf16.msra.mxu0 %v9499
        %10572 = vmatprep.subr.bf16.mxu0 %v9492
        %10573 = vmatpush1.bf16.msra.mxu0 %v9491
        %10574 = vmatprep.subr.bf16.mxu0 %v9484
        %10575 = vmatpush1.bf16.msra.mxu0 %v9483
        %10576 = vmatprep.subr.bf16.mxu0 %v9476
        %10577 = vmatpush1.bf16.msra.mxu0 %v9475
        %10578 = vmatprep.subr.bf16.mxu0 %v9596
        %10579 = vmatpush2.bf16.msra.mxu0 %v9595
        %10580 = vmatprep.subr.bf16.mxu0 %v9588
        %10581 = vmatpush2.bf16.msra.mxu0 %v9587
        %10582 = vmatprep.subr.bf16.mxu0 %v9580
        %10583 = vmatpush2.bf16.msra.mxu0 %v9579
        %10584 = vmatprep.subr.bf16.mxu0 %v9572
        %10585 = vmatpush2.bf16.msra.mxu0 %v9571
        %10586 = vmatprep.subr.bf16.mxu0 %v9564
        %10587 = vmatpush2.bf16.msra.mxu0 %v9563
        %10588 = vmatprep.subr.bf16.mxu0 %v9556
        %10589 = vmatpush2.bf16.msra.mxu0 %v9555
        %10590 = vmatprep.subr.bf16.mxu0 %v9548
        %10591 = vmatpush2.bf16.msra.mxu0 %v9547
        %10592 = vmatprep.subr.bf16.mxu0 %v9540
        %10593 = vmatpush2.bf16.msra.mxu0 %v9539
        %10594 = vmatprep.mubr.bf16.mxu0 %v6996
        %10595 = vmatmul.mubr.bf16.gmra.mxu0 %v6995
        %v10596 = vpop.f32.mrf.mxu0
        %v10597 = vadd.f32 %v10556, %v10596
        %v10598 = vpop.f32.mrf.mxu0
        %v10599 = vadd.f32 %v10558, %v10598
        %v10600 = vpop.f32.mrf.mxu0
        %v10601 = vpop.f32.mrf.mxu0
        %10602 = vdwg.mxu0
        %10603 = vmatprep.subr.bf16.mxu0 %v9150
        %10604 = vmatpush1.bf16.msra.mxu0 %v9149
        %10605 = vmatprep.subr.bf16.mxu0 %v9142
        %10606 = vmatpush1.bf16.msra.mxu0 %v9141
        %10607 = vmatprep.subr.bf16.mxu0 %v9134
        %10608 = vmatpush1.bf16.msra.mxu0 %v9133
        %10609 = vmatprep.subr.bf16.mxu0 %v9126
        %10610 = vmatpush1.bf16.msra.mxu0 %v9125
        %10611 = vmatprep.subr.bf16.mxu0 %v9118
        %10612 = vmatpush1.bf16.msra.mxu0 %v9117
        %10613 = vmatprep.subr.bf16.mxu0 %v9110
        %10614 = vmatpush1.bf16.msra.mxu0 %v9109
        %10615 = vmatprep.subr.bf16.mxu0 %v9102
        %10616 = vmatpush1.bf16.msra.mxu0 %v9101
        %10617 = vmatprep.subr.bf16.mxu0 %v9094
        %10618 = vmatpush1.bf16.msra.mxu0 %v9093
        %10619 = vmatprep.subr.bf16.mxu0 %v9214
        %10620 = vmatpush2.bf16.msra.mxu0 %v9213
        %10621 = vmatprep.subr.bf16.mxu0 %v9206
        %10622 = vmatpush2.bf16.msra.mxu0 %v9205
        %10623 = vmatprep.subr.bf16.mxu0 %v9198
        %10624 = vmatpush2.bf16.msra.mxu0 %v9197
        %10625 = vmatprep.subr.bf16.mxu0 %v9190
        %10626 = vmatpush2.bf16.msra.mxu0 %v9189
        %10627 = vmatprep.subr.bf16.mxu0 %v9182
        %10628 = vmatpush2.bf16.msra.mxu0 %v9181
        %10629 = vmatprep.subr.bf16.mxu0 %v9174
        %10630 = vmatpush2.bf16.msra.mxu0 %v9173
        %10631 = vmatprep.subr.bf16.mxu0 %v9166
        %10632 = vmatpush2.bf16.msra.mxu0 %v9165
        %10633 = vmatprep.subr.bf16.mxu0 %v9158
        %10634 = vmatpush2.bf16.msra.mxu0 %v9157
        %10635 = vmatprep.mubr.bf16.mxu0 %v6990
        %10636 = vmatmul.mubr.bf16.gmra.mxu0 %v6989
        %v10637 = vpop.f32.mrf.mxu0
        %v10638 = vadd.f32 %v7538, %v10637
        %v10639 = vpop.f32.mrf.mxu0
        %v10640 = vadd.f32 %v7542, %v10639
        %v10641 = vpop.f32.mrf.mxu0
        %v10642 = vpop.f32.mrf.mxu0
        %10643 = vdwg.mxu0
        %10644 = vmatprep.subr.bf16.mxu0 %v9278
        %10645 = vmatpush1.bf16.msra.mxu0 %v9277
        %10646 = vmatprep.subr.bf16.mxu0 %v9270
        %10647 = vmatpush1.bf16.msra.mxu0 %v9269
        %10648 = vmatprep.subr.bf16.mxu0 %v9262
        %10649 = vmatpush1.bf16.msra.mxu0 %v9261
        %10650 = vmatprep.subr.bf16.mxu0 %v9254
        %10651 = vmatpush1.bf16.msra.mxu0 %v9253
        %10652 = vmatprep.subr.bf16.mxu0 %v9246
        %10653 = vmatpush1.bf16.msra.mxu0 %v9245
        %10654 = vmatprep.subr.bf16.mxu0 %v9238
        %10655 = vmatpush1.bf16.msra.mxu0 %v9237
        %10656 = vmatprep.subr.bf16.mxu0 %v9230
        %10657 = vmatpush1.bf16.msra.mxu0 %v9229
        %10658 = vmatprep.subr.bf16.mxu0 %v9222
        %10659 = vmatpush1.bf16.msra.mxu0 %v9221
        %10660 = vmatprep.subr.bf16.mxu0 %v9342
        %10661 = vmatpush2.bf16.msra.mxu0 %v9341
        %10662 = vmatprep.subr.bf16.mxu0 %v9334
        %10663 = vmatpush2.bf16.msra.mxu0 %v9333
        %10664 = vmatprep.subr.bf16.mxu0 %v9326
        %10665 = vmatpush2.bf16.msra.mxu0 %v9325
        %10666 = vmatprep.subr.bf16.mxu0 %v9318
        %10667 = vmatpush2.bf16.msra.mxu0 %v9317
        %10668 = vmatprep.subr.bf16.mxu0 %v9310
        %10669 = vmatpush2.bf16.msra.mxu0 %v9309
        %10670 = vmatprep.subr.bf16.mxu0 %v9302
        %10671 = vmatpush2.bf16.msra.mxu0 %v9301
        %10672 = vmatprep.subr.bf16.mxu0 %v9294
        %10673 = vmatpush2.bf16.msra.mxu0 %v9293
        %10674 = vmatprep.subr.bf16.mxu0 %v9286
        %10675 = vmatpush2.bf16.msra.mxu0 %v9285
        %10676 = vmatprep.mubr.bf16.mxu0 %v6992
        %10677 = vmatmul.mubr.bf16.gmra.mxu0 %v6991
        %v10678 = vpop.f32.mrf.mxu0
        %v10679 = vadd.f32 %v10638, %v10678
        %v10680 = vpop.f32.mrf.mxu0
        %v10681 = vadd.f32 %v10640, %v10680
        %v10682 = vpop.f32.mrf.mxu0
        %v10683 = vpop.f32.mrf.mxu0
        %10684 = vdwg.mxu0
        %10685 = vmatprep.subr.bf16.mxu0 %v9406
        %10686 = vmatpush1.bf16.msra.mxu0 %v9405
        %10687 = vmatprep.subr.bf16.mxu0 %v9398
        %10688 = vmatpush1.bf16.msra.mxu0 %v9397
        %10689 = vmatprep.subr.bf16.mxu0 %v9390
        %10690 = vmatpush1.bf16.msra.mxu0 %v9389
        %10691 = vmatprep.subr.bf16.mxu0 %v9382
        %10692 = vmatpush1.bf16.msra.mxu0 %v9381
        %10693 = vmatprep.subr.bf16.mxu0 %v9374
        %10694 = vmatpush1.bf16.msra.mxu0 %v9373
        %10695 = vmatprep.subr.bf16.mxu0 %v9366
        %10696 = vmatpush1.bf16.msra.mxu0 %v9365
        %10697 = vmatprep.subr.bf16.mxu0 %v9358
        %10698 = vmatpush1.bf16.msra.mxu0 %v9357
        %10699 = vmatprep.subr.bf16.mxu0 %v9350
        %10700 = vmatpush1.bf16.msra.mxu0 %v9349
        %10701 = vmatprep.subr.bf16.mxu0 %v9470
        %10702 = vmatpush2.bf16.msra.mxu0 %v9469
        %10703 = vmatprep.subr.bf16.mxu0 %v9462
        %10704 = vmatpush2.bf16.msra.mxu0 %v9461
        %10705 = vmatprep.subr.bf16.mxu0 %v9454
        %10706 = vmatpush2.bf16.msra.mxu0 %v9453
        %10707 = vmatprep.subr.bf16.mxu0 %v9446
        %10708 = vmatpush2.bf16.msra.mxu0 %v9445
        %10709 = vmatprep.subr.bf16.mxu0 %v9438
        %10710 = vmatpush2.bf16.msra.mxu0 %v9437
        %10711 = vmatprep.subr.bf16.mxu0 %v9430
        %10712 = vmatpush2.bf16.msra.mxu0 %v9429
        %10713 = vmatprep.subr.bf16.mxu0 %v9422
        %10714 = vmatpush2.bf16.msra.mxu0 %v9421
        %10715 = vmatprep.subr.bf16.mxu0 %v9414
        %10716 = vmatpush2.bf16.msra.mxu0 %v9413
        %10717 = vmatprep.mubr.bf16.mxu0 %v6994
        %10718 = vmatmul.mubr.bf16.gmra.mxu0 %v6993
        %v10719 = vpop.f32.mrf.mxu0
        %v10720 = vadd.f32 %v10679, %v10719
        %v10721 = vpop.f32.mrf.mxu0
        %v10722 = vadd.f32 %v10681, %v10721
        %v10723 = vpop.f32.mrf.mxu0
        %v10724 = vpop.f32.mrf.mxu0
        %10725 = vdwg.mxu0
        %10726 = vmatprep.subr.bf16.mxu0 %v9534
        %10727 = vmatpush1.bf16.msra.mxu0 %v9533
        %10728 = vmatprep.subr.bf16.mxu0 %v9526
        %10729 = vmatpush1.bf16.msra.mxu0 %v9525
        %10730 = vmatprep.subr.bf16.mxu0 %v9518
        %10731 = vmatpush1.bf16.msra.mxu0 %v9517
        %10732 = vmatprep.subr.bf16.mxu0 %v9510
        %10733 = vmatpush1.bf16.msra.mxu0 %v9509
        %10734 = vmatprep.subr.bf16.mxu0 %v9502
        %10735 = vmatpush1.bf16.msra.mxu0 %v9501
        %10736 = vmatprep.subr.bf16.mxu0 %v9494
        %10737 = vmatpush1.bf16.msra.mxu0 %v9493
        %10738 = vmatprep.subr.bf16.mxu0 %v9486
        %10739 = vmatpush1.bf16.msra.mxu0 %v9485
        %10740 = vmatprep.subr.bf16.mxu0 %v9478
        %10741 = vmatpush1.bf16.msra.mxu0 %v9477
        %10742 = vmatprep.subr.bf16.mxu0 %v9598
        %10743 = vmatpush2.bf16.msra.mxu0 %v9597
        %10744 = vmatprep.subr.bf16.mxu0 %v9590
        %10745 = vmatpush2.bf16.msra.mxu0 %v9589
        %10746 = vmatprep.subr.bf16.mxu0 %v9582
        %10747 = vmatpush2.bf16.msra.mxu0 %v9581
        %10748 = vmatprep.subr.bf16.mxu0 %v9574
        %10749 = vmatpush2.bf16.msra.mxu0 %v9573
        %10750 = vmatprep.subr.bf16.mxu0 %v9566
        %10751 = vmatpush2.bf16.msra.mxu0 %v9565
        %10752 = vmatprep.subr.bf16.mxu0 %v9558
        %10753 = vmatpush2.bf16.msra.mxu0 %v9557
        %10754 = vmatprep.subr.bf16.mxu0 %v9550
        %10755 = vmatpush2.bf16.msra.mxu0 %v9549
        %10756 = vmatprep.subr.bf16.mxu0 %v9542
        %10757 = vmatpush2.bf16.msra.mxu0 %v9541
        %10758 = vmatprep.mubr.bf16.mxu0 %v6996
        %10759 = vmatmul.mubr.bf16.gmra.mxu0 %v6995
        %v10760 = vpop.f32.mrf.mxu0
        %v10761 = vadd.f32 %v10720, %v10760
        %v10762 = vpop.f32.mrf.mxu0
        %v10763 = vadd.f32 %v10722, %v10762
        %v10764 = vpop.f32.mrf.mxu0
        %v10765 = vpop.f32.mrf.mxu0
        %10766 = vdwg.mxu0
        %v10767 = vmax.f32 %v10269, 0.0
        %v10768 = vmax.f32 %v10271, 0.0
        %v10769 = vmax.f32 %v10433, 0.0
        %v10770 = vmax.f32 %v10435, 0.0
        %v10771 = vmax.f32 %v10597, 0.0
        %v10772 = vmax.f32 %v10599, 0.0
        %v10773 = vmax.f32 %v10761, 0.0
        %v10774 = vmax.f32 %v10763, 0.0
        %v10775 = vpack.c.bf16 %v10767, %v10767
        %v10776 = vpack.c.bf16 %v10768, %v10768
        %v10777 = vpack.c.bf16 %v10769, %v10769
        %v10778 = vpack.c.bf16 %v10770, %v10770
        %v10779 = vpack.c.bf16 %v10771, %v10771
        %v10780 = vpack.c.bf16 %v10772, %v10772
        %v10781 = vpack.c.bf16 %v10773, %v10773
        %v10782 = vpack.c.bf16 %v10774, %v10774
        %v10783 = vld [vmem:[%s5] sm:$0xf]
        %v10784 = vld [vmem:[%s5 + $0x4] sm:$0xf]
        %v10785 = vld [vmem:[%s5 + $0x8] sm:$0xf]
        %v10786 = vld [vmem:[%s5 + $0xc] sm:$0xf]
        %v10787 = vld [vmem:[%s5 + $0x10] sm:$0xf]
        %v10788 = vld [vmem:[%s5 + $0x14] sm:$0xf]
        %v10789 = vld [vmem:[%s5 + $0x18] sm:$0xf]
        %v10790 = vld [vmem:[%s5 + $0x1c] sm:$0xf]
        %v10791 = vld [vmem:[%s5 + $0x20] sm:$0xf]
        %v10792 = vld [vmem:[%s5 + $0x24] sm:$0xf]
        %v10793 = vld [vmem:[%s5 + $0x28] sm:$0xf]
        %v10794 = vld [vmem:[%s5 + $0x2c] sm:$0xf]
        %v10795 = vld [vmem:[%s5 + $0x30] sm:$0xf]
        %v10796 = vld [vmem:[%s5 + $0x34] sm:$0xf]
        %v10797 = vld [vmem:[%s5 + $0x38] sm:$0xf]
        %v10798 = vld [vmem:[%s5 + $0x3c] sm:$0xf]
        %v10799 = vld [vmem:[%s5 + $0x40] sm:$0xf]
        %v10800 = vld [vmem:[%s5 + $0x44] sm:$0xf]
        %v10801 = vld [vmem:[%s5 + $0x48] sm:$0xf]
        %v10802 = vld [vmem:[%s5 + $0x4c] sm:$0xf]
        %v10803 = vld [vmem:[%s5 + $0x50] sm:$0xf]
        %v10804 = vld [vmem:[%s5 + $0x54] sm:$0xf]
        %v10805 = vld [vmem:[%s5 + $0x58] sm:$0xf]
        %v10806 = vld [vmem:[%s5 + $0x5c] sm:$0xf]
        %v10807 = vld [vmem:[%s5 + $0x60] sm:$0xf]
        %v10808 = vld [vmem:[%s5 + $0x64] sm:$0xf]
        %v10809 = vld [vmem:[%s5 + $0x68] sm:$0xf]
        %v10810 = vld [vmem:[%s5 + $0x6c] sm:$0xf]
        %v10811 = vld [vmem:[%s5 + $0x70] sm:$0xf]
        %v10812 = vld [vmem:[%s5 + $0x74] sm:$0xf]
        %v10813 = vld [vmem:[%s5 + $0x78] sm:$0xf]
        %v10814 = vld [vmem:[%s5 + $0x7c] sm:$0xf]
        %v10815 = vld [vmem:[%s5 + $0x80] sm:$0xf]
        %v10816 = vld [vmem:[%s5 + $0x84] sm:$0xf]
        %v10817 = vld [vmem:[%s5 + $0x88] sm:$0xf]
        %v10818 = vld [vmem:[%s5 + $0x8c] sm:$0xf]
        %v10819 = vld [vmem:[%s5 + $0x90] sm:$0xf]
        %v10820 = vld [vmem:[%s5 + $0x94] sm:$0xf]
        %v10821 = vld [vmem:[%s5 + $0x98] sm:$0xf]
        %v10822 = vld [vmem:[%s5 + $0x9c] sm:$0xf]
        %v10823 = vld [vmem:[%s5 + $0xa0] sm:$0xf]
        %v10824 = vld [vmem:[%s5 + $0xa4] sm:$0xf]
        %v10825 = vld [vmem:[%s5 + $0xa8] sm:$0xf]
        %v10826 = vld [vmem:[%s5 + $0xac] sm:$0xf]
        %v10827 = vld [vmem:[%s5 + $0xb0] sm:$0xf]
        %v10828 = vld [vmem:[%s5 + $0xb4] sm:$0xf]
        %v10829 = vld [vmem:[%s5 + $0xb8] sm:$0xf]
        %v10830 = vld [vmem:[%s5 + $0xbc] sm:$0xf]
        %v10831 = vld [vmem:[%s5 + $0xc0] sm:$0xf]
        %v10832 = vld [vmem:[%s5 + $0xc4] sm:$0xf]
        %v10833 = vld [vmem:[%s5 + $0xc8] sm:$0xf]
        %v10834 = vld [vmem:[%s5 + $0xcc] sm:$0xf]
        %v10835 = vld [vmem:[%s5 + $0xd0] sm:$0xf]
        %v10836 = vld [vmem:[%s5 + $0xd4] sm:$0xf]
        %v10837 = vld [vmem:[%s5 + $0xd8] sm:$0xf]
        %v10838 = vld [vmem:[%s5 + $0xdc] sm:$0xf]
        %v10839 = vld [vmem:[%s5 + $0xe0] sm:$0xf]
        %v10840 = vld [vmem:[%s5 + $0xe4] sm:$0xf]
        %v10841 = vld [vmem:[%s5 + $0xe8] sm:$0xf]
        %v10842 = vld [vmem:[%s5 + $0xec] sm:$0xf]
        %v10843 = vld [vmem:[%s5 + $0xf0] sm:$0xf]
        %v10844 = vld [vmem:[%s5 + $0xf4] sm:$0xf]
        %v10845 = vld [vmem:[%s5 + $0xf8] sm:$0xf]
        %v10846 = vld [vmem:[%s5 + $0xfc] sm:$0xf]
        %v10847 = vld [vmem:[%s5 + $0x100] sm:$0xf]
        %v10848 = vld [vmem:[%s5 + $0x104] sm:$0xf]
        %v10849 = vld [vmem:[%s5 + $0x108] sm:$0xf]
        %v10850 = vld [vmem:[%s5 + $0x10c] sm:$0xf]
        %v10851 = vld [vmem:[%s5 + $0x110] sm:$0xf]
        %v10852 = vld [vmem:[%s5 + $0x114] sm:$0xf]
        %v10853 = vld [vmem:[%s5 + $0x118] sm:$0xf]
        %v10854 = vld [vmem:[%s5 + $0x11c] sm:$0xf]
        %v10855 = vld [vmem:[%s5 + $0x120] sm:$0xf]
        %v10856 = vld [vmem:[%s5 + $0x124] sm:$0xf]
        %v10857 = vld [vmem:[%s5 + $0x128] sm:$0xf]
        %v10858 = vld [vmem:[%s5 + $0x12c] sm:$0xf]
        %v10859 = vld [vmem:[%s5 + $0x130] sm:$0xf]
        %v10860 = vld [vmem:[%s5 + $0x134] sm:$0xf]
        %v10861 = vld [vmem:[%s5 + $0x138] sm:$0xf]
        %v10862 = vld [vmem:[%s5 + $0x13c] sm:$0xf]
        %v10863 = vld [vmem:[%s5 + $0x140] sm:$0xf]
        %v10864 = vld [vmem:[%s5 + $0x144] sm:$0xf]
        %v10865 = vld [vmem:[%s5 + $0x148] sm:$0xf]
        %v10866 = vld [vmem:[%s5 + $0x14c] sm:$0xf]
        %v10867 = vld [vmem:[%s5 + $0x150] sm:$0xf]
        %v10868 = vld [vmem:[%s5 + $0x154] sm:$0xf]
        %v10869 = vld [vmem:[%s5 + $0x158] sm:$0xf]
        %v10870 = vld [vmem:[%s5 + $0x15c] sm:$0xf]
        %v10871 = vld [vmem:[%s5 + $0x160] sm:$0xf]
        %v10872 = vld [vmem:[%s5 + $0x164] sm:$0xf]
        %v10873 = vld [vmem:[%s5 + $0x168] sm:$0xf]
        %v10874 = vld [vmem:[%s5 + $0x16c] sm:$0xf]
        %v10875 = vld [vmem:[%s5 + $0x170] sm:$0xf]
        %v10876 = vld [vmem:[%s5 + $0x174] sm:$0xf]
        %v10877 = vld [vmem:[%s5 + $0x178] sm:$0xf]
        %v10878 = vld [vmem:[%s5 + $0x17c] sm:$0xf]
        %v10879 = vld [vmem:[%s5 + $0x180] sm:$0xf]
        %v10880 = vld [vmem:[%s5 + $0x184] sm:$0xf]
        %v10881 = vld [vmem:[%s5 + $0x188] sm:$0xf]
        %v10882 = vld [vmem:[%s5 + $0x18c] sm:$0xf]
        %v10883 = vld [vmem:[%s5 + $0x190] sm:$0xf]
        %v10884 = vld [vmem:[%s5 + $0x194] sm:$0xf]
        %v10885 = vld [vmem:[%s5 + $0x198] sm:$0xf]
        %v10886 = vld [vmem:[%s5 + $0x19c] sm:$0xf]
        %v10887 = vld [vmem:[%s5 + $0x1a0] sm:$0xf]
        %v10888 = vld [vmem:[%s5 + $0x1a4] sm:$0xf]
        %v10889 = vld [vmem:[%s5 + $0x1a8] sm:$0xf]
        %v10890 = vld [vmem:[%s5 + $0x1ac] sm:$0xf]
        %v10891 = vld [vmem:[%s5 + $0x1b0] sm:$0xf]
        %v10892 = vld [vmem:[%s5 + $0x1b4] sm:$0xf]
        %v10893 = vld [vmem:[%s5 + $0x1b8] sm:$0xf]
        %v10894 = vld [vmem:[%s5 + $0x1bc] sm:$0xf]
        %v10895 = vld [vmem:[%s5 + $0x1c0] sm:$0xf]
        %v10896 = vld [vmem:[%s5 + $0x1c4] sm:$0xf]
        %v10897 = vld [vmem:[%s5 + $0x1c8] sm:$0xf]
        %v10898 = vld [vmem:[%s5 + $0x1cc] sm:$0xf]
        %v10899 = vld [vmem:[%s5 + $0x1d0] sm:$0xf]
        %v10900 = vld [vmem:[%s5 + $0x1d4] sm:$0xf]
        %v10901 = vld [vmem:[%s5 + $0x1d8] sm:$0xf]
        %v10902 = vld [vmem:[%s5 + $0x1dc] sm:$0xf]
        %v10903 = vld [vmem:[%s5 + $0x1e0] sm:$0xf]
        %v10904 = vld [vmem:[%s5 + $0x1e4] sm:$0xf]
        %v10905 = vld [vmem:[%s5 + $0x1e8] sm:$0xf]
        %v10906 = vld [vmem:[%s5 + $0x1ec] sm:$0xf]
        %v10907 = vld [vmem:[%s5 + $0x1f0] sm:$0xf]
        %v10908 = vld [vmem:[%s5 + $0x1f4] sm:$0xf]
        %v10909 = vld [vmem:[%s5 + $0x1f8] sm:$0xf]
        %v10910 = vld [vmem:[%s5 + $0x1fc] sm:$0xf]
        %v10911 = vld [vmem:[%s6] sm:$0x1]
        %v10913 = vlaneseq
        %v10914 = vshrl.u32 %v10913, 7
        %v10915 = vsub.s32 0, %v10914
        %v10916 = vrot.slane %v10911, %v10915
        %v11046 = vunpack.c.l.b16 %v10783
        %v11047 = vunpack.c.l.b16 %v10784
        %v11048 = vunpack.c.l.b16 %v10785
        %v11049 = vunpack.c.l.b16 %v10786
        %v11050 = vunpack.c.l.b16 %v10787
        %v11051 = vunpack.c.l.b16 %v10788
        %v11052 = vunpack.c.l.b16 %v10789
        %v11053 = vunpack.c.l.b16 %v10790
        %v11054 = vunpack.c.l.b16 %v10791
        %v11055 = vunpack.c.l.b16 %v10792
        %v11056 = vunpack.c.l.b16 %v10793
        %v11057 = vunpack.c.l.b16 %v10794
        %v11058 = vunpack.c.l.b16 %v10795
        %v11059 = vunpack.c.l.b16 %v10796
        %v11060 = vunpack.c.l.b16 %v10797
        %v11061 = vunpack.c.l.b16 %v10798
        %v11062 = vunpack.c.l.b16 %v10799
        %v11063 = vunpack.c.l.b16 %v10800
        %v11064 = vunpack.c.l.b16 %v10801
        %v11065 = vunpack.c.l.b16 %v10802
        %v11066 = vunpack.c.l.b16 %v10803
        %v11067 = vunpack.c.l.b16 %v10804
        %v11068 = vunpack.c.l.b16 %v10805
        %v11069 = vunpack.c.l.b16 %v10806
        %v11070 = vunpack.c.l.b16 %v10807
        %v11071 = vunpack.c.l.b16 %v10808
        %v11072 = vunpack.c.l.b16 %v10809
        %v11073 = vunpack.c.l.b16 %v10810
        %v11074 = vunpack.c.l.b16 %v10811
        %v11075 = vunpack.c.l.b16 %v10812
        %v11076 = vunpack.c.l.b16 %v10813
        %v11077 = vunpack.c.l.b16 %v10814
        %v11078 = vunpack.c.l.b16 %v10815
        %v11079 = vunpack.c.l.b16 %v10816
        %v11080 = vunpack.c.l.b16 %v10817
        %v11081 = vunpack.c.l.b16 %v10818
        %v11082 = vunpack.c.l.b16 %v10819
        %v11083 = vunpack.c.l.b16 %v10820
        %v11084 = vunpack.c.l.b16 %v10821
        %v11085 = vunpack.c.l.b16 %v10822
        %v11086 = vunpack.c.l.b16 %v10823
        %v11087 = vunpack.c.l.b16 %v10824
        %v11088 = vunpack.c.l.b16 %v10825
        %v11089 = vunpack.c.l.b16 %v10826
        %v11090 = vunpack.c.l.b16 %v10827
        %v11091 = vunpack.c.l.b16 %v10828
        %v11092 = vunpack.c.l.b16 %v10829
        %v11093 = vunpack.c.l.b16 %v10830
        %v11094 = vunpack.c.l.b16 %v10831
        %v11095 = vunpack.c.l.b16 %v10832
        %v11096 = vunpack.c.l.b16 %v10833
        %v11097 = vunpack.c.l.b16 %v10834
        %v11098 = vunpack.c.l.b16 %v10835
        %v11099 = vunpack.c.l.b16 %v10836
        %v11100 = vunpack.c.l.b16 %v10837
        %v11101 = vunpack.c.l.b16 %v10838
        %v11102 = vunpack.c.l.b16 %v10839
        %v11103 = vunpack.c.l.b16 %v10840
        %v11104 = vunpack.c.l.b16 %v10841
        %v11105 = vunpack.c.l.b16 %v10842
        %v11106 = vunpack.c.l.b16 %v10843
        %v11107 = vunpack.c.l.b16 %v10844
        %v11108 = vunpack.c.l.b16 %v10845
        %v11109 = vunpack.c.l.b16 %v10846
        %v11110 = vunpack.c.l.b16 %v10847
        %v11111 = vunpack.c.l.b16 %v10848
        %v11112 = vunpack.c.l.b16 %v10849
        %v11113 = vunpack.c.l.b16 %v10850
        %v11114 = vunpack.c.l.b16 %v10851
        %v11115 = vunpack.c.l.b16 %v10852
        %v11116 = vunpack.c.l.b16 %v10853
        %v11117 = vunpack.c.l.b16 %v10854
        %v11118 = vunpack.c.l.b16 %v10855
        %v11119 = vunpack.c.l.b16 %v10856
        %v11120 = vunpack.c.l.b16 %v10857
        %v11121 = vunpack.c.l.b16 %v10858
        %v11122 = vunpack.c.l.b16 %v10859
        %v11123 = vunpack.c.l.b16 %v10860
        %v11124 = vunpack.c.l.b16 %v10861
        %v11125 = vunpack.c.l.b16 %v10862
        %v11126 = vunpack.c.l.b16 %v10863
        %v11127 = vunpack.c.l.b16 %v10864
        %v11128 = vunpack.c.l.b16 %v10865
        %v11129 = vunpack.c.l.b16 %v10866
        %v11130 = vunpack.c.l.b16 %v10867
        %v11131 = vunpack.c.l.b16 %v10868
        %v11132 = vunpack.c.l.b16 %v10869
        %v11133 = vunpack.c.l.b16 %v10870
        %v11134 = vunpack.c.l.b16 %v10871
        %v11135 = vunpack.c.l.b16 %v10872
        %v11136 = vunpack.c.l.b16 %v10873
        %v11137 = vunpack.c.l.b16 %v10874
        %v11138 = vunpack.c.l.b16 %v10875
        %v11139 = vunpack.c.l.b16 %v10876
        %v11140 = vunpack.c.l.b16 %v10877
        %v11141 = vunpack.c.l.b16 %v10878
        %v11142 = vunpack.c.l.b16 %v10879
        %v11143 = vunpack.c.l.b16 %v10880
        %v11144 = vunpack.c.l.b16 %v10881
        %v11145 = vunpack.c.l.b16 %v10882
        %v11146 = vunpack.c.l.b16 %v10883
        %v11147 = vunpack.c.l.b16 %v10884
        %v11148 = vunpack.c.l.b16 %v10885
        %v11149 = vunpack.c.l.b16 %v10886
        %v11150 = vunpack.c.l.b16 %v10887
        %v11151 = vunpack.c.l.b16 %v10888
        %v11152 = vunpack.c.l.b16 %v10889
        %v11153 = vunpack.c.l.b16 %v10890
        %v11154 = vunpack.c.l.b16 %v10891
        %v11155 = vunpack.c.l.b16 %v10892
        %v11156 = vunpack.c.l.b16 %v10893
        %v11157 = vunpack.c.l.b16 %v10894
        %v11158 = vunpack.c.l.b16 %v10895
        %v11159 = vunpack.c.l.b16 %v10896
        %v11160 = vunpack.c.l.b16 %v10897
        %v11161 = vunpack.c.l.b16 %v10898
        %v11162 = vunpack.c.l.b16 %v10899
        %v11163 = vunpack.c.l.b16 %v10900
        %v11164 = vunpack.c.l.b16 %v10901
        %v11165 = vunpack.c.l.b16 %v10902
        %v11166 = vunpack.c.l.b16 %v10903
        %v11167 = vunpack.c.l.b16 %v10904
        %v11168 = vunpack.c.l.b16 %v10905
        %v11169 = vunpack.c.l.b16 %v10906
        %v11170 = vunpack.c.l.b16 %v10907
        %v11171 = vunpack.c.l.b16 %v10908
        %v11172 = vunpack.c.l.b16 %v10909
        %v11173 = vunpack.c.l.b16 %v10910
        %v11174 = vpack.c.b16 %v11047, %v11046
        %v11175 = vpack.c.b16 %v11049, %v11048
        %v11176 = vpack.c.b16 %v11051, %v11050
        %v11177 = vpack.c.b16 %v11053, %v11052
        %v11178 = vpack.c.b16 %v11055, %v11054
        %v11179 = vpack.c.b16 %v11057, %v11056
        %v11180 = vpack.c.b16 %v11059, %v11058
        %v11181 = vpack.c.b16 %v11061, %v11060
        %v11182 = vpack.c.b16 %v11063, %v11062
        %v11183 = vpack.c.b16 %v11065, %v11064
        %v11184 = vpack.c.b16 %v11067, %v11066
        %v11185 = vpack.c.b16 %v11069, %v11068
        %v11186 = vpack.c.b16 %v11071, %v11070
        %v11187 = vpack.c.b16 %v11073, %v11072
        %v11188 = vpack.c.b16 %v11075, %v11074
        %v11189 = vpack.c.b16 %v11077, %v11076
        %v11190 = vpack.c.b16 %v11079, %v11078
        %v11191 = vpack.c.b16 %v11081, %v11080
        %v11192 = vpack.c.b16 %v11083, %v11082
        %v11193 = vpack.c.b16 %v11085, %v11084
        %v11194 = vpack.c.b16 %v11087, %v11086
        %v11195 = vpack.c.b16 %v11089, %v11088
        %v11196 = vpack.c.b16 %v11091, %v11090
        %v11197 = vpack.c.b16 %v11093, %v11092
        %v11198 = vpack.c.b16 %v11095, %v11094
        %v11199 = vpack.c.b16 %v11097, %v11096
        %v11200 = vpack.c.b16 %v11099, %v11098
        %v11201 = vpack.c.b16 %v11101, %v11100
        %v11202 = vpack.c.b16 %v11103, %v11102
        %v11203 = vpack.c.b16 %v11105, %v11104
        %v11204 = vpack.c.b16 %v11107, %v11106
        %v11205 = vpack.c.b16 %v11109, %v11108
        %v11206 = vpack.c.b16 %v11111, %v11110
        %v11207 = vpack.c.b16 %v11113, %v11112
        %v11208 = vpack.c.b16 %v11115, %v11114
        %v11209 = vpack.c.b16 %v11117, %v11116
        %v11210 = vpack.c.b16 %v11119, %v11118
        %v11211 = vpack.c.b16 %v11121, %v11120
        %v11212 = vpack.c.b16 %v11123, %v11122
        %v11213 = vpack.c.b16 %v11125, %v11124
        %v11214 = vpack.c.b16 %v11127, %v11126
        %v11215 = vpack.c.b16 %v11129, %v11128
        %v11216 = vpack.c.b16 %v11131, %v11130
        %v11217 = vpack.c.b16 %v11133, %v11132
        %v11218 = vpack.c.b16 %v11135, %v11134
        %v11219 = vpack.c.b16 %v11137, %v11136
        %v11220 = vpack.c.b16 %v11139, %v11138
        %v11221 = vpack.c.b16 %v11141, %v11140
        %v11222 = vpack.c.b16 %v11143, %v11142
        %v11223 = vpack.c.b16 %v11145, %v11144
        %v11224 = vpack.c.b16 %v11147, %v11146
        %v11225 = vpack.c.b16 %v11149, %v11148
        %v11226 = vpack.c.b16 %v11151, %v11150
        %v11227 = vpack.c.b16 %v11153, %v11152
        %v11228 = vpack.c.b16 %v11155, %v11154
        %v11229 = vpack.c.b16 %v11157, %v11156
        %v11230 = vpack.c.b16 %v11159, %v11158
        %v11231 = vpack.c.b16 %v11161, %v11160
        %v11232 = vpack.c.b16 %v11163, %v11162
        %v11233 = vpack.c.b16 %v11165, %v11164
        %v11234 = vpack.c.b16 %v11167, %v11166
        %v11235 = vpack.c.b16 %v11169, %v11168
        %v11236 = vpack.c.b16 %v11171, %v11170
        %v11237 = vpack.c.b16 %v11173, %v11172
        %11302 = vmatprep.subr.bf16.mxu0 0
        %11303 = vmatpush1.bf16.msra.mxu0 %v11181
        %11304 = vmatprep.subr.bf16.mxu0 0
        %11305 = vmatpush1.bf16.msra.mxu0 %v11180
        %11306 = vmatprep.subr.bf16.mxu0 0
        %11307 = vmatpush1.bf16.msra.mxu0 %v11179
        %11308 = vmatprep.subr.bf16.mxu0 0
        %11309 = vmatpush1.bf16.msra.mxu0 %v11178
        %11310 = vmatprep.subr.bf16.mxu0 0
        %11311 = vmatpush1.bf16.msra.mxu0 %v11177
        %11312 = vmatprep.subr.bf16.mxu0 0
        %11313 = vmatpush1.bf16.msra.mxu0 %v11176
        %11314 = vmatprep.subr.bf16.mxu0 0
        %11315 = vmatpush1.bf16.msra.mxu0 %v11175
        %11316 = vmatprep.subr.bf16.mxu0 0
        %11317 = vmatpush1.bf16.msra.mxu0 %v11174
        %11318 = vmatprep.subr.bf16.mxu0 0
        %11319 = vmatpush2.bf16.msra.mxu0 %v11189
        %11320 = vmatprep.subr.bf16.mxu0 0
        %11321 = vmatpush2.bf16.msra.mxu0 %v11188
        %11322 = vmatprep.subr.bf16.mxu0 0
        %11323 = vmatpush2.bf16.msra.mxu0 %v11187
        %11324 = vmatprep.subr.bf16.mxu0 0
        %11325 = vmatpush2.bf16.msra.mxu0 %v11186
        %11326 = vmatprep.subr.bf16.mxu0 0
        %11327 = vmatpush2.bf16.msra.mxu0 %v11185
        %11328 = vmatprep.subr.bf16.mxu0 0
        %11329 = vmatpush2.bf16.msra.mxu0 %v11184
        %11330 = vmatprep.subr.bf16.mxu0 0
        %11331 = vmatpush2.bf16.msra.mxu0 %v11183
        %11332 = vmatprep.subr.bf16.mxu0 0
        %11333 = vmatpush2.bf16.msra.mxu0 %v11182
        %11334 = vmatprep.mubr.bf16.mxu0 %v10776
        %11335 = vmatmul.mubr.bf16.gmra.mxu0 %v10775
        %v11336 = vpop.f32.mrf.mxu0
        %v11337 = vadd.f32 %v10916, %v11336
        %v11338 = vpop.f32.mrf.mxu0
        %v11339 = vpop.f32.mrf.mxu0
        %v11340 = vpop.f32.mrf.mxu0
        %11341 = vdwg.mxu0
        %11342 = vmatprep.subr.bf16.mxu0 0
        %11343 = vmatpush1.bf16.msra.mxu0 %v11197
        %11344 = vmatprep.subr.bf16.mxu0 0
        %11345 = vmatpush1.bf16.msra.mxu0 %v11196
        %11346 = vmatprep.subr.bf16.mxu0 0
        %11347 = vmatpush1.bf16.msra.mxu0 %v11195
        %11348 = vmatprep.subr.bf16.mxu0 0
        %11349 = vmatpush1.bf16.msra.mxu0 %v11194
        %11350 = vmatprep.subr.bf16.mxu0 0
        %11351 = vmatpush1.bf16.msra.mxu0 %v11193
        %11352 = vmatprep.subr.bf16.mxu0 0
        %11353 = vmatpush1.bf16.msra.mxu0 %v11192
        %11354 = vmatprep.subr.bf16.mxu0 0
        %11355 = vmatpush1.bf16.msra.mxu0 %v11191
        %11356 = vmatprep.subr.bf16.mxu0 0
        %11357 = vmatpush1.bf16.msra.mxu0 %v11190
        %11358 = vmatprep.subr.bf16.mxu0 0
        %11359 = vmatpush2.bf16.msra.mxu0 %v11205
        %11360 = vmatprep.subr.bf16.mxu0 0
        %11361 = vmatpush2.bf16.msra.mxu0 %v11204
        %11362 = vmatprep.subr.bf16.mxu0 0
        %11363 = vmatpush2.bf16.msra.mxu0 %v11203
        %11364 = vmatprep.subr.bf16.mxu0 0
        %11365 = vmatpush2.bf16.msra.mxu0 %v11202
        %11366 = vmatprep.subr.bf16.mxu0 0
        %11367 = vmatpush2.bf16.msra.mxu0 %v11201
        %11368 = vmatprep.subr.bf16.mxu0 0
        %11369 = vmatpush2.bf16.msra.mxu0 %v11200
        %11370 = vmatprep.subr.bf16.mxu0 0
        %11371 = vmatpush2.bf16.msra.mxu0 %v11199
        %11372 = vmatprep.subr.bf16.mxu0 0
        %11373 = vmatpush2.bf16.msra.mxu0 %v11198
        %11374 = vmatprep.mubr.bf16.mxu0 %v10778
        %11375 = vmatmul.mubr.bf16.gmra.mxu0 %v10777
        %v11376 = vpop.f32.mrf.mxu0
        %v11377 = vadd.f32 %v11337, %v11376
        %v11378 = vpop.f32.mrf.mxu0
        %v11379 = vpop.f32.mrf.mxu0
        %v11380 = vpop.f32.mrf.mxu0
        %11381 = vdwg.mxu0
        %11382 = vmatprep.subr.bf16.mxu0 0
        %11383 = vmatpush1.bf16.msra.mxu0 %v11213
        %11384 = vmatprep.subr.bf16.mxu0 0
        %11385 = vmatpush1.bf16.msra.mxu0 %v11212
        %11386 = vmatprep.subr.bf16.mxu0 0
        %11387 = vmatpush1.bf16.msra.mxu0 %v11211
        %11388 = vmatprep.subr.bf16.mxu0 0
        %11389 = vmatpush1.bf16.msra.mxu0 %v11210
        %11390 = vmatprep.subr.bf16.mxu0 0
        %11391 = vmatpush1.bf16.msra.mxu0 %v11209
        %11392 = vmatprep.subr.bf16.mxu0 0
        %11393 = vmatpush1.bf16.msra.mxu0 %v11208
        %11394 = vmatprep.subr.bf16.mxu0 0
        %11395 = vmatpush1.bf16.msra.mxu0 %v11207
        %11396 = vmatprep.subr.bf16.mxu0 0
        %11397 = vmatpush1.bf16.msra.mxu0 %v11206
        %11398 = vmatprep.subr.bf16.mxu0 0
        %11399 = vmatpush2.bf16.msra.mxu0 %v11221
        %11400 = vmatprep.subr.bf16.mxu0 0
        %11401 = vmatpush2.bf16.msra.mxu0 %v11220
        %11402 = vmatprep.subr.bf16.mxu0 0
        %11403 = vmatpush2.bf16.msra.mxu0 %v11219
        %11404 = vmatprep.subr.bf16.mxu0 0
        %11405 = vmatpush2.bf16.msra.mxu0 %v11218
        %11406 = vmatprep.subr.bf16.mxu0 0
        %11407 = vmatpush2.bf16.msra.mxu0 %v11217
        %11408 = vmatprep.subr.bf16.mxu0 0
        %11409 = vmatpush2.bf16.msra.mxu0 %v11216
        %11410 = vmatprep.subr.bf16.mxu0 0
        %11411 = vmatpush2.bf16.msra.mxu0 %v11215
        %11412 = vmatprep.subr.bf16.mxu0 0
        %11413 = vmatpush2.bf16.msra.mxu0 %v11214
        %11414 = vmatprep.mubr.bf16.mxu0 %v10780
        %11415 = vmatmul.mubr.bf16.gmra.mxu0 %v10779
        %v11416 = vpop.f32.mrf.mxu0
        %v11417 = vadd.f32 %v11377, %v11416
        %v11418 = vpop.f32.mrf.mxu0
        %v11419 = vpop.f32.mrf.mxu0
        %v11420 = vpop.f32.mrf.mxu0
        %11421 = vdwg.mxu0
        %11422 = vmatprep.subr.bf16.mxu0 0
        %11423 = vmatpush1.bf16.msra.mxu0 %v11229
        %11424 = vmatprep.subr.bf16.mxu0 0
        %11425 = vmatpush1.bf16.msra.mxu0 %v11228
        %11426 = vmatprep.subr.bf16.mxu0 0
        %11427 = vmatpush1.bf16.msra.mxu0 %v11227
        %11428 = vmatprep.subr.bf16.mxu0 0
        %11429 = vmatpush1.bf16.msra.mxu0 %v11226
        %11430 = vmatprep.subr.bf16.mxu0 0
        %11431 = vmatpush1.bf16.msra.mxu0 %v11225
        %11432 = vmatprep.subr.bf16.mxu0 0
        %11433 = vmatpush1.bf16.msra.mxu0 %v11224
        %11434 = vmatprep.subr.bf16.mxu0 0
        %11435 = vmatpush1.bf16.msra.mxu0 %v11223
        %11436 = vmatprep.subr.bf16.mxu0 0
        %11437 = vmatpush1.bf16.msra.mxu0 %v11222
        %11438 = vmatprep.subr.bf16.mxu0 0
        %11439 = vmatpush2.bf16.msra.mxu0 %v11237
        %11440 = vmatprep.subr.bf16.mxu0 0
        %11441 = vmatpush2.bf16.msra.mxu0 %v11236
        %11442 = vmatprep.subr.bf16.mxu0 0
        %11443 = vmatpush2.bf16.msra.mxu0 %v11235
        %11444 = vmatprep.subr.bf16.mxu0 0
        %11445 = vmatpush2.bf16.msra.mxu0 %v11234
        %11446 = vmatprep.subr.bf16.mxu0 0
        %11447 = vmatpush2.bf16.msra.mxu0 %v11233
        %11448 = vmatprep.subr.bf16.mxu0 0
        %11449 = vmatpush2.bf16.msra.mxu0 %v11232
        %11450 = vmatprep.subr.bf16.mxu0 0
        %11451 = vmatpush2.bf16.msra.mxu0 %v11231
        %11452 = vmatprep.subr.bf16.mxu0 0
        %11453 = vmatpush2.bf16.msra.mxu0 %v11230
        %11454 = vmatprep.mubr.bf16.mxu0 %v10782
        %11455 = vmatmul.mubr.bf16.gmra.mxu0 %v10781
        %v11456 = vpop.f32.mrf.mxu0
        %v11457 = vadd.f32 %v11417, %v11456
        %v11458 = vpop.f32.mrf.mxu0
        %v11459 = vpop.f32.mrf.mxu0
        %v11460 = vpop.f32.mrf.mxu0
        %11461 = vdwg.mxu0
        %11462 = vst [vmem:[%s329] sm:$0xff] %v11457
      $region56: #{boxhead_forward.1} parent=47 // pred_fallthru
        _
      %p11463 = scmp.lt.s32.totalorder %s22, 0
      %s11464 = scalar_select %p11463, %s22, 0
      %s11465 = smul.addr %s11464, 8
      %s11466 = scalar_lea.vmem %s7, %s11465
      // Predicated region
      $region57: #{boxhead_forward.1} parent=47 // pred_check
        %p11467 = pneg %p207
      $region58: #{boxhead_forward.1} parent=47 // pred_check_branch
        %11469 = sbr.rel (%p11467) target = $region60
      $region59: #{boxhead_forward.1} parent=47 // pred_region
        _
      $region60: #{boxhead_forward.1} parent=47 // pred_fallthru
        _
      // Predicated region
      $region61: #{boxhead_forward.1} parent=47 // pred_check
        %p11470 = pneg %p207
      $region62: #{boxhead_forward.1} parent=47 // pred_check_branch
        %11472 = sbr.rel (%p11470) target = $region64
      $region63: #{boxhead_forward.1} parent=47 // pred_region
        %p11473 = scmp.lt.s32.totalorder %s22, 0
        %s11474 = scalar_select %p11473, %s22, 0
        %s11475 = smul.addr %s11474, 8
        %s11476 = scalar_lea.vmem %s7, %s11475
      $region64: #{boxhead_forward.1} parent=47 // pred_fallthru
        _
    $region48: #{boxhead_forward.1} parent=5 // pred_fallthru
      _
    %p11477 = scmp.le.s32.totalorder 2, %s13
    // Predicated region
    $region65: #{boxhead_forward.1} parent=5 // pred_check
      %p11478 = pneg %p11477
    $region66: #{boxhead_forward.1} parent=5 // pred_check_branch
      %11480 = sbr.rel (%p11478) target = $region68
    $region67: #{boxhead_forward.1} parent=5 // pred_region
      %s11481 = ssub.s32 %s13, 2
    $region68: #{boxhead_forward.1} parent=5 // pred_fallthru
      _
  $region6: #{boxhead_forward.1} parent=0 // loop_footer
    %s17 = sadd.s32 1, %s13
  $region7: #{boxhead_forward.1} parent=0 // loop_footer_branch
    %12 = sbr.rel target = $region3
  $region8: #{boxhead_forward.1} parent=0 // loop_exit
    _

</llo_original>
